<compile_context>
chip_gen: v7x
topology: tpu7x:2x2x1
jax: 0.10.0
libtpu: 0.0.40
codegen_flags: <defaults>
</compile_context>

<pallas_src>
import functools

import numpy as np
import jax
import jax.numpy as jnp
from jax import lax
from jax.experimental import pallas as pl
from jax.experimental.pallas import tpu as pltpu

POOL_K = 5
POOL_S = 3
CONV1_K = 5
BN_EPS = 1e-3


def _aux_fused_kernel(x_ref, pmatT_ref, w0_ref, s0_ref, b0_ref,
                      w1_ref, s1_ref, b1_ref, fcw_ref, fcb_ref,
                      out_ref, h0_scr, *, wp, ho, wo):
    """Fused aux head for one block of images.

    x_ref:    (b_blk, Cin, H*W)      f32   native NCHW, spatial flattened
    pmatT_ref:(H*W, HP*WP)           bf16  constant 0/1 pooling matrix (transposed)
    w0_ref:   (128, Cin)             bf16  1x1 conv weight, native (out, in)
    s0/b0:    (1, 128)               f32   folded BN0 scale (incl. 1/25) / bias
    w1_ref:   (25, 128, 768)         bf16  5x5 conv weight, (kh*kw, in, out)
    s1/b1:    (1, 768)               f32   folded BN1 scale / bias
    fcw_ref:  (768, ncls_pad)        bf16  fc weight (lane-padded)
    fcb_ref:  (1, ncls_pad)          f32
    out_ref:  (1, b_blk, ncls_pad)   f32
    h0_scr:   (b_blk, HP*WP, 128)    bf16  VMEM scratch for conv0 activations
    """
    bblk = x_ref.shape[0]
    cmid = w0_ref.shape[0]
    cout = w1_ref.shape[2]
    n_out = ho * wo

    # --- avg-pool (matmul vs 0/1 matrix) + 1x1 conv + BN0 + ReLU, per image --------
    # Both matmuls run in "NCHW-transposed" orientation so x never needs transposing:
    #   pooled_T = x_cb (Cin, HW) @ pmatT (HW, P)                       -> (Cin, P)
    #   h0       = dot_general(pooled_T, w0, contracting Cin)           -> (P, 128)
    for b in range(bblk):
        x_cb = x_ref[b].astype(jnp.bfloat16)                               # (Cin, HW)
        pooled_t = jnp.dot(x_cb, pmatT_ref[...],
                           preferred_element_type=jnp.float32)             # (Cin, P)
        h0 = lax.dot_general(pooled_t.astype(jnp.bfloat16), w0_ref[...],
                             dimension_numbers=(((0,), (1,)), ((), ())),
                             preferred_element_type=jnp.float32)           # (P, 128)
        h0 = jnp.maximum(h0 * s0_ref[...] + b0_ref[...], 0.0)              # BN0+ReLU
        h0_scr[b] = h0.astype(jnp.bfloat16)                                # bf16 stage

    # --- 5x5 conv1 as 25 accumulated matmuls (M = b_blk * output positions) --------
    acc = jnp.zeros((bblk * n_out, cout), jnp.float32)
    for ki in range(CONV1_K):
        for kj in range(CONV1_K):
            w1_t = w1_ref[ki * CONV1_K + kj]                               # (128, 768)
            if n_out == 1:        # canonical Inception geometry (5x5 pooled map)
                taps = h0_scr[:, pl.ds(ki * wp + kj, 1), :].reshape(bblk, cmid)
            else:                 # general geometry: still batched over images & width
                parts = []
                for oi in range(ho):
                    strip = h0_scr[:, pl.ds((oi + ki) * wp + kj, wo), :]   # (b, wo, 128)
                    parts.append(strip.reshape(bblk * wo, cmid))
                taps = jnp.concatenate(parts, axis=0)                      # (ho*b*wo, 128)
            acc = acc + jnp.dot(taps, w1_t, preferred_element_type=jnp.float32)

    # --- BN1 + ReLU once, after the full f32 accumulation ---------------------------
    h1 = jnp.maximum(acc * s1_ref[...] + b1_ref[...], 0.0)                 # (rows, 768)

    # --- adaptive_avg_pool2d((1,1)) + flatten ----------------------------------------
    if n_out == 1:
        feat = h1                                                          # (b_blk, 768)
    else:
        feat = jnp.mean(h1.reshape(ho, bblk, wo, cout), axis=(0, 2))       # (b_blk, 768)

    # --- fc into a lane-dense (128-padded) output slab --------------------------------
    logits = jnp.dot(feat.astype(jnp.bfloat16), fcw_ref[...],
                     preferred_element_type=jnp.float32) + fcb_ref[...]
    out_ref[0] = logits


def _fold_bn(gamma, beta, mean, var, extra_scale=1.0):
    scale = gamma / jnp.sqrt(var + BN_EPS)
    bias = beta - mean * scale
    return ((scale * extra_scale)[None, :].astype(jnp.float32),
            bias[None, :].astype(jnp.float32))


def inception_aux_forward(x_nchw, params):
    n, cin, h, w = x_nchw.shape
    hp = (h - POOL_K) // POOL_S + 1
    wp = (w - POOL_K) // POOL_S + 1
    assert hp >= CONV1_K and wp >= CONV1_K, "spatial too small for the 5x5 valid conv1"
    ho, wo = hp - CONV1_K + 1, wp - CONV1_K + 1
    cmid = params["w0"].shape[0]          # 128
    cout = params["w1"].shape[0]          # 768
    ncls = params["fc_w"].shape[0]
    ncls_pad = ((ncls + 127) // 128) * 128

    # ---- weight preparation (x itself only gets a FREE reshape, no HBM pass) --------
    x3 = x_nchw.reshape(n, cin, h * w)                                    # native NCHW
    w0 = params["w0"].reshape(cmid, cin).astype(jnp.bfloat16)             # (128, Cin)
    s0, b0 = _fold_bn(params["g0"], params["b0"], params["m0"], params["v0"],
                      extra_scale=1.0 / float(POOL_K * POOL_K))           # fold 1/25
    # (out,in,kh,kw) -> (kh,kw,in,out) -> (25, in, out): matches in-kernel tap order.
    w1 = jnp.transpose(params["w1"], (2, 3, 1, 0)).reshape(
        CONV1_K * CONV1_K, cmid, cout).astype(jnp.bfloat16)
    s1, b1 = _fold_bn(params["g1"], params["b1"], params["m1"], params["v1"])
    fcw = jnp.zeros((cout, ncls_pad), jnp.float32).at[:, :ncls].set(params["fc_w"].T)
    fcw = fcw.astype(jnp.bfloat16)
    fcb = jnp.zeros((1, ncls_pad), jnp.float32).at[:, :ncls].set(params["fc_b"][None, :])

    # Constant 0/1 pooling matrix (transposed): pooled_T = x_cb @ pmatT (sum; /25 in s0).
    pmatT_np = np.zeros((h * w, hp * wp), np.float32)
    for i in range(hp):
        for j in range(wp):
            for ki in range(POOL_K):
                for kj in range(POOL_K):
                    pmatT_np[(POOL_S * i + ki) * w + (POOL_S * j + kj), i * wp + j] = 1.0
    pmatT = jnp.asarray(pmatT_np, jnp.bfloat16)

    # ---- batch blocking: <=8 images per step, >=2 grid steps whenever n >= 2 --------
    b_blk = max(1, min(8, -(-n // 2)))
    n_steps = -(-n // b_blk)
    n_pad = n_steps * b_blk
    if n_pad != n:
        x3 = jnp.pad(x3, ((0, n_pad - n), (0, 0), (0, 0)))

    kernel = functools.partial(_aux_fused_kernel, wp=wp, ho=ho, wo=wo)
    const = dict(pipeline_mode=pl.Buffered(1))   # resident operands: single-buffered
    out = pl.pallas_call(
        kernel,
        out_shape=jax.ShapeDtypeStruct((n_steps, b_blk, ncls_pad), jnp.float32),
        grid=(n_steps,),
        in_specs=[
            pl.BlockSpec((b_blk, cin, h * w), lambda i: (i, 0, 0)),
            pl.BlockSpec((h * w, hp * wp), lambda i: (0, 0), **const),
            pl.BlockSpec((cmid, cin), lambda i: (0, 0), **const),
            pl.BlockSpec((1, cmid), lambda i: (0, 0), **const),
            pl.BlockSpec((1, cmid), lambda i: (0, 0), **const),
            pl.BlockSpec((CONV1_K * CONV1_K, cmid, cout), lambda i: (0, 0, 0), **const),
            pl.BlockSpec((1, cout), lambda i: (0, 0), **const),
            pl.BlockSpec((1, cout), lambda i: (0, 0), **const),
            pl.BlockSpec((cout, ncls_pad), lambda i: (0, 0), **const),
            pl.BlockSpec((1, ncls_pad), lambda i: (0, 0), **const),
        ],
        out_specs=pl.BlockSpec((1, b_blk, ncls_pad), lambda i: (i, 0, 0)),
        scratch_shapes=[pltpu.VMEM((b_blk, hp * wp, cmid), jnp.bfloat16)],
        compiler_params=pltpu.CompilerParams(
            dimension_semantics=("parallel",),
            vmem_limit_bytes=48 << 20),
    )(x3, pmatT, w0, s0, b0, w1, s1, b1, fcw, fcb)
    return out.reshape(n_pad, ncls_pad)[:n, :ncls]


def reference_forward(x, p):
    """Pure-JAX f32 reference reproducing the PyTorch forward (NCHW)."""
    y = lax.reduce_window(x, 0.0, lax.add,
                          (1, 1, POOL_K, POOL_K), (1, 1, POOL_S, POOL_S), "VALID")
    y = y / float(POOL_K * POOL_K)

    def conv_norm_act(y, w, g, b, m, v):
        y = lax.conv_general_dilated(y, w, (1, 1), "VALID",
                                     dimension_numbers=("NCHW", "OIHW", "NCHW"))
        sc = g / jnp.sqrt(v + BN_EPS)
        y = y * sc[None, :, None, None] + (b - m * sc)[None, :, None, None]
        return jnp.maximum(y, 0.0)

    y = conv_norm_act(y, p["w0"], p["g0"], p["b0"], p["m0"], p["v0"])
    y = conv_norm_act(y, p["w1"], p["g1"], p["b1"], p["m1"], p["v1"])
    y = jnp.mean(y, axis=(2, 3))
    return y @ p["fc_w"].T + p["fc_b"]


if __name__ == "__main__":
    key = jax.random.PRNGKey(0)
    keys = jax.random.split(key, 13)

    # 17x17 is the canonical Inception-v3 aux geometry (pool 5/3 -> 5x5 map, so the
    # 5x5 valid conv1 is possible); 16 would make it impossible.
    N, CIN, H, W = 2, 4, 17, 17
    NUM_CLASSES = 10
    CMID, COUT = 128, 768

    x = jax.random.normal(keys[0], (N, CIN, H, W), jnp.float32)
    params = {
        "w0": 0.5 * jax.random.normal(keys[1], (CMID, CIN, 1, 1), jnp.float32),
        "g0": 1.0 + 0.1 * jax.random.normal(keys[2], (CMID,), jnp.float32),
        "b0": 0.1 * jax.random.normal(keys[3], (CMID,), jnp.float32),
        "m0": 0.1 * jax.random.normal(keys[4], (CMID,), jnp.float32),
        "v0": jax.random.uniform(keys[5], (CMID,), jnp.float32, 0.5, 1.5),
        "w1": 0.05 * jax.random.normal(keys[6], (COUT, CMID, CONV1_K, CONV1_K), jnp.float32),
        "g1": 1.0 + 0.1 * jax.random.normal(keys[7], (COUT,), jnp.float32),
        "b1": 0.1 * jax.random.normal(keys[8], (COUT,), jnp.float32),
        "m1": 0.1 * jax.random.normal(keys[9], (COUT,), jnp.float32),
        "v1": jax.random.uniform(keys[10], (COUT,), jnp.float32, 0.5, 1.5),
        "fc_w": 0.1 * jax.random.normal(keys[11], (NUM_CLASSES, COUT), jnp.float32),
        "fc_b": 0.1 * jax.random.normal(keys[12], (NUM_CLASSES,), jnp.float32),
    }

    out = jax.jit(inception_aux_forward)(x, params)
    out = jax.block_until_ready(out)

    ref = reference_forward(x, params)
    assert out.shape == (N, NUM_CLASSES)
    # bf16 matmul operands (f32 accumulation) vs an all-f32 reference.
    assert jnp.allclose(out, ref, rtol=3e-2, atol=3e-2), (
        f"max abs err = {jnp.max(jnp.abs(out - ref))}")
    print("KERNEL_OK")
</pallas_src>

<mosaic_0001>
module attributes {stable_mosaic.version = 11 : i64} {
  func.func @_aux_fused_kernel(%arg0: i32, %arg1: memref<1x4x289xf32, #tpu.memory_space<vmem>>, %arg2: memref<289x25xbf16, #tpu.memory_space<vmem>>, %arg3: memref<128x4xbf16, #tpu.memory_space<vmem>>, %arg4: memref<1x128xf32, #tpu.memory_space<vmem>>, %arg5: memref<1x128xf32, #tpu.memory_space<vmem>>, %arg6: memref<25x128x768xbf16, #tpu.memory_space<vmem>>, %arg7: memref<1x768xf32, #tpu.memory_space<vmem>>, %arg8: memref<1x768xf32, #tpu.memory_space<vmem>>, %arg9: memref<768x128xbf16, #tpu.memory_space<vmem>>, %arg10: memref<1x128xf32, #tpu.memory_space<vmem>>, %arg11: memref<1x1x128xf32, #tpu.memory_space<vmem>>, %arg12: memref<1x25x128xbf16, #tpu.memory_space<vmem>>) attributes {dimension_semantics = [#tpu.dimension_semantics<parallel>], iteration_bounds = array<i64: 2>, scalar_prefetch = 0 : i64, scratch_operands = 1 : i64, tpu.core_type = #tpu.core_type<tc>, window_params = [{transform_indices = @transform_0, window_bounds = array<i64: 1, 4, 289>}, {pipeline_mode = #tpu.pipeline_mode<synchronous>, transform_indices = @transform_1, window_bounds = array<i64: 289, 25>}, {pipeline_mode = #tpu.pipeline_mode<synchronous>, transform_indices = @transform_2, window_bounds = array<i64: 128, 4>}, {pipeline_mode = #tpu.pipeline_mode<synchronous>, transform_indices = @transform_3, window_bounds = array<i64: 1, 128>}, {pipeline_mode = #tpu.pipeline_mode<synchronous>, transform_indices = @transform_4, window_bounds = array<i64: 1, 128>}, {pipeline_mode = #tpu.pipeline_mode<synchronous>, transform_indices = @transform_5, window_bounds = array<i64: 25, 128, 768>}, {pipeline_mode = #tpu.pipeline_mode<synchronous>, transform_indices = @transform_6, window_bounds = array<i64: 1, 768>}, {pipeline_mode = #tpu.pipeline_mode<synchronous>, transform_indices = @transform_7, window_bounds = array<i64: 1, 768>}, {pipeline_mode = #tpu.pipeline_mode<synchronous>, transform_indices = @transform_8, window_bounds = array<i64: 768, 128>}, {pipeline_mode = #tpu.pipeline_mode<synchronous>, transform_indices = @transform_9, window_bounds = array<i64: 1, 128>}, {transform_indices = @transform_10, window_bounds = array<i64: 1, 1, 128>}]} {
    %c0 = arith.constant 0 : index
    %c0_0 = arith.constant 0 : index
    %c0_1 = arith.constant 0 : index
    %0 = vector.load %arg1[%c0, %c0_0, %c0_1] : memref<1x4x289xf32, #tpu.memory_space<vmem>>, vector<1x4x289xf32>
    %1 = vector.shape_cast %0 : vector<1x4x289xf32> to vector<4x289xf32>
    %2 = arith.truncf %1 : vector<4x289xf32> to vector<4x289xbf16>
    %c0_2 = arith.constant 0 : index
    %c0_3 = arith.constant 0 : index
    %3 = vector.load %arg2[%c0_2, %c0_3] : memref<289x25xbf16, #tpu.memory_space<vmem>>, vector<289x25xbf16>
    %cst = arith.constant dense<0.000000e+00> : vector<4x25xf32>
    %4 = tpu.matmul %2, %3, %cst {dimension_numbers = #tpu.dot_dimension_numbers<[1], [0], [0], [1], [0, 0, 1, 1], [], []>} : vector<4x289xbf16>, vector<289x25xbf16>, vector<4x25xf32> -> vector<4x25xf32>
    %5 = arith.truncf %4 : vector<4x25xf32> to vector<4x25xbf16>
    %c0_4 = arith.constant 0 : index
    %c0_5 = arith.constant 0 : index
    %6 = vector.load %arg3[%c0_4, %c0_5] : memref<128x4xbf16, #tpu.memory_space<vmem>>, vector<128x4xbf16>
    %cst_6 = arith.constant dense<0.000000e+00> : vector<25x128xf32>
    %7 = tpu.matmul %5, %6, %cst_6 {dimension_numbers = #tpu.dot_dimension_numbers<[0], [1], [1], [0], [0, 1, 1, 0], [], []>} : vector<4x25xbf16>, vector<128x4xbf16>, vector<25x128xf32> -> vector<25x128xf32>
    %c0_7 = arith.constant 0 : index
    %c0_8 = arith.constant 0 : index
    %8 = vector.load %arg4[%c0_7, %c0_8] : memref<1x128xf32, #tpu.memory_space<vmem>>, vector<1x128xf32>
    %9 = vector.broadcast %8 : vector<1x128xf32> to vector<25x128xf32>
    %10 = arith.mulf %7, %9 : vector<25x128xf32>
    %c0_9 = arith.constant 0 : index
    %c0_10 = arith.constant 0 : index
    %11 = vector.load %arg5[%c0_9, %c0_10] : memref<1x128xf32, #tpu.memory_space<vmem>>, vector<1x128xf32>
    %12 = vector.broadcast %11 : vector<1x128xf32> to vector<25x128xf32>
    %13 = arith.addf %10, %12 : vector<25x128xf32>
    %cst_11 = arith.constant 0.000000e+00 : f32
    %14 = vector.broadcast %cst_11 : f32 to vector<25x128xf32>
    %15 = arith.maximumf %13, %14 : vector<25x128xf32>
    %16 = arith.truncf %15 : vector<25x128xf32> to vector<25x128xbf16>
    %c0_12 = arith.constant 0 : index
    %c0_13 = arith.constant 0 : index
    %c0_14 = arith.constant 0 : index
    %17 = vector.load %arg12[%c0_12, %c0_13, %c0_14] : memref<1x25x128xbf16, #tpu.memory_space<vmem>>, vector<1x25x128xbf16>
    %18 = vector.shape_cast %17 : vector<1x25x128xbf16> to vector<25x128xbf16>
    %19 = vector.shape_cast %16 : vector<25x128xbf16> to vector<1x25x128xbf16>
    tpu.vector_store %arg12[%c0_12, %c0_13, %c0_14], %19 {strides = array<i32>} : memref<1x25x128xbf16, #tpu.memory_space<vmem>>, vector<1x25x128xbf16>,
    %cst_15 = arith.constant 0.000000e+00 : f32
    %20 = vector.broadcast %cst_15 : f32 to vector<1x768xf32>
    %c0_16 = arith.constant 0 : index
    %c0_17 = arith.constant 0 : index
    %c0_18 = arith.constant 0 : index
    %21 = vector.load %arg6[%c0_16, %c0_17, %c0_18] : memref<25x128x768xbf16, #tpu.memory_space<vmem>>, vector<1x128x768xbf16>
    %22 = vector.shape_cast %21 : vector<1x128x768xbf16> to vector<128x768xbf16>
    %c0_19 = arith.constant 0 : index
    %c0_20 = arith.constant 0 : index
    %c0_21 = arith.constant 0 : index
    %23 = vector.load %arg12[%c0_19, %c0_20, %c0_21] : memref<1x25x128xbf16, #tpu.memory_space<vmem>>, vector<1x1x128xbf16>
    %24 = vector.shape_cast %23 : vector<1x1x128xbf16> to vector<1x128xbf16>
    %cst_22 = arith.constant dense<0.000000e+00> : vector<1x768xf32>
    %25 = tpu.matmul %24, %22, %cst_22 {dimension_numbers = #tpu.dot_dimension_numbers<[1], [0], [0], [1], [0, 0, 1, 1], [], []>} : vector<1x128xbf16>, vector<128x768xbf16>, vector<1x768xf32> -> vector<1x768xf32>
    %26 = arith.addf %20, %25 : vector<1x768xf32>
    %c1 = arith.constant 1 : index
    %c0_23 = arith.constant 0 : index
    %c0_24 = arith.constant 0 : index
    %27 = vector.load %arg6[%c1, %c0_23, %c0_24] : memref<25x128x768xbf16, #tpu.memory_space<vmem>>, vector<1x128x768xbf16>
    %28 = vector.shape_cast %27 : vector<1x128x768xbf16> to vector<128x768xbf16>
    %c0_25 = arith.constant 0 : index
    %c1_26 = arith.constant 1 : index
    %c0_27 = arith.constant 0 : index
    %29 = vector.load %arg12[%c0_25, %c1_26, %c0_27] : memref<1x25x128xbf16, #tpu.memory_space<vmem>>, vector<1x1x128xbf16>
    %30 = vector.shape_cast %29 : vector<1x1x128xbf16> to vector<1x128xbf16>
    %cst_28 = arith.constant dense<0.000000e+00> : vector<1x768xf32>
    %31 = tpu.matmul %30, %28, %cst_28 {dimension_numbers = #tpu.dot_dimension_numbers<[1], [0], [0], [1], [0, 0, 1, 1], [], []>} : vector<1x128xbf16>, vector<128x768xbf16>, vector<1x768xf32> -> vector<1x768xf32>
    %32 = arith.addf %26, %31 : vector<1x768xf32>
    %c2 = arith.constant 2 : index
    %c0_29 = arith.constant 0 : index
    %c0_30 = arith.constant 0 : index
    %33 = vector.load %arg6[%c2, %c0_29, %c0_30] : memref<25x128x768xbf16, #tpu.memory_space<vmem>>, vector<1x128x768xbf16>
    %34 = vector.shape_cast %33 : vector<1x128x768xbf16> to vector<128x768xbf16>
    %c0_31 = arith.constant 0 : index
    %c2_32 = arith.constant 2 : index
    %c0_33 = arith.constant 0 : index
    %35 = vector.load %arg12[%c0_31, %c2_32, %c0_33] : memref<1x25x128xbf16, #tpu.memory_space<vmem>>, vector<1x1x128xbf16>
    %36 = vector.shape_cast %35 : vector<1x1x128xbf16> to vector<1x128xbf16>
    %cst_34 = arith.constant dense<0.000000e+00> : vector<1x768xf32>
    %37 = tpu.matmul %36, %34, %cst_34 {dimension_numbers = #tpu.dot_dimension_numbers<[1], [0], [0], [1], [0, 0, 1, 1], [], []>} : vector<1x128xbf16>, vector<128x768xbf16>, vector<1x768xf32> -> vector<1x768xf32>
    %38 = arith.addf %32, %37 : vector<1x768xf32>
    %c3 = arith.constant 3 : index
    %c0_35 = arith.constant 0 : index
    %c0_36 = arith.constant 0 : index
    %39 = vector.load %arg6[%c3, %c0_35, %c0_36] : memref<25x128x768xbf16, #tpu.memory_space<vmem>>, vector<1x128x768xbf16>
    %40 = vector.shape_cast %39 : vector<1x128x768xbf16> to vector<128x768xbf16>
    %c0_37 = arith.constant 0 : index
    %c3_38 = arith.constant 3 : index
    %c0_39 = arith.constant 0 : index
    %41 = vector.load %arg12[%c0_37, %c3_38, %c0_39] : memref<1x25x128xbf16, #tpu.memory_space<vmem>>, vector<1x1x128xbf16>
    %42 = vector.shape_cast %41 : vector<1x1x128xbf16> to vector<1x128xbf16>
    %cst_40 = arith.constant dense<0.000000e+00> : vector<1x768xf32>
    %43 = tpu.matmul %42, %40, %cst_40 {dimension_numbers = #tpu.dot_dimension_numbers<[1], [0], [0], [1], [0, 0, 1, 1], [], []>} : vector<1x128xbf16>, vector<128x768xbf16>, vector<1x768xf32> -> vector<1x768xf32>
    %44 = arith.addf %38, %43 : vector<1x768xf32>
    %c4 = arith.constant 4 : index
    %c0_41 = arith.constant 0 : index
    %c0_42 = arith.constant 0 : index
    %45 = vector.load %arg6[%c4, %c0_41, %c0_42] : memref<25x128x768xbf16, #tpu.memory_space<vmem>>, vector<1x128x768xbf16>
    %46 = vector.shape_cast %45 : vector<1x128x768xbf16> to vector<128x768xbf16>
    %c0_43 = arith.constant 0 : index
    %c4_44 = arith.constant 4 : index
    %c0_45 = arith.constant 0 : index
    %47 = vector.load %arg12[%c0_43, %c4_44, %c0_45] : memref<1x25x128xbf16, #tpu.memory_space<vmem>>, vector<1x1x128xbf16>
    %48 = vector.shape_cast %47 : vector<1x1x128xbf16> to vector<1x128xbf16>
    %cst_46 = arith.constant dense<0.000000e+00> : vector<1x768xf32>
    %49 = tpu.matmul %48, %46, %cst_46 {dimension_numbers = #tpu.dot_dimension_numbers<[1], [0], [0], [1], [0, 0, 1, 1], [], []>} : vector<1x128xbf16>, vector<128x768xbf16>, vector<1x768xf32> -> vector<1x768xf32>
    %50 = arith.addf %44, %49 : vector<1x768xf32>
    %c5 = arith.constant 5 : index
    %c0_47 = arith.constant 0 : index
    %c0_48 = arith.constant 0 : index
    %51 = vector.load %arg6[%c5, %c0_47, %c0_48] : memref<25x128x768xbf16, #tpu.memory_space<vmem>>, vector<1x128x768xbf16>
    %52 = vector.shape_cast %51 : vector<1x128x768xbf16> to vector<128x768xbf16>
    %c0_49 = arith.constant 0 : index
    %c5_50 = arith.constant 5 : index
    %c0_51 = arith.constant 0 : index
    %53 = vector.load %arg12[%c0_49, %c5_50, %c0_51] : memref<1x25x128xbf16, #tpu.memory_space<vmem>>, vector<1x1x128xbf16>
    %54 = vector.shape_cast %53 : vector<1x1x128xbf16> to vector<1x128xbf16>
    %cst_52 = arith.constant dense<0.000000e+00> : vector<1x768xf32>
    %55 = tpu.matmul %54, %52, %cst_52 {dimension_numbers = #tpu.dot_dimension_numbers<[1], [0], [0], [1], [0, 0, 1, 1], [], []>} : vector<1x128xbf16>, vector<128x768xbf16>, vector<1x768xf32> -> vector<1x768xf32>
    %56 = arith.addf %50, %55 : vector<1x768xf32>
    %c6 = arith.constant 6 : index
    %c0_53 = arith.constant 0 : index
    %c0_54 = arith.constant 0 : index
    %57 = vector.load %arg6[%c6, %c0_53, %c0_54] : memref<25x128x768xbf16, #tpu.memory_space<vmem>>, vector<1x128x768xbf16>
    %58 = vector.shape_cast %57 : vector<1x128x768xbf16> to vector<128x768xbf16>
    %c0_55 = arith.constant 0 : index
    %c6_56 = arith.constant 6 : index
    %c0_57 = arith.constant 0 : index
    %59 = vector.load %arg12[%c0_55, %c6_56, %c0_57] : memref<1x25x128xbf16, #tpu.memory_space<vmem>>, vector<1x1x128xbf16>
    %60 = vector.shape_cast %59 : vector<1x1x128xbf16> to vector<1x128xbf16>
    %cst_58 = arith.constant dense<0.000000e+00> : vector<1x768xf32>
    %61 = tpu.matmul %60, %58, %cst_58 {dimension_numbers = #tpu.dot_dimension_numbers<[1], [0], [0], [1], [0, 0, 1, 1], [], []>} : vector<1x128xbf16>, vector<128x768xbf16>, vector<1x768xf32> -> vector<1x768xf32>
    %62 = arith.addf %56, %61 : vector<1x768xf32>
    %c7 = arith.constant 7 : index
    %c0_59 = arith.constant 0 : index
    %c0_60 = arith.constant 0 : index
    %63 = vector.load %arg6[%c7, %c0_59, %c0_60] : memref<25x128x768xbf16, #tpu.memory_space<vmem>>, vector<1x128x768xbf16>
    %64 = vector.shape_cast %63 : vector<1x128x768xbf16> to vector<128x768xbf16>
    %c0_61 = arith.constant 0 : index
    %c7_62 = arith.constant 7 : index
    %c0_63 = arith.constant 0 : index
    %65 = vector.load %arg12[%c0_61, %c7_62, %c0_63] : memref<1x25x128xbf16, #tpu.memory_space<vmem>>, vector<1x1x128xbf16>
    %66 = vector.shape_cast %65 : vector<1x1x128xbf16> to vector<1x128xbf16>
    %cst_64 = arith.constant dense<0.000000e+00> : vector<1x768xf32>
    %67 = tpu.matmul %66, %64, %cst_64 {dimension_numbers = #tpu.dot_dimension_numbers<[1], [0], [0], [1], [0, 0, 1, 1], [], []>} : vector<1x128xbf16>, vector<128x768xbf16>, vector<1x768xf32> -> vector<1x768xf32>
    %68 = arith.addf %62, %67 : vector<1x768xf32>
    %c8 = arith.constant 8 : index
    %c0_65 = arith.constant 0 : index
    %c0_66 = arith.constant 0 : index
    %69 = vector.load %arg6[%c8, %c0_65, %c0_66] : memref<25x128x768xbf16, #tpu.memory_space<vmem>>, vector<1x128x768xbf16>
    %70 = vector.shape_cast %69 : vector<1x128x768xbf16> to vector<128x768xbf16>
    %c0_67 = arith.constant 0 : index
    %c8_68 = arith.constant 8 : index
    %c0_69 = arith.constant 0 : index
    %71 = vector.load %arg12[%c0_67, %c8_68, %c0_69] : memref<1x25x128xbf16, #tpu.memory_space<vmem>>, vector<1x1x128xbf16>
    %72 = vector.shape_cast %71 : vector<1x1x128xbf16> to vector<1x128xbf16>
    %cst_70 = arith.constant dense<0.000000e+00> : vector<1x768xf32>
    %73 = tpu.matmul %72, %70, %cst_70 {dimension_numbers = #tpu.dot_dimension_numbers<[1], [0], [0], [1], [0, 0, 1, 1], [], []>} : vector<1x128xbf16>, vector<128x768xbf16>, vector<1x768xf32> -> vector<1x768xf32>
    %74 = arith.addf %68, %73 : vector<1x768xf32>
    %c9 = arith.constant 9 : index
    %c0_71 = arith.constant 0 : index
    %c0_72 = arith.constant 0 : index
    %75 = vector.load %arg6[%c9, %c0_71, %c0_72] : memref<25x128x768xbf16, #tpu.memory_space<vmem>>, vector<1x128x768xbf16>
    %76 = vector.shape_cast %75 : vector<1x128x768xbf16> to vector<128x768xbf16>
    %c0_73 = arith.constant 0 : index
    %c9_74 = arith.constant 9 : index
    %c0_75 = arith.constant 0 : index
    %77 = vector.load %arg12[%c0_73, %c9_74, %c0_75] : memref<1x25x128xbf16, #tpu.memory_space<vmem>>, vector<1x1x128xbf16>
    %78 = vector.shape_cast %77 : vector<1x1x128xbf16> to vector<1x128xbf16>
    %cst_76 = arith.constant dense<0.000000e+00> : vector<1x768xf32>
    %79 = tpu.matmul %78, %76, %cst_76 {dimension_numbers = #tpu.dot_dimension_numbers<[1], [0], [0], [1], [0, 0, 1, 1], [], []>} : vector<1x128xbf16>, vector<128x768xbf16>, vector<1x768xf32> -> vector<1x768xf32>
    %80 = arith.addf %74, %79 : vector<1x768xf32>
    %c10 = arith.constant 10 : index
    %c0_77 = arith.constant 0 : index
    %c0_78 = arith.constant 0 : index
    %81 = vector.load %arg6[%c10, %c0_77, %c0_78] : memref<25x128x768xbf16, #tpu.memory_space<vmem>>, vector<1x128x768xbf16>
    %82 = vector.shape_cast %81 : vector<1x128x768xbf16> to vector<128x768xbf16>
    %c0_79 = arith.constant 0 : index
    %c10_80 = arith.constant 10 : index
    %c0_81 = arith.constant 0 : index
    %83 = vector.load %arg12[%c0_79, %c10_80, %c0_81] : memref<1x25x128xbf16, #tpu.memory_space<vmem>>, vector<1x1x128xbf16>
    %84 = vector.shape_cast %83 : vector<1x1x128xbf16> to vector<1x128xbf16>
    %cst_82 = arith.constant dense<0.000000e+00> : vector<1x768xf32>
    %85 = tpu.matmul %84, %82, %cst_82 {dimension_numbers = #tpu.dot_dimension_numbers<[1], [0], [0], [1], [0, 0, 1, 1], [], []>} : vector<1x128xbf16>, vector<128x768xbf16>, vector<1x768xf32> -> vector<1x768xf32>
    %86 = arith.addf %80, %85 : vector<1x768xf32>
    %c11 = arith.constant 11 : index
    %c0_83 = arith.constant 0 : index
    %c0_84 = arith.constant 0 : index
    %87 = vector.load %arg6[%c11, %c0_83, %c0_84] : memref<25x128x768xbf16, #tpu.memory_space<vmem>>, vector<1x128x768xbf16>
    %88 = vector.shape_cast %87 : vector<1x128x768xbf16> to vector<128x768xbf16>
    %c0_85 = arith.constant 0 : index
    %c11_86 = arith.constant 11 : index
    %c0_87 = arith.constant 0 : index
    %89 = vector.load %arg12[%c0_85, %c11_86, %c0_87] : memref<1x25x128xbf16, #tpu.memory_space<vmem>>, vector<1x1x128xbf16>
    %90 = vector.shape_cast %89 : vector<1x1x128xbf16> to vector<1x128xbf16>
    %cst_88 = arith.constant dense<0.000000e+00> : vector<1x768xf32>
    %91 = tpu.matmul %90, %88, %cst_88 {dimension_numbers = #tpu.dot_dimension_numbers<[1], [0], [0], [1], [0, 0, 1, 1], [], []>} : vector<1x128xbf16>, vector<128x768xbf16>, vector<1x768xf32> -> vector<1x768xf32>
    %92 = arith.addf %86, %91 : vector<1x768xf32>
    %c12 = arith.constant 12 : index
    %c0_89 = arith.constant 0 : index
    %c0_90 = arith.constant 0 : index
    %93 = vector.load %arg6[%c12, %c0_89, %c0_90] : memref<25x128x768xbf16, #tpu.memory_space<vmem>>, vector<1x128x768xbf16>
    %94 = vector.shape_cast %93 : vector<1x128x768xbf16> to vector<128x768xbf16>
    %c0_91 = arith.constant 0 : index
    %c12_92 = arith.constant 12 : index
    %c0_93 = arith.constant 0 : index
    %95 = vector.load %arg12[%c0_91, %c12_92, %c0_93] : memref<1x25x128xbf16, #tpu.memory_space<vmem>>, vector<1x1x128xbf16>
    %96 = vector.shape_cast %95 : vector<1x1x128xbf16> to vector<1x128xbf16>
    %cst_94 = arith.constant dense<0.000000e+00> : vector<1x768xf32>
    %97 = tpu.matmul %96, %94, %cst_94 {dimension_numbers = #tpu.dot_dimension_numbers<[1], [0], [0], [1], [0, 0, 1, 1], [], []>} : vector<1x128xbf16>, vector<128x768xbf16>, vector<1x768xf32> -> vector<1x768xf32>
    %98 = arith.addf %92, %97 : vector<1x768xf32>
    %c13 = arith.constant 13 : index
    %c0_95 = arith.constant 0 : index
    %c0_96 = arith.constant 0 : index
    %99 = vector.load %arg6[%c13, %c0_95, %c0_96] : memref<25x128x768xbf16, #tpu.memory_space<vmem>>, vector<1x128x768xbf16>
    %100 = vector.shape_cast %99 : vector<1x128x768xbf16> to vector<128x768xbf16>
    %c0_97 = arith.constant 0 : index
    %c13_98 = arith.constant 13 : index
    %c0_99 = arith.constant 0 : index
    %101 = vector.load %arg12[%c0_97, %c13_98, %c0_99] : memref<1x25x128xbf16, #tpu.memory_space<vmem>>, vector<1x1x128xbf16>
    %102 = vector.shape_cast %101 : vector<1x1x128xbf16> to vector<1x128xbf16>
    %cst_100 = arith.constant dense<0.000000e+00> : vector<1x768xf32>
    %103 = tpu.matmul %102, %100, %cst_100 {dimension_numbers = #tpu.dot_dimension_numbers<[1], [0], [0], [1], [0, 0, 1, 1], [], []>} : vector<1x128xbf16>, vector<128x768xbf16>, vector<1x768xf32> -> vector<1x768xf32>
    %104 = arith.addf %98, %103 : vector<1x768xf32>
    %c14 = arith.constant 14 : index
    %c0_101 = arith.constant 0 : index
    %c0_102 = arith.constant 0 : index
    %105 = vector.load %arg6[%c14, %c0_101, %c0_102] : memref<25x128x768xbf16, #tpu.memory_space<vmem>>, vector<1x128x768xbf16>
    %106 = vector.shape_cast %105 : vector<1x128x768xbf16> to vector<128x768xbf16>
    %c0_103 = arith.constant 0 : index
    %c14_104 = arith.constant 14 : index
    %c0_105 = arith.constant 0 : index
    %107 = vector.load %arg12[%c0_103, %c14_104, %c0_105] : memref<1x25x128xbf16, #tpu.memory_space<vmem>>, vector<1x1x128xbf16>
    %108 = vector.shape_cast %107 : vector<1x1x128xbf16> to vector<1x128xbf16>
    %cst_106 = arith.constant dense<0.000000e+00> : vector<1x768xf32>
    %109 = tpu.matmul %108, %106, %cst_106 {dimension_numbers = #tpu.dot_dimension_numbers<[1], [0], [0], [1], [0, 0, 1, 1], [], []>} : vector<1x128xbf16>, vector<128x768xbf16>, vector<1x768xf32> -> vector<1x768xf32>
    %110 = arith.addf %104, %109 : vector<1x768xf32>
    %c15 = arith.constant 15 : index
    %c0_107 = arith.constant 0 : index
    %c0_108 = arith.constant 0 : index
    %111 = vector.load %arg6[%c15, %c0_107, %c0_108] : memref<25x128x768xbf16, #tpu.memory_space<vmem>>, vector<1x128x768xbf16>
    %112 = vector.shape_cast %111 : vector<1x128x768xbf16> to vector<128x768xbf16>
    %c0_109 = arith.constant 0 : index
    %c15_110 = arith.constant 15 : index
    %c0_111 = arith.constant 0 : index
    %113 = vector.load %arg12[%c0_109, %c15_110, %c0_111] : memref<1x25x128xbf16, #tpu.memory_space<vmem>>, vector<1x1x128xbf16>
    %114 = vector.shape_cast %113 : vector<1x1x128xbf16> to vector<1x128xbf16>
    %cst_112 = arith.constant dense<0.000000e+00> : vector<1x768xf32>
    %115 = tpu.matmul %114, %112, %cst_112 {dimension_numbers = #tpu.dot_dimension_numbers<[1], [0], [0], [1], [0, 0, 1, 1], [], []>} : vector<1x128xbf16>, vector<128x768xbf16>, vector<1x768xf32> -> vector<1x768xf32>
    %116 = arith.addf %110, %115 : vector<1x768xf32>
    %c16 = arith.constant 16 : index
    %c0_113 = arith.constant 0 : index
    %c0_114 = arith.constant 0 : index
    %117 = vector.load %arg6[%c16, %c0_113, %c0_114] : memref<25x128x768xbf16, #tpu.memory_space<vmem>>, vector<1x128x768xbf16>
    %118 = vector.shape_cast %117 : vector<1x128x768xbf16> to vector<128x768xbf16>
    %c0_115 = arith.constant 0 : index
    %c16_116 = arith.constant 16 : index
    %c0_117 = arith.constant 0 : index
    %119 = vector.load %arg12[%c0_115, %c16_116, %c0_117] : memref<1x25x128xbf16, #tpu.memory_space<vmem>>, vector<1x1x128xbf16>
    %120 = vector.shape_cast %119 : vector<1x1x128xbf16> to vector<1x128xbf16>
    %cst_118 = arith.constant dense<0.000000e+00> : vector<1x768xf32>
    %121 = tpu.matmul %120, %118, %cst_118 {dimension_numbers = #tpu.dot_dimension_numbers<[1], [0], [0], [1], [0, 0, 1, 1], [], []>} : vector<1x128xbf16>, vector<128x768xbf16>, vector<1x768xf32> -> vector<1x768xf32>
    %122 = arith.addf %116, %121 : vector<1x768xf32>
    %c17 = arith.constant 17 : index
    %c0_119 = arith.constant 0 : index
    %c0_120 = arith.constant 0 : index
    %123 = vector.load %arg6[%c17, %c0_119, %c0_120] : memref<25x128x768xbf16, #tpu.memory_space<vmem>>, vector<1x128x768xbf16>
    %124 = vector.shape_cast %123 : vector<1x128x768xbf16> to vector<128x768xbf16>
    %c0_121 = arith.constant 0 : index
    %c17_122 = arith.constant 17 : index
    %c0_123 = arith.constant 0 : index
    %125 = vector.load %arg12[%c0_121, %c17_122, %c0_123] : memref<1x25x128xbf16, #tpu.memory_space<vmem>>, vector<1x1x128xbf16>
    %126 = vector.shape_cast %125 : vector<1x1x128xbf16> to vector<1x128xbf16>
    %cst_124 = arith.constant dense<0.000000e+00> : vector<1x768xf32>
    %127 = tpu.matmul %126, %124, %cst_124 {dimension_numbers = #tpu.dot_dimension_numbers<[1], [0], [0], [1], [0, 0, 1, 1], [], []>} : vector<1x128xbf16>, vector<128x768xbf16>, vector<1x768xf32> -> vector<1x768xf32>
    %128 = arith.addf %122, %127 : vector<1x768xf32>
    %c18 = arith.constant 18 : index
    %c0_125 = arith.constant 0 : index
    %c0_126 = arith.constant 0 : index
    %129 = vector.load %arg6[%c18, %c0_125, %c0_126] : memref<25x128x768xbf16, #tpu.memory_space<vmem>>, vector<1x128x768xbf16>
    %130 = vector.shape_cast %129 : vector<1x128x768xbf16> to vector<128x768xbf16>
    %c0_127 = arith.constant 0 : index
    %c18_128 = arith.constant 18 : index
    %c0_129 = arith.constant 0 : index
    %131 = vector.load %arg12[%c0_127, %c18_128, %c0_129] : memref<1x25x128xbf16, #tpu.memory_space<vmem>>, vector<1x1x128xbf16>
    %132 = vector.shape_cast %131 : vector<1x1x128xbf16> to vector<1x128xbf16>
    %cst_130 = arith.constant dense<0.000000e+00> : vector<1x768xf32>
    %133 = tpu.matmul %132, %130, %cst_130 {dimension_numbers = #tpu.dot_dimension_numbers<[1], [0], [0], [1], [0, 0, 1, 1], [], []>} : vector<1x128xbf16>, vector<128x768xbf16>, vector<1x768xf32> -> vector<1x768xf32>
    %134 = arith.addf %128, %133 : vector<1x768xf32>
    %c19 = arith.constant 19 : index
    %c0_131 = arith.constant 0 : index
    %c0_132 = arith.constant 0 : index
    %135 = vector.load %arg6[%c19, %c0_131, %c0_132] : memref<25x128x768xbf16, #tpu.memory_space<vmem>>, vector<1x128x768xbf16>
    %136 = vector.shape_cast %135 : vector<1x128x768xbf16> to vector<128x768xbf16>
    %c0_133 = arith.constant 0 : index
    %c19_134 = arith.constant 19 : index
    %c0_135 = arith.constant 0 : index
    %137 = vector.load %arg12[%c0_133, %c19_134, %c0_135] : memref<1x25x128xbf16, #tpu.memory_space<vmem>>, vector<1x1x128xbf16>
    %138 = vector.shape_cast %137 : vector<1x1x128xbf16> to vector<1x128xbf16>
    %cst_136 = arith.constant dense<0.000000e+00> : vector<1x768xf32>
    %139 = tpu.matmul %138, %136, %cst_136 {dimension_numbers = #tpu.dot_dimension_numbers<[1], [0], [0], [1], [0, 0, 1, 1], [], []>} : vector<1x128xbf16>, vector<128x768xbf16>, vector<1x768xf32> -> vector<1x768xf32>
    %140 = arith.addf %134, %139 : vector<1x768xf32>
    %c20 = arith.constant 20 : index
    %c0_137 = arith.constant 0 : index
    %c0_138 = arith.constant 0 : index
    %141 = vector.load %arg6[%c20, %c0_137, %c0_138] : memref<25x128x768xbf16, #tpu.memory_space<vmem>>, vector<1x128x768xbf16>
    %142 = vector.shape_cast %141 : vector<1x128x768xbf16> to vector<128x768xbf16>
    %c0_139 = arith.constant 0 : index
    %c20_140 = arith.constant 20 : index
    %c0_141 = arith.constant 0 : index
    %143 = vector.load %arg12[%c0_139, %c20_140, %c0_141] : memref<1x25x128xbf16, #tpu.memory_space<vmem>>, vector<1x1x128xbf16>
    %144 = vector.shape_cast %143 : vector<1x1x128xbf16> to vector<1x128xbf16>
    %cst_142 = arith.constant dense<0.000000e+00> : vector<1x768xf32>
    %145 = tpu.matmul %144, %142, %cst_142 {dimension_numbers = #tpu.dot_dimension_numbers<[1], [0], [0], [1], [0, 0, 1, 1], [], []>} : vector<1x128xbf16>, vector<128x768xbf16>, vector<1x768xf32> -> vector<1x768xf32>
    %146 = arith.addf %140, %145 : vector<1x768xf32>
    %c21 = arith.constant 21 : index
    %c0_143 = arith.constant 0 : index
    %c0_144 = arith.constant 0 : index
    %147 = vector.load %arg6[%c21, %c0_143, %c0_144] : memref<25x128x768xbf16, #tpu.memory_space<vmem>>, vector<1x128x768xbf16>
    %148 = vector.shape_cast %147 : vector<1x128x768xbf16> to vector<128x768xbf16>
    %c0_145 = arith.constant 0 : index
    %c21_146 = arith.constant 21 : index
    %c0_147 = arith.constant 0 : index
    %149 = vector.load %arg12[%c0_145, %c21_146, %c0_147] : memref<1x25x128xbf16, #tpu.memory_space<vmem>>, vector<1x1x128xbf16>
    %150 = vector.shape_cast %149 : vector<1x1x128xbf16> to vector<1x128xbf16>
    %cst_148 = arith.constant dense<0.000000e+00> : vector<1x768xf32>
    %151 = tpu.matmul %150, %148, %cst_148 {dimension_numbers = #tpu.dot_dimension_numbers<[1], [0], [0], [1], [0, 0, 1, 1], [], []>} : vector<1x128xbf16>, vector<128x768xbf16>, vector<1x768xf32> -> vector<1x768xf32>
    %152 = arith.addf %146, %151 : vector<1x768xf32>
    %c22 = arith.constant 22 : index
    %c0_149 = arith.constant 0 : index
    %c0_150 = arith.constant 0 : index
    %153 = vector.load %arg6[%c22, %c0_149, %c0_150] : memref<25x128x768xbf16, #tpu.memory_space<vmem>>, vector<1x128x768xbf16>
    %154 = vector.shape_cast %153 : vector<1x128x768xbf16> to vector<128x768xbf16>
    %c0_151 = arith.constant 0 : index
    %c22_152 = arith.constant 22 : index
    %c0_153 = arith.constant 0 : index
    %155 = vector.load %arg12[%c0_151, %c22_152, %c0_153] : memref<1x25x128xbf16, #tpu.memory_space<vmem>>, vector<1x1x128xbf16>
    %156 = vector.shape_cast %155 : vector<1x1x128xbf16> to vector<1x128xbf16>
    %cst_154 = arith.constant dense<0.000000e+00> : vector<1x768xf32>
    %157 = tpu.matmul %156, %154, %cst_154 {dimension_numbers = #tpu.dot_dimension_numbers<[1], [0], [0], [1], [0, 0, 1, 1], [], []>} : vector<1x128xbf16>, vector<128x768xbf16>, vector<1x768xf32> -> vector<1x768xf32>
    %158 = arith.addf %152, %157 : vector<1x768xf32>
    %c23 = arith.constant 23 : index
    %c0_155 = arith.constant 0 : index
    %c0_156 = arith.constant 0 : index
    %159 = vector.load %arg6[%c23, %c0_155, %c0_156] : memref<25x128x768xbf16, #tpu.memory_space<vmem>>, vector<1x128x768xbf16>
    %160 = vector.shape_cast %159 : vector<1x128x768xbf16> to vector<128x768xbf16>
    %c0_157 = arith.constant 0 : index
    %c23_158 = arith.constant 23 : index
    %c0_159 = arith.constant 0 : index
    %161 = vector.load %arg12[%c0_157, %c23_158, %c0_159] : memref<1x25x128xbf16, #tpu.memory_space<vmem>>, vector<1x1x128xbf16>
    %162 = vector.shape_cast %161 : vector<1x1x128xbf16> to vector<1x128xbf16>
    %cst_160 = arith.constant dense<0.000000e+00> : vector<1x768xf32>
    %163 = tpu.matmul %162, %160, %cst_160 {dimension_numbers = #tpu.dot_dimension_numbers<[1], [0], [0], [1], [0, 0, 1, 1], [], []>} : vector<1x128xbf16>, vector<128x768xbf16>, vector<1x768xf32> -> vector<1x768xf32>
    %164 = arith.addf %158, %163 : vector<1x768xf32>
    %c24 = arith.constant 24 : index
    %c0_161 = arith.constant 0 : index
    %c0_162 = arith.constant 0 : index
    %165 = vector.load %arg6[%c24, %c0_161, %c0_162] : memref<25x128x768xbf16, #tpu.memory_space<vmem>>, vector<1x128x768xbf16>
    %166 = vector.shape_cast %165 : vector<1x128x768xbf16> to vector<128x768xbf16>
    %c0_163 = arith.constant 0 : index
    %c24_164 = arith.constant 24 : index
    %c0_165 = arith.constant 0 : index
    %167 = vector.load %arg12[%c0_163, %c24_164, %c0_165] : memref<1x25x128xbf16, #tpu.memory_space<vmem>>, vector<1x1x128xbf16>
    %168 = vector.shape_cast %167 : vector<1x1x128xbf16> to vector<1x128xbf16>
    %cst_166 = arith.constant dense<0.000000e+00> : vector<1x768xf32>
    %169 = tpu.matmul %168, %166, %cst_166 {dimension_numbers = #tpu.dot_dimension_numbers<[1], [0], [0], [1], [0, 0, 1, 1], [], []>} : vector<1x128xbf16>, vector<128x768xbf16>, vector<1x768xf32> -> vector<1x768xf32>
    %170 = arith.addf %164, %169 : vector<1x768xf32>
    %c0_167 = arith.constant 0 : index
    %c0_168 = arith.constant 0 : index
    %171 = vector.load %arg7[%c0_167, %c0_168] : memref<1x768xf32, #tpu.memory_space<vmem>>, vector<1x768xf32>
    %172 = arith.mulf %170, %171 : vector<1x768xf32>
    %c0_169 = arith.constant 0 : index
    %c0_170 = arith.constant 0 : index
    %173 = vector.load %arg8[%c0_169, %c0_170] : memref<1x768xf32, #tpu.memory_space<vmem>>, vector<1x768xf32>
    %174 = arith.addf %172, %173 : vector<1x768xf32>
    %cst_171 = arith.constant 0.000000e+00 : f32
    %175 = vector.broadcast %cst_171 : f32 to vector<1x768xf32>
    %176 = arith.maximumf %174, %175 : vector<1x768xf32>
    %177 = arith.truncf %176 : vector<1x768xf32> to vector<1x768xbf16>
    %c0_172 = arith.constant 0 : index
    %c0_173 = arith.constant 0 : index
    %178 = vector.load %arg9[%c0_172, %c0_173] : memref<768x128xbf16, #tpu.memory_space<vmem>>, vector<768x128xbf16>
    %cst_174 = arith.constant dense<0.000000e+00> : vector<1x128xf32>
    %179 = tpu.matmul %177, %178, %cst_174 {dimension_numbers = #tpu.dot_dimension_numbers<[1], [0], [0], [1], [0, 0, 1, 1], [], []>} : vector<1x768xbf16>, vector<768x128xbf16>, vector<1x128xf32> -> vector<1x128xf32>
    %c0_175 = arith.constant 0 : index
    %c0_176 = arith.constant 0 : index
    %180 = vector.load %arg10[%c0_175, %c0_176] : memref<1x128xf32, #tpu.memory_space<vmem>>, vector<1x128xf32>
    %181 = arith.addf %179, %180 : vector<1x128xf32>
    %c0_177 = arith.constant 0 : index
    %c0_178 = arith.constant 0 : index
    %c0_179 = arith.constant 0 : index
    %182 = vector.load %arg11[%c0_177, %c0_178, %c0_179] : memref<1x1x128xf32, #tpu.memory_space<vmem>>, vector<1x1x128xf32>
    %183 = vector.shape_cast %182 : vector<1x1x128xf32> to vector<1x128xf32>
    %184 = vector.shape_cast %181 : vector<1x128xf32> to vector<1x1x128xf32>
    tpu.vector_store %arg11[%c0_177, %c0_178, %c0_179], %184 {strides = array<i32>} : memref<1x1x128xf32, #tpu.memory_space<vmem>>, vector<1x1x128xf32>,
    return
  }
  func.func @transform_0(%arg0: i32) -> (i32, i32, i32) {
    %c0_i32 = arith.constant 0 : i32
    %c0_i32_0 = arith.constant 0 : i32
    %c0_i32_1 = arith.constant 0 : i32
    return %arg0, %c0_i32, %c0_i32_0 : i32, i32, i32
  }
  func.func @transform_1(%arg0: i32) -> (i32, i32) {
    %c0_i32 = arith.constant 0 : i32
    %c0_i32_0 = arith.constant 0 : i32
    %c0_i32_1 = arith.constant 0 : i32
    return %c0_i32, %c0_i32_0 : i32, i32
  }
  func.func @transform_2(%arg0: i32) -> (i32, i32) {
    %c0_i32 = arith.constant 0 : i32
    %c0_i32_0 = arith.constant 0 : i32
    %c0_i32_1 = arith.constant 0 : i32
    return %c0_i32, %c0_i32_0 : i32, i32
  }
  func.func @transform_3(%arg0: i32) -> (i32, i32) {
    %c0_i32 = arith.constant 0 : i32
    %c0_i32_0 = arith.constant 0 : i32
    %c0_i32_1 = arith.constant 0 : i32
    return %c0_i32, %c0_i32_0 : i32, i32
  }
  func.func @transform_4(%arg0: i32) -> (i32, i32) {
    %c0_i32 = arith.constant 0 : i32
    %c0_i32_0 = arith.constant 0 : i32
    %c0_i32_1 = arith.constant 0 : i32
    return %c0_i32, %c0_i32_0 : i32, i32
  }
  func.func @transform_5(%arg0: i32) -> (i32, i32, i32) {
    %c0_i32 = arith.constant 0 : i32
    %c0_i32_0 = arith.constant 0 : i32
    %c0_i32_1 = arith.constant 0 : i32
    %c0_i32_2 = arith.constant 0 : i32
    return %c0_i32, %c0_i32_0, %c0_i32_1 : i32, i32, i32
  }
  func.func @transform_6(%arg0: i32) -> (i32, i32) {
    %c0_i32 = arith.constant 0 : i32
    %c0_i32_0 = arith.constant 0 : i32
    %c0_i32_1 = arith.constant 0 : i32
    return %c0_i32, %c0_i32_0 : i32, i32
  }
  func.func @transform_7(%arg0: i32) -> (i32, i32) {
    %c0_i32 = arith.constant 0 : i32
    %c0_i32_0 = arith.constant 0 : i32
    %c0_i32_1 = arith.constant 0 : i32
    return %c0_i32, %c0_i32_0 : i32, i32
  }
  func.func @transform_8(%arg0: i32) -> (i32, i32) {
    %c0_i32 = arith.constant 0 : i32
    %c0_i32_0 = arith.constant 0 : i32
    %c0_i32_1 = arith.constant 0 : i32
    return %c0_i32, %c0_i32_0 : i32, i32
  }
  func.func @transform_9(%arg0: i32) -> (i32, i32) {
    %c0_i32 = arith.constant 0 : i32
    %c0_i32_0 = arith.constant 0 : i32
    %c0_i32_1 = arith.constant 0 : i32
    return %c0_i32, %c0_i32_0 : i32, i32
  }
  func.func @transform_10(%arg0: i32) -> (i32, i32, i32) {
    %c0_i32 = arith.constant 0 : i32
    %c0_i32_0 = arith.constant 0 : i32
    %c0_i32_1 = arith.constant 0 : i32
    return %arg0, %c0_i32, %c0_i32_0 : i32, i32, i32
  }
}

</mosaic_0001>

<llo_original>
// kernel: inception_aux_forward.1
$region0: #{inception_aux_forward.1}
  #allocation0 [shape = 'u32[]', space=smem, size = 0x4, offset = 0x4, fixed_abs, tag = 'smem constant byte address 0x4 - core index']
  #allocation1 [shape = 'u32[144,128]{1,0:T(1,128)}', space=vmem, size = 0x12000, scoped, tag = 'internal scratch']
  #allocation2 [shape = 'bf16[1,25,128]{2,1,0:T(8,128)(2,1)}', space=vmem, size = 0x2000, scoped, tag = 'scratch operand']
  %s0 = inlined_call_operand.vmem [shape: f32[2,4,289], index: 0, kind: input, shape index: {}]
  %s1 = inlined_call_operand.vmem [shape: bf16[289,25], index: 1, kind: input, shape index: {}]
  %s2 = inlined_call_operand.vmem [shape: bf16[128,4], index: 2, kind: input, shape index: {}]
  %s3 = inlined_call_operand.vmem [shape: f32[1,128], index: 3, kind: input, shape index: {}]
  %s4 = inlined_call_operand.vmem [shape: f32[1,128], index: 4, kind: input, shape index: {}]
  %s5 = inlined_call_operand.vmem [shape: bf16[25,128,768], index: 5, kind: input, shape index: {}]
  %s6 = inlined_call_operand.vmem [shape: f32[1,768], index: 6, kind: input, shape index: {}]
  %s7 = inlined_call_operand.vmem [shape: f32[1,768], index: 7, kind: input, shape index: {}]
  %s8 = inlined_call_operand.vmem [shape: bf16[768,128], index: 8, kind: input, shape index: {}]
  %s9 = inlined_call_operand.vmem [shape: f32[1,128], index: 9, kind: input, shape index: {}]
  %s10 = inlined_call_operand.hbm [shape: f32[2,1,128], index: 10, kind: output, shape index: {}]
  %s11 = sld [smem:[#allocation0]]
  $region73: #{inception_aux_forward.1} parent=0
    _
  %s13 = ssub.s32 1, %s11
  %s14 = scalar_select 0, %s13, %s11
  $region1: #{inception_aux_forward.1} parent=0
    #allocation3 [shape = 'u8[1024]{0}', space=vmem, size = 0x400, scoped, tag = 'output window, operand 0']
    #allocation4 [shape = 's32[2]{0}', space=sflag, size = 0x8, scoped, tag = 'scoped memory for inception_aux_forward.1']
    %15 = vsyncpa [#allocation4], 0
    %s16 = scalar_lea.sflag [#allocation4], 1
    %17 = vsyncpa %s16, 0
    loop: start=0, step=1, limit=4
    $region2: #{inception_aux_forward.1} parent=1 // loop_pre_header
      _
    $region3: #{inception_aux_forward.1} parent=1 // loop_header
      %s19 = sphi 0, %s23
      %p20 = scmp.ge.s32.totalorder %s19, 4
      %s29 = sphi 0, %s31
      %s32 = sphi 0, %s29
      %s33 = sphi 0, %s32
      %s49 = sphi 0, %s33
      %s53 = sphi 0, %s53
      %s55 = sphi 0, %s53
      %s56 = sphi 0, %s55
      %s70 = sphi 0, %s56
      %s74 = sphi 0, %s74
      %s76 = sphi 0, %s74
      %s77 = sphi 0, %s76
      %s91 = sphi 0, %s77
      %s95 = sphi 0, %s95
      %s97 = sphi 0, %s95
      %s98 = sphi 0, %s97
      %s112 = sphi 0, %s98
      %s116 = sphi 0, %s116
      %s118 = sphi 0, %s116
      %s119 = sphi 0, %s118
      %s133 = sphi 0, %s119
      %s137 = sphi 0, %s137
      %s139 = sphi 0, %s137
      %s140 = sphi 0, %s139
      %s154 = sphi 0, %s140
      %s158 = sphi 0, %s158
      %s160 = sphi 0, %s158
      %s161 = sphi 0, %s160
      %s175 = sphi 0, %s161
      %s179 = sphi 0, %s179
      %s181 = sphi 0, %s179
      %s182 = sphi 0, %s181
      %s196 = sphi 0, %s182
      %s200 = sphi 0, %s200
      %s202 = sphi 0, %s200
      %s203 = sphi 0, %s202
      %s217 = sphi 0, %s203
      %s221 = sphi 0, %s221
      %s223 = sphi 0, %s221
      %s224 = sphi 0, %s223
      %s238 = sphi 0, %s224
      %s244 = sphi 0, %s246
      %s247 = sphi 0, %s244
      %s248 = sphi 0, %s247
      %s264 = sphi 0, %s248
    $region4: #{inception_aux_forward.1} parent=1 // loop_header_branch
      %22 = sbr.rel (%p20) target = $region8
    $region5: #{inception_aux_forward.1} parent=1 // loop_body
      %s24 = ssub.s32 %s19, 1
      %s25 = ssub.s32 %s19, 2
      %s26 = sadd.s32 %s19, 1
      %s27 = ssub.s32 %s19, %s26
      %p28 = scmp.eq.s32.totalorder %s27, 0
      %s30 = sadd.s32 %s29, 1
      %s31 = scalar_select %p28, %s29, %s30
      %p34 = pneg %p28
      %p35 = scmp.eq.s32.totalorder %s19, 1
      %p36 = por %p34, %p35
      %p37 = scmp.ne.s32.totalorder %s29, %s32
      %p38 = scmp.eq.s32.totalorder %s19, 0
      %p39 = por %p37, %p38
      %p40 = scmp.ne.s32.totalorder %s29, %s32
      %p41 = scmp.eq.s32.totalorder %s24, 1
      %p42 = por %p40, %p41
      %p43 = scmp.ne.s32.totalorder %s32, %s33
      %p44 = scmp.eq.s32.totalorder %s24, 0
      %p45 = por %p43, %p44
      %p46 = scmp.ne.s32.totalorder %s32, %s33
      %p47 = scmp.eq.s32.totalorder %s25, 1
      %p48 = por %p46, %p47
      %p50 = scmp.ne.s32.totalorder %s33, %s49
      %p51 = scmp.eq.s32.totalorder %s25, 0
      %p52 = por %p50, %p51
      %s54 = sadd.s32 %s53, 1
      %p57 = scmp.eq.s32.totalorder %s19, 1
      %p58 = scmp.ne.s32.totalorder %s53, %s55
      %p59 = scmp.eq.s32.totalorder %s19, 0
      %p60 = por %p58, %p59
      %p61 = scmp.ne.s32.totalorder %s53, %s55
      %p62 = scmp.eq.s32.totalorder %s24, 1
      %p63 = por %p61, %p62
      %p64 = scmp.ne.s32.totalorder %s55, %s56
      %p65 = scmp.eq.s32.totalorder %s24, 0
      %p66 = por %p64, %p65
      %p67 = scmp.ne.s32.totalorder %s55, %s56
      %p68 = scmp.eq.s32.totalorder %s25, 1
      %p69 = por %p67, %p68
      %p71 = scmp.ne.s32.totalorder %s56, %s70
      %p72 = scmp.eq.s32.totalorder %s25, 0
      %p73 = por %p71, %p72
      %s75 = sadd.s32 %s74, 1
      %p78 = scmp.eq.s32.totalorder %s19, 1
      %p79 = scmp.ne.s32.totalorder %s74, %s76
      %p80 = scmp.eq.s32.totalorder %s19, 0
      %p81 = por %p79, %p80
      %p82 = scmp.ne.s32.totalorder %s74, %s76
      %p83 = scmp.eq.s32.totalorder %s24, 1
      %p84 = por %p82, %p83
      %p85 = scmp.ne.s32.totalorder %s76, %s77
      %p86 = scmp.eq.s32.totalorder %s24, 0
      %p87 = por %p85, %p86
      %p88 = scmp.ne.s32.totalorder %s76, %s77
      %p89 = scmp.eq.s32.totalorder %s25, 1
      %p90 = por %p88, %p89
      %p92 = scmp.ne.s32.totalorder %s77, %s91
      %p93 = scmp.eq.s32.totalorder %s25, 0
      %p94 = por %p92, %p93
      %s96 = sadd.s32 %s95, 1
      %p99 = scmp.eq.s32.totalorder %s19, 1
      %p100 = scmp.ne.s32.totalorder %s95, %s97
      %p101 = scmp.eq.s32.totalorder %s19, 0
      %p102 = por %p100, %p101
      %p103 = scmp.ne.s32.totalorder %s95, %s97
      %p104 = scmp.eq.s32.totalorder %s24, 1
      %p105 = por %p103, %p104
      %p106 = scmp.ne.s32.totalorder %s97, %s98
      %p107 = scmp.eq.s32.totalorder %s24, 0
      %p108 = por %p106, %p107
      %p109 = scmp.ne.s32.totalorder %s97, %s98
      %p110 = scmp.eq.s32.totalorder %s25, 1
      %p111 = por %p109, %p110
      %p113 = scmp.ne.s32.totalorder %s98, %s112
      %p114 = scmp.eq.s32.totalorder %s25, 0
      %p115 = por %p113, %p114
      %s117 = sadd.s32 %s116, 1
      %p120 = scmp.eq.s32.totalorder %s19, 1
      %p121 = scmp.ne.s32.totalorder %s116, %s118
      %p122 = scmp.eq.s32.totalorder %s19, 0
      %p123 = por %p121, %p122
      %p124 = scmp.ne.s32.totalorder %s116, %s118
      %p125 = scmp.eq.s32.totalorder %s24, 1
      %p126 = por %p124, %p125
      %p127 = scmp.ne.s32.totalorder %s118, %s119
      %p128 = scmp.eq.s32.totalorder %s24, 0
      %p129 = por %p127, %p128
      %p130 = scmp.ne.s32.totalorder %s118, %s119
      %p131 = scmp.eq.s32.totalorder %s25, 1
      %p132 = por %p130, %p131
      %p134 = scmp.ne.s32.totalorder %s119, %s133
      %p135 = scmp.eq.s32.totalorder %s25, 0
      %p136 = por %p134, %p135
      %s138 = sadd.s32 %s137, 1
      %p141 = scmp.eq.s32.totalorder %s19, 1
      %p142 = scmp.ne.s32.totalorder %s137, %s139
      %p143 = scmp.eq.s32.totalorder %s19, 0
      %p144 = por %p142, %p143
      %p145 = scmp.ne.s32.totalorder %s137, %s139
      %p146 = scmp.eq.s32.totalorder %s24, 1
      %p147 = por %p145, %p146
      %p148 = scmp.ne.s32.totalorder %s139, %s140
      %p149 = scmp.eq.s32.totalorder %s24, 0
      %p150 = por %p148, %p149
      %p151 = scmp.ne.s32.totalorder %s139, %s140
      %p152 = scmp.eq.s32.totalorder %s25, 1
      %p153 = por %p151, %p152
      %p155 = scmp.ne.s32.totalorder %s140, %s154
      %p156 = scmp.eq.s32.totalorder %s25, 0
      %p157 = por %p155, %p156
      %s159 = sadd.s32 %s158, 1
      %p162 = scmp.eq.s32.totalorder %s19, 1
      %p163 = scmp.ne.s32.totalorder %s158, %s160
      %p164 = scmp.eq.s32.totalorder %s19, 0
      %p165 = por %p163, %p164
      %p166 = scmp.ne.s32.totalorder %s158, %s160
      %p167 = scmp.eq.s32.totalorder %s24, 1
      %p168 = por %p166, %p167
      %p169 = scmp.ne.s32.totalorder %s160, %s161
      %p170 = scmp.eq.s32.totalorder %s24, 0
      %p171 = por %p169, %p170
      %p172 = scmp.ne.s32.totalorder %s160, %s161
      %p173 = scmp.eq.s32.totalorder %s25, 1
      %p174 = por %p172, %p173
      %p176 = scmp.ne.s32.totalorder %s161, %s175
      %p177 = scmp.eq.s32.totalorder %s25, 0
      %p178 = por %p176, %p177
      %s180 = sadd.s32 %s179, 1
      %p183 = scmp.eq.s32.totalorder %s19, 1
      %p184 = scmp.ne.s32.totalorder %s179, %s181
      %p185 = scmp.eq.s32.totalorder %s19, 0
      %p186 = por %p184, %p185
      %p187 = scmp.ne.s32.totalorder %s179, %s181
      %p188 = scmp.eq.s32.totalorder %s24, 1
      %p189 = por %p187, %p188
      %p190 = scmp.ne.s32.totalorder %s181, %s182
      %p191 = scmp.eq.s32.totalorder %s24, 0
      %p192 = por %p190, %p191
      %p193 = scmp.ne.s32.totalorder %s181, %s182
      %p194 = scmp.eq.s32.totalorder %s25, 1
      %p195 = por %p193, %p194
      %p197 = scmp.ne.s32.totalorder %s182, %s196
      %p198 = scmp.eq.s32.totalorder %s25, 0
      %p199 = por %p197, %p198
      %s201 = sadd.s32 %s200, 1
      %p204 = scmp.eq.s32.totalorder %s19, 1
      %p205 = scmp.ne.s32.totalorder %s200, %s202
      %p206 = scmp.eq.s32.totalorder %s19, 0
      %p207 = por %p205, %p206
      %p208 = scmp.ne.s32.totalorder %s200, %s202
      %p209 = scmp.eq.s32.totalorder %s24, 1
      %p210 = por %p208, %p209
      %p211 = scmp.ne.s32.totalorder %s202, %s203
      %p212 = scmp.eq.s32.totalorder %s24, 0
      %p213 = por %p211, %p212
      %p214 = scmp.ne.s32.totalorder %s202, %s203
      %p215 = scmp.eq.s32.totalorder %s25, 1
      %p216 = por %p214, %p215
      %p218 = scmp.ne.s32.totalorder %s203, %s217
      %p219 = scmp.eq.s32.totalorder %s25, 0
      %p220 = por %p218, %p219
      %s222 = sadd.s32 %s221, 1
      %p225 = scmp.eq.s32.totalorder %s19, 1
      %p226 = scmp.ne.s32.totalorder %s221, %s223
      %p227 = scmp.eq.s32.totalorder %s19, 0
      %p228 = por %p226, %p227
      %p229 = scmp.ne.s32.totalorder %s221, %s223
      %p230 = scmp.eq.s32.totalorder %s24, 1
      %p231 = por %p229, %p230
      %p232 = scmp.ne.s32.totalorder %s223, %s224
      %p233 = scmp.eq.s32.totalorder %s24, 0
      %p234 = por %p232, %p233
      %p235 = scmp.ne.s32.totalorder %s223, %s224
      %p236 = scmp.eq.s32.totalorder %s25, 1
      %p237 = por %p235, %p236
      %p239 = scmp.ne.s32.totalorder %s224, %s238
      %p240 = scmp.eq.s32.totalorder %s25, 0
      %p241 = por %p239, %p240
      %s242 = ssub.s32 %s19, %s26
      %p243 = scmp.eq.s32.totalorder %s242, 0
      %s245 = sadd.s32 %s244, 1
      %s246 = scalar_select %p243, %s244, %s245
      %p249 = pneg %p243
      %p250 = scmp.eq.s32.totalorder %s19, 1
      %p251 = por %p249, %p250
      %p252 = scmp.ne.s32.totalorder %s244, %s247
      %p253 = scmp.eq.s32.totalorder %s19, 0
      %p254 = por %p252, %p253
      %p255 = scmp.ne.s32.totalorder %s244, %s247
      %p256 = scmp.eq.s32.totalorder %s24, 1
      %p257 = por %p255, %p256
      %p258 = scmp.ne.s32.totalorder %s247, %s248
      %p259 = scmp.eq.s32.totalorder %s24, 0
      %p260 = por %p258, %p259
      %p261 = scmp.ne.s32.totalorder %s247, %s248
      %p262 = scmp.eq.s32.totalorder %s25, 1
      %p263 = por %p261, %p262
      %p265 = scmp.ne.s32.totalorder %s248, %s264
      %p266 = scmp.eq.s32.totalorder %s25, 0
      %p267 = por %p265, %p266
      %p268 = scmp.le.s32.totalorder 1, %s19
      %p269 = scmp.lt.s32.totalorder %s19, 3
      %p270 = pnand %p268, %p269
      %p271 = pneg %p270
      // Predicated region
      $region9: #{inception_aux_forward.1} parent=5 // pred_check
        _
      $region10: #{inception_aux_forward.1} parent=5 // pred_check_branch
        %273 = sbr.rel (%p270) target = $region12
      $region11: #{inception_aux_forward.1} parent=5 // pred_region
        %s274 = ssub.s32 %s19, 1
        // Predicated region
        $region13: #{inception_aux_forward.1} parent=11 // pred_check
          %p275 = pneg %p66
        $region14: #{inception_aux_forward.1} parent=11 // pred_check_branch
          %277 = sbr.rel (%p275) target = $region16
        $region15: #{inception_aux_forward.1} parent=11 // pred_region
          _
        $region16: #{inception_aux_forward.1} parent=11 // pred_fallthru
          _
        // Predicated region
        $region17: #{inception_aux_forward.1} parent=11 // pred_check
          %p278 = pneg %p87
        $region18: #{inception_aux_forward.1} parent=11 // pred_check_branch
          %280 = sbr.rel (%p278) target = $region20
        $region19: #{inception_aux_forward.1} parent=11 // pred_region
          _
        $region20: #{inception_aux_forward.1} parent=11 // pred_fallthru
          _
        // Predicated region
        $region21: #{inception_aux_forward.1} parent=11 // pred_check
          %p281 = pneg %p108
        $region22: #{inception_aux_forward.1} parent=11 // pred_check_branch
          %283 = sbr.rel (%p281) target = $region24
        $region23: #{inception_aux_forward.1} parent=11 // pred_region
          _
        $region24: #{inception_aux_forward.1} parent=11 // pred_fallthru
          _
        // Predicated region
        $region25: #{inception_aux_forward.1} parent=11 // pred_check
          %p284 = pneg %p129
        $region26: #{inception_aux_forward.1} parent=11 // pred_check_branch
          %286 = sbr.rel (%p284) target = $region28
        $region27: #{inception_aux_forward.1} parent=11 // pred_region
          _
        $region28: #{inception_aux_forward.1} parent=11 // pred_fallthru
          _
        // Predicated region
        $region29: #{inception_aux_forward.1} parent=11 // pred_check
          %p287 = pneg %p150
        $region30: #{inception_aux_forward.1} parent=11 // pred_check_branch
          %289 = sbr.rel (%p287) target = $region32
        $region31: #{inception_aux_forward.1} parent=11 // pred_region
          _
        $region32: #{inception_aux_forward.1} parent=11 // pred_fallthru
          _
        // Predicated region
        $region33: #{inception_aux_forward.1} parent=11 // pred_check
          %p290 = pneg %p171
        $region34: #{inception_aux_forward.1} parent=11 // pred_check_branch
          %292 = sbr.rel (%p290) target = $region36
        $region35: #{inception_aux_forward.1} parent=11 // pred_region
          _
        $region36: #{inception_aux_forward.1} parent=11 // pred_fallthru
          _
        // Predicated region
        $region37: #{inception_aux_forward.1} parent=11 // pred_check
          %p293 = pneg %p192
        $region38: #{inception_aux_forward.1} parent=11 // pred_check_branch
          %295 = sbr.rel (%p293) target = $region40
        $region39: #{inception_aux_forward.1} parent=11 // pred_region
          _
        $region40: #{inception_aux_forward.1} parent=11 // pred_fallthru
          _
        // Predicated region
        $region41: #{inception_aux_forward.1} parent=11 // pred_check
          %p296 = pneg %p213
        $region42: #{inception_aux_forward.1} parent=11 // pred_check_branch
          %298 = sbr.rel (%p296) target = $region44
        $region43: #{inception_aux_forward.1} parent=11 // pred_region
          _
        $region44: #{inception_aux_forward.1} parent=11 // pred_fallthru
          _
        // Predicated region
        $region45: #{inception_aux_forward.1} parent=11 // pred_check
          %p299 = pneg %p234
        $region46: #{inception_aux_forward.1} parent=11 // pred_check_branch
          %301 = sbr.rel (%p299) target = $region48
        $region47: #{inception_aux_forward.1} parent=11 // pred_region
          _
        $region48: #{inception_aux_forward.1} parent=11 // pred_fallthru
          _
      $region12: #{inception_aux_forward.1} parent=5 // pred_fallthru
        _
      %p302 = scmp.lt.s32.totalorder %s19, 2
      // Predicated region
      $region49: #{inception_aux_forward.1} parent=5 // pred_check
        %p303 = pneg %p302
      $region50: #{inception_aux_forward.1} parent=5 // pred_check_branch
        %305 = sbr.rel (%p303) target = $region52
      $region51: #{inception_aux_forward.1} parent=5 // pred_region
        // Predicated region
        $region53: #{inception_aux_forward.1} parent=51 // pred_check
          %p306 = pneg %p39
        $region54: #{inception_aux_forward.1} parent=51 // pred_check_branch
          %308 = sbr.rel (%p306) target = $region56
        $region55: #{inception_aux_forward.1} parent=51 // pred_region
          %p309 = scmp.lt.s32.totalorder %s19, 1
          %s310 = scalar_select %p309, %s19, 1
          %s311 = smul.addr %s310, 3
          %s312 = smul.addr %s311, 4
          %s313 = scalar_lea.vmem %s0, %s312
        $region56: #{inception_aux_forward.1} parent=51 // pred_fallthru
          _
      $region52: #{inception_aux_forward.1} parent=5 // pred_fallthru
        _
      %p314 = scmp.le.s32.totalorder 1, %s19
      %p315 = scmp.lt.s32.totalorder %s19, 3
      %p316 = pnand %p314, %p315
      %p317 = pneg %p316
      // Predicated region
      $region57: #{inception_aux_forward.1} parent=5 // pred_check
        _
      $region58: #{inception_aux_forward.1} parent=5 // pred_check_branch
        %319 = sbr.rel (%p316) target = $region60
      $region59: #{inception_aux_forward.1} parent=5 // pred_region
        %s320 = ssub.s32 %s19, 1
        %p321 = scmp.lt.s32.totalorder %s24, 1
        %s322 = scalar_select %p321, %s24, 1
        %s323 = smul.addr %s322, 3
        %s324 = smul.addr %s323, 4
        %s325 = scalar_lea.vmem %s0, %s324
        %p326 = pneg %p45
        %p327 = pneg %p42
        %p328 = pneg %p66
        %p329 = pneg %p63
        %p330 = pneg %p87
        %p331 = pneg %p84
        %p332 = pneg %p108
        %p333 = pneg %p105
        %p334 = pneg %p129
        %p335 = pneg %p126
        %p336 = pneg %p150
        %p337 = pneg %p147
        %p338 = pneg %p171
        %p339 = pneg %p168
        %p340 = pneg %p192
        %p341 = pneg %p189
        %p342 = pneg %p213
        %p343 = pneg %p210
        %p344 = pneg %p234
        %p345 = pneg %p231
        %p346 = pneg %p260
        %p347 = pneg %p257
        %s348 = sand.u32 %s247, 1
        %s349 = scalar_lea.sflag [#allocation4], %s348
        %s350 = sand.u32 %s247, 1
        %s351 = scalar_lea.vmem [#allocation3], %s350
        %p352 = scmp.lt.s32.totalorder %s24, 1
        %s353 = scalar_select %p352, %s24, 1
        %s354 = smul.addr %s353, 3
        %s355 = smul.addr %s354, 4
        %s356 = scalar_lea.vmem %s0, %s355
        %v358 = vld [vmem:[%s356] sm:$0xff]
        %v359 = vld [vmem:[%s356 + $0x8] sm:$0xf]
        %v361 = vcombine.high %v358, %v358
        %v363 = vpack.c.bf16 %v358, %v358
        %v364 = vpack.c.bf16 %v361, %v361
        %v365 = vpack.c.bf16 %v359, %v359
        %v366 = vld [vmem:[%s1] sm:$0xf]
        %v367 = vld [vmem:[%s1 + $0x4] sm:$0xf]
        %v368 = vld [vmem:[%s1 + $0x8] sm:$0xf]
        %v369 = vld [vmem:[%s1 + $0xc] sm:$0xf]
        %v370 = vld [vmem:[%s1 + $0x10] sm:$0xf]
        %v371 = vld [vmem:[%s1 + $0x14] sm:$0xf]
        %v372 = vld [vmem:[%s1 + $0x18] sm:$0xf]
        %v373 = vld [vmem:[%s1 + $0x1c] sm:$0xf]
        %v374 = vld [vmem:[%s1 + $0x20] sm:$0xf]
        %v375 = vld [vmem:[%s1 + $0x24] sm:$0xf]
        %v376 = vld [vmem:[%s1 + $0x28] sm:$0xf]
        %v377 = vld [vmem:[%s1 + $0x2c] sm:$0xf]
        %v378 = vld [vmem:[%s1 + $0x30] sm:$0xf]
        %v379 = vld [vmem:[%s1 + $0x34] sm:$0xf]
        %v380 = vld [vmem:[%s1 + $0x38] sm:$0xf]
        %v381 = vld [vmem:[%s1 + $0x3c] sm:$0xf]
        %v382 = vld [vmem:[%s1 + $0x40] sm:$0xf]
        %v383 = vld [vmem:[%s1 + $0x44] sm:$0xf]
        %v384 = vld [vmem:[%s1 + $0x48] sm:$0xf]
        %v385 = vld [vmem:[%s1 + $0x4c] sm:$0xf]
        %v386 = vld [vmem:[%s1 + $0x50] sm:$0xf]
        %v387 = vld [vmem:[%s1 + $0x54] sm:$0xf]
        %v388 = vld [vmem:[%s1 + $0x58] sm:$0xf]
        %v389 = vld [vmem:[%s1 + $0x5c] sm:$0xf]
        %v390 = vld [vmem:[%s1 + $0x60] sm:$0xf]
        %v391 = vld [vmem:[%s1 + $0x64] sm:$0xf]
        %v392 = vld [vmem:[%s1 + $0x68] sm:$0xf]
        %v393 = vld [vmem:[%s1 + $0x6c] sm:$0xf]
        %v394 = vld [vmem:[%s1 + $0x70] sm:$0xf]
        %v395 = vld [vmem:[%s1 + $0x74] sm:$0xf]
        %v396 = vld [vmem:[%s1 + $0x78] sm:$0xf]
        %v397 = vld [vmem:[%s1 + $0x7c] sm:$0xf]
        %v398 = vld [vmem:[%s1 + $0x80] sm:$0xf]
        %v399 = vld [vmem:[%s1 + $0x84] sm:$0xf]
        %v400 = vld [vmem:[%s1 + $0x88] sm:$0xf]
        %v401 = vld [vmem:[%s1 + $0x8c] sm:$0xf]
        %v402 = vld [vmem:[%s1 + $0x90] sm:$0x1]
        %v440 = vunpack.c.l.b16 %v366
        %v441 = vunpack.c.l.b16 %v367
        %v442 = vunpack.c.l.b16 %v368
        %v443 = vunpack.c.l.b16 %v369
        %v444 = vunpack.c.l.b16 %v370
        %v445 = vunpack.c.l.b16 %v371
        %v446 = vunpack.c.l.b16 %v372
        %v447 = vunpack.c.l.b16 %v373
        %v448 = vunpack.c.l.b16 %v374
        %v449 = vunpack.c.l.b16 %v375
        %v450 = vunpack.c.l.b16 %v376
        %v451 = vunpack.c.l.b16 %v377
        %v452 = vunpack.c.l.b16 %v378
        %v453 = vunpack.c.l.b16 %v379
        %v454 = vunpack.c.l.b16 %v380
        %v455 = vunpack.c.l.b16 %v381
        %v456 = vunpack.c.l.b16 %v382
        %v457 = vunpack.c.l.b16 %v383
        %v458 = vunpack.c.l.b16 %v384
        %v459 = vunpack.c.l.b16 %v385
        %v460 = vunpack.c.l.b16 %v386
        %v461 = vunpack.c.l.b16 %v387
        %v462 = vunpack.c.l.b16 %v388
        %v463 = vunpack.c.l.b16 %v389
        %v464 = vunpack.c.l.b16 %v390
        %v465 = vunpack.c.l.b16 %v391
        %v466 = vunpack.c.l.b16 %v392
        %v467 = vunpack.c.l.b16 %v393
        %v468 = vunpack.c.l.b16 %v394
        %v469 = vunpack.c.l.b16 %v395
        %v470 = vunpack.c.l.b16 %v396
        %v471 = vunpack.c.l.b16 %v397
        %v472 = vunpack.c.l.b16 %v398
        %v473 = vunpack.c.l.b16 %v399
        %v474 = vunpack.c.l.b16 %v400
        %v475 = vunpack.c.l.b16 %v401
        %v476 = vunpack.c.l.b16 %v402
        %v477 = vpack.c.b16 %v441, %v440
        %v478 = vpack.c.b16 %v443, %v442
        %v479 = vpack.c.b16 %v445, %v444
        %v480 = vpack.c.b16 %v447, %v446
        %v481 = vpack.c.b16 %v449, %v448
        %v482 = vpack.c.b16 %v451, %v450
        %v483 = vpack.c.b16 %v453, %v452
        %v484 = vpack.c.b16 %v455, %v454
        %v485 = vpack.c.b16 %v457, %v456
        %v486 = vpack.c.b16 %v459, %v458
        %v487 = vpack.c.b16 %v461, %v460
        %v488 = vpack.c.b16 %v463, %v462
        %v489 = vpack.c.b16 %v465, %v464
        %v490 = vpack.c.b16 %v467, %v466
        %v491 = vpack.c.b16 %v469, %v468
        %v492 = vpack.c.b16 %v471, %v470
        %v493 = vpack.c.b16 %v473, %v472
        %v494 = vpack.c.b16 %v475, %v474
        %v495 = vpack.c.b16 %v476, %v476
        %vm514 = vcmask 269312
        %v516 = vsel %vm514, %v365, 0
        %vm518 = vcmask 1040384
        %v519 = vsel 0, 4294967295, 65535
        %v520 = vsel %vm518, %v519, 0
        %v522 = vand.u32 %v495, %v520
        %524 = vmatprep.subr.bf16.mxu0 0
        %525 = vmatpush1.bf16.msra.mxu0 %v477
        %526 = vmatprep.subr.bf16.mxu0 0
        %527 = vmatpush1.bf16.msra.mxu0 %v478
        %528 = vmatprep.subr.bf16.mxu0 0
        %529 = vmatpush1.bf16.msra.mxu0 %v479
        %530 = vmatprep.subr.bf16.mxu0 0
        %531 = vmatpush1.bf16.msra.mxu0 %v480
        %532 = vmatprep.subr.bf16.mxu0 0
        %533 = vmatpush1.bf16.msra.mxu0 %v481
        %534 = vmatprep.subr.bf16.mxu0 0
        %535 = vmatpush1.bf16.msra.mxu0 %v482
        %536 = vmatprep.subr.bf16.mxu0 0
        %537 = vmatpush1.bf16.msra.mxu0 %v483
        %538 = vmatprep.subr.bf16.mxu0 0
        %539 = vmatpush1.bf16.msra.mxu0 %v484
        %540 = vmatprep.subr.bf16.mxu0 0
        %541 = vmatpush1.bf16.msra.mxu0 %v485
        %542 = vmatprep.subr.bf16.mxu0 0
        %543 = vmatpush1.bf16.msra.mxu0 %v486
        %544 = vmatprep.subr.bf16.mxu0 0
        %545 = vmatpush1.bf16.msra.mxu0 %v487
        %546 = vmatprep.subr.bf16.mxu0 0
        %547 = vmatpush1.bf16.msra.mxu0 %v488
        %548 = vmatprep.subr.bf16.mxu0 0
        %549 = vmatpush1.bf16.msra.mxu0 %v489
        %550 = vmatprep.subr.bf16.mxu0 0
        %551 = vmatpush1.bf16.msra.mxu0 %v490
        %552 = vmatprep.subr.bf16.mxu0 0
        %553 = vmatpush1.bf16.msra.mxu0 %v491
        %554 = vmatprep.subr.bf16.mxu0 0
        %555 = vmatpush1.bf16.msra.mxu0 %v492
        %556 = vmatprep.mubr.bf16.mxu0 %v364
        %557 = vmatmul.mubr.bf16.gmra.mrb[0].mxu0 %v363
        %v558 = vpop.f32.mrb[0].mxu0
        %v559 = vadd.f32 0.0, %v558
        %v560 = vpop.f32.mrb[0].mxu0
        %v561 = vpop.f32.mrb[0].mxu0
        %v562 = vpop.f32.mrb[0].mxu0
        %563 = vdwg.mxu0
        %564 = vmatprep.subr.bf16.mxu0 0
        %565 = vmatpush1.bf16.msra.mxu0 %v493
        %566 = vmatprep.subr.bf16.mxu0 0
        %567 = vmatpush1.bf16.msra.mxu0 %v494
        %568 = vmatprep.subr.bf16.mxu0 0
        %569 = vmatpush1.bf16.msra.mxu0 %v522
        %570 = vmatprep.subr.bf16.mxu0 0
        %571 = vmatpush1.bf16.msra.mxu0 0
        %572 = vmatprep.subr.bf16.mxu0 0
        %573 = vmatpush1.bf16.msra.mxu0 0
        %574 = vmatprep.subr.bf16.mxu0 0
        %575 = vmatpush1.bf16.msra.mxu0 0
        %576 = vmatprep.subr.bf16.mxu0 0
        %577 = vmatpush1.bf16.msra.mxu0 0
        %578 = vmatprep.subr.bf16.mxu0 0
        %579 = vmatpush1.bf16.msra.mxu0 0
        %580 = vmatprep.subr.bf16.mxu0 0
        %581 = vmatpush1.bf16.msra.mxu0 0
        %582 = vmatprep.subr.bf16.mxu0 0
        %583 = vmatpush1.bf16.msra.mxu0 0
        %584 = vmatprep.subr.bf16.mxu0 0
        %585 = vmatpush1.bf16.msra.mxu0 0
        %586 = vmatprep.subr.bf16.mxu0 0
        %587 = vmatpush1.bf16.msra.mxu0 0
        %588 = vmatprep.subr.bf16.mxu0 0
        %589 = vmatpush1.bf16.msra.mxu0 0
        %590 = vmatprep.subr.bf16.mxu0 0
        %591 = vmatpush1.bf16.msra.mxu0 0
        %592 = vmatprep.subr.bf16.mxu0 0
        %593 = vmatpush1.bf16.msra.mxu0 0
        %594 = vmatprep.subr.bf16.mxu0 0
        %595 = vmatpush1.bf16.msra.mxu0 0
        %596 = vmatprep.mubr.bf16.mxu0 0
        %597 = vmatmul.mubr.bf16.gmra.mrb[0].mxu0 %v516
        %v598 = vpop.f32.mrb[0].mxu0
        %v599 = vadd.f32 %v559, %v598
        %v600 = vpop.f32.mrb[0].mxu0
        %v601 = vpop.f32.mrb[0].mxu0
        %v602 = vpop.f32.mrb[0].mxu0
        %603 = vdwg.mxu0
        %v604 = vpack.c.bf16 %v599, %v599
        %v605 = vld [vmem:[%s2] sm:$0xf]
        %v606 = vld [vmem:[%s2 + $0x4] sm:$0xf]
        %v607 = vld [vmem:[%s2 + $0x8] sm:$0xf]
        %v608 = vld [vmem:[%s2 + $0xc] sm:$0xf]
        %v609 = vld [vmem:[%s2 + $0x10] sm:$0xf]
        %v610 = vld [vmem:[%s2 + $0x14] sm:$0xf]
        %v611 = vld [vmem:[%s2 + $0x18] sm:$0xf]
        %v612 = vld [vmem:[%s2 + $0x1c] sm:$0xf]
        %v613 = vld [vmem:[%s2 + $0x20] sm:$0xf]
        %v614 = vld [vmem:[%s2 + $0x24] sm:$0xf]
        %v615 = vld [vmem:[%s2 + $0x28] sm:$0xf]
        %v616 = vld [vmem:[%s2 + $0x2c] sm:$0xf]
        %v617 = vld [vmem:[%s2 + $0x30] sm:$0xf]
        %v618 = vld [vmem:[%s2 + $0x34] sm:$0xf]
        %v619 = vld [vmem:[%s2 + $0x38] sm:$0xf]
        %v620 = vld [vmem:[%s2 + $0x3c] sm:$0xf]
        %621 = vxpose.xlu0.c.b16.start [1/8] %v604, 128
        %622 = vxpose.xlu0.c.b16.cont [2/8] 0, 128
        %623 = vxpose.xlu0.c.b16.cont [3/8] 0, 128
        %624 = vxpose.xlu0.c.b16.cont [4/8] 0, 128
        %625 = vxpose.xlu0.c.b16.cont [5/8] 0, 128
        %626 = vxpose.xlu0.c.b16.cont [6/8] 0, 128
        %627 = vxpose.xlu0.c.b16.cont [7/8] 0, 128
        %628 = vxpose.xlu0.c.b16.end [8/8] 0, 128
        %v629 = vpop.trf.xlu0
        %v630 = vpop.trf.xlu0
        %v631 = vpop.trf.xlu0
        %v632 = vpop.trf.xlu0
        %v633 = vpop.trf.xlu0
        %v634 = vpop.trf.xlu0
        %v635 = vpop.trf.xlu0
        %v636 = vpop.trf.xlu0
        %v653 = vunpack.c.l.b16 %v605
        %v654 = vunpack.c.l.b16 %v606
        %v655 = vunpack.c.l.b16 %v607
        %v656 = vunpack.c.l.b16 %v608
        %v657 = vunpack.c.l.b16 %v609
        %v658 = vunpack.c.l.b16 %v610
        %v659 = vunpack.c.l.b16 %v611
        %v660 = vunpack.c.l.b16 %v612
        %v661 = vunpack.c.l.b16 %v613
        %v662 = vunpack.c.l.b16 %v614
        %v663 = vunpack.c.l.b16 %v615
        %v664 = vunpack.c.l.b16 %v616
        %v665 = vunpack.c.l.b16 %v617
        %v666 = vunpack.c.l.b16 %v618
        %v667 = vunpack.c.l.b16 %v619
        %v668 = vunpack.c.l.b16 %v620
        %v669 = vpack.c.b16 %v654, %v653
        %v670 = vpack.c.b16 %v656, %v655
        %v671 = vpack.c.b16 %v658, %v657
        %v672 = vpack.c.b16 %v660, %v659
        %v673 = vpack.c.b16 %v662, %v661
        %v674 = vpack.c.b16 %v664, %v663
        %v675 = vpack.c.b16 %v666, %v665
        %v676 = vpack.c.b16 %v668, %v667
        %vm677 = vcmask 31744
        %v679 = vsel %vm677, %v629, 0
        %v682 = vsel %vm677, %v630, 0
        %v685 = vsel %vm677, %v669, 0
        %v688 = vsel %vm677, %v670, 0
        %v691 = vsel %vm677, %v671, 0
        %v694 = vsel %vm677, %v672, 0
        %v697 = vsel %vm677, %v673, 0
        %v700 = vsel %vm677, %v674, 0
        %v703 = vsel %vm677, %v675, 0
        %v706 = vsel %vm677, %v676, 0
        %708 = vmatprep.subr.bf16.mxu0 0
        %709 = vmatpush1.bf16.xpose.msra.mxu0 %v685
        %710 = vmatprep.subr.bf16.mxu0 0
        %711 = vmatpush1.bf16.xpose.msra.mxu0 %v688
        %712 = vmatprep.subr.bf16.mxu0 0
        %713 = vmatpush1.bf16.xpose.msra.mxu0 %v691
        %714 = vmatprep.subr.bf16.mxu0 0
        %715 = vmatpush1.bf16.xpose.msra.mxu0 %v694
        %716 = vmatprep.subr.bf16.mxu0 0
        %717 = vmatpush1.bf16.xpose.msra.mxu0 %v697
        %718 = vmatprep.subr.bf16.mxu0 0
        %719 = vmatpush1.bf16.xpose.msra.mxu0 %v700
        %720 = vmatprep.subr.bf16.mxu0 0
        %721 = vmatpush1.bf16.xpose.msra.mxu0 %v703
        %722 = vmatprep.subr.bf16.mxu0 0
        %723 = vmatpush1.bf16.xpose.msra.mxu0 %v706
        %724 = vmatprep.subr.bf16.mxu0 0
        %725 = vmatpush1.bf16.xpose.msra.mxu0 0
        %726 = vmatprep.subr.bf16.mxu0 0
        %727 = vmatpush1.bf16.xpose.msra.mxu0 0
        %728 = vmatprep.subr.bf16.mxu0 0
        %729 = vmatpush1.bf16.xpose.msra.mxu0 0
        %730 = vmatprep.subr.bf16.mxu0 0
        %731 = vmatpush1.bf16.xpose.msra.mxu0 0
        %732 = vmatprep.subr.bf16.mxu0 0
        %733 = vmatpush1.bf16.xpose.msra.mxu0 0
        %734 = vmatprep.subr.bf16.mxu0 0
        %735 = vmatpush1.bf16.xpose.msra.mxu0 0
        %736 = vmatprep.subr.bf16.mxu0 0
        %737 = vmatpush1.bf16.xpose.msra.mxu0 0
        %738 = vmatprep.subr.bf16.mxu0 0
        %739 = vmatpush1.bf16.xpose.msra.mxu0 0
        %740 = vmatprep.mubr.bf16.mxu0 0
        %741 = vmatmul.mubr.bf16.gmra.mrb[0].mxu0 %v679
        %v742 = vpop.f32.mrb[0].mxu0
        %v743 = vadd.f32 0.0, %v742
        %v744 = vpop.f32.mrb[0].mxu0
        %v745 = vpop.f32.mrb[0].mxu0
        %v746 = vadd.f32 0.0, %v745
        %v747 = vpop.f32.mrb[0].mxu0
        %748 = vmatprep.mubr.bf16.mxu0 0
        %749 = vmatmul.mubr.bf16.gmra.mrb[0].mxu0 %v682
        %v750 = vpop.f32.mrb[0].mxu0
        %v751 = vadd.f32 0.0, %v750
        %v752 = vpop.f32.mrb[0].mxu0
        %v753 = vpop.f32.mrb[0].mxu0
        %v754 = vadd.f32 0.0, %v753
        %v755 = vpop.f32.mrb[0].mxu0
        %756 = vdwg.mxu0
        %v757 = vld [vmem:[%s3] sm:$0x1]
        %v759 = vlaneseq
        %v760 = vshrl.u32 %v759, 7
        %v761 = vsub.s32 0, %v760
        %v762 = vrot.slane %v757, %v761
        %v764 = vmul.f32 %v743, %v762
        %v765 = vmul.f32 %v746, %v762
        %v766 = vmul.f32 %v751, %v762
        %v767 = vmul.f32 %v754, %v762
        %v768 = vld [vmem:[%s4] sm:$0x1]
        %v770 = vlaneseq
        %v771 = vshrl.u32 %v770, 7
        %v772 = vsub.s32 0, %v771
        %v773 = vrot.slane %v768, %v772
        %v775 = vadd.f32 %v764, %v773
        %v776 = vadd.f32 %v765, %v773
        %v777 = vadd.f32 %v766, %v773
        %v778 = vadd.f32 %v767, %v773
        %v779 = vmax.f32 %v775, 0.0
        %v780 = vmax.f32 %v776, 0.0
        %v781 = vmax.f32 %v777, 0.0
        %v782 = vmax.f32 %v778, 0.0
        %v783 = vpack.c.bf16 %v780, %v779
        %v784 = vpack.c.bf16 %v782, %v781
        %v787 = vunpack.c.l.b16 %v783
        %v788 = vunpack.c.h.b16 %v783
        %v789 = vunpack.c.l.b16 %v784
        %v790 = vunpack.c.h.b16 %v784
        %v791 = vpack.c.b16 %v787, %v787
        %v792 = vpack.c.b16 %v788, %v788
        %v793 = vpack.c.b16 %v789, %v789
        %v794 = vpack.c.b16 %v790, %v790
        %799 = vst [vmem:[#allocation2] sm:$0xf] %v791
        %800 = vst [vmem:[#allocation2 + $0x4] sm:$0xf] %v792
        %801 = vst [vmem:[#allocation2 + $0x8] sm:$0xf] %v793
        %vm802 = vcmask 1040384
        %vm803 = vsmask.f32 256
        %vm804 = vmand %vm802, %vm803
        %v805 = vld [vmem:[#allocation2 + $0xc] sm:$0x1]
        %v806 = vsel %vm804, %v794, %v805
        %807 = vst [vmem:[#allocation2 + $0xc] sm:$0x1] %v806
        %v808 = vld [vmem:[%s5] sm:$0xff]
        %v809 = vld [vmem:[%s5 + $0x8] sm:$0xff]
        %v810 = vld [vmem:[%s5 + $0x10] sm:$0xff]
        %v811 = vld [vmem:[%s5 + $0x18] sm:$0xff]
        %v812 = vld [vmem:[%s5 + $0x20] sm:$0xff]
        %v813 = vld [vmem:[%s5 + $0x28] sm:$0xff]
        %v814 = vld [vmem:[%s5 + $0x30] sm:$0xff]
        %v815 = vld [vmem:[%s5 + $0x38] sm:$0xff]
        %v816 = vld [vmem:[%s5 + $0x40] sm:$0xff]
        %v817 = vld [vmem:[%s5 + $0x48] sm:$0xff]
        %v818 = vld [vmem:[%s5 + $0x50] sm:$0xff]
        %v819 = vld [vmem:[%s5 + $0x58] sm:$0xff]
        %v820 = vld [vmem:[%s5 + $0x60] sm:$0xff]
        %v821 = vld [vmem:[%s5 + $0x68] sm:$0xff]
        %v822 = vld [vmem:[%s5 + $0x70] sm:$0xff]
        %v823 = vld [vmem:[%s5 + $0x78] sm:$0xff]
        %v824 = vld [vmem:[%s5 + $0x80] sm:$0xff]
        %v825 = vld [vmem:[%s5 + $0x88] sm:$0xff]
        %v826 = vld [vmem:[%s5 + $0x90] sm:$0xff]
        %v827 = vld [vmem:[%s5 + $0x98] sm:$0xff]
        %v828 = vld [vmem:[%s5 + $0xa0] sm:$0xff]
        %v829 = vld [vmem:[%s5 + $0xa8] sm:$0xff]
        %v830 = vld [vmem:[%s5 + $0xb0] sm:$0xff]
        %v831 = vld [vmem:[%s5 + $0xb8] sm:$0xff]
        %v832 = vld [vmem:[%s5 + $0xc0] sm:$0xff]
        %v833 = vld [vmem:[%s5 + $0xc8] sm:$0xff]
        %v834 = vld [vmem:[%s5 + $0xd0] sm:$0xff]
        %v835 = vld [vmem:[%s5 + $0xd8] sm:$0xff]
        %v836 = vld [vmem:[%s5 + $0xe0] sm:$0xff]
        %v837 = vld [vmem:[%s5 + $0xe8] sm:$0xff]
        %v838 = vld [vmem:[%s5 + $0xf0] sm:$0xff]
        %v839 = vld [vmem:[%s5 + $0xf8] sm:$0xff]
        %v840 = vld [vmem:[%s5 + $0x100] sm:$0xff]
        %v841 = vld [vmem:[%s5 + $0x108] sm:$0xff]
        %v842 = vld [vmem:[%s5 + $0x110] sm:$0xff]
        %v843 = vld [vmem:[%s5 + $0x118] sm:$0xff]
        %v844 = vld [vmem:[%s5 + $0x120] sm:$0xff]
        %v845 = vld [vmem:[%s5 + $0x128] sm:$0xff]
        %v846 = vld [vmem:[%s5 + $0x130] sm:$0xff]
        %v847 = vld [vmem:[%s5 + $0x138] sm:$0xff]
        %v848 = vld [vmem:[%s5 + $0x140] sm:$0xff]
        %v849 = vld [vmem:[%s5 + $0x148] sm:$0xff]
        %v850 = vld [vmem:[%s5 + $0x150] sm:$0xff]
        %v851 = vld [vmem:[%s5 + $0x158] sm:$0xff]
        %v852 = vld [vmem:[%s5 + $0x160] sm:$0xff]
        %v853 = vld [vmem:[%s5 + $0x168] sm:$0xff]
        %v854 = vld [vmem:[%s5 + $0x170] sm:$0xff]
        %v855 = vld [vmem:[%s5 + $0x178] sm:$0xff]
        %v856 = vld [vmem:[#allocation2] sm:$0x1]
        %s857 = scalar_lea.vmem %s5, 384
        %v858 = vld [vmem:[%s857] sm:$0xff]
        %v859 = vld [vmem:[%s857 + $0x8] sm:$0xff]
        %v860 = vld [vmem:[%s857 + $0x10] sm:$0xff]
        %v861 = vld [vmem:[%s857 + $0x18] sm:$0xff]
        %v862 = vld [vmem:[%s857 + $0x20] sm:$0xff]
        %v863 = vld [vmem:[%s857 + $0x28] sm:$0xff]
        %v864 = vld [vmem:[%s857 + $0x30] sm:$0xff]
        %v865 = vld [vmem:[%s857 + $0x38] sm:$0xff]
        %v866 = vld [vmem:[%s857 + $0x40] sm:$0xff]
        %v867 = vld [vmem:[%s857 + $0x48] sm:$0xff]
        %v868 = vld [vmem:[%s857 + $0x50] sm:$0xff]
        %v869 = vld [vmem:[%s857 + $0x58] sm:$0xff]
        %v870 = vld [vmem:[%s857 + $0x60] sm:$0xff]
        %v871 = vld [vmem:[%s857 + $0x68] sm:$0xff]
        %v872 = vld [vmem:[%s857 + $0x70] sm:$0xff]
        %v873 = vld [vmem:[%s857 + $0x78] sm:$0xff]
        %v874 = vld [vmem:[%s857 + $0x80] sm:$0xff]
        %v875 = vld [vmem:[%s857 + $0x88] sm:$0xff]
        %v876 = vld [vmem:[%s857 + $0x90] sm:$0xff]
        %v877 = vld [vmem:[%s857 + $0x98] sm:$0xff]
        %v878 = vld [vmem:[%s857 + $0xa0] sm:$0xff]
        %v879 = vld [vmem:[%s857 + $0xa8] sm:$0xff]
        %v880 = vld [vmem:[%s857 + $0xb0] sm:$0xff]
        %v881 = vld [vmem:[%s857 + $0xb8] sm:$0xff]
        %v882 = vld [vmem:[%s857 + $0xc0] sm:$0xff]
        %v883 = vld [vmem:[%s857 + $0xc8] sm:$0xff]
        %v884 = vld [vmem:[%s857 + $0xd0] sm:$0xff]
        %v885 = vld [vmem:[%s857 + $0xd8] sm:$0xff]
        %v886 = vld [vmem:[%s857 + $0xe0] sm:$0xff]
        %v887 = vld [vmem:[%s857 + $0xe8] sm:$0xff]
        %v888 = vld [vmem:[%s857 + $0xf0] sm:$0xff]
        %v889 = vld [vmem:[%s857 + $0xf8] sm:$0xff]
        %v890 = vld [vmem:[%s857 + $0x100] sm:$0xff]
        %v891 = vld [vmem:[%s857 + $0x108] sm:$0xff]
        %v892 = vld [vmem:[%s857 + $0x110] sm:$0xff]
        %v893 = vld [vmem:[%s857 + $0x118] sm:$0xff]
        %v894 = vld [vmem:[%s857 + $0x120] sm:$0xff]
        %v895 = vld [vmem:[%s857 + $0x128] sm:$0xff]
        %v896 = vld [vmem:[%s857 + $0x130] sm:$0xff]
        %v897 = vld [vmem:[%s857 + $0x138] sm:$0xff]
        %v898 = vld [vmem:[%s857 + $0x140] sm:$0xff]
        %v899 = vld [vmem:[%s857 + $0x148] sm:$0xff]
        %v900 = vld [vmem:[%s857 + $0x150] sm:$0xff]
        %v901 = vld [vmem:[%s857 + $0x158] sm:$0xff]
        %v902 = vld [vmem:[%s857 + $0x160] sm:$0xff]
        %v903 = vld [vmem:[%s857 + $0x168] sm:$0xff]
        %v904 = vld [vmem:[%s857 + $0x170] sm:$0xff]
        %v905 = vld [vmem:[%s857 + $0x178] sm:$0xff]
        %v907 = vunpack.c.l.b16 %v856
        %v908 = vpack.c.b16 %v907, %v907
        %v910 = vshrl.u32 %v908, 16
        %v961 = vunpack.c.l.b16 %v858
        %v962 = vunpack.c.h.b16 %v858
        %v963 = vunpack.c.l.b16 %v859
        %v964 = vunpack.c.h.b16 %v859
        %v965 = vunpack.c.l.b16 %v860
        %v966 = vunpack.c.h.b16 %v860
        %v967 = vunpack.c.l.b16 %v861
        %v968 = vunpack.c.h.b16 %v861
        %v969 = vunpack.c.l.b16 %v862
        %v970 = vunpack.c.h.b16 %v862
        %v971 = vunpack.c.l.b16 %v863
        %v972 = vunpack.c.h.b16 %v863
        %v973 = vunpack.c.l.b16 %v864
        %v974 = vunpack.c.h.b16 %v864
        %v975 = vunpack.c.l.b16 %v865
        %v976 = vunpack.c.h.b16 %v865
        %v977 = vunpack.c.l.b16 %v866
        %v978 = vunpack.c.h.b16 %v866
        %v979 = vunpack.c.l.b16 %v867
        %v980 = vunpack.c.h.b16 %v867
        %v981 = vunpack.c.l.b16 %v868
        %v982 = vunpack.c.h.b16 %v868
        %v983 = vunpack.c.l.b16 %v869
        %v984 = vunpack.c.h.b16 %v869
        %v985 = vunpack.c.l.b16 %v870
        %v986 = vunpack.c.h.b16 %v870
        %v987 = vunpack.c.l.b16 %v871
        %v988 = vunpack.c.h.b16 %v871
        %v989 = vunpack.c.l.b16 %v872
        %v990 = vunpack.c.h.b16 %v872
        %v991 = vunpack.c.l.b16 %v873
        %v992 = vunpack.c.h.b16 %v873
        %v993 = vunpack.c.l.b16 %v874
        %v994 = vunpack.c.h.b16 %v874
        %v995 = vunpack.c.l.b16 %v875
        %v996 = vunpack.c.h.b16 %v875
        %v997 = vunpack.c.l.b16 %v876
        %v998 = vunpack.c.h.b16 %v876
        %v999 = vunpack.c.l.b16 %v877
        %v1000 = vunpack.c.h.b16 %v877
        %v1001 = vunpack.c.l.b16 %v878
        %v1002 = vunpack.c.h.b16 %v878
        %v1003 = vunpack.c.l.b16 %v879
        %v1004 = vunpack.c.h.b16 %v879
        %v1005 = vunpack.c.l.b16 %v880
        %v1006 = vunpack.c.h.b16 %v880
        %v1007 = vunpack.c.l.b16 %v881
        %v1008 = vunpack.c.h.b16 %v881
        %v1009 = vunpack.c.l.b16 %v882
        %v1010 = vunpack.c.h.b16 %v882
        %v1011 = vunpack.c.l.b16 %v883
        %v1012 = vunpack.c.h.b16 %v883
        %v1013 = vunpack.c.l.b16 %v884
        %v1014 = vunpack.c.h.b16 %v884
        %v1015 = vunpack.c.l.b16 %v885
        %v1016 = vunpack.c.h.b16 %v885
        %v1017 = vunpack.c.l.b16 %v886
        %v1018 = vunpack.c.h.b16 %v886
        %v1019 = vunpack.c.l.b16 %v887
        %v1020 = vunpack.c.h.b16 %v887
        %v1021 = vunpack.c.l.b16 %v888
        %v1022 = vunpack.c.h.b16 %v888
        %v1023 = vunpack.c.l.b16 %v889
        %v1024 = vunpack.c.h.b16 %v889
        %v1025 = vunpack.c.l.b16 %v890
        %v1026 = vunpack.c.h.b16 %v890
        %v1027 = vunpack.c.l.b16 %v891
        %v1028 = vunpack.c.h.b16 %v891
        %v1029 = vunpack.c.l.b16 %v892
        %v1030 = vunpack.c.h.b16 %v892
        %v1031 = vunpack.c.l.b16 %v893
        %v1032 = vunpack.c.h.b16 %v893
        %v1033 = vunpack.c.l.b16 %v894
        %v1034 = vunpack.c.h.b16 %v894
        %v1035 = vunpack.c.l.b16 %v895
        %v1036 = vunpack.c.h.b16 %v895
        %v1037 = vunpack.c.l.b16 %v896
        %v1038 = vunpack.c.h.b16 %v896
        %v1039 = vunpack.c.l.b16 %v897
        %v1040 = vunpack.c.h.b16 %v897
        %v1041 = vunpack.c.l.b16 %v898
        %v1042 = vunpack.c.h.b16 %v898
        %v1043 = vunpack.c.l.b16 %v899
        %v1044 = vunpack.c.h.b16 %v899
        %v1045 = vunpack.c.l.b16 %v900
        %v1046 = vunpack.c.h.b16 %v900
        %v1047 = vunpack.c.l.b16 %v901
        %v1048 = vunpack.c.h.b16 %v901
        %v1049 = vunpack.c.l.b16 %v902
        %v1050 = vunpack.c.h.b16 %v902
        %v1051 = vunpack.c.l.b16 %v903
        %v1052 = vunpack.c.h.b16 %v903
        %v1053 = vunpack.c.l.b16 %v904
        %v1054 = vunpack.c.h.b16 %v904
        %v1055 = vunpack.c.l.b16 %v905
        %v1056 = vunpack.c.h.b16 %v905
        %v1057 = vpack.c.b16 %v967, %v961
        %v1058 = vpack.c.b16 %v968, %v962
        %v1059 = vpack.c.b16 %v969, %v963
        %v1060 = vpack.c.b16 %v970, %v964
        %v1061 = vpack.c.b16 %v971, %v965
        %v1062 = vpack.c.b16 %v972, %v966
        %v1063 = vpack.c.b16 %v979, %v973
        %v1064 = vpack.c.b16 %v980, %v974
        %v1065 = vpack.c.b16 %v981, %v975
        %v1066 = vpack.c.b16 %v982, %v976
        %v1067 = vpack.c.b16 %v983, %v977
        %v1068 = vpack.c.b16 %v984, %v978
        %v1069 = vpack.c.b16 %v991, %v985
        %v1070 = vpack.c.b16 %v992, %v986
        %v1071 = vpack.c.b16 %v993, %v987
        %v1072 = vpack.c.b16 %v994, %v988
        %v1073 = vpack.c.b16 %v995, %v989
        %v1074 = vpack.c.b16 %v996, %v990
        %v1075 = vpack.c.b16 %v1003, %v997
        %v1076 = vpack.c.b16 %v1004, %v998
        %v1077 = vpack.c.b16 %v1005, %v999
        %v1078 = vpack.c.b16 %v1006, %v1000
        %v1079 = vpack.c.b16 %v1007, %v1001
        %v1080 = vpack.c.b16 %v1008, %v1002
        %v1081 = vpack.c.b16 %v1015, %v1009
        %v1082 = vpack.c.b16 %v1016, %v1010
        %v1083 = vpack.c.b16 %v1017, %v1011
        %v1084 = vpack.c.b16 %v1018, %v1012
        %v1085 = vpack.c.b16 %v1019, %v1013
        %v1086 = vpack.c.b16 %v1020, %v1014
        %v1087 = vpack.c.b16 %v1027, %v1021
        %v1088 = vpack.c.b16 %v1028, %v1022
        %v1089 = vpack.c.b16 %v1029, %v1023
        %v1090 = vpack.c.b16 %v1030, %v1024
        %v1091 = vpack.c.b16 %v1031, %v1025
        %v1092 = vpack.c.b16 %v1032, %v1026
        %v1093 = vpack.c.b16 %v1039, %v1033
        %v1094 = vpack.c.b16 %v1040, %v1034
        %v1095 = vpack.c.b16 %v1041, %v1035
        %v1096 = vpack.c.b16 %v1042, %v1036
        %v1097 = vpack.c.b16 %v1043, %v1037
        %v1098 = vpack.c.b16 %v1044, %v1038
        %v1099 = vpack.c.b16 %v1051, %v1045
        %v1100 = vpack.c.b16 %v1052, %v1046
        %v1101 = vpack.c.b16 %v1053, %v1047
        %v1102 = vpack.c.b16 %v1054, %v1048
        %v1103 = vpack.c.b16 %v1055, %v1049
        %v1104 = vpack.c.b16 %v1056, %v1050
        %1153 = vmatprep.subr.bf16.mxu0 %v1058
        %1154 = vmatpush1.bf16.msra.mxu0 %v1057
        %1155 = vmatprep.subr.bf16.mxu0 %v1064
        %1156 = vmatpush1.bf16.msra.mxu0 %v1063
        %1157 = vmatprep.subr.bf16.mxu0 %v1070
        %1158 = vmatpush1.bf16.msra.mxu0 %v1069
        %1159 = vmatprep.subr.bf16.mxu0 %v1076
        %1160 = vmatpush1.bf16.msra.mxu0 %v1075
        %1161 = vmatprep.subr.bf16.mxu0 %v1082
        %1162 = vmatpush1.bf16.msra.mxu0 %v1081
        %1163 = vmatprep.subr.bf16.mxu0 %v1088
        %1164 = vmatpush1.bf16.msra.mxu0 %v1087
        %1165 = vmatprep.subr.bf16.mxu0 %v1094
        %1166 = vmatpush1.bf16.msra.mxu0 %v1093
        %1167 = vmatprep.subr.bf16.mxu0 %v1100
        %1168 = vmatpush1.bf16.msra.mxu0 %v1099
        %1169 = vmatprep.subr.bf16.mxu0 0
        %1170 = vmatpush1.bf16.msra.mxu0 0
        %1171 = vmatprep.subr.bf16.mxu0 0
        %1172 = vmatpush1.bf16.msra.mxu0 0
        %1173 = vmatprep.subr.bf16.mxu0 0
        %1174 = vmatpush1.bf16.msra.mxu0 0
        %1175 = vmatprep.subr.bf16.mxu0 0
        %1176 = vmatpush1.bf16.msra.mxu0 0
        %1177 = vmatprep.subr.bf16.mxu0 0
        %1178 = vmatpush1.bf16.msra.mxu0 0
        %1179 = vmatprep.subr.bf16.mxu0 0
        %1180 = vmatpush1.bf16.msra.mxu0 0
        %1181 = vmatprep.subr.bf16.mxu0 0
        %1182 = vmatpush1.bf16.msra.mxu0 0
        %1183 = vmatprep.subr.bf16.mxu0 0
        %1184 = vmatpush1.bf16.msra.mxu0 0
        %1185 = vmatprep.mubr.bf16.mxu0 0
        %1186 = vmatmul.mubr.bf16.gmra.mrb[0].mxu0 %v910
        %v1187 = vpop.f32.mrb[0].mxu0
        %v1188 = vadd.f32 0.0, %v1187
        %v1189 = vpop.f32.mrb[0].mxu0
        %v1190 = vadd.f32 0.0, %v1189
        %v1191 = vpop.f32.mrb[0].mxu0
        %v1192 = vpop.f32.mrb[0].mxu0
        %1193 = vdwg.mxu0
        %1194 = vmatprep.subr.bf16.mxu0 %v1060
        %1195 = vmatpush1.bf16.msra.mxu0 %v1059
        %1196 = vmatprep.subr.bf16.mxu0 %v1066
        %1197 = vmatpush1.bf16.msra.mxu0 %v1065
        %1198 = vmatprep.subr.bf16.mxu0 %v1072
        %1199 = vmatpush1.bf16.msra.mxu0 %v1071
        %1200 = vmatprep.subr.bf16.mxu0 %v1078
        %1201 = vmatpush1.bf16.msra.mxu0 %v1077
        %1202 = vmatprep.subr.bf16.mxu0 %v1084
        %1203 = vmatpush1.bf16.msra.mxu0 %v1083
        %1204 = vmatprep.subr.bf16.mxu0 %v1090
        %1205 = vmatpush1.bf16.msra.mxu0 %v1089
        %1206 = vmatprep.subr.bf16.mxu0 %v1096
        %1207 = vmatpush1.bf16.msra.mxu0 %v1095
        %1208 = vmatprep.subr.bf16.mxu0 %v1102
        %1209 = vmatpush1.bf16.msra.mxu0 %v1101
        %1210 = vmatprep.subr.bf16.mxu0 0
        %1211 = vmatpush1.bf16.msra.mxu0 0
        %1212 = vmatprep.subr.bf16.mxu0 0
        %1213 = vmatpush1.bf16.msra.mxu0 0
        %1214 = vmatprep.subr.bf16.mxu0 0
        %1215 = vmatpush1.bf16.msra.mxu0 0
        %1216 = vmatprep.subr.bf16.mxu0 0
        %1217 = vmatpush1.bf16.msra.mxu0 0
        %1218 = vmatprep.subr.bf16.mxu0 0
        %1219 = vmatpush1.bf16.msra.mxu0 0
        %1220 = vmatprep.subr.bf16.mxu0 0
        %1221 = vmatpush1.bf16.msra.mxu0 0
        %1222 = vmatprep.subr.bf16.mxu0 0
        %1223 = vmatpush1.bf16.msra.mxu0 0
        %1224 = vmatprep.subr.bf16.mxu0 0
        %1225 = vmatpush1.bf16.msra.mxu0 0
        %1226 = vmatprep.mubr.bf16.mxu0 0
        %1227 = vmatmul.mubr.bf16.gmra.mrb[0].mxu0 %v910
        %v1228 = vpop.f32.mrb[0].mxu0
        %v1229 = vadd.f32 0.0, %v1228
        %v1230 = vpop.f32.mrb[0].mxu0
        %v1231 = vadd.f32 0.0, %v1230
        %v1232 = vpop.f32.mrb[0].mxu0
        %v1233 = vpop.f32.mrb[0].mxu0
        %1234 = vdwg.mxu0
        %1235 = vmatprep.subr.bf16.mxu0 %v1062
        %1236 = vmatpush1.bf16.msra.mxu0 %v1061
        %1237 = vmatprep.subr.bf16.mxu0 %v1068
        %1238 = vmatpush1.bf16.msra.mxu0 %v1067
        %1239 = vmatprep.subr.bf16.mxu0 %v1074
        %1240 = vmatpush1.bf16.msra.mxu0 %v1073
        %1241 = vmatprep.subr.bf16.mxu0 %v1080
        %1242 = vmatpush1.bf16.msra.mxu0 %v1079
        %1243 = vmatprep.subr.bf16.mxu0 %v1086
        %1244 = vmatpush1.bf16.msra.mxu0 %v1085
        %1245 = vmatprep.subr.bf16.mxu0 %v1092
        %1246 = vmatpush1.bf16.msra.mxu0 %v1091
        %1247 = vmatprep.subr.bf16.mxu0 %v1098
        %1248 = vmatpush1.bf16.msra.mxu0 %v1097
        %1249 = vmatprep.subr.bf16.mxu0 %v1104
        %1250 = vmatpush1.bf16.msra.mxu0 %v1103
        %1251 = vmatprep.subr.bf16.mxu0 0
        %1252 = vmatpush1.bf16.msra.mxu0 0
        %1253 = vmatprep.subr.bf16.mxu0 0
        %1254 = vmatpush1.bf16.msra.mxu0 0
        %1255 = vmatprep.subr.bf16.mxu0 0
        %1256 = vmatpush1.bf16.msra.mxu0 0
        %1257 = vmatprep.subr.bf16.mxu0 0
        %1258 = vmatpush1.bf16.msra.mxu0 0
        %1259 = vmatprep.subr.bf16.mxu0 0
        %1260 = vmatpush1.bf16.msra.mxu0 0
        %1261 = vmatprep.subr.bf16.mxu0 0
        %1262 = vmatpush1.bf16.msra.mxu0 0
        %1263 = vmatprep.subr.bf16.mxu0 0
        %1264 = vmatpush1.bf16.msra.mxu0 0
        %1265 = vmatprep.subr.bf16.mxu0 0
        %1266 = vmatpush1.bf16.msra.mxu0 0
        %1267 = vmatprep.mubr.bf16.mxu0 0
        %1268 = vmatmul.mubr.bf16.gmra.mrb[0].mxu0 %v910
        %v1269 = vpop.f32.mrb[0].mxu0
        %v1270 = vadd.f32 0.0, %v1269
        %v1271 = vpop.f32.mrb[0].mxu0
        %v1272 = vadd.f32 0.0, %v1271
        %v1273 = vpop.f32.mrb[0].mxu0
        %v1274 = vpop.f32.mrb[0].mxu0
        %1275 = vdwg.mxu0
        %v1324 = vunpack.c.l.b16 %v808
        %v1325 = vunpack.c.h.b16 %v808
        %v1326 = vunpack.c.l.b16 %v809
        %v1327 = vunpack.c.h.b16 %v809
        %v1328 = vunpack.c.l.b16 %v810
        %v1329 = vunpack.c.h.b16 %v810
        %v1330 = vunpack.c.l.b16 %v811
        %v1331 = vunpack.c.h.b16 %v811
        %v1332 = vunpack.c.l.b16 %v812
        %v1333 = vunpack.c.h.b16 %v812
        %v1334 = vunpack.c.l.b16 %v813
        %v1335 = vunpack.c.h.b16 %v813
        %v1336 = vunpack.c.l.b16 %v814
        %v1337 = vunpack.c.h.b16 %v814
        %v1338 = vunpack.c.l.b16 %v815
        %v1339 = vunpack.c.h.b16 %v815
        %v1340 = vunpack.c.l.b16 %v816
        %v1341 = vunpack.c.h.b16 %v816
        %v1342 = vunpack.c.l.b16 %v817
        %v1343 = vunpack.c.h.b16 %v817
        %v1344 = vunpack.c.l.b16 %v818
        %v1345 = vunpack.c.h.b16 %v818
        %v1346 = vunpack.c.l.b16 %v819
        %v1347 = vunpack.c.h.b16 %v819
        %v1348 = vunpack.c.l.b16 %v820
        %v1349 = vunpack.c.h.b16 %v820
        %v1350 = vunpack.c.l.b16 %v821
        %v1351 = vunpack.c.h.b16 %v821
        %v1352 = vunpack.c.l.b16 %v822
        %v1353 = vunpack.c.h.b16 %v822
        %v1354 = vunpack.c.l.b16 %v823
        %v1355 = vunpack.c.h.b16 %v823
        %v1356 = vunpack.c.l.b16 %v824
        %v1357 = vunpack.c.h.b16 %v824
        %v1358 = vunpack.c.l.b16 %v825
        %v1359 = vunpack.c.h.b16 %v825
        %v1360 = vunpack.c.l.b16 %v826
        %v1361 = vunpack.c.h.b16 %v826
        %v1362 = vunpack.c.l.b16 %v827
        %v1363 = vunpack.c.h.b16 %v827
        %v1364 = vunpack.c.l.b16 %v828
        %v1365 = vunpack.c.h.b16 %v828
        %v1366 = vunpack.c.l.b16 %v829
        %v1367 = vunpack.c.h.b16 %v829
        %v1368 = vunpack.c.l.b16 %v830
        %v1369 = vunpack.c.h.b16 %v830
        %v1370 = vunpack.c.l.b16 %v831
        %v1371 = vunpack.c.h.b16 %v831
        %v1372 = vunpack.c.l.b16 %v832
        %v1373 = vunpack.c.h.b16 %v832
        %v1374 = vunpack.c.l.b16 %v833
        %v1375 = vunpack.c.h.b16 %v833
        %v1376 = vunpack.c.l.b16 %v834
        %v1377 = vunpack.c.h.b16 %v834
        %v1378 = vunpack.c.l.b16 %v835
        %v1379 = vunpack.c.h.b16 %v835
        %v1380 = vunpack.c.l.b16 %v836
        %v1381 = vunpack.c.h.b16 %v836
        %v1382 = vunpack.c.l.b16 %v837
        %v1383 = vunpack.c.h.b16 %v837
        %v1384 = vunpack.c.l.b16 %v838
        %v1385 = vunpack.c.h.b16 %v838
        %v1386 = vunpack.c.l.b16 %v839
        %v1387 = vunpack.c.h.b16 %v839
        %v1388 = vunpack.c.l.b16 %v840
        %v1389 = vunpack.c.h.b16 %v840
        %v1390 = vunpack.c.l.b16 %v841
        %v1391 = vunpack.c.h.b16 %v841
        %v1392 = vunpack.c.l.b16 %v842
        %v1393 = vunpack.c.h.b16 %v842
        %v1394 = vunpack.c.l.b16 %v843
        %v1395 = vunpack.c.h.b16 %v843
        %v1396 = vunpack.c.l.b16 %v844
        %v1397 = vunpack.c.h.b16 %v844
        %v1398 = vunpack.c.l.b16 %v845
        %v1399 = vunpack.c.h.b16 %v845
        %v1400 = vunpack.c.l.b16 %v846
        %v1401 = vunpack.c.h.b16 %v846
        %v1402 = vunpack.c.l.b16 %v847
        %v1403 = vunpack.c.h.b16 %v847
        %v1404 = vunpack.c.l.b16 %v848
        %v1405 = vunpack.c.h.b16 %v848
        %v1406 = vunpack.c.l.b16 %v849
        %v1407 = vunpack.c.h.b16 %v849
        %v1408 = vunpack.c.l.b16 %v850
        %v1409 = vunpack.c.h.b16 %v850
        %v1410 = vunpack.c.l.b16 %v851
        %v1411 = vunpack.c.h.b16 %v851
        %v1412 = vunpack.c.l.b16 %v852
        %v1413 = vunpack.c.h.b16 %v852
        %v1414 = vunpack.c.l.b16 %v853
        %v1415 = vunpack.c.h.b16 %v853
        %v1416 = vunpack.c.l.b16 %v854
        %v1417 = vunpack.c.h.b16 %v854
        %v1418 = vunpack.c.l.b16 %v855
        %v1419 = vunpack.c.h.b16 %v855
        %v1420 = vpack.c.b16 %v1330, %v1324
        %v1421 = vpack.c.b16 %v1331, %v1325
        %v1422 = vpack.c.b16 %v1332, %v1326
        %v1423 = vpack.c.b16 %v1333, %v1327
        %v1424 = vpack.c.b16 %v1334, %v1328
        %v1425 = vpack.c.b16 %v1335, %v1329
        %v1426 = vpack.c.b16 %v1342, %v1336
        %v1427 = vpack.c.b16 %v1343, %v1337
        %v1428 = vpack.c.b16 %v1344, %v1338
        %v1429 = vpack.c.b16 %v1345, %v1339
        %v1430 = vpack.c.b16 %v1346, %v1340
        %v1431 = vpack.c.b16 %v1347, %v1341
        %v1432 = vpack.c.b16 %v1354, %v1348
        %v1433 = vpack.c.b16 %v1355, %v1349
        %v1434 = vpack.c.b16 %v1356, %v1350
        %v1435 = vpack.c.b16 %v1357, %v1351
        %v1436 = vpack.c.b16 %v1358, %v1352
        %v1437 = vpack.c.b16 %v1359, %v1353
        %v1438 = vpack.c.b16 %v1366, %v1360
        %v1439 = vpack.c.b16 %v1367, %v1361
        %v1440 = vpack.c.b16 %v1368, %v1362
        %v1441 = vpack.c.b16 %v1369, %v1363
        %v1442 = vpack.c.b16 %v1370, %v1364
        %v1443 = vpack.c.b16 %v1371, %v1365
        %v1444 = vpack.c.b16 %v1378, %v1372
        %v1445 = vpack.c.b16 %v1379, %v1373
        %v1446 = vpack.c.b16 %v1380, %v1374
        %v1447 = vpack.c.b16 %v1381, %v1375
        %v1448 = vpack.c.b16 %v1382, %v1376
        %v1449 = vpack.c.b16 %v1383, %v1377
        %v1450 = vpack.c.b16 %v1390, %v1384
        %v1451 = vpack.c.b16 %v1391, %v1385
        %v1452 = vpack.c.b16 %v1392, %v1386
        %v1453 = vpack.c.b16 %v1393, %v1387
        %v1454 = vpack.c.b16 %v1394, %v1388
        %v1455 = vpack.c.b16 %v1395, %v1389
        %v1456 = vpack.c.b16 %v1402, %v1396
        %v1457 = vpack.c.b16 %v1403, %v1397
        %v1458 = vpack.c.b16 %v1404, %v1398
        %v1459 = vpack.c.b16 %v1405, %v1399
        %v1460 = vpack.c.b16 %v1406, %v1400
        %v1461 = vpack.c.b16 %v1407, %v1401
        %v1462 = vpack.c.b16 %v1414, %v1408
        %v1463 = vpack.c.b16 %v1415, %v1409
        %v1464 = vpack.c.b16 %v1416, %v1410
        %v1465 = vpack.c.b16 %v1417, %v1411
        %v1466 = vpack.c.b16 %v1418, %v1412
        %v1467 = vpack.c.b16 %v1419, %v1413
        %1516 = vmatprep.subr.bf16.mxu0 %v1421
        %1517 = vmatpush1.bf16.msra.mxu0 %v1420
        %1518 = vmatprep.subr.bf16.mxu0 %v1427
        %1519 = vmatpush1.bf16.msra.mxu0 %v1426
        %1520 = vmatprep.subr.bf16.mxu0 %v1433
        %1521 = vmatpush1.bf16.msra.mxu0 %v1432
        %1522 = vmatprep.subr.bf16.mxu0 %v1439
        %1523 = vmatpush1.bf16.msra.mxu0 %v1438
        %1524 = vmatprep.subr.bf16.mxu0 %v1445
        %1525 = vmatpush1.bf16.msra.mxu0 %v1444
        %1526 = vmatprep.subr.bf16.mxu0 %v1451
        %1527 = vmatpush1.bf16.msra.mxu0 %v1450
        %1528 = vmatprep.subr.bf16.mxu0 %v1457
        %1529 = vmatpush1.bf16.msra.mxu0 %v1456
        %1530 = vmatprep.subr.bf16.mxu0 %v1463
        %1531 = vmatpush1.bf16.msra.mxu0 %v1462
        %1532 = vmatprep.subr.bf16.mxu0 0
        %1533 = vmatpush1.bf16.msra.mxu0 0
        %1534 = vmatprep.subr.bf16.mxu0 0
        %1535 = vmatpush1.bf16.msra.mxu0 0
        %1536 = vmatprep.subr.bf16.mxu0 0
        %1537 = vmatpush1.bf16.msra.mxu0 0
        %1538 = vmatprep.subr.bf16.mxu0 0
        %1539 = vmatpush1.bf16.msra.mxu0 0
        %1540 = vmatprep.subr.bf16.mxu0 0
        %1541 = vmatpush1.bf16.msra.mxu0 0
        %1542 = vmatprep.subr.bf16.mxu0 0
        %1543 = vmatpush1.bf16.msra.mxu0 0
        %1544 = vmatprep.subr.bf16.mxu0 0
        %1545 = vmatpush1.bf16.msra.mxu0 0
        %1546 = vmatprep.subr.bf16.mxu0 0
        %1547 = vmatpush1.bf16.msra.mxu0 0
        %1548 = vmatprep.mubr.bf16.mxu0 0
        %1549 = vmatmul.mubr.bf16.gmra.mrb[0].mxu0 %v856
        %v1550 = vpop.f32.mrb[0].mxu0
        %v1551 = vadd.f32 %v1188, %v1550
        %v1552 = vpop.f32.mrb[0].mxu0
        %v1553 = vadd.f32 %v1190, %v1552
        %v1554 = vpop.f32.mrb[0].mxu0
        %v1555 = vpop.f32.mrb[0].mxu0
        %1556 = vdwg.mxu0
        %1557 = vmatprep.subr.bf16.mxu0 %v1423
        %1558 = vmatpush1.bf16.msra.mxu0 %v1422
        %1559 = vmatprep.subr.bf16.mxu0 %v1429
        %1560 = vmatpush1.bf16.msra.mxu0 %v1428
        %1561 = vmatprep.subr.bf16.mxu0 %v1435
        %1562 = vmatpush1.bf16.msra.mxu0 %v1434
        %1563 = vmatprep.subr.bf16.mxu0 %v1441
        %1564 = vmatpush1.bf16.msra.mxu0 %v1440
        %1565 = vmatprep.subr.bf16.mxu0 %v1447
        %1566 = vmatpush1.bf16.msra.mxu0 %v1446
        %1567 = vmatprep.subr.bf16.mxu0 %v1453
        %1568 = vmatpush1.bf16.msra.mxu0 %v1452
        %1569 = vmatprep.subr.bf16.mxu0 %v1459
        %1570 = vmatpush1.bf16.msra.mxu0 %v1458
        %1571 = vmatprep.subr.bf16.mxu0 %v1465
        %1572 = vmatpush1.bf16.msra.mxu0 %v1464
        %1573 = vmatprep.subr.bf16.mxu0 0
        %1574 = vmatpush1.bf16.msra.mxu0 0
        %1575 = vmatprep.subr.bf16.mxu0 0
        %1576 = vmatpush1.bf16.msra.mxu0 0
        %1577 = vmatprep.subr.bf16.mxu0 0
        %1578 = vmatpush1.bf16.msra.mxu0 0
        %1579 = vmatprep.subr.bf16.mxu0 0
        %1580 = vmatpush1.bf16.msra.mxu0 0
        %1581 = vmatprep.subr.bf16.mxu0 0
        %1582 = vmatpush1.bf16.msra.mxu0 0
        %1583 = vmatprep.subr.bf16.mxu0 0
        %1584 = vmatpush1.bf16.msra.mxu0 0
        %1585 = vmatprep.subr.bf16.mxu0 0
        %1586 = vmatpush1.bf16.msra.mxu0 0
        %1587 = vmatprep.subr.bf16.mxu0 0
        %1588 = vmatpush1.bf16.msra.mxu0 0
        %1589 = vmatprep.mubr.bf16.mxu0 0
        %1590 = vmatmul.mubr.bf16.gmra.mrb[0].mxu0 %v856
        %v1591 = vpop.f32.mrb[0].mxu0
        %v1592 = vadd.f32 %v1229, %v1591
        %v1593 = vpop.f32.mrb[0].mxu0
        %v1594 = vadd.f32 %v1231, %v1593
        %v1595 = vpop.f32.mrb[0].mxu0
        %v1596 = vpop.f32.mrb[0].mxu0
        %1597 = vdwg.mxu0
        %1598 = vmatprep.subr.bf16.mxu0 %v1425
        %1599 = vmatpush1.bf16.msra.mxu0 %v1424
        %1600 = vmatprep.subr.bf16.mxu0 %v1431
        %1601 = vmatpush1.bf16.msra.mxu0 %v1430
        %1602 = vmatprep.subr.bf16.mxu0 %v1437
        %1603 = vmatpush1.bf16.msra.mxu0 %v1436
        %1604 = vmatprep.subr.bf16.mxu0 %v1443
        %1605 = vmatpush1.bf16.msra.mxu0 %v1442
        %1606 = vmatprep.subr.bf16.mxu0 %v1449
        %1607 = vmatpush1.bf16.msra.mxu0 %v1448
        %1608 = vmatprep.subr.bf16.mxu0 %v1455
        %1609 = vmatpush1.bf16.msra.mxu0 %v1454
        %1610 = vmatprep.subr.bf16.mxu0 %v1461
        %1611 = vmatpush1.bf16.msra.mxu0 %v1460
        %1612 = vmatprep.subr.bf16.mxu0 %v1467
        %1613 = vmatpush1.bf16.msra.mxu0 %v1466
        %1614 = vmatprep.subr.bf16.mxu0 0
        %1615 = vmatpush1.bf16.msra.mxu0 0
        %1616 = vmatprep.subr.bf16.mxu0 0
        %1617 = vmatpush1.bf16.msra.mxu0 0
        %1618 = vmatprep.subr.bf16.mxu0 0
        %1619 = vmatpush1.bf16.msra.mxu0 0
        %1620 = vmatprep.subr.bf16.mxu0 0
        %1621 = vmatpush1.bf16.msra.mxu0 0
        %1622 = vmatprep.subr.bf16.mxu0 0
        %1623 = vmatpush1.bf16.msra.mxu0 0
        %1624 = vmatprep.subr.bf16.mxu0 0
        %1625 = vmatpush1.bf16.msra.mxu0 0
        %1626 = vmatprep.subr.bf16.mxu0 0
        %1627 = vmatpush1.bf16.msra.mxu0 0
        %1628 = vmatprep.subr.bf16.mxu0 0
        %1629 = vmatpush1.bf16.msra.mxu0 0
        %1630 = vmatprep.mubr.bf16.mxu0 0
        %1631 = vmatmul.mubr.bf16.gmra.mrb[0].mxu0 %v856
        %v1632 = vpop.f32.mrb[0].mxu0
        %v1633 = vadd.f32 %v1270, %v1632
        %v1634 = vpop.f32.mrb[0].mxu0
        %v1635 = vadd.f32 %v1272, %v1634
        %v1636 = vpop.f32.mrb[0].mxu0
        %v1637 = vpop.f32.mrb[0].mxu0
        %1638 = vdwg.mxu0
        %s1639 = scalar_lea.vmem %s5, 768
        %v1640 = vld [vmem:[%s1639] sm:$0xff]
        %v1641 = vld [vmem:[%s1639 + $0x8] sm:$0xff]
        %v1642 = vld [vmem:[%s1639 + $0x10] sm:$0xff]
        %v1643 = vld [vmem:[%s1639 + $0x18] sm:$0xff]
        %v1644 = vld [vmem:[%s1639 + $0x20] sm:$0xff]
        %v1645 = vld [vmem:[%s1639 + $0x28] sm:$0xff]
        %v1646 = vld [vmem:[%s1639 + $0x30] sm:$0xff]
        %v1647 = vld [vmem:[%s1639 + $0x38] sm:$0xff]
        %v1648 = vld [vmem:[%s1639 + $0x40] sm:$0xff]
        %v1649 = vld [vmem:[%s1639 + $0x48] sm:$0xff]
        %v1650 = vld [vmem:[%s1639 + $0x50] sm:$0xff]
        %v1651 = vld [vmem:[%s1639 + $0x58] sm:$0xff]
        %v1652 = vld [vmem:[%s1639 + $0x60] sm:$0xff]
        %v1653 = vld [vmem:[%s1639 + $0x68] sm:$0xff]
        %v1654 = vld [vmem:[%s1639 + $0x70] sm:$0xff]
        %v1655 = vld [vmem:[%s1639 + $0x78] sm:$0xff]
        %v1656 = vld [vmem:[%s1639 + $0x80] sm:$0xff]
        %v1657 = vld [vmem:[%s1639 + $0x88] sm:$0xff]
        %v1658 = vld [vmem:[%s1639 + $0x90] sm:$0xff]
        %v1659 = vld [vmem:[%s1639 + $0x98] sm:$0xff]
        %v1660 = vld [vmem:[%s1639 + $0xa0] sm:$0xff]
        %v1661 = vld [vmem:[%s1639 + $0xa8] sm:$0xff]
        %v1662 = vld [vmem:[%s1639 + $0xb0] sm:$0xff]
        %v1663 = vld [vmem:[%s1639 + $0xb8] sm:$0xff]
        %v1664 = vld [vmem:[%s1639 + $0xc0] sm:$0xff]
        %v1665 = vld [vmem:[%s1639 + $0xc8] sm:$0xff]
        %v1666 = vld [vmem:[%s1639 + $0xd0] sm:$0xff]
        %v1667 = vld [vmem:[%s1639 + $0xd8] sm:$0xff]
        %v1668 = vld [vmem:[%s1639 + $0xe0] sm:$0xff]
        %v1669 = vld [vmem:[%s1639 + $0xe8] sm:$0xff]
        %v1670 = vld [vmem:[%s1639 + $0xf0] sm:$0xff]
        %v1671 = vld [vmem:[%s1639 + $0xf8] sm:$0xff]
        %v1672 = vld [vmem:[%s1639 + $0x100] sm:$0xff]
        %v1673 = vld [vmem:[%s1639 + $0x108] sm:$0xff]
        %v1674 = vld [vmem:[%s1639 + $0x110] sm:$0xff]
        %v1675 = vld [vmem:[%s1639 + $0x118] sm:$0xff]
        %v1676 = vld [vmem:[%s1639 + $0x120] sm:$0xff]
        %v1677 = vld [vmem:[%s1639 + $0x128] sm:$0xff]
        %v1678 = vld [vmem:[%s1639 + $0x130] sm:$0xff]
        %v1679 = vld [vmem:[%s1639 + $0x138] sm:$0xff]
        %v1680 = vld [vmem:[%s1639 + $0x140] sm:$0xff]
        %v1681 = vld [vmem:[%s1639 + $0x148] sm:$0xff]
        %v1682 = vld [vmem:[%s1639 + $0x150] sm:$0xff]
        %v1683 = vld [vmem:[%s1639 + $0x158] sm:$0xff]
        %v1684 = vld [vmem:[%s1639 + $0x160] sm:$0xff]
        %v1685 = vld [vmem:[%s1639 + $0x168] sm:$0xff]
        %v1686 = vld [vmem:[%s1639 + $0x170] sm:$0xff]
        %v1687 = vld [vmem:[%s1639 + $0x178] sm:$0xff]
        %v1688 = vld [vmem:[#allocation2] sm:$0x2]
        %v1690 = vunpack.c.l.b16 %v1688
        %v1691 = vpack.c.b16 %v1690, %v1690
        %v1692 = vrot.slane %v1691, 1
        %v1742 = vunpack.c.l.b16 %v1640
        %v1743 = vunpack.c.h.b16 %v1640
        %v1744 = vunpack.c.l.b16 %v1641
        %v1745 = vunpack.c.h.b16 %v1641
        %v1746 = vunpack.c.l.b16 %v1642
        %v1747 = vunpack.c.h.b16 %v1642
        %v1748 = vunpack.c.l.b16 %v1643
        %v1749 = vunpack.c.h.b16 %v1643
        %v1750 = vunpack.c.l.b16 %v1644
        %v1751 = vunpack.c.h.b16 %v1644
        %v1752 = vunpack.c.l.b16 %v1645
        %v1753 = vunpack.c.h.b16 %v1645
        %v1754 = vunpack.c.l.b16 %v1646
        %v1755 = vunpack.c.h.b16 %v1646
        %v1756 = vunpack.c.l.b16 %v1647
        %v1757 = vunpack.c.h.b16 %v1647
        %v1758 = vunpack.c.l.b16 %v1648
        %v1759 = vunpack.c.h.b16 %v1648
        %v1760 = vunpack.c.l.b16 %v1649
        %v1761 = vunpack.c.h.b16 %v1649
        %v1762 = vunpack.c.l.b16 %v1650
        %v1763 = vunpack.c.h.b16 %v1650
        %v1764 = vunpack.c.l.b16 %v1651
        %v1765 = vunpack.c.h.b16 %v1651
        %v1766 = vunpack.c.l.b16 %v1652
        %v1767 = vunpack.c.h.b16 %v1652
        %v1768 = vunpack.c.l.b16 %v1653
        %v1769 = vunpack.c.h.b16 %v1653
        %v1770 = vunpack.c.l.b16 %v1654
        %v1771 = vunpack.c.h.b16 %v1654
        %v1772 = vunpack.c.l.b16 %v1655
        %v1773 = vunpack.c.h.b16 %v1655
        %v1774 = vunpack.c.l.b16 %v1656
        %v1775 = vunpack.c.h.b16 %v1656
        %v1776 = vunpack.c.l.b16 %v1657
        %v1777 = vunpack.c.h.b16 %v1657
        %v1778 = vunpack.c.l.b16 %v1658
        %v1779 = vunpack.c.h.b16 %v1658
        %v1780 = vunpack.c.l.b16 %v1659
        %v1781 = vunpack.c.h.b16 %v1659
        %v1782 = vunpack.c.l.b16 %v1660
        %v1783 = vunpack.c.h.b16 %v1660
        %v1784 = vunpack.c.l.b16 %v1661
        %v1785 = vunpack.c.h.b16 %v1661
        %v1786 = vunpack.c.l.b16 %v1662
        %v1787 = vunpack.c.h.b16 %v1662
        %v1788 = vunpack.c.l.b16 %v1663
        %v1789 = vunpack.c.h.b16 %v1663
        %v1790 = vunpack.c.l.b16 %v1664
        %v1791 = vunpack.c.h.b16 %v1664
        %v1792 = vunpack.c.l.b16 %v1665
        %v1793 = vunpack.c.h.b16 %v1665
        %v1794 = vunpack.c.l.b16 %v1666
        %v1795 = vunpack.c.h.b16 %v1666
        %v1796 = vunpack.c.l.b16 %v1667
        %v1797 = vunpack.c.h.b16 %v1667
        %v1798 = vunpack.c.l.b16 %v1668
        %v1799 = vunpack.c.h.b16 %v1668
        %v1800 = vunpack.c.l.b16 %v1669
        %v1801 = vunpack.c.h.b16 %v1669
        %v1802 = vunpack.c.l.b16 %v1670
        %v1803 = vunpack.c.h.b16 %v1670
        %v1804 = vunpack.c.l.b16 %v1671
        %v1805 = vunpack.c.h.b16 %v1671
        %v1806 = vunpack.c.l.b16 %v1672
        %v1807 = vunpack.c.h.b16 %v1672
        %v1808 = vunpack.c.l.b16 %v1673
        %v1809 = vunpack.c.h.b16 %v1673
        %v1810 = vunpack.c.l.b16 %v1674
        %v1811 = vunpack.c.h.b16 %v1674
        %v1812 = vunpack.c.l.b16 %v1675
        %v1813 = vunpack.c.h.b16 %v1675
        %v1814 = vunpack.c.l.b16 %v1676
        %v1815 = vunpack.c.h.b16 %v1676
        %v1816 = vunpack.c.l.b16 %v1677
        %v1817 = vunpack.c.h.b16 %v1677
        %v1818 = vunpack.c.l.b16 %v1678
        %v1819 = vunpack.c.h.b16 %v1678
        %v1820 = vunpack.c.l.b16 %v1679
        %v1821 = vunpack.c.h.b16 %v1679
        %v1822 = vunpack.c.l.b16 %v1680
        %v1823 = vunpack.c.h.b16 %v1680
        %v1824 = vunpack.c.l.b16 %v1681
        %v1825 = vunpack.c.h.b16 %v1681
        %v1826 = vunpack.c.l.b16 %v1682
        %v1827 = vunpack.c.h.b16 %v1682
        %v1828 = vunpack.c.l.b16 %v1683
        %v1829 = vunpack.c.h.b16 %v1683
        %v1830 = vunpack.c.l.b16 %v1684
        %v1831 = vunpack.c.h.b16 %v1684
        %v1832 = vunpack.c.l.b16 %v1685
        %v1833 = vunpack.c.h.b16 %v1685
        %v1834 = vunpack.c.l.b16 %v1686
        %v1835 = vunpack.c.h.b16 %v1686
        %v1836 = vunpack.c.l.b16 %v1687
        %v1837 = vunpack.c.h.b16 %v1687
        %v1838 = vpack.c.b16 %v1748, %v1742
        %v1839 = vpack.c.b16 %v1749, %v1743
        %v1840 = vpack.c.b16 %v1750, %v1744
        %v1841 = vpack.c.b16 %v1751, %v1745
        %v1842 = vpack.c.b16 %v1752, %v1746
        %v1843 = vpack.c.b16 %v1753, %v1747
        %v1844 = vpack.c.b16 %v1760, %v1754
        %v1845 = vpack.c.b16 %v1761, %v1755
        %v1846 = vpack.c.b16 %v1762, %v1756
        %v1847 = vpack.c.b16 %v1763, %v1757
        %v1848 = vpack.c.b16 %v1764, %v1758
        %v1849 = vpack.c.b16 %v1765, %v1759
        %v1850 = vpack.c.b16 %v1772, %v1766
        %v1851 = vpack.c.b16 %v1773, %v1767
        %v1852 = vpack.c.b16 %v1774, %v1768
        %v1853 = vpack.c.b16 %v1775, %v1769
        %v1854 = vpack.c.b16 %v1776, %v1770
        %v1855 = vpack.c.b16 %v1777, %v1771
        %v1856 = vpack.c.b16 %v1784, %v1778
        %v1857 = vpack.c.b16 %v1785, %v1779
        %v1858 = vpack.c.b16 %v1786, %v1780
        %v1859 = vpack.c.b16 %v1787, %v1781
        %v1860 = vpack.c.b16 %v1788, %v1782
        %v1861 = vpack.c.b16 %v1789, %v1783
        %v1862 = vpack.c.b16 %v1796, %v1790
        %v1863 = vpack.c.b16 %v1797, %v1791
        %v1864 = vpack.c.b16 %v1798, %v1792
        %v1865 = vpack.c.b16 %v1799, %v1793
        %v1866 = vpack.c.b16 %v1800, %v1794
        %v1867 = vpack.c.b16 %v1801, %v1795
        %v1868 = vpack.c.b16 %v1808, %v1802
        %v1869 = vpack.c.b16 %v1809, %v1803
        %v1870 = vpack.c.b16 %v1810, %v1804
        %v1871 = vpack.c.b16 %v1811, %v1805
        %v1872 = vpack.c.b16 %v1812, %v1806
        %v1873 = vpack.c.b16 %v1813, %v1807
        %v1874 = vpack.c.b16 %v1820, %v1814
        %v1875 = vpack.c.b16 %v1821, %v1815
        %v1876 = vpack.c.b16 %v1822, %v1816
        %v1877 = vpack.c.b16 %v1823, %v1817
        %v1878 = vpack.c.b16 %v1824, %v1818
        %v1879 = vpack.c.b16 %v1825, %v1819
        %v1880 = vpack.c.b16 %v1832, %v1826
        %v1881 = vpack.c.b16 %v1833, %v1827
        %v1882 = vpack.c.b16 %v1834, %v1828
        %v1883 = vpack.c.b16 %v1835, %v1829
        %v1884 = vpack.c.b16 %v1836, %v1830
        %v1885 = vpack.c.b16 %v1837, %v1831
        %1934 = vmatprep.subr.bf16.mxu0 %v1839
        %1935 = vmatpush1.bf16.msra.mxu0 %v1838
        %1936 = vmatprep.subr.bf16.mxu0 %v1845
        %1937 = vmatpush1.bf16.msra.mxu0 %v1844
        %1938 = vmatprep.subr.bf16.mxu0 %v1851
        %1939 = vmatpush1.bf16.msra.mxu0 %v1850
        %1940 = vmatprep.subr.bf16.mxu0 %v1857
        %1941 = vmatpush1.bf16.msra.mxu0 %v1856
        %1942 = vmatprep.subr.bf16.mxu0 %v1863
        %1943 = vmatpush1.bf16.msra.mxu0 %v1862
        %1944 = vmatprep.subr.bf16.mxu0 %v1869
        %1945 = vmatpush1.bf16.msra.mxu0 %v1868
        %1946 = vmatprep.subr.bf16.mxu0 %v1875
        %1947 = vmatpush1.bf16.msra.mxu0 %v1874
        %1948 = vmatprep.subr.bf16.mxu0 %v1881
        %1949 = vmatpush1.bf16.msra.mxu0 %v1880
        %1950 = vmatprep.subr.bf16.mxu0 0
        %1951 = vmatpush1.bf16.msra.mxu0 0
        %1952 = vmatprep.subr.bf16.mxu0 0
        %1953 = vmatpush1.bf16.msra.mxu0 0
        %1954 = vmatprep.subr.bf16.mxu0 0
        %1955 = vmatpush1.bf16.msra.mxu0 0
        %1956 = vmatprep.subr.bf16.mxu0 0
        %1957 = vmatpush1.bf16.msra.mxu0 0
        %1958 = vmatprep.subr.bf16.mxu0 0
        %1959 = vmatpush1.bf16.msra.mxu0 0
        %1960 = vmatprep.subr.bf16.mxu0 0
        %1961 = vmatpush1.bf16.msra.mxu0 0
        %1962 = vmatprep.subr.bf16.mxu0 0
        %1963 = vmatpush1.bf16.msra.mxu0 0
        %1964 = vmatprep.subr.bf16.mxu0 0
        %1965 = vmatpush1.bf16.msra.mxu0 0
        %1966 = vmatprep.mubr.bf16.mxu0 0
        %1967 = vmatmul.mubr.bf16.gmra.mrb[0].mxu0 %v1692
        %v1968 = vpop.f32.mrb[0].mxu0
        %v1969 = vadd.f32 0.0, %v1968
        %v1970 = vpop.f32.mrb[0].mxu0
        %v1971 = vadd.f32 0.0, %v1970
        %v1972 = vpop.f32.mrb[0].mxu0
        %v1973 = vpop.f32.mrb[0].mxu0
        %1974 = vdwg.mxu0
        %1975 = vmatprep.subr.bf16.mxu0 %v1841
        %1976 = vmatpush1.bf16.msra.mxu0 %v1840
        %1977 = vmatprep.subr.bf16.mxu0 %v1847
        %1978 = vmatpush1.bf16.msra.mxu0 %v1846
        %1979 = vmatprep.subr.bf16.mxu0 %v1853
        %1980 = vmatpush1.bf16.msra.mxu0 %v1852
        %1981 = vmatprep.subr.bf16.mxu0 %v1859
        %1982 = vmatpush1.bf16.msra.mxu0 %v1858
        %1983 = vmatprep.subr.bf16.mxu0 %v1865
        %1984 = vmatpush1.bf16.msra.mxu0 %v1864
        %1985 = vmatprep.subr.bf16.mxu0 %v1871
        %1986 = vmatpush1.bf16.msra.mxu0 %v1870
        %1987 = vmatprep.subr.bf16.mxu0 %v1877
        %1988 = vmatpush1.bf16.msra.mxu0 %v1876
        %1989 = vmatprep.subr.bf16.mxu0 %v1883
        %1990 = vmatpush1.bf16.msra.mxu0 %v1882
        %1991 = vmatprep.subr.bf16.mxu0 0
        %1992 = vmatpush1.bf16.msra.mxu0 0
        %1993 = vmatprep.subr.bf16.mxu0 0
        %1994 = vmatpush1.bf16.msra.mxu0 0
        %1995 = vmatprep.subr.bf16.mxu0 0
        %1996 = vmatpush1.bf16.msra.mxu0 0
        %1997 = vmatprep.subr.bf16.mxu0 0
        %1998 = vmatpush1.bf16.msra.mxu0 0
        %1999 = vmatprep.subr.bf16.mxu0 0
        %2000 = vmatpush1.bf16.msra.mxu0 0
        %2001 = vmatprep.subr.bf16.mxu0 0
        %2002 = vmatpush1.bf16.msra.mxu0 0
        %2003 = vmatprep.subr.bf16.mxu0 0
        %2004 = vmatpush1.bf16.msra.mxu0 0
        %2005 = vmatprep.subr.bf16.mxu0 0
        %2006 = vmatpush1.bf16.msra.mxu0 0
        %2007 = vmatprep.mubr.bf16.mxu0 0
        %2008 = vmatmul.mubr.bf16.gmra.mrb[0].mxu0 %v1692
        %v2009 = vpop.f32.mrb[0].mxu0
        %v2010 = vadd.f32 0.0, %v2009
        %v2011 = vpop.f32.mrb[0].mxu0
        %v2012 = vadd.f32 0.0, %v2011
        %v2013 = vpop.f32.mrb[0].mxu0
        %v2014 = vpop.f32.mrb[0].mxu0
        %2015 = vdwg.mxu0
        %2016 = vmatprep.subr.bf16.mxu0 %v1843
        %2017 = vmatpush1.bf16.msra.mxu0 %v1842
        %2018 = vmatprep.subr.bf16.mxu0 %v1849
        %2019 = vmatpush1.bf16.msra.mxu0 %v1848
        %2020 = vmatprep.subr.bf16.mxu0 %v1855
        %2021 = vmatpush1.bf16.msra.mxu0 %v1854
        %2022 = vmatprep.subr.bf16.mxu0 %v1861
        %2023 = vmatpush1.bf16.msra.mxu0 %v1860
        %2024 = vmatprep.subr.bf16.mxu0 %v1867
        %2025 = vmatpush1.bf16.msra.mxu0 %v1866
        %2026 = vmatprep.subr.bf16.mxu0 %v1873
        %2027 = vmatpush1.bf16.msra.mxu0 %v1872
        %2028 = vmatprep.subr.bf16.mxu0 %v1879
        %2029 = vmatpush1.bf16.msra.mxu0 %v1878
        %2030 = vmatprep.subr.bf16.mxu0 %v1885
        %2031 = vmatpush1.bf16.msra.mxu0 %v1884
        %2032 = vmatprep.subr.bf16.mxu0 0
        %2033 = vmatpush1.bf16.msra.mxu0 0
        %2034 = vmatprep.subr.bf16.mxu0 0
        %2035 = vmatpush1.bf16.msra.mxu0 0
        %2036 = vmatprep.subr.bf16.mxu0 0
        %2037 = vmatpush1.bf16.msra.mxu0 0
        %2038 = vmatprep.subr.bf16.mxu0 0
        %2039 = vmatpush1.bf16.msra.mxu0 0
        %2040 = vmatprep.subr.bf16.mxu0 0
        %2041 = vmatpush1.bf16.msra.mxu0 0
        %2042 = vmatprep.subr.bf16.mxu0 0
        %2043 = vmatpush1.bf16.msra.mxu0 0
        %2044 = vmatprep.subr.bf16.mxu0 0
        %2045 = vmatpush1.bf16.msra.mxu0 0
        %2046 = vmatprep.subr.bf16.mxu0 0
        %2047 = vmatpush1.bf16.msra.mxu0 0
        %2048 = vmatprep.mubr.bf16.mxu0 0
        %2049 = vmatmul.mubr.bf16.gmra.mrb[0].mxu0 %v1692
        %v2050 = vpop.f32.mrb[0].mxu0
        %v2051 = vadd.f32 0.0, %v2050
        %v2052 = vpop.f32.mrb[0].mxu0
        %v2053 = vadd.f32 0.0, %v2052
        %v2054 = vpop.f32.mrb[0].mxu0
        %v2055 = vpop.f32.mrb[0].mxu0
        %2056 = vdwg.mxu0
        %v2057 = vadd.f32 %v1551, %v1969
        %v2058 = vadd.f32 %v1553, %v1971
        %v2059 = vadd.f32 %v1592, %v2010
        %v2060 = vadd.f32 %v1594, %v2012
        %v2061 = vadd.f32 %v1633, %v2051
        %v2062 = vadd.f32 %v1635, %v2053
        %s2063 = scalar_lea.vmem %s5, 1152
        %v2064 = vld [vmem:[%s2063] sm:$0xff]
        %v2065 = vld [vmem:[%s2063 + $0x8] sm:$0xff]
        %v2066 = vld [vmem:[%s2063 + $0x10] sm:$0xff]
        %v2067 = vld [vmem:[%s2063 + $0x18] sm:$0xff]
        %v2068 = vld [vmem:[%s2063 + $0x20] sm:$0xff]
        %v2069 = vld [vmem:[%s2063 + $0x28] sm:$0xff]
        %v2070 = vld [vmem:[%s2063 + $0x30] sm:$0xff]
        %v2071 = vld [vmem:[%s2063 + $0x38] sm:$0xff]
        %v2072 = vld [vmem:[%s2063 + $0x40] sm:$0xff]
        %v2073 = vld [vmem:[%s2063 + $0x48] sm:$0xff]
        %v2074 = vld [vmem:[%s2063 + $0x50] sm:$0xff]
        %v2075 = vld [vmem:[%s2063 + $0x58] sm:$0xff]
        %v2076 = vld [vmem:[%s2063 + $0x60] sm:$0xff]
        %v2077 = vld [vmem:[%s2063 + $0x68] sm:$0xff]
        %v2078 = vld [vmem:[%s2063 + $0x70] sm:$0xff]
        %v2079 = vld [vmem:[%s2063 + $0x78] sm:$0xff]
        %v2080 = vld [vmem:[%s2063 + $0x80] sm:$0xff]
        %v2081 = vld [vmem:[%s2063 + $0x88] sm:$0xff]
        %v2082 = vld [vmem:[%s2063 + $0x90] sm:$0xff]
        %v2083 = vld [vmem:[%s2063 + $0x98] sm:$0xff]
        %v2084 = vld [vmem:[%s2063 + $0xa0] sm:$0xff]
        %v2085 = vld [vmem:[%s2063 + $0xa8] sm:$0xff]
        %v2086 = vld [vmem:[%s2063 + $0xb0] sm:$0xff]
        %v2087 = vld [vmem:[%s2063 + $0xb8] sm:$0xff]
        %v2088 = vld [vmem:[%s2063 + $0xc0] sm:$0xff]
        %v2089 = vld [vmem:[%s2063 + $0xc8] sm:$0xff]
        %v2090 = vld [vmem:[%s2063 + $0xd0] sm:$0xff]
        %v2091 = vld [vmem:[%s2063 + $0xd8] sm:$0xff]
        %v2092 = vld [vmem:[%s2063 + $0xe0] sm:$0xff]
        %v2093 = vld [vmem:[%s2063 + $0xe8] sm:$0xff]
        %v2094 = vld [vmem:[%s2063 + $0xf0] sm:$0xff]
        %v2095 = vld [vmem:[%s2063 + $0xf8] sm:$0xff]
        %v2096 = vld [vmem:[%s2063 + $0x100] sm:$0xff]
        %v2097 = vld [vmem:[%s2063 + $0x108] sm:$0xff]
        %v2098 = vld [vmem:[%s2063 + $0x110] sm:$0xff]
        %v2099 = vld [vmem:[%s2063 + $0x118] sm:$0xff]
        %v2100 = vld [vmem:[%s2063 + $0x120] sm:$0xff]
        %v2101 = vld [vmem:[%s2063 + $0x128] sm:$0xff]
        %v2102 = vld [vmem:[%s2063 + $0x130] sm:$0xff]
        %v2103 = vld [vmem:[%s2063 + $0x138] sm:$0xff]
        %v2104 = vld [vmem:[%s2063 + $0x140] sm:$0xff]
        %v2105 = vld [vmem:[%s2063 + $0x148] sm:$0xff]
        %v2106 = vld [vmem:[%s2063 + $0x150] sm:$0xff]
        %v2107 = vld [vmem:[%s2063 + $0x158] sm:$0xff]
        %v2108 = vld [vmem:[%s2063 + $0x160] sm:$0xff]
        %v2109 = vld [vmem:[%s2063 + $0x168] sm:$0xff]
        %v2110 = vld [vmem:[%s2063 + $0x170] sm:$0xff]
        %v2111 = vld [vmem:[%s2063 + $0x178] sm:$0xff]
        %v2113 = vshrl.u32 %v1691, 16
        %v2115 = vrot.slane %v2113, 1
        %v2165 = vunpack.c.l.b16 %v2064
        %v2166 = vunpack.c.h.b16 %v2064
        %v2167 = vunpack.c.l.b16 %v2065
        %v2168 = vunpack.c.h.b16 %v2065
        %v2169 = vunpack.c.l.b16 %v2066
        %v2170 = vunpack.c.h.b16 %v2066
        %v2171 = vunpack.c.l.b16 %v2067
        %v2172 = vunpack.c.h.b16 %v2067
        %v2173 = vunpack.c.l.b16 %v2068
        %v2174 = vunpack.c.h.b16 %v2068
        %v2175 = vunpack.c.l.b16 %v2069
        %v2176 = vunpack.c.h.b16 %v2069
        %v2177 = vunpack.c.l.b16 %v2070
        %v2178 = vunpack.c.h.b16 %v2070
        %v2179 = vunpack.c.l.b16 %v2071
        %v2180 = vunpack.c.h.b16 %v2071
        %v2181 = vunpack.c.l.b16 %v2072
        %v2182 = vunpack.c.h.b16 %v2072
        %v2183 = vunpack.c.l.b16 %v2073
        %v2184 = vunpack.c.h.b16 %v2073
        %v2185 = vunpack.c.l.b16 %v2074
        %v2186 = vunpack.c.h.b16 %v2074
        %v2187 = vunpack.c.l.b16 %v2075
        %v2188 = vunpack.c.h.b16 %v2075
        %v2189 = vunpack.c.l.b16 %v2076
        %v2190 = vunpack.c.h.b16 %v2076
        %v2191 = vunpack.c.l.b16 %v2077
        %v2192 = vunpack.c.h.b16 %v2077
        %v2193 = vunpack.c.l.b16 %v2078
        %v2194 = vunpack.c.h.b16 %v2078
        %v2195 = vunpack.c.l.b16 %v2079
        %v2196 = vunpack.c.h.b16 %v2079
        %v2197 = vunpack.c.l.b16 %v2080
        %v2198 = vunpack.c.h.b16 %v2080
        %v2199 = vunpack.c.l.b16 %v2081
        %v2200 = vunpack.c.h.b16 %v2081
        %v2201 = vunpack.c.l.b16 %v2082
        %v2202 = vunpack.c.h.b16 %v2082
        %v2203 = vunpack.c.l.b16 %v2083
        %v2204 = vunpack.c.h.b16 %v2083
        %v2205 = vunpack.c.l.b16 %v2084
        %v2206 = vunpack.c.h.b16 %v2084
        %v2207 = vunpack.c.l.b16 %v2085
        %v2208 = vunpack.c.h.b16 %v2085
        %v2209 = vunpack.c.l.b16 %v2086
        %v2210 = vunpack.c.h.b16 %v2086
        %v2211 = vunpack.c.l.b16 %v2087
        %v2212 = vunpack.c.h.b16 %v2087
        %v2213 = vunpack.c.l.b16 %v2088
        %v2214 = vunpack.c.h.b16 %v2088
        %v2215 = vunpack.c.l.b16 %v2089
        %v2216 = vunpack.c.h.b16 %v2089
        %v2217 = vunpack.c.l.b16 %v2090
        %v2218 = vunpack.c.h.b16 %v2090
        %v2219 = vunpack.c.l.b16 %v2091
        %v2220 = vunpack.c.h.b16 %v2091
        %v2221 = vunpack.c.l.b16 %v2092
        %v2222 = vunpack.c.h.b16 %v2092
        %v2223 = vunpack.c.l.b16 %v2093
        %v2224 = vunpack.c.h.b16 %v2093
        %v2225 = vunpack.c.l.b16 %v2094
        %v2226 = vunpack.c.h.b16 %v2094
        %v2227 = vunpack.c.l.b16 %v2095
        %v2228 = vunpack.c.h.b16 %v2095
        %v2229 = vunpack.c.l.b16 %v2096
        %v2230 = vunpack.c.h.b16 %v2096
        %v2231 = vunpack.c.l.b16 %v2097
        %v2232 = vunpack.c.h.b16 %v2097
        %v2233 = vunpack.c.l.b16 %v2098
        %v2234 = vunpack.c.h.b16 %v2098
        %v2235 = vunpack.c.l.b16 %v2099
        %v2236 = vunpack.c.h.b16 %v2099
        %v2237 = vunpack.c.l.b16 %v2100
        %v2238 = vunpack.c.h.b16 %v2100
        %v2239 = vunpack.c.l.b16 %v2101
        %v2240 = vunpack.c.h.b16 %v2101
        %v2241 = vunpack.c.l.b16 %v2102
        %v2242 = vunpack.c.h.b16 %v2102
        %v2243 = vunpack.c.l.b16 %v2103
        %v2244 = vunpack.c.h.b16 %v2103
        %v2245 = vunpack.c.l.b16 %v2104
        %v2246 = vunpack.c.h.b16 %v2104
        %v2247 = vunpack.c.l.b16 %v2105
        %v2248 = vunpack.c.h.b16 %v2105
        %v2249 = vunpack.c.l.b16 %v2106
        %v2250 = vunpack.c.h.b16 %v2106
        %v2251 = vunpack.c.l.b16 %v2107
        %v2252 = vunpack.c.h.b16 %v2107
        %v2253 = vunpack.c.l.b16 %v2108
        %v2254 = vunpack.c.h.b16 %v2108
        %v2255 = vunpack.c.l.b16 %v2109
        %v2256 = vunpack.c.h.b16 %v2109
        %v2257 = vunpack.c.l.b16 %v2110
        %v2258 = vunpack.c.h.b16 %v2110
        %v2259 = vunpack.c.l.b16 %v2111
        %v2260 = vunpack.c.h.b16 %v2111
        %v2261 = vpack.c.b16 %v2171, %v2165
        %v2262 = vpack.c.b16 %v2172, %v2166
        %v2263 = vpack.c.b16 %v2173, %v2167
        %v2264 = vpack.c.b16 %v2174, %v2168
        %v2265 = vpack.c.b16 %v2175, %v2169
        %v2266 = vpack.c.b16 %v2176, %v2170
        %v2267 = vpack.c.b16 %v2183, %v2177
        %v2268 = vpack.c.b16 %v2184, %v2178
        %v2269 = vpack.c.b16 %v2185, %v2179
        %v2270 = vpack.c.b16 %v2186, %v2180
        %v2271 = vpack.c.b16 %v2187, %v2181
        %v2272 = vpack.c.b16 %v2188, %v2182
        %v2273 = vpack.c.b16 %v2195, %v2189
        %v2274 = vpack.c.b16 %v2196, %v2190
        %v2275 = vpack.c.b16 %v2197, %v2191
        %v2276 = vpack.c.b16 %v2198, %v2192
        %v2277 = vpack.c.b16 %v2199, %v2193
        %v2278 = vpack.c.b16 %v2200, %v2194
        %v2279 = vpack.c.b16 %v2207, %v2201
        %v2280 = vpack.c.b16 %v2208, %v2202
        %v2281 = vpack.c.b16 %v2209, %v2203
        %v2282 = vpack.c.b16 %v2210, %v2204
        %v2283 = vpack.c.b16 %v2211, %v2205
        %v2284 = vpack.c.b16 %v2212, %v2206
        %v2285 = vpack.c.b16 %v2219, %v2213
        %v2286 = vpack.c.b16 %v2220, %v2214
        %v2287 = vpack.c.b16 %v2221, %v2215
        %v2288 = vpack.c.b16 %v2222, %v2216
        %v2289 = vpack.c.b16 %v2223, %v2217
        %v2290 = vpack.c.b16 %v2224, %v2218
        %v2291 = vpack.c.b16 %v2231, %v2225
        %v2292 = vpack.c.b16 %v2232, %v2226
        %v2293 = vpack.c.b16 %v2233, %v2227
        %v2294 = vpack.c.b16 %v2234, %v2228
        %v2295 = vpack.c.b16 %v2235, %v2229
        %v2296 = vpack.c.b16 %v2236, %v2230
        %v2297 = vpack.c.b16 %v2243, %v2237
        %v2298 = vpack.c.b16 %v2244, %v2238
        %v2299 = vpack.c.b16 %v2245, %v2239
        %v2300 = vpack.c.b16 %v2246, %v2240
        %v2301 = vpack.c.b16 %v2247, %v2241
        %v2302 = vpack.c.b16 %v2248, %v2242
        %v2303 = vpack.c.b16 %v2255, %v2249
        %v2304 = vpack.c.b16 %v2256, %v2250
        %v2305 = vpack.c.b16 %v2257, %v2251
        %v2306 = vpack.c.b16 %v2258, %v2252
        %v2307 = vpack.c.b16 %v2259, %v2253
        %v2308 = vpack.c.b16 %v2260, %v2254
        %2357 = vmatprep.subr.bf16.mxu0 %v2262
        %2358 = vmatpush1.bf16.msra.mxu0 %v2261
        %2359 = vmatprep.subr.bf16.mxu0 %v2268
        %2360 = vmatpush1.bf16.msra.mxu0 %v2267
        %2361 = vmatprep.subr.bf16.mxu0 %v2274
        %2362 = vmatpush1.bf16.msra.mxu0 %v2273
        %2363 = vmatprep.subr.bf16.mxu0 %v2280
        %2364 = vmatpush1.bf16.msra.mxu0 %v2279
        %2365 = vmatprep.subr.bf16.mxu0 %v2286
        %2366 = vmatpush1.bf16.msra.mxu0 %v2285
        %2367 = vmatprep.subr.bf16.mxu0 %v2292
        %2368 = vmatpush1.bf16.msra.mxu0 %v2291
        %2369 = vmatprep.subr.bf16.mxu0 %v2298
        %2370 = vmatpush1.bf16.msra.mxu0 %v2297
        %2371 = vmatprep.subr.bf16.mxu0 %v2304
        %2372 = vmatpush1.bf16.msra.mxu0 %v2303
        %2373 = vmatprep.subr.bf16.mxu0 0
        %2374 = vmatpush1.bf16.msra.mxu0 0
        %2375 = vmatprep.subr.bf16.mxu0 0
        %2376 = vmatpush1.bf16.msra.mxu0 0
        %2377 = vmatprep.subr.bf16.mxu0 0
        %2378 = vmatpush1.bf16.msra.mxu0 0
        %2379 = vmatprep.subr.bf16.mxu0 0
        %2380 = vmatpush1.bf16.msra.mxu0 0
        %2381 = vmatprep.subr.bf16.mxu0 0
        %2382 = vmatpush1.bf16.msra.mxu0 0
        %2383 = vmatprep.subr.bf16.mxu0 0
        %2384 = vmatpush1.bf16.msra.mxu0 0
        %2385 = vmatprep.subr.bf16.mxu0 0
        %2386 = vmatpush1.bf16.msra.mxu0 0
        %2387 = vmatprep.subr.bf16.mxu0 0
        %2388 = vmatpush1.bf16.msra.mxu0 0
        %2389 = vmatprep.mubr.bf16.mxu0 0
        %2390 = vmatmul.mubr.bf16.gmra.mrb[0].mxu0 %v2115
        %v2391 = vpop.f32.mrb[0].mxu0
        %v2392 = vadd.f32 0.0, %v2391
        %v2393 = vpop.f32.mrb[0].mxu0
        %v2394 = vadd.f32 0.0, %v2393
        %v2395 = vpop.f32.mrb[0].mxu0
        %v2396 = vpop.f32.mrb[0].mxu0
        %2397 = vdwg.mxu0
        %2398 = vmatprep.subr.bf16.mxu0 %v2264
        %2399 = vmatpush1.bf16.msra.mxu0 %v2263
        %2400 = vmatprep.subr.bf16.mxu0 %v2270
        %2401 = vmatpush1.bf16.msra.mxu0 %v2269
        %2402 = vmatprep.subr.bf16.mxu0 %v2276
        %2403 = vmatpush1.bf16.msra.mxu0 %v2275
        %2404 = vmatprep.subr.bf16.mxu0 %v2282
        %2405 = vmatpush1.bf16.msra.mxu0 %v2281
        %2406 = vmatprep.subr.bf16.mxu0 %v2288
        %2407 = vmatpush1.bf16.msra.mxu0 %v2287
        %2408 = vmatprep.subr.bf16.mxu0 %v2294
        %2409 = vmatpush1.bf16.msra.mxu0 %v2293
        %2410 = vmatprep.subr.bf16.mxu0 %v2300
        %2411 = vmatpush1.bf16.msra.mxu0 %v2299
        %2412 = vmatprep.subr.bf16.mxu0 %v2306
        %2413 = vmatpush1.bf16.msra.mxu0 %v2305
        %2414 = vmatprep.subr.bf16.mxu0 0
        %2415 = vmatpush1.bf16.msra.mxu0 0
        %2416 = vmatprep.subr.bf16.mxu0 0
        %2417 = vmatpush1.bf16.msra.mxu0 0
        %2418 = vmatprep.subr.bf16.mxu0 0
        %2419 = vmatpush1.bf16.msra.mxu0 0
        %2420 = vmatprep.subr.bf16.mxu0 0
        %2421 = vmatpush1.bf16.msra.mxu0 0
        %2422 = vmatprep.subr.bf16.mxu0 0
        %2423 = vmatpush1.bf16.msra.mxu0 0
        %2424 = vmatprep.subr.bf16.mxu0 0
        %2425 = vmatpush1.bf16.msra.mxu0 0
        %2426 = vmatprep.subr.bf16.mxu0 0
        %2427 = vmatpush1.bf16.msra.mxu0 0
        %2428 = vmatprep.subr.bf16.mxu0 0
        %2429 = vmatpush1.bf16.msra.mxu0 0
        %2430 = vmatprep.mubr.bf16.mxu0 0
        %2431 = vmatmul.mubr.bf16.gmra.mrb[0].mxu0 %v2115
        %v2432 = vpop.f32.mrb[0].mxu0
        %v2433 = vadd.f32 0.0, %v2432
        %v2434 = vpop.f32.mrb[0].mxu0
        %v2435 = vadd.f32 0.0, %v2434
        %v2436 = vpop.f32.mrb[0].mxu0
        %v2437 = vpop.f32.mrb[0].mxu0
        %2438 = vdwg.mxu0
        %2439 = vmatprep.subr.bf16.mxu0 %v2266
        %2440 = vmatpush1.bf16.msra.mxu0 %v2265
        %2441 = vmatprep.subr.bf16.mxu0 %v2272
        %2442 = vmatpush1.bf16.msra.mxu0 %v2271
        %2443 = vmatprep.subr.bf16.mxu0 %v2278
        %2444 = vmatpush1.bf16.msra.mxu0 %v2277
        %2445 = vmatprep.subr.bf16.mxu0 %v2284
        %2446 = vmatpush1.bf16.msra.mxu0 %v2283
        %2447 = vmatprep.subr.bf16.mxu0 %v2290
        %2448 = vmatpush1.bf16.msra.mxu0 %v2289
        %2449 = vmatprep.subr.bf16.mxu0 %v2296
        %2450 = vmatpush1.bf16.msra.mxu0 %v2295
        %2451 = vmatprep.subr.bf16.mxu0 %v2302
        %2452 = vmatpush1.bf16.msra.mxu0 %v2301
        %2453 = vmatprep.subr.bf16.mxu0 %v2308
        %2454 = vmatpush1.bf16.msra.mxu0 %v2307
        %2455 = vmatprep.subr.bf16.mxu0 0
        %2456 = vmatpush1.bf16.msra.mxu0 0
        %2457 = vmatprep.subr.bf16.mxu0 0
        %2458 = vmatpush1.bf16.msra.mxu0 0
        %2459 = vmatprep.subr.bf16.mxu0 0
        %2460 = vmatpush1.bf16.msra.mxu0 0
        %2461 = vmatprep.subr.bf16.mxu0 0
        %2462 = vmatpush1.bf16.msra.mxu0 0
        %2463 = vmatprep.subr.bf16.mxu0 0
        %2464 = vmatpush1.bf16.msra.mxu0 0
        %2465 = vmatprep.subr.bf16.mxu0 0
        %2466 = vmatpush1.bf16.msra.mxu0 0
        %2467 = vmatprep.subr.bf16.mxu0 0
        %2468 = vmatpush1.bf16.msra.mxu0 0
        %2469 = vmatprep.subr.bf16.mxu0 0
        %2470 = vmatpush1.bf16.msra.mxu0 0
        %2471 = vmatprep.mubr.bf16.mxu0 0
        %2472 = vmatmul.mubr.bf16.gmra.mrb[0].mxu0 %v2115
        %v2473 = vpop.f32.mrb[0].mxu0
        %v2474 = vadd.f32 0.0, %v2473
        %v2475 = vpop.f32.mrb[0].mxu0
        %v2476 = vadd.f32 0.0, %v2475
        %v2477 = vpop.f32.mrb[0].mxu0
        %v2478 = vpop.f32.mrb[0].mxu0
        %2479 = vdwg.mxu0
        %v2480 = vadd.f32 %v2057, %v2392
        %v2481 = vadd.f32 %v2058, %v2394
        %v2482 = vadd.f32 %v2059, %v2433
        %v2483 = vadd.f32 %v2060, %v2435
        %v2484 = vadd.f32 %v2061, %v2474
        %v2485 = vadd.f32 %v2062, %v2476
        %s2486 = scalar_lea.vmem %s5, 1536
        %v2487 = vld [vmem:[%s2486] sm:$0xff]
        %v2488 = vld [vmem:[%s2486 + $0x8] sm:$0xff]
        %v2489 = vld [vmem:[%s2486 + $0x10] sm:$0xff]
        %v2490 = vld [vmem:[%s2486 + $0x18] sm:$0xff]
        %v2491 = vld [vmem:[%s2486 + $0x20] sm:$0xff]
        %v2492 = vld [vmem:[%s2486 + $0x28] sm:$0xff]
        %v2493 = vld [vmem:[%s2486 + $0x30] sm:$0xff]
        %v2494 = vld [vmem:[%s2486 + $0x38] sm:$0xff]
        %v2495 = vld [vmem:[%s2486 + $0x40] sm:$0xff]
        %v2496 = vld [vmem:[%s2486 + $0x48] sm:$0xff]
        %v2497 = vld [vmem:[%s2486 + $0x50] sm:$0xff]
        %v2498 = vld [vmem:[%s2486 + $0x58] sm:$0xff]
        %v2499 = vld [vmem:[%s2486 + $0x60] sm:$0xff]
        %v2500 = vld [vmem:[%s2486 + $0x68] sm:$0xff]
        %v2501 = vld [vmem:[%s2486 + $0x70] sm:$0xff]
        %v2502 = vld [vmem:[%s2486 + $0x78] sm:$0xff]
        %v2503 = vld [vmem:[%s2486 + $0x80] sm:$0xff]
        %v2504 = vld [vmem:[%s2486 + $0x88] sm:$0xff]
        %v2505 = vld [vmem:[%s2486 + $0x90] sm:$0xff]
        %v2506 = vld [vmem:[%s2486 + $0x98] sm:$0xff]
        %v2507 = vld [vmem:[%s2486 + $0xa0] sm:$0xff]
        %v2508 = vld [vmem:[%s2486 + $0xa8] sm:$0xff]
        %v2509 = vld [vmem:[%s2486 + $0xb0] sm:$0xff]
        %v2510 = vld [vmem:[%s2486 + $0xb8] sm:$0xff]
        %v2511 = vld [vmem:[%s2486 + $0xc0] sm:$0xff]
        %v2512 = vld [vmem:[%s2486 + $0xc8] sm:$0xff]
        %v2513 = vld [vmem:[%s2486 + $0xd0] sm:$0xff]
        %v2514 = vld [vmem:[%s2486 + $0xd8] sm:$0xff]
        %v2515 = vld [vmem:[%s2486 + $0xe0] sm:$0xff]
        %v2516 = vld [vmem:[%s2486 + $0xe8] sm:$0xff]
        %v2517 = vld [vmem:[%s2486 + $0xf0] sm:$0xff]
        %v2518 = vld [vmem:[%s2486 + $0xf8] sm:$0xff]
        %v2519 = vld [vmem:[%s2486 + $0x100] sm:$0xff]
        %v2520 = vld [vmem:[%s2486 + $0x108] sm:$0xff]
        %v2521 = vld [vmem:[%s2486 + $0x110] sm:$0xff]
        %v2522 = vld [vmem:[%s2486 + $0x118] sm:$0xff]
        %v2523 = vld [vmem:[%s2486 + $0x120] sm:$0xff]
        %v2524 = vld [vmem:[%s2486 + $0x128] sm:$0xff]
        %v2525 = vld [vmem:[%s2486 + $0x130] sm:$0xff]
        %v2526 = vld [vmem:[%s2486 + $0x138] sm:$0xff]
        %v2527 = vld [vmem:[%s2486 + $0x140] sm:$0xff]
        %v2528 = vld [vmem:[%s2486 + $0x148] sm:$0xff]
        %v2529 = vld [vmem:[%s2486 + $0x150] sm:$0xff]
        %v2530 = vld [vmem:[%s2486 + $0x158] sm:$0xff]
        %v2531 = vld [vmem:[%s2486 + $0x160] sm:$0xff]
        %v2532 = vld [vmem:[%s2486 + $0x168] sm:$0xff]
        %v2533 = vld [vmem:[%s2486 + $0x170] sm:$0xff]
        %v2534 = vld [vmem:[%s2486 + $0x178] sm:$0xff]
        %v2535 = vld [vmem:[#allocation2] sm:$0x4]
        %v2537 = vunpack.c.l.b16 %v2535
        %v2538 = vpack.c.b16 %v2537, %v2537
        %v2539 = vrot.slane %v2538, 2
        %v2589 = vunpack.c.l.b16 %v2487
        %v2590 = vunpack.c.h.b16 %v2487
        %v2591 = vunpack.c.l.b16 %v2488
        %v2592 = vunpack.c.h.b16 %v2488
        %v2593 = vunpack.c.l.b16 %v2489
        %v2594 = vunpack.c.h.b16 %v2489
        %v2595 = vunpack.c.l.b16 %v2490
        %v2596 = vunpack.c.h.b16 %v2490
        %v2597 = vunpack.c.l.b16 %v2491
        %v2598 = vunpack.c.h.b16 %v2491
        %v2599 = vunpack.c.l.b16 %v2492
        %v2600 = vunpack.c.h.b16 %v2492
        %v2601 = vunpack.c.l.b16 %v2493
        %v2602 = vunpack.c.h.b16 %v2493
        %v2603 = vunpack.c.l.b16 %v2494
        %v2604 = vunpack.c.h.b16 %v2494
        %v2605 = vunpack.c.l.b16 %v2495
        %v2606 = vunpack.c.h.b16 %v2495
        %v2607 = vunpack.c.l.b16 %v2496
        %v2608 = vunpack.c.h.b16 %v2496
        %v2609 = vunpack.c.l.b16 %v2497
        %v2610 = vunpack.c.h.b16 %v2497
        %v2611 = vunpack.c.l.b16 %v2498
        %v2612 = vunpack.c.h.b16 %v2498
        %v2613 = vunpack.c.l.b16 %v2499
        %v2614 = vunpack.c.h.b16 %v2499
        %v2615 = vunpack.c.l.b16 %v2500
        %v2616 = vunpack.c.h.b16 %v2500
        %v2617 = vunpack.c.l.b16 %v2501
        %v2618 = vunpack.c.h.b16 %v2501
        %v2619 = vunpack.c.l.b16 %v2502
        %v2620 = vunpack.c.h.b16 %v2502
        %v2621 = vunpack.c.l.b16 %v2503
        %v2622 = vunpack.c.h.b16 %v2503
        %v2623 = vunpack.c.l.b16 %v2504
        %v2624 = vunpack.c.h.b16 %v2504
        %v2625 = vunpack.c.l.b16 %v2505
        %v2626 = vunpack.c.h.b16 %v2505
        %v2627 = vunpack.c.l.b16 %v2506
        %v2628 = vunpack.c.h.b16 %v2506
        %v2629 = vunpack.c.l.b16 %v2507
        %v2630 = vunpack.c.h.b16 %v2507
        %v2631 = vunpack.c.l.b16 %v2508
        %v2632 = vunpack.c.h.b16 %v2508
        %v2633 = vunpack.c.l.b16 %v2509
        %v2634 = vunpack.c.h.b16 %v2509
        %v2635 = vunpack.c.l.b16 %v2510
        %v2636 = vunpack.c.h.b16 %v2510
        %v2637 = vunpack.c.l.b16 %v2511
        %v2638 = vunpack.c.h.b16 %v2511
        %v2639 = vunpack.c.l.b16 %v2512
        %v2640 = vunpack.c.h.b16 %v2512
        %v2641 = vunpack.c.l.b16 %v2513
        %v2642 = vunpack.c.h.b16 %v2513
        %v2643 = vunpack.c.l.b16 %v2514
        %v2644 = vunpack.c.h.b16 %v2514
        %v2645 = vunpack.c.l.b16 %v2515
        %v2646 = vunpack.c.h.b16 %v2515
        %v2647 = vunpack.c.l.b16 %v2516
        %v2648 = vunpack.c.h.b16 %v2516
        %v2649 = vunpack.c.l.b16 %v2517
        %v2650 = vunpack.c.h.b16 %v2517
        %v2651 = vunpack.c.l.b16 %v2518
        %v2652 = vunpack.c.h.b16 %v2518
        %v2653 = vunpack.c.l.b16 %v2519
        %v2654 = vunpack.c.h.b16 %v2519
        %v2655 = vunpack.c.l.b16 %v2520
        %v2656 = vunpack.c.h.b16 %v2520
        %v2657 = vunpack.c.l.b16 %v2521
        %v2658 = vunpack.c.h.b16 %v2521
        %v2659 = vunpack.c.l.b16 %v2522
        %v2660 = vunpack.c.h.b16 %v2522
        %v2661 = vunpack.c.l.b16 %v2523
        %v2662 = vunpack.c.h.b16 %v2523
        %v2663 = vunpack.c.l.b16 %v2524
        %v2664 = vunpack.c.h.b16 %v2524
        %v2665 = vunpack.c.l.b16 %v2525
        %v2666 = vunpack.c.h.b16 %v2525
        %v2667 = vunpack.c.l.b16 %v2526
        %v2668 = vunpack.c.h.b16 %v2526
        %v2669 = vunpack.c.l.b16 %v2527
        %v2670 = vunpack.c.h.b16 %v2527
        %v2671 = vunpack.c.l.b16 %v2528
        %v2672 = vunpack.c.h.b16 %v2528
        %v2673 = vunpack.c.l.b16 %v2529
        %v2674 = vunpack.c.h.b16 %v2529
        %v2675 = vunpack.c.l.b16 %v2530
        %v2676 = vunpack.c.h.b16 %v2530
        %v2677 = vunpack.c.l.b16 %v2531
        %v2678 = vunpack.c.h.b16 %v2531
        %v2679 = vunpack.c.l.b16 %v2532
        %v2680 = vunpack.c.h.b16 %v2532
        %v2681 = vunpack.c.l.b16 %v2533
        %v2682 = vunpack.c.h.b16 %v2533
        %v2683 = vunpack.c.l.b16 %v2534
        %v2684 = vunpack.c.h.b16 %v2534
        %v2685 = vpack.c.b16 %v2595, %v2589
        %v2686 = vpack.c.b16 %v2596, %v2590
        %v2687 = vpack.c.b16 %v2597, %v2591
        %v2688 = vpack.c.b16 %v2598, %v2592
        %v2689 = vpack.c.b16 %v2599, %v2593
        %v2690 = vpack.c.b16 %v2600, %v2594
        %v2691 = vpack.c.b16 %v2607, %v2601
        %v2692 = vpack.c.b16 %v2608, %v2602
        %v2693 = vpack.c.b16 %v2609, %v2603
        %v2694 = vpack.c.b16 %v2610, %v2604
        %v2695 = vpack.c.b16 %v2611, %v2605
        %v2696 = vpack.c.b16 %v2612, %v2606
        %v2697 = vpack.c.b16 %v2619, %v2613
        %v2698 = vpack.c.b16 %v2620, %v2614
        %v2699 = vpack.c.b16 %v2621, %v2615
        %v2700 = vpack.c.b16 %v2622, %v2616
        %v2701 = vpack.c.b16 %v2623, %v2617
        %v2702 = vpack.c.b16 %v2624, %v2618
        %v2703 = vpack.c.b16 %v2631, %v2625
        %v2704 = vpack.c.b16 %v2632, %v2626
        %v2705 = vpack.c.b16 %v2633, %v2627
        %v2706 = vpack.c.b16 %v2634, %v2628
        %v2707 = vpack.c.b16 %v2635, %v2629
        %v2708 = vpack.c.b16 %v2636, %v2630
        %v2709 = vpack.c.b16 %v2643, %v2637
        %v2710 = vpack.c.b16 %v2644, %v2638
        %v2711 = vpack.c.b16 %v2645, %v2639
        %v2712 = vpack.c.b16 %v2646, %v2640
        %v2713 = vpack.c.b16 %v2647, %v2641
        %v2714 = vpack.c.b16 %v2648, %v2642
        %v2715 = vpack.c.b16 %v2655, %v2649
        %v2716 = vpack.c.b16 %v2656, %v2650
        %v2717 = vpack.c.b16 %v2657, %v2651
        %v2718 = vpack.c.b16 %v2658, %v2652
        %v2719 = vpack.c.b16 %v2659, %v2653
        %v2720 = vpack.c.b16 %v2660, %v2654
        %v2721 = vpack.c.b16 %v2667, %v2661
        %v2722 = vpack.c.b16 %v2668, %v2662
        %v2723 = vpack.c.b16 %v2669, %v2663
        %v2724 = vpack.c.b16 %v2670, %v2664
        %v2725 = vpack.c.b16 %v2671, %v2665
        %v2726 = vpack.c.b16 %v2672, %v2666
        %v2727 = vpack.c.b16 %v2679, %v2673
        %v2728 = vpack.c.b16 %v2680, %v2674
        %v2729 = vpack.c.b16 %v2681, %v2675
        %v2730 = vpack.c.b16 %v2682, %v2676
        %v2731 = vpack.c.b16 %v2683, %v2677
        %v2732 = vpack.c.b16 %v2684, %v2678
        %2781 = vmatprep.subr.bf16.mxu0 %v2686
        %2782 = vmatpush1.bf16.msra.mxu0 %v2685
        %2783 = vmatprep.subr.bf16.mxu0 %v2692
        %2784 = vmatpush1.bf16.msra.mxu0 %v2691
        %2785 = vmatprep.subr.bf16.mxu0 %v2698
        %2786 = vmatpush1.bf16.msra.mxu0 %v2697
        %2787 = vmatprep.subr.bf16.mxu0 %v2704
        %2788 = vmatpush1.bf16.msra.mxu0 %v2703
        %2789 = vmatprep.subr.bf16.mxu0 %v2710
        %2790 = vmatpush1.bf16.msra.mxu0 %v2709
        %2791 = vmatprep.subr.bf16.mxu0 %v2716
        %2792 = vmatpush1.bf16.msra.mxu0 %v2715
        %2793 = vmatprep.subr.bf16.mxu0 %v2722
        %2794 = vmatpush1.bf16.msra.mxu0 %v2721
        %2795 = vmatprep.subr.bf16.mxu0 %v2728
        %2796 = vmatpush1.bf16.msra.mxu0 %v2727
        %2797 = vmatprep.subr.bf16.mxu0 0
        %2798 = vmatpush1.bf16.msra.mxu0 0
        %2799 = vmatprep.subr.bf16.mxu0 0
        %2800 = vmatpush1.bf16.msra.mxu0 0
        %2801 = vmatprep.subr.bf16.mxu0 0
        %2802 = vmatpush1.bf16.msra.mxu0 0
        %2803 = vmatprep.subr.bf16.mxu0 0
        %2804 = vmatpush1.bf16.msra.mxu0 0
        %2805 = vmatprep.subr.bf16.mxu0 0
        %2806 = vmatpush1.bf16.msra.mxu0 0
        %2807 = vmatprep.subr.bf16.mxu0 0
        %2808 = vmatpush1.bf16.msra.mxu0 0
        %2809 = vmatprep.subr.bf16.mxu0 0
        %2810 = vmatpush1.bf16.msra.mxu0 0
        %2811 = vmatprep.subr.bf16.mxu0 0
        %2812 = vmatpush1.bf16.msra.mxu0 0
        %2813 = vmatprep.mubr.bf16.mxu0 0
        %2814 = vmatmul.mubr.bf16.gmra.mrb[0].mxu0 %v2539
        %v2815 = vpop.f32.mrb[0].mxu0
        %v2816 = vadd.f32 0.0, %v2815
        %v2817 = vpop.f32.mrb[0].mxu0
        %v2818 = vadd.f32 0.0, %v2817
        %v2819 = vpop.f32.mrb[0].mxu0
        %v2820 = vpop.f32.mrb[0].mxu0
        %2821 = vdwg.mxu0
        %2822 = vmatprep.subr.bf16.mxu0 %v2688
        %2823 = vmatpush1.bf16.msra.mxu0 %v2687
        %2824 = vmatprep.subr.bf16.mxu0 %v2694
        %2825 = vmatpush1.bf16.msra.mxu0 %v2693
        %2826 = vmatprep.subr.bf16.mxu0 %v2700
        %2827 = vmatpush1.bf16.msra.mxu0 %v2699
        %2828 = vmatprep.subr.bf16.mxu0 %v2706
        %2829 = vmatpush1.bf16.msra.mxu0 %v2705
        %2830 = vmatprep.subr.bf16.mxu0 %v2712
        %2831 = vmatpush1.bf16.msra.mxu0 %v2711
        %2832 = vmatprep.subr.bf16.mxu0 %v2718
        %2833 = vmatpush1.bf16.msra.mxu0 %v2717
        %2834 = vmatprep.subr.bf16.mxu0 %v2724
        %2835 = vmatpush1.bf16.msra.mxu0 %v2723
        %2836 = vmatprep.subr.bf16.mxu0 %v2730
        %2837 = vmatpush1.bf16.msra.mxu0 %v2729
        %2838 = vmatprep.subr.bf16.mxu0 0
        %2839 = vmatpush1.bf16.msra.mxu0 0
        %2840 = vmatprep.subr.bf16.mxu0 0
        %2841 = vmatpush1.bf16.msra.mxu0 0
        %2842 = vmatprep.subr.bf16.mxu0 0
        %2843 = vmatpush1.bf16.msra.mxu0 0
        %2844 = vmatprep.subr.bf16.mxu0 0
        %2845 = vmatpush1.bf16.msra.mxu0 0
        %2846 = vmatprep.subr.bf16.mxu0 0
        %2847 = vmatpush1.bf16.msra.mxu0 0
        %2848 = vmatprep.subr.bf16.mxu0 0
        %2849 = vmatpush1.bf16.msra.mxu0 0
        %2850 = vmatprep.subr.bf16.mxu0 0
        %2851 = vmatpush1.bf16.msra.mxu0 0
        %2852 = vmatprep.subr.bf16.mxu0 0
        %2853 = vmatpush1.bf16.msra.mxu0 0
        %2854 = vmatprep.mubr.bf16.mxu0 0
        %2855 = vmatmul.mubr.bf16.gmra.mrb[0].mxu0 %v2539
        %v2856 = vpop.f32.mrb[0].mxu0
        %v2857 = vadd.f32 0.0, %v2856
        %v2858 = vpop.f32.mrb[0].mxu0
        %v2859 = vadd.f32 0.0, %v2858
        %v2860 = vpop.f32.mrb[0].mxu0
        %v2861 = vpop.f32.mrb[0].mxu0
        %2862 = vdwg.mxu0
        %2863 = vmatprep.subr.bf16.mxu0 %v2690
        %2864 = vmatpush1.bf16.msra.mxu0 %v2689
        %2865 = vmatprep.subr.bf16.mxu0 %v2696
        %2866 = vmatpush1.bf16.msra.mxu0 %v2695
        %2867 = vmatprep.subr.bf16.mxu0 %v2702
        %2868 = vmatpush1.bf16.msra.mxu0 %v2701
        %2869 = vmatprep.subr.bf16.mxu0 %v2708
        %2870 = vmatpush1.bf16.msra.mxu0 %v2707
        %2871 = vmatprep.subr.bf16.mxu0 %v2714
        %2872 = vmatpush1.bf16.msra.mxu0 %v2713
        %2873 = vmatprep.subr.bf16.mxu0 %v2720
        %2874 = vmatpush1.bf16.msra.mxu0 %v2719
        %2875 = vmatprep.subr.bf16.mxu0 %v2726
        %2876 = vmatpush1.bf16.msra.mxu0 %v2725
        %2877 = vmatprep.subr.bf16.mxu0 %v2732
        %2878 = vmatpush1.bf16.msra.mxu0 %v2731
        %2879 = vmatprep.subr.bf16.mxu0 0
        %2880 = vmatpush1.bf16.msra.mxu0 0
        %2881 = vmatprep.subr.bf16.mxu0 0
        %2882 = vmatpush1.bf16.msra.mxu0 0
        %2883 = vmatprep.subr.bf16.mxu0 0
        %2884 = vmatpush1.bf16.msra.mxu0 0
        %2885 = vmatprep.subr.bf16.mxu0 0
        %2886 = vmatpush1.bf16.msra.mxu0 0
        %2887 = vmatprep.subr.bf16.mxu0 0
        %2888 = vmatpush1.bf16.msra.mxu0 0
        %2889 = vmatprep.subr.bf16.mxu0 0
        %2890 = vmatpush1.bf16.msra.mxu0 0
        %2891 = vmatprep.subr.bf16.mxu0 0
        %2892 = vmatpush1.bf16.msra.mxu0 0
        %2893 = vmatprep.subr.bf16.mxu0 0
        %2894 = vmatpush1.bf16.msra.mxu0 0
        %2895 = vmatprep.mubr.bf16.mxu0 0
        %2896 = vmatmul.mubr.bf16.gmra.mrb[0].mxu0 %v2539
        %v2897 = vpop.f32.mrb[0].mxu0
        %v2898 = vadd.f32 0.0, %v2897
        %v2899 = vpop.f32.mrb[0].mxu0
        %v2900 = vadd.f32 0.0, %v2899
        %v2901 = vpop.f32.mrb[0].mxu0
        %v2902 = vpop.f32.mrb[0].mxu0
        %2903 = vdwg.mxu0
        %v2904 = vadd.f32 %v2480, %v2816
        %v2905 = vadd.f32 %v2481, %v2818
        %v2906 = vadd.f32 %v2482, %v2857
        %v2907 = vadd.f32 %v2483, %v2859
        %v2908 = vadd.f32 %v2484, %v2898
        %v2909 = vadd.f32 %v2485, %v2900
        %s2910 = scalar_lea.vmem %s5, 1920
        %v2911 = vld [vmem:[%s2910] sm:$0xff]
        %v2912 = vld [vmem:[%s2910 + $0x8] sm:$0xff]
        %v2913 = vld [vmem:[%s2910 + $0x10] sm:$0xff]
        %v2914 = vld [vmem:[%s2910 + $0x18] sm:$0xff]
        %v2915 = vld [vmem:[%s2910 + $0x20] sm:$0xff]
        %v2916 = vld [vmem:[%s2910 + $0x28] sm:$0xff]
        %v2917 = vld [vmem:[%s2910 + $0x30] sm:$0xff]
        %v2918 = vld [vmem:[%s2910 + $0x38] sm:$0xff]
        %v2919 = vld [vmem:[%s2910 + $0x40] sm:$0xff]
        %v2920 = vld [vmem:[%s2910 + $0x48] sm:$0xff]
        %v2921 = vld [vmem:[%s2910 + $0x50] sm:$0xff]
        %v2922 = vld [vmem:[%s2910 + $0x58] sm:$0xff]
        %v2923 = vld [vmem:[%s2910 + $0x60] sm:$0xff]
        %v2924 = vld [vmem:[%s2910 + $0x68] sm:$0xff]
        %v2925 = vld [vmem:[%s2910 + $0x70] sm:$0xff]
        %v2926 = vld [vmem:[%s2910 + $0x78] sm:$0xff]
        %v2927 = vld [vmem:[%s2910 + $0x80] sm:$0xff]
        %v2928 = vld [vmem:[%s2910 + $0x88] sm:$0xff]
        %v2929 = vld [vmem:[%s2910 + $0x90] sm:$0xff]
        %v2930 = vld [vmem:[%s2910 + $0x98] sm:$0xff]
        %v2931 = vld [vmem:[%s2910 + $0xa0] sm:$0xff]
        %v2932 = vld [vmem:[%s2910 + $0xa8] sm:$0xff]
        %v2933 = vld [vmem:[%s2910 + $0xb0] sm:$0xff]
        %v2934 = vld [vmem:[%s2910 + $0xb8] sm:$0xff]
        %v2935 = vld [vmem:[%s2910 + $0xc0] sm:$0xff]
        %v2936 = vld [vmem:[%s2910 + $0xc8] sm:$0xff]
        %v2937 = vld [vmem:[%s2910 + $0xd0] sm:$0xff]
        %v2938 = vld [vmem:[%s2910 + $0xd8] sm:$0xff]
        %v2939 = vld [vmem:[%s2910 + $0xe0] sm:$0xff]
        %v2940 = vld [vmem:[%s2910 + $0xe8] sm:$0xff]
        %v2941 = vld [vmem:[%s2910 + $0xf0] sm:$0xff]
        %v2942 = vld [vmem:[%s2910 + $0xf8] sm:$0xff]
        %v2943 = vld [vmem:[%s2910 + $0x100] sm:$0xff]
        %v2944 = vld [vmem:[%s2910 + $0x108] sm:$0xff]
        %v2945 = vld [vmem:[%s2910 + $0x110] sm:$0xff]
        %v2946 = vld [vmem:[%s2910 + $0x118] sm:$0xff]
        %v2947 = vld [vmem:[%s2910 + $0x120] sm:$0xff]
        %v2948 = vld [vmem:[%s2910 + $0x128] sm:$0xff]
        %v2949 = vld [vmem:[%s2910 + $0x130] sm:$0xff]
        %v2950 = vld [vmem:[%s2910 + $0x138] sm:$0xff]
        %v2951 = vld [vmem:[%s2910 + $0x140] sm:$0xff]
        %v2952 = vld [vmem:[%s2910 + $0x148] sm:$0xff]
        %v2953 = vld [vmem:[%s2910 + $0x150] sm:$0xff]
        %v2954 = vld [vmem:[%s2910 + $0x158] sm:$0xff]
        %v2955 = vld [vmem:[%s2910 + $0x160] sm:$0xff]
        %v2956 = vld [vmem:[%s2910 + $0x168] sm:$0xff]
        %v2957 = vld [vmem:[%s2910 + $0x170] sm:$0xff]
        %v2958 = vld [vmem:[%s2910 + $0x178] sm:$0xff]
        %v2960 = vshrl.u32 %v2538, 16
        %v2962 = vrot.slane %v2960, 2
        %v3012 = vunpack.c.l.b16 %v2911
        %v3013 = vunpack.c.h.b16 %v2911
        %v3014 = vunpack.c.l.b16 %v2912
        %v3015 = vunpack.c.h.b16 %v2912
        %v3016 = vunpack.c.l.b16 %v2913
        %v3017 = vunpack.c.h.b16 %v2913
        %v3018 = vunpack.c.l.b16 %v2914
        %v3019 = vunpack.c.h.b16 %v2914
        %v3020 = vunpack.c.l.b16 %v2915
        %v3021 = vunpack.c.h.b16 %v2915
        %v3022 = vunpack.c.l.b16 %v2916
        %v3023 = vunpack.c.h.b16 %v2916
        %v3024 = vunpack.c.l.b16 %v2917
        %v3025 = vunpack.c.h.b16 %v2917
        %v3026 = vunpack.c.l.b16 %v2918
        %v3027 = vunpack.c.h.b16 %v2918
        %v3028 = vunpack.c.l.b16 %v2919
        %v3029 = vunpack.c.h.b16 %v2919
        %v3030 = vunpack.c.l.b16 %v2920
        %v3031 = vunpack.c.h.b16 %v2920
        %v3032 = vunpack.c.l.b16 %v2921
        %v3033 = vunpack.c.h.b16 %v2921
        %v3034 = vunpack.c.l.b16 %v2922
        %v3035 = vunpack.c.h.b16 %v2922
        %v3036 = vunpack.c.l.b16 %v2923
        %v3037 = vunpack.c.h.b16 %v2923
        %v3038 = vunpack.c.l.b16 %v2924
        %v3039 = vunpack.c.h.b16 %v2924
        %v3040 = vunpack.c.l.b16 %v2925
        %v3041 = vunpack.c.h.b16 %v2925
        %v3042 = vunpack.c.l.b16 %v2926
        %v3043 = vunpack.c.h.b16 %v2926
        %v3044 = vunpack.c.l.b16 %v2927
        %v3045 = vunpack.c.h.b16 %v2927
        %v3046 = vunpack.c.l.b16 %v2928
        %v3047 = vunpack.c.h.b16 %v2928
        %v3048 = vunpack.c.l.b16 %v2929
        %v3049 = vunpack.c.h.b16 %v2929
        %v3050 = vunpack.c.l.b16 %v2930
        %v3051 = vunpack.c.h.b16 %v2930
        %v3052 = vunpack.c.l.b16 %v2931
        %v3053 = vunpack.c.h.b16 %v2931
        %v3054 = vunpack.c.l.b16 %v2932
        %v3055 = vunpack.c.h.b16 %v2932
        %v3056 = vunpack.c.l.b16 %v2933
        %v3057 = vunpack.c.h.b16 %v2933
        %v3058 = vunpack.c.l.b16 %v2934
        %v3059 = vunpack.c.h.b16 %v2934
        %v3060 = vunpack.c.l.b16 %v2935
        %v3061 = vunpack.c.h.b16 %v2935
        %v3062 = vunpack.c.l.b16 %v2936
        %v3063 = vunpack.c.h.b16 %v2936
        %v3064 = vunpack.c.l.b16 %v2937
        %v3065 = vunpack.c.h.b16 %v2937
        %v3066 = vunpack.c.l.b16 %v2938
        %v3067 = vunpack.c.h.b16 %v2938
        %v3068 = vunpack.c.l.b16 %v2939
        %v3069 = vunpack.c.h.b16 %v2939
        %v3070 = vunpack.c.l.b16 %v2940
        %v3071 = vunpack.c.h.b16 %v2940
        %v3072 = vunpack.c.l.b16 %v2941
        %v3073 = vunpack.c.h.b16 %v2941
        %v3074 = vunpack.c.l.b16 %v2942
        %v3075 = vunpack.c.h.b16 %v2942
        %v3076 = vunpack.c.l.b16 %v2943
        %v3077 = vunpack.c.h.b16 %v2943
        %v3078 = vunpack.c.l.b16 %v2944
        %v3079 = vunpack.c.h.b16 %v2944
        %v3080 = vunpack.c.l.b16 %v2945
        %v3081 = vunpack.c.h.b16 %v2945
        %v3082 = vunpack.c.l.b16 %v2946
        %v3083 = vunpack.c.h.b16 %v2946
        %v3084 = vunpack.c.l.b16 %v2947
        %v3085 = vunpack.c.h.b16 %v2947
        %v3086 = vunpack.c.l.b16 %v2948
        %v3087 = vunpack.c.h.b16 %v2948
        %v3088 = vunpack.c.l.b16 %v2949
        %v3089 = vunpack.c.h.b16 %v2949
        %v3090 = vunpack.c.l.b16 %v2950
        %v3091 = vunpack.c.h.b16 %v2950
        %v3092 = vunpack.c.l.b16 %v2951
        %v3093 = vunpack.c.h.b16 %v2951
        %v3094 = vunpack.c.l.b16 %v2952
        %v3095 = vunpack.c.h.b16 %v2952
        %v3096 = vunpack.c.l.b16 %v2953
        %v3097 = vunpack.c.h.b16 %v2953
        %v3098 = vunpack.c.l.b16 %v2954
        %v3099 = vunpack.c.h.b16 %v2954
        %v3100 = vunpack.c.l.b16 %v2955
        %v3101 = vunpack.c.h.b16 %v2955
        %v3102 = vunpack.c.l.b16 %v2956
        %v3103 = vunpack.c.h.b16 %v2956
        %v3104 = vunpack.c.l.b16 %v2957
        %v3105 = vunpack.c.h.b16 %v2957
        %v3106 = vunpack.c.l.b16 %v2958
        %v3107 = vunpack.c.h.b16 %v2958
        %v3108 = vpack.c.b16 %v3018, %v3012
        %v3109 = vpack.c.b16 %v3019, %v3013
        %v3110 = vpack.c.b16 %v3020, %v3014
        %v3111 = vpack.c.b16 %v3021, %v3015
        %v3112 = vpack.c.b16 %v3022, %v3016
        %v3113 = vpack.c.b16 %v3023, %v3017
        %v3114 = vpack.c.b16 %v3030, %v3024
        %v3115 = vpack.c.b16 %v3031, %v3025
        %v3116 = vpack.c.b16 %v3032, %v3026
        %v3117 = vpack.c.b16 %v3033, %v3027
        %v3118 = vpack.c.b16 %v3034, %v3028
        %v3119 = vpack.c.b16 %v3035, %v3029
        %v3120 = vpack.c.b16 %v3042, %v3036
        %v3121 = vpack.c.b16 %v3043, %v3037
        %v3122 = vpack.c.b16 %v3044, %v3038
        %v3123 = vpack.c.b16 %v3045, %v3039
        %v3124 = vpack.c.b16 %v3046, %v3040
        %v3125 = vpack.c.b16 %v3047, %v3041
        %v3126 = vpack.c.b16 %v3054, %v3048
        %v3127 = vpack.c.b16 %v3055, %v3049
        %v3128 = vpack.c.b16 %v3056, %v3050
        %v3129 = vpack.c.b16 %v3057, %v3051
        %v3130 = vpack.c.b16 %v3058, %v3052
        %v3131 = vpack.c.b16 %v3059, %v3053
        %v3132 = vpack.c.b16 %v3066, %v3060
        %v3133 = vpack.c.b16 %v3067, %v3061
        %v3134 = vpack.c.b16 %v3068, %v3062
        %v3135 = vpack.c.b16 %v3069, %v3063
        %v3136 = vpack.c.b16 %v3070, %v3064
        %v3137 = vpack.c.b16 %v3071, %v3065
        %v3138 = vpack.c.b16 %v3078, %v3072
        %v3139 = vpack.c.b16 %v3079, %v3073
        %v3140 = vpack.c.b16 %v3080, %v3074
        %v3141 = vpack.c.b16 %v3081, %v3075
        %v3142 = vpack.c.b16 %v3082, %v3076
        %v3143 = vpack.c.b16 %v3083, %v3077
        %v3144 = vpack.c.b16 %v3090, %v3084
        %v3145 = vpack.c.b16 %v3091, %v3085
        %v3146 = vpack.c.b16 %v3092, %v3086
        %v3147 = vpack.c.b16 %v3093, %v3087
        %v3148 = vpack.c.b16 %v3094, %v3088
        %v3149 = vpack.c.b16 %v3095, %v3089
        %v3150 = vpack.c.b16 %v3102, %v3096
        %v3151 = vpack.c.b16 %v3103, %v3097
        %v3152 = vpack.c.b16 %v3104, %v3098
        %v3153 = vpack.c.b16 %v3105, %v3099
        %v3154 = vpack.c.b16 %v3106, %v3100
        %v3155 = vpack.c.b16 %v3107, %v3101
        %3204 = vmatprep.subr.bf16.mxu0 %v3109
        %3205 = vmatpush1.bf16.msra.mxu0 %v3108
        %3206 = vmatprep.subr.bf16.mxu0 %v3115
        %3207 = vmatpush1.bf16.msra.mxu0 %v3114
        %3208 = vmatprep.subr.bf16.mxu0 %v3121
        %3209 = vmatpush1.bf16.msra.mxu0 %v3120
        %3210 = vmatprep.subr.bf16.mxu0 %v3127
        %3211 = vmatpush1.bf16.msra.mxu0 %v3126
        %3212 = vmatprep.subr.bf16.mxu0 %v3133
        %3213 = vmatpush1.bf16.msra.mxu0 %v3132
        %3214 = vmatprep.subr.bf16.mxu0 %v3139
        %3215 = vmatpush1.bf16.msra.mxu0 %v3138
        %3216 = vmatprep.subr.bf16.mxu0 %v3145
        %3217 = vmatpush1.bf16.msra.mxu0 %v3144
        %3218 = vmatprep.subr.bf16.mxu0 %v3151
        %3219 = vmatpush1.bf16.msra.mxu0 %v3150
        %3220 = vmatprep.subr.bf16.mxu0 0
        %3221 = vmatpush1.bf16.msra.mxu0 0
        %3222 = vmatprep.subr.bf16.mxu0 0
        %3223 = vmatpush1.bf16.msra.mxu0 0
        %3224 = vmatprep.subr.bf16.mxu0 0
        %3225 = vmatpush1.bf16.msra.mxu0 0
        %3226 = vmatprep.subr.bf16.mxu0 0
        %3227 = vmatpush1.bf16.msra.mxu0 0
        %3228 = vmatprep.subr.bf16.mxu0 0
        %3229 = vmatpush1.bf16.msra.mxu0 0
        %3230 = vmatprep.subr.bf16.mxu0 0
        %3231 = vmatpush1.bf16.msra.mxu0 0
        %3232 = vmatprep.subr.bf16.mxu0 0
        %3233 = vmatpush1.bf16.msra.mxu0 0
        %3234 = vmatprep.subr.bf16.mxu0 0
        %3235 = vmatpush1.bf16.msra.mxu0 0
        %3236 = vmatprep.mubr.bf16.mxu0 0
        %3237 = vmatmul.mubr.bf16.gmra.mrb[0].mxu0 %v2962
        %v3238 = vpop.f32.mrb[0].mxu0
        %v3239 = vadd.f32 0.0, %v3238
        %v3240 = vpop.f32.mrb[0].mxu0
        %v3241 = vadd.f32 0.0, %v3240
        %v3242 = vpop.f32.mrb[0].mxu0
        %v3243 = vpop.f32.mrb[0].mxu0
        %3244 = vdwg.mxu0
        %3245 = vmatprep.subr.bf16.mxu0 %v3111
        %3246 = vmatpush1.bf16.msra.mxu0 %v3110
        %3247 = vmatprep.subr.bf16.mxu0 %v3117
        %3248 = vmatpush1.bf16.msra.mxu0 %v3116
        %3249 = vmatprep.subr.bf16.mxu0 %v3123
        %3250 = vmatpush1.bf16.msra.mxu0 %v3122
        %3251 = vmatprep.subr.bf16.mxu0 %v3129
        %3252 = vmatpush1.bf16.msra.mxu0 %v3128
        %3253 = vmatprep.subr.bf16.mxu0 %v3135
        %3254 = vmatpush1.bf16.msra.mxu0 %v3134
        %3255 = vmatprep.subr.bf16.mxu0 %v3141
        %3256 = vmatpush1.bf16.msra.mxu0 %v3140
        %3257 = vmatprep.subr.bf16.mxu0 %v3147
        %3258 = vmatpush1.bf16.msra.mxu0 %v3146
        %3259 = vmatprep.subr.bf16.mxu0 %v3153
        %3260 = vmatpush1.bf16.msra.mxu0 %v3152
        %3261 = vmatprep.subr.bf16.mxu0 0
        %3262 = vmatpush1.bf16.msra.mxu0 0
        %3263 = vmatprep.subr.bf16.mxu0 0
        %3264 = vmatpush1.bf16.msra.mxu0 0
        %3265 = vmatprep.subr.bf16.mxu0 0
        %3266 = vmatpush1.bf16.msra.mxu0 0
        %3267 = vmatprep.subr.bf16.mxu0 0
        %3268 = vmatpush1.bf16.msra.mxu0 0
        %3269 = vmatprep.subr.bf16.mxu0 0
        %3270 = vmatpush1.bf16.msra.mxu0 0
        %3271 = vmatprep.subr.bf16.mxu0 0
        %3272 = vmatpush1.bf16.msra.mxu0 0
        %3273 = vmatprep.subr.bf16.mxu0 0
        %3274 = vmatpush1.bf16.msra.mxu0 0
        %3275 = vmatprep.subr.bf16.mxu0 0
        %3276 = vmatpush1.bf16.msra.mxu0 0
        %3277 = vmatprep.mubr.bf16.mxu0 0
        %3278 = vmatmul.mubr.bf16.gmra.mrb[0].mxu0 %v2962
        %v3279 = vpop.f32.mrb[0].mxu0
        %v3280 = vadd.f32 0.0, %v3279
        %v3281 = vpop.f32.mrb[0].mxu0
        %v3282 = vadd.f32 0.0, %v3281
        %v3283 = vpop.f32.mrb[0].mxu0
        %v3284 = vpop.f32.mrb[0].mxu0
        %3285 = vdwg.mxu0
        %3286 = vmatprep.subr.bf16.mxu0 %v3113
        %3287 = vmatpush1.bf16.msra.mxu0 %v3112
        %3288 = vmatprep.subr.bf16.mxu0 %v3119
        %3289 = vmatpush1.bf16.msra.mxu0 %v3118
        %3290 = vmatprep.subr.bf16.mxu0 %v3125
        %3291 = vmatpush1.bf16.msra.mxu0 %v3124
        %3292 = vmatprep.subr.bf16.mxu0 %v3131
        %3293 = vmatpush1.bf16.msra.mxu0 %v3130
        %3294 = vmatprep.subr.bf16.mxu0 %v3137
        %3295 = vmatpush1.bf16.msra.mxu0 %v3136
        %3296 = vmatprep.subr.bf16.mxu0 %v3143
        %3297 = vmatpush1.bf16.msra.mxu0 %v3142
        %3298 = vmatprep.subr.bf16.mxu0 %v3149
        %3299 = vmatpush1.bf16.msra.mxu0 %v3148
        %3300 = vmatprep.subr.bf16.mxu0 %v3155
        %3301 = vmatpush1.bf16.msra.mxu0 %v3154
        %3302 = vmatprep.subr.bf16.mxu0 0
        %3303 = vmatpush1.bf16.msra.mxu0 0
        %3304 = vmatprep.subr.bf16.mxu0 0
        %3305 = vmatpush1.bf16.msra.mxu0 0
        %3306 = vmatprep.subr.bf16.mxu0 0
        %3307 = vmatpush1.bf16.msra.mxu0 0
        %3308 = vmatprep.subr.bf16.mxu0 0
        %3309 = vmatpush1.bf16.msra.mxu0 0
        %3310 = vmatprep.subr.bf16.mxu0 0
        %3311 = vmatpush1.bf16.msra.mxu0 0
        %3312 = vmatprep.subr.bf16.mxu0 0
        %3313 = vmatpush1.bf16.msra.mxu0 0
        %3314 = vmatprep.subr.bf16.mxu0 0
        %3315 = vmatpush1.bf16.msra.mxu0 0
        %3316 = vmatprep.subr.bf16.mxu0 0
        %3317 = vmatpush1.bf16.msra.mxu0 0
        %3318 = vmatprep.mubr.bf16.mxu0 0
        %3319 = vmatmul.mubr.bf16.gmra.mrb[0].mxu0 %v2962
        %v3320 = vpop.f32.mrb[0].mxu0
        %v3321 = vadd.f32 0.0, %v3320
        %v3322 = vpop.f32.mrb[0].mxu0
        %v3323 = vadd.f32 0.0, %v3322
        %v3324 = vpop.f32.mrb[0].mxu0
        %v3325 = vpop.f32.mrb[0].mxu0
        %3326 = vdwg.mxu0
        %v3327 = vadd.f32 %v2904, %v3239
        %v3328 = vadd.f32 %v2905, %v3241
        %v3329 = vadd.f32 %v2906, %v3280
        %v3330 = vadd.f32 %v2907, %v3282
        %v3331 = vadd.f32 %v2908, %v3321
        %v3332 = vadd.f32 %v2909, %v3323
        %s3333 = scalar_lea.vmem %s5, 2304
        %v3334 = vld [vmem:[%s3333] sm:$0xff]
        %v3335 = vld [vmem:[%s3333 + $0x8] sm:$0xff]
        %v3336 = vld [vmem:[%s3333 + $0x10] sm:$0xff]
        %v3337 = vld [vmem:[%s3333 + $0x18] sm:$0xff]
        %v3338 = vld [vmem:[%s3333 + $0x20] sm:$0xff]
        %v3339 = vld [vmem:[%s3333 + $0x28] sm:$0xff]
        %v3340 = vld [vmem:[%s3333 + $0x30] sm:$0xff]
        %v3341 = vld [vmem:[%s3333 + $0x38] sm:$0xff]
        %v3342 = vld [vmem:[%s3333 + $0x40] sm:$0xff]
        %v3343 = vld [vmem:[%s3333 + $0x48] sm:$0xff]
        %v3344 = vld [vmem:[%s3333 + $0x50] sm:$0xff]
        %v3345 = vld [vmem:[%s3333 + $0x58] sm:$0xff]
        %v3346 = vld [vmem:[%s3333 + $0x60] sm:$0xff]
        %v3347 = vld [vmem:[%s3333 + $0x68] sm:$0xff]
        %v3348 = vld [vmem:[%s3333 + $0x70] sm:$0xff]
        %v3349 = vld [vmem:[%s3333 + $0x78] sm:$0xff]
        %v3350 = vld [vmem:[%s3333 + $0x80] sm:$0xff]
        %v3351 = vld [vmem:[%s3333 + $0x88] sm:$0xff]
        %v3352 = vld [vmem:[%s3333 + $0x90] sm:$0xff]
        %v3353 = vld [vmem:[%s3333 + $0x98] sm:$0xff]
        %v3354 = vld [vmem:[%s3333 + $0xa0] sm:$0xff]
        %v3355 = vld [vmem:[%s3333 + $0xa8] sm:$0xff]
        %v3356 = vld [vmem:[%s3333 + $0xb0] sm:$0xff]
        %v3357 = vld [vmem:[%s3333 + $0xb8] sm:$0xff]
        %v3358 = vld [vmem:[%s3333 + $0xc0] sm:$0xff]
        %v3359 = vld [vmem:[%s3333 + $0xc8] sm:$0xff]
        %v3360 = vld [vmem:[%s3333 + $0xd0] sm:$0xff]
        %v3361 = vld [vmem:[%s3333 + $0xd8] sm:$0xff]
        %v3362 = vld [vmem:[%s3333 + $0xe0] sm:$0xff]
        %v3363 = vld [vmem:[%s3333 + $0xe8] sm:$0xff]
        %v3364 = vld [vmem:[%s3333 + $0xf0] sm:$0xff]
        %v3365 = vld [vmem:[%s3333 + $0xf8] sm:$0xff]
        %v3366 = vld [vmem:[%s3333 + $0x100] sm:$0xff]
        %v3367 = vld [vmem:[%s3333 + $0x108] sm:$0xff]
        %v3368 = vld [vmem:[%s3333 + $0x110] sm:$0xff]
        %v3369 = vld [vmem:[%s3333 + $0x118] sm:$0xff]
        %v3370 = vld [vmem:[%s3333 + $0x120] sm:$0xff]
        %v3371 = vld [vmem:[%s3333 + $0x128] sm:$0xff]
        %v3372 = vld [vmem:[%s3333 + $0x130] sm:$0xff]
        %v3373 = vld [vmem:[%s3333 + $0x138] sm:$0xff]
        %v3374 = vld [vmem:[%s3333 + $0x140] sm:$0xff]
        %v3375 = vld [vmem:[%s3333 + $0x148] sm:$0xff]
        %v3376 = vld [vmem:[%s3333 + $0x150] sm:$0xff]
        %v3377 = vld [vmem:[%s3333 + $0x158] sm:$0xff]
        %v3378 = vld [vmem:[%s3333 + $0x160] sm:$0xff]
        %v3379 = vld [vmem:[%s3333 + $0x168] sm:$0xff]
        %v3380 = vld [vmem:[%s3333 + $0x170] sm:$0xff]
        %v3381 = vld [vmem:[%s3333 + $0x178] sm:$0xff]
        %v3382 = vld [vmem:[#allocation2] sm:$0x8]
        %v3384 = vunpack.c.l.b16 %v3382
        %v3385 = vpack.c.b16 %v3384, %v3384
        %v3386 = vrot.slane %v3385, 3
        %v3436 = vunpack.c.l.b16 %v3334
        %v3437 = vunpack.c.h.b16 %v3334
        %v3438 = vunpack.c.l.b16 %v3335
        %v3439 = vunpack.c.h.b16 %v3335
        %v3440 = vunpack.c.l.b16 %v3336
        %v3441 = vunpack.c.h.b16 %v3336
        %v3442 = vunpack.c.l.b16 %v3337
        %v3443 = vunpack.c.h.b16 %v3337
        %v3444 = vunpack.c.l.b16 %v3338
        %v3445 = vunpack.c.h.b16 %v3338
        %v3446 = vunpack.c.l.b16 %v3339
        %v3447 = vunpack.c.h.b16 %v3339
        %v3448 = vunpack.c.l.b16 %v3340
        %v3449 = vunpack.c.h.b16 %v3340
        %v3450 = vunpack.c.l.b16 %v3341
        %v3451 = vunpack.c.h.b16 %v3341
        %v3452 = vunpack.c.l.b16 %v3342
        %v3453 = vunpack.c.h.b16 %v3342
        %v3454 = vunpack.c.l.b16 %v3343
        %v3455 = vunpack.c.h.b16 %v3343
        %v3456 = vunpack.c.l.b16 %v3344
        %v3457 = vunpack.c.h.b16 %v3344
        %v3458 = vunpack.c.l.b16 %v3345
        %v3459 = vunpack.c.h.b16 %v3345
        %v3460 = vunpack.c.l.b16 %v3346
        %v3461 = vunpack.c.h.b16 %v3346
        %v3462 = vunpack.c.l.b16 %v3347
        %v3463 = vunpack.c.h.b16 %v3347
        %v3464 = vunpack.c.l.b16 %v3348
        %v3465 = vunpack.c.h.b16 %v3348
        %v3466 = vunpack.c.l.b16 %v3349
        %v3467 = vunpack.c.h.b16 %v3349
        %v3468 = vunpack.c.l.b16 %v3350
        %v3469 = vunpack.c.h.b16 %v3350
        %v3470 = vunpack.c.l.b16 %v3351
        %v3471 = vunpack.c.h.b16 %v3351
        %v3472 = vunpack.c.l.b16 %v3352
        %v3473 = vunpack.c.h.b16 %v3352
        %v3474 = vunpack.c.l.b16 %v3353
        %v3475 = vunpack.c.h.b16 %v3353
        %v3476 = vunpack.c.l.b16 %v3354
        %v3477 = vunpack.c.h.b16 %v3354
        %v3478 = vunpack.c.l.b16 %v3355
        %v3479 = vunpack.c.h.b16 %v3355
        %v3480 = vunpack.c.l.b16 %v3356
        %v3481 = vunpack.c.h.b16 %v3356
        %v3482 = vunpack.c.l.b16 %v3357
        %v3483 = vunpack.c.h.b16 %v3357
        %v3484 = vunpack.c.l.b16 %v3358
        %v3485 = vunpack.c.h.b16 %v3358
        %v3486 = vunpack.c.l.b16 %v3359
        %v3487 = vunpack.c.h.b16 %v3359
        %v3488 = vunpack.c.l.b16 %v3360
        %v3489 = vunpack.c.h.b16 %v3360
        %v3490 = vunpack.c.l.b16 %v3361
        %v3491 = vunpack.c.h.b16 %v3361
        %v3492 = vunpack.c.l.b16 %v3362
        %v3493 = vunpack.c.h.b16 %v3362
        %v3494 = vunpack.c.l.b16 %v3363
        %v3495 = vunpack.c.h.b16 %v3363
        %v3496 = vunpack.c.l.b16 %v3364
        %v3497 = vunpack.c.h.b16 %v3364
        %v3498 = vunpack.c.l.b16 %v3365
        %v3499 = vunpack.c.h.b16 %v3365
        %v3500 = vunpack.c.l.b16 %v3366
        %v3501 = vunpack.c.h.b16 %v3366
        %v3502 = vunpack.c.l.b16 %v3367
        %v3503 = vunpack.c.h.b16 %v3367
        %v3504 = vunpack.c.l.b16 %v3368
        %v3505 = vunpack.c.h.b16 %v3368
        %v3506 = vunpack.c.l.b16 %v3369
        %v3507 = vunpack.c.h.b16 %v3369
        %v3508 = vunpack.c.l.b16 %v3370
        %v3509 = vunpack.c.h.b16 %v3370
        %v3510 = vunpack.c.l.b16 %v3371
        %v3511 = vunpack.c.h.b16 %v3371
        %v3512 = vunpack.c.l.b16 %v3372
        %v3513 = vunpack.c.h.b16 %v3372
        %v3514 = vunpack.c.l.b16 %v3373
        %v3515 = vunpack.c.h.b16 %v3373
        %v3516 = vunpack.c.l.b16 %v3374
        %v3517 = vunpack.c.h.b16 %v3374
        %v3518 = vunpack.c.l.b16 %v3375
        %v3519 = vunpack.c.h.b16 %v3375
        %v3520 = vunpack.c.l.b16 %v3376
        %v3521 = vunpack.c.h.b16 %v3376
        %v3522 = vunpack.c.l.b16 %v3377
        %v3523 = vunpack.c.h.b16 %v3377
        %v3524 = vunpack.c.l.b16 %v3378
        %v3525 = vunpack.c.h.b16 %v3378
        %v3526 = vunpack.c.l.b16 %v3379
        %v3527 = vunpack.c.h.b16 %v3379
        %v3528 = vunpack.c.l.b16 %v3380
        %v3529 = vunpack.c.h.b16 %v3380
        %v3530 = vunpack.c.l.b16 %v3381
        %v3531 = vunpack.c.h.b16 %v3381
        %v3532 = vpack.c.b16 %v3442, %v3436
        %v3533 = vpack.c.b16 %v3443, %v3437
        %v3534 = vpack.c.b16 %v3444, %v3438
        %v3535 = vpack.c.b16 %v3445, %v3439
        %v3536 = vpack.c.b16 %v3446, %v3440
        %v3537 = vpack.c.b16 %v3447, %v3441
        %v3538 = vpack.c.b16 %v3454, %v3448
        %v3539 = vpack.c.b16 %v3455, %v3449
        %v3540 = vpack.c.b16 %v3456, %v3450
        %v3541 = vpack.c.b16 %v3457, %v3451
        %v3542 = vpack.c.b16 %v3458, %v3452
        %v3543 = vpack.c.b16 %v3459, %v3453
        %v3544 = vpack.c.b16 %v3466, %v3460
        %v3545 = vpack.c.b16 %v3467, %v3461
        %v3546 = vpack.c.b16 %v3468, %v3462
        %v3547 = vpack.c.b16 %v3469, %v3463
        %v3548 = vpack.c.b16 %v3470, %v3464
        %v3549 = vpack.c.b16 %v3471, %v3465
        %v3550 = vpack.c.b16 %v3478, %v3472
        %v3551 = vpack.c.b16 %v3479, %v3473
        %v3552 = vpack.c.b16 %v3480, %v3474
        %v3553 = vpack.c.b16 %v3481, %v3475
        %v3554 = vpack.c.b16 %v3482, %v3476
        %v3555 = vpack.c.b16 %v3483, %v3477
        %v3556 = vpack.c.b16 %v3490, %v3484
        %v3557 = vpack.c.b16 %v3491, %v3485
        %v3558 = vpack.c.b16 %v3492, %v3486
        %v3559 = vpack.c.b16 %v3493, %v3487
        %v3560 = vpack.c.b16 %v3494, %v3488
        %v3561 = vpack.c.b16 %v3495, %v3489
        %v3562 = vpack.c.b16 %v3502, %v3496
        %v3563 = vpack.c.b16 %v3503, %v3497
        %v3564 = vpack.c.b16 %v3504, %v3498
        %v3565 = vpack.c.b16 %v3505, %v3499
        %v3566 = vpack.c.b16 %v3506, %v3500
        %v3567 = vpack.c.b16 %v3507, %v3501
        %v3568 = vpack.c.b16 %v3514, %v3508
        %v3569 = vpack.c.b16 %v3515, %v3509
        %v3570 = vpack.c.b16 %v3516, %v3510
        %v3571 = vpack.c.b16 %v3517, %v3511
        %v3572 = vpack.c.b16 %v3518, %v3512
        %v3573 = vpack.c.b16 %v3519, %v3513
        %v3574 = vpack.c.b16 %v3526, %v3520
        %v3575 = vpack.c.b16 %v3527, %v3521
        %v3576 = vpack.c.b16 %v3528, %v3522
        %v3577 = vpack.c.b16 %v3529, %v3523
        %v3578 = vpack.c.b16 %v3530, %v3524
        %v3579 = vpack.c.b16 %v3531, %v3525
        %3628 = vmatprep.subr.bf16.mxu0 %v3533
        %3629 = vmatpush1.bf16.msra.mxu0 %v3532
        %3630 = vmatprep.subr.bf16.mxu0 %v3539
        %3631 = vmatpush1.bf16.msra.mxu0 %v3538
        %3632 = vmatprep.subr.bf16.mxu0 %v3545
        %3633 = vmatpush1.bf16.msra.mxu0 %v3544
        %3634 = vmatprep.subr.bf16.mxu0 %v3551
        %3635 = vmatpush1.bf16.msra.mxu0 %v3550
        %3636 = vmatprep.subr.bf16.mxu0 %v3557
        %3637 = vmatpush1.bf16.msra.mxu0 %v3556
        %3638 = vmatprep.subr.bf16.mxu0 %v3563
        %3639 = vmatpush1.bf16.msra.mxu0 %v3562
        %3640 = vmatprep.subr.bf16.mxu0 %v3569
        %3641 = vmatpush1.bf16.msra.mxu0 %v3568
        %3642 = vmatprep.subr.bf16.mxu0 %v3575
        %3643 = vmatpush1.bf16.msra.mxu0 %v3574
        %3644 = vmatprep.subr.bf16.mxu0 0
        %3645 = vmatpush1.bf16.msra.mxu0 0
        %3646 = vmatprep.subr.bf16.mxu0 0
        %3647 = vmatpush1.bf16.msra.mxu0 0
        %3648 = vmatprep.subr.bf16.mxu0 0
        %3649 = vmatpush1.bf16.msra.mxu0 0
        %3650 = vmatprep.subr.bf16.mxu0 0
        %3651 = vmatpush1.bf16.msra.mxu0 0
        %3652 = vmatprep.subr.bf16.mxu0 0
        %3653 = vmatpush1.bf16.msra.mxu0 0
        %3654 = vmatprep.subr.bf16.mxu0 0
        %3655 = vmatpush1.bf16.msra.mxu0 0
        %3656 = vmatprep.subr.bf16.mxu0 0
        %3657 = vmatpush1.bf16.msra.mxu0 0
        %3658 = vmatprep.subr.bf16.mxu0 0
        %3659 = vmatpush1.bf16.msra.mxu0 0
        %3660 = vmatprep.mubr.bf16.mxu0 0
        %3661 = vmatmul.mubr.bf16.gmra.mrb[0].mxu0 %v3386
        %v3662 = vpop.f32.mrb[0].mxu0
        %v3663 = vadd.f32 0.0, %v3662
        %v3664 = vpop.f32.mrb[0].mxu0
        %v3665 = vadd.f32 0.0, %v3664
        %v3666 = vpop.f32.mrb[0].mxu0
        %v3667 = vpop.f32.mrb[0].mxu0
        %3668 = vdwg.mxu0
        %3669 = vmatprep.subr.bf16.mxu0 %v3535
        %3670 = vmatpush1.bf16.msra.mxu0 %v3534
        %3671 = vmatprep.subr.bf16.mxu0 %v3541
        %3672 = vmatpush1.bf16.msra.mxu0 %v3540
        %3673 = vmatprep.subr.bf16.mxu0 %v3547
        %3674 = vmatpush1.bf16.msra.mxu0 %v3546
        %3675 = vmatprep.subr.bf16.mxu0 %v3553
        %3676 = vmatpush1.bf16.msra.mxu0 %v3552
        %3677 = vmatprep.subr.bf16.mxu0 %v3559
        %3678 = vmatpush1.bf16.msra.mxu0 %v3558
        %3679 = vmatprep.subr.bf16.mxu0 %v3565
        %3680 = vmatpush1.bf16.msra.mxu0 %v3564
        %3681 = vmatprep.subr.bf16.mxu0 %v3571
        %3682 = vmatpush1.bf16.msra.mxu0 %v3570
        %3683 = vmatprep.subr.bf16.mxu0 %v3577
        %3684 = vmatpush1.bf16.msra.mxu0 %v3576
        %3685 = vmatprep.subr.bf16.mxu0 0
        %3686 = vmatpush1.bf16.msra.mxu0 0
        %3687 = vmatprep.subr.bf16.mxu0 0
        %3688 = vmatpush1.bf16.msra.mxu0 0
        %3689 = vmatprep.subr.bf16.mxu0 0
        %3690 = vmatpush1.bf16.msra.mxu0 0
        %3691 = vmatprep.subr.bf16.mxu0 0
        %3692 = vmatpush1.bf16.msra.mxu0 0
        %3693 = vmatprep.subr.bf16.mxu0 0
        %3694 = vmatpush1.bf16.msra.mxu0 0
        %3695 = vmatprep.subr.bf16.mxu0 0
        %3696 = vmatpush1.bf16.msra.mxu0 0
        %3697 = vmatprep.subr.bf16.mxu0 0
        %3698 = vmatpush1.bf16.msra.mxu0 0
        %3699 = vmatprep.subr.bf16.mxu0 0
        %3700 = vmatpush1.bf16.msra.mxu0 0
        %3701 = vmatprep.mubr.bf16.mxu0 0
        %3702 = vmatmul.mubr.bf16.gmra.mrb[0].mxu0 %v3386
        %v3703 = vpop.f32.mrb[0].mxu0
        %v3704 = vadd.f32 0.0, %v3703
        %v3705 = vpop.f32.mrb[0].mxu0
        %v3706 = vadd.f32 0.0, %v3705
        %v3707 = vpop.f32.mrb[0].mxu0
        %v3708 = vpop.f32.mrb[0].mxu0
        %3709 = vdwg.mxu0
        %3710 = vmatprep.subr.bf16.mxu0 %v3537
        %3711 = vmatpush1.bf16.msra.mxu0 %v3536
        %3712 = vmatprep.subr.bf16.mxu0 %v3543
        %3713 = vmatpush1.bf16.msra.mxu0 %v3542
        %3714 = vmatprep.subr.bf16.mxu0 %v3549
        %3715 = vmatpush1.bf16.msra.mxu0 %v3548
        %3716 = vmatprep.subr.bf16.mxu0 %v3555
        %3717 = vmatpush1.bf16.msra.mxu0 %v3554
        %3718 = vmatprep.subr.bf16.mxu0 %v3561
        %3719 = vmatpush1.bf16.msra.mxu0 %v3560
        %3720 = vmatprep.subr.bf16.mxu0 %v3567
        %3721 = vmatpush1.bf16.msra.mxu0 %v3566
        %3722 = vmatprep.subr.bf16.mxu0 %v3573
        %3723 = vmatpush1.bf16.msra.mxu0 %v3572
        %3724 = vmatprep.subr.bf16.mxu0 %v3579
        %3725 = vmatpush1.bf16.msra.mxu0 %v3578
        %3726 = vmatprep.subr.bf16.mxu0 0
        %3727 = vmatpush1.bf16.msra.mxu0 0
        %3728 = vmatprep.subr.bf16.mxu0 0
        %3729 = vmatpush1.bf16.msra.mxu0 0
        %3730 = vmatprep.subr.bf16.mxu0 0
        %3731 = vmatpush1.bf16.msra.mxu0 0
        %3732 = vmatprep.subr.bf16.mxu0 0
        %3733 = vmatpush1.bf16.msra.mxu0 0
        %3734 = vmatprep.subr.bf16.mxu0 0
        %3735 = vmatpush1.bf16.msra.mxu0 0
        %3736 = vmatprep.subr.bf16.mxu0 0
        %3737 = vmatpush1.bf16.msra.mxu0 0
        %3738 = vmatprep.subr.bf16.mxu0 0
        %3739 = vmatpush1.bf16.msra.mxu0 0
        %3740 = vmatprep.subr.bf16.mxu0 0
        %3741 = vmatpush1.bf16.msra.mxu0 0
        %3742 = vmatprep.mubr.bf16.mxu0 0
        %3743 = vmatmul.mubr.bf16.gmra.mrb[0].mxu0 %v3386
        %v3744 = vpop.f32.mrb[0].mxu0
        %v3745 = vadd.f32 0.0, %v3744
        %v3746 = vpop.f32.mrb[0].mxu0
        %v3747 = vadd.f32 0.0, %v3746
        %v3748 = vpop.f32.mrb[0].mxu0
        %v3749 = vpop.f32.mrb[0].mxu0
        %3750 = vdwg.mxu0
        %v3751 = vadd.f32 %v3327, %v3663
        %v3752 = vadd.f32 %v3328, %v3665
        %v3753 = vadd.f32 %v3329, %v3704
        %v3754 = vadd.f32 %v3330, %v3706
        %v3755 = vadd.f32 %v3331, %v3745
        %v3756 = vadd.f32 %v3332, %v3747
        %s3757 = scalar_lea.vmem %s5, 2688
        %v3758 = vld [vmem:[%s3757] sm:$0xff]
        %v3759 = vld [vmem:[%s3757 + $0x8] sm:$0xff]
        %v3760 = vld [vmem:[%s3757 + $0x10] sm:$0xff]
        %v3761 = vld [vmem:[%s3757 + $0x18] sm:$0xff]
        %v3762 = vld [vmem:[%s3757 + $0x20] sm:$0xff]
        %v3763 = vld [vmem:[%s3757 + $0x28] sm:$0xff]
        %v3764 = vld [vmem:[%s3757 + $0x30] sm:$0xff]
        %v3765 = vld [vmem:[%s3757 + $0x38] sm:$0xff]
        %v3766 = vld [vmem:[%s3757 + $0x40] sm:$0xff]
        %v3767 = vld [vmem:[%s3757 + $0x48] sm:$0xff]
        %v3768 = vld [vmem:[%s3757 + $0x50] sm:$0xff]
        %v3769 = vld [vmem:[%s3757 + $0x58] sm:$0xff]
        %v3770 = vld [vmem:[%s3757 + $0x60] sm:$0xff]
        %v3771 = vld [vmem:[%s3757 + $0x68] sm:$0xff]
        %v3772 = vld [vmem:[%s3757 + $0x70] sm:$0xff]
        %v3773 = vld [vmem:[%s3757 + $0x78] sm:$0xff]
        %v3774 = vld [vmem:[%s3757 + $0x80] sm:$0xff]
        %v3775 = vld [vmem:[%s3757 + $0x88] sm:$0xff]
        %v3776 = vld [vmem:[%s3757 + $0x90] sm:$0xff]
        %v3777 = vld [vmem:[%s3757 + $0x98] sm:$0xff]
        %v3778 = vld [vmem:[%s3757 + $0xa0] sm:$0xff]
        %v3779 = vld [vmem:[%s3757 + $0xa8] sm:$0xff]
        %v3780 = vld [vmem:[%s3757 + $0xb0] sm:$0xff]
        %v3781 = vld [vmem:[%s3757 + $0xb8] sm:$0xff]
        %v3782 = vld [vmem:[%s3757 + $0xc0] sm:$0xff]
        %v3783 = vld [vmem:[%s3757 + $0xc8] sm:$0xff]
        %v3784 = vld [vmem:[%s3757 + $0xd0] sm:$0xff]
        %v3785 = vld [vmem:[%s3757 + $0xd8] sm:$0xff]
        %v3786 = vld [vmem:[%s3757 + $0xe0] sm:$0xff]
        %v3787 = vld [vmem:[%s3757 + $0xe8] sm:$0xff]
        %v3788 = vld [vmem:[%s3757 + $0xf0] sm:$0xff]
        %v3789 = vld [vmem:[%s3757 + $0xf8] sm:$0xff]
        %v3790 = vld [vmem:[%s3757 + $0x100] sm:$0xff]
        %v3791 = vld [vmem:[%s3757 + $0x108] sm:$0xff]
        %v3792 = vld [vmem:[%s3757 + $0x110] sm:$0xff]
        %v3793 = vld [vmem:[%s3757 + $0x118] sm:$0xff]
        %v3794 = vld [vmem:[%s3757 + $0x120] sm:$0xff]
        %v3795 = vld [vmem:[%s3757 + $0x128] sm:$0xff]
        %v3796 = vld [vmem:[%s3757 + $0x130] sm:$0xff]
        %v3797 = vld [vmem:[%s3757 + $0x138] sm:$0xff]
        %v3798 = vld [vmem:[%s3757 + $0x140] sm:$0xff]
        %v3799 = vld [vmem:[%s3757 + $0x148] sm:$0xff]
        %v3800 = vld [vmem:[%s3757 + $0x150] sm:$0xff]
        %v3801 = vld [vmem:[%s3757 + $0x158] sm:$0xff]
        %v3802 = vld [vmem:[%s3757 + $0x160] sm:$0xff]
        %v3803 = vld [vmem:[%s3757 + $0x168] sm:$0xff]
        %v3804 = vld [vmem:[%s3757 + $0x170] sm:$0xff]
        %v3805 = vld [vmem:[%s3757 + $0x178] sm:$0xff]
        %v3807 = vshrl.u32 %v3385, 16
        %v3809 = vrot.slane %v3807, 3
        %v3859 = vunpack.c.l.b16 %v3758
        %v3860 = vunpack.c.h.b16 %v3758
        %v3861 = vunpack.c.l.b16 %v3759
        %v3862 = vunpack.c.h.b16 %v3759
        %v3863 = vunpack.c.l.b16 %v3760
        %v3864 = vunpack.c.h.b16 %v3760
        %v3865 = vunpack.c.l.b16 %v3761
        %v3866 = vunpack.c.h.b16 %v3761
        %v3867 = vunpack.c.l.b16 %v3762
        %v3868 = vunpack.c.h.b16 %v3762
        %v3869 = vunpack.c.l.b16 %v3763
        %v3870 = vunpack.c.h.b16 %v3763
        %v3871 = vunpack.c.l.b16 %v3764
        %v3872 = vunpack.c.h.b16 %v3764
        %v3873 = vunpack.c.l.b16 %v3765
        %v3874 = vunpack.c.h.b16 %v3765
        %v3875 = vunpack.c.l.b16 %v3766
        %v3876 = vunpack.c.h.b16 %v3766
        %v3877 = vunpack.c.l.b16 %v3767
        %v3878 = vunpack.c.h.b16 %v3767
        %v3879 = vunpack.c.l.b16 %v3768
        %v3880 = vunpack.c.h.b16 %v3768
        %v3881 = vunpack.c.l.b16 %v3769
        %v3882 = vunpack.c.h.b16 %v3769
        %v3883 = vunpack.c.l.b16 %v3770
        %v3884 = vunpack.c.h.b16 %v3770
        %v3885 = vunpack.c.l.b16 %v3771
        %v3886 = vunpack.c.h.b16 %v3771
        %v3887 = vunpack.c.l.b16 %v3772
        %v3888 = vunpack.c.h.b16 %v3772
        %v3889 = vunpack.c.l.b16 %v3773
        %v3890 = vunpack.c.h.b16 %v3773
        %v3891 = vunpack.c.l.b16 %v3774
        %v3892 = vunpack.c.h.b16 %v3774
        %v3893 = vunpack.c.l.b16 %v3775
        %v3894 = vunpack.c.h.b16 %v3775
        %v3895 = vunpack.c.l.b16 %v3776
        %v3896 = vunpack.c.h.b16 %v3776
        %v3897 = vunpack.c.l.b16 %v3777
        %v3898 = vunpack.c.h.b16 %v3777
        %v3899 = vunpack.c.l.b16 %v3778
        %v3900 = vunpack.c.h.b16 %v3778
        %v3901 = vunpack.c.l.b16 %v3779
        %v3902 = vunpack.c.h.b16 %v3779
        %v3903 = vunpack.c.l.b16 %v3780
        %v3904 = vunpack.c.h.b16 %v3780
        %v3905 = vunpack.c.l.b16 %v3781
        %v3906 = vunpack.c.h.b16 %v3781
        %v3907 = vunpack.c.l.b16 %v3782
        %v3908 = vunpack.c.h.b16 %v3782
        %v3909 = vunpack.c.l.b16 %v3783
        %v3910 = vunpack.c.h.b16 %v3783
        %v3911 = vunpack.c.l.b16 %v3784
        %v3912 = vunpack.c.h.b16 %v3784
        %v3913 = vunpack.c.l.b16 %v3785
        %v3914 = vunpack.c.h.b16 %v3785
        %v3915 = vunpack.c.l.b16 %v3786
        %v3916 = vunpack.c.h.b16 %v3786
        %v3917 = vunpack.c.l.b16 %v3787
        %v3918 = vunpack.c.h.b16 %v3787
        %v3919 = vunpack.c.l.b16 %v3788
        %v3920 = vunpack.c.h.b16 %v3788
        %v3921 = vunpack.c.l.b16 %v3789
        %v3922 = vunpack.c.h.b16 %v3789
        %v3923 = vunpack.c.l.b16 %v3790
        %v3924 = vunpack.c.h.b16 %v3790
        %v3925 = vunpack.c.l.b16 %v3791
        %v3926 = vunpack.c.h.b16 %v3791
        %v3927 = vunpack.c.l.b16 %v3792
        %v3928 = vunpack.c.h.b16 %v3792
        %v3929 = vunpack.c.l.b16 %v3793
        %v3930 = vunpack.c.h.b16 %v3793
        %v3931 = vunpack.c.l.b16 %v3794
        %v3932 = vunpack.c.h.b16 %v3794
        %v3933 = vunpack.c.l.b16 %v3795
        %v3934 = vunpack.c.h.b16 %v3795
        %v3935 = vunpack.c.l.b16 %v3796
        %v3936 = vunpack.c.h.b16 %v3796
        %v3937 = vunpack.c.l.b16 %v3797
        %v3938 = vunpack.c.h.b16 %v3797
        %v3939 = vunpack.c.l.b16 %v3798
        %v3940 = vunpack.c.h.b16 %v3798
        %v3941 = vunpack.c.l.b16 %v3799
        %v3942 = vunpack.c.h.b16 %v3799
        %v3943 = vunpack.c.l.b16 %v3800
        %v3944 = vunpack.c.h.b16 %v3800
        %v3945 = vunpack.c.l.b16 %v3801
        %v3946 = vunpack.c.h.b16 %v3801
        %v3947 = vunpack.c.l.b16 %v3802
        %v3948 = vunpack.c.h.b16 %v3802
        %v3949 = vunpack.c.l.b16 %v3803
        %v3950 = vunpack.c.h.b16 %v3803
        %v3951 = vunpack.c.l.b16 %v3804
        %v3952 = vunpack.c.h.b16 %v3804
        %v3953 = vunpack.c.l.b16 %v3805
        %v3954 = vunpack.c.h.b16 %v3805
        %v3955 = vpack.c.b16 %v3865, %v3859
        %v3956 = vpack.c.b16 %v3866, %v3860
        %v3957 = vpack.c.b16 %v3867, %v3861
        %v3958 = vpack.c.b16 %v3868, %v3862
        %v3959 = vpack.c.b16 %v3869, %v3863
        %v3960 = vpack.c.b16 %v3870, %v3864
        %v3961 = vpack.c.b16 %v3877, %v3871
        %v3962 = vpack.c.b16 %v3878, %v3872
        %v3963 = vpack.c.b16 %v3879, %v3873
        %v3964 = vpack.c.b16 %v3880, %v3874
        %v3965 = vpack.c.b16 %v3881, %v3875
        %v3966 = vpack.c.b16 %v3882, %v3876
        %v3967 = vpack.c.b16 %v3889, %v3883
        %v3968 = vpack.c.b16 %v3890, %v3884
        %v3969 = vpack.c.b16 %v3891, %v3885
        %v3970 = vpack.c.b16 %v3892, %v3886
        %v3971 = vpack.c.b16 %v3893, %v3887
        %v3972 = vpack.c.b16 %v3894, %v3888
        %v3973 = vpack.c.b16 %v3901, %v3895
        %v3974 = vpack.c.b16 %v3902, %v3896
        %v3975 = vpack.c.b16 %v3903, %v3897
        %v3976 = vpack.c.b16 %v3904, %v3898
        %v3977 = vpack.c.b16 %v3905, %v3899
        %v3978 = vpack.c.b16 %v3906, %v3900
        %v3979 = vpack.c.b16 %v3913, %v3907
        %v3980 = vpack.c.b16 %v3914, %v3908
        %v3981 = vpack.c.b16 %v3915, %v3909
        %v3982 = vpack.c.b16 %v3916, %v3910
        %v3983 = vpack.c.b16 %v3917, %v3911
        %v3984 = vpack.c.b16 %v3918, %v3912
        %v3985 = vpack.c.b16 %v3925, %v3919
        %v3986 = vpack.c.b16 %v3926, %v3920
        %v3987 = vpack.c.b16 %v3927, %v3921
        %v3988 = vpack.c.b16 %v3928, %v3922
        %v3989 = vpack.c.b16 %v3929, %v3923
        %v3990 = vpack.c.b16 %v3930, %v3924
        %v3991 = vpack.c.b16 %v3937, %v3931
        %v3992 = vpack.c.b16 %v3938, %v3932
        %v3993 = vpack.c.b16 %v3939, %v3933
        %v3994 = vpack.c.b16 %v3940, %v3934
        %v3995 = vpack.c.b16 %v3941, %v3935
        %v3996 = vpack.c.b16 %v3942, %v3936
        %v3997 = vpack.c.b16 %v3949, %v3943
        %v3998 = vpack.c.b16 %v3950, %v3944
        %v3999 = vpack.c.b16 %v3951, %v3945
        %v4000 = vpack.c.b16 %v3952, %v3946
        %v4001 = vpack.c.b16 %v3953, %v3947
        %v4002 = vpack.c.b16 %v3954, %v3948
        %4051 = vmatprep.subr.bf16.mxu0 %v3956
        %4052 = vmatpush1.bf16.msra.mxu0 %v3955
        %4053 = vmatprep.subr.bf16.mxu0 %v3962
        %4054 = vmatpush1.bf16.msra.mxu0 %v3961
        %4055 = vmatprep.subr.bf16.mxu0 %v3968
        %4056 = vmatpush1.bf16.msra.mxu0 %v3967
        %4057 = vmatprep.subr.bf16.mxu0 %v3974
        %4058 = vmatpush1.bf16.msra.mxu0 %v3973
        %4059 = vmatprep.subr.bf16.mxu0 %v3980
        %4060 = vmatpush1.bf16.msra.mxu0 %v3979
        %4061 = vmatprep.subr.bf16.mxu0 %v3986
        %4062 = vmatpush1.bf16.msra.mxu0 %v3985
        %4063 = vmatprep.subr.bf16.mxu0 %v3992
        %4064 = vmatpush1.bf16.msra.mxu0 %v3991
        %4065 = vmatprep.subr.bf16.mxu0 %v3998
        %4066 = vmatpush1.bf16.msra.mxu0 %v3997
        %4067 = vmatprep.subr.bf16.mxu0 0
        %4068 = vmatpush1.bf16.msra.mxu0 0
        %4069 = vmatprep.subr.bf16.mxu0 0
        %4070 = vmatpush1.bf16.msra.mxu0 0
        %4071 = vmatprep.subr.bf16.mxu0 0
        %4072 = vmatpush1.bf16.msra.mxu0 0
        %4073 = vmatprep.subr.bf16.mxu0 0
        %4074 = vmatpush1.bf16.msra.mxu0 0
        %4075 = vmatprep.subr.bf16.mxu0 0
        %4076 = vmatpush1.bf16.msra.mxu0 0
        %4077 = vmatprep.subr.bf16.mxu0 0
        %4078 = vmatpush1.bf16.msra.mxu0 0
        %4079 = vmatprep.subr.bf16.mxu0 0
        %4080 = vmatpush1.bf16.msra.mxu0 0
        %4081 = vmatprep.subr.bf16.mxu0 0
        %4082 = vmatpush1.bf16.msra.mxu0 0
        %4083 = vmatprep.mubr.bf16.mxu0 0
        %4084 = vmatmul.mubr.bf16.gmra.mrb[0].mxu0 %v3809
        %v4085 = vpop.f32.mrb[0].mxu0
        %v4086 = vadd.f32 0.0, %v4085
        %v4087 = vpop.f32.mrb[0].mxu0
        %v4088 = vadd.f32 0.0, %v4087
        %v4089 = vpop.f32.mrb[0].mxu0
        %v4090 = vpop.f32.mrb[0].mxu0
        %4091 = vdwg.mxu0
        %4092 = vmatprep.subr.bf16.mxu0 %v3958
        %4093 = vmatpush1.bf16.msra.mxu0 %v3957
        %4094 = vmatprep.subr.bf16.mxu0 %v3964
        %4095 = vmatpush1.bf16.msra.mxu0 %v3963
        %4096 = vmatprep.subr.bf16.mxu0 %v3970
        %4097 = vmatpush1.bf16.msra.mxu0 %v3969
        %4098 = vmatprep.subr.bf16.mxu0 %v3976
        %4099 = vmatpush1.bf16.msra.mxu0 %v3975
        %4100 = vmatprep.subr.bf16.mxu0 %v3982
        %4101 = vmatpush1.bf16.msra.mxu0 %v3981
        %4102 = vmatprep.subr.bf16.mxu0 %v3988
        %4103 = vmatpush1.bf16.msra.mxu0 %v3987
        %4104 = vmatprep.subr.bf16.mxu0 %v3994
        %4105 = vmatpush1.bf16.msra.mxu0 %v3993
        %4106 = vmatprep.subr.bf16.mxu0 %v4000
        %4107 = vmatpush1.bf16.msra.mxu0 %v3999
        %4108 = vmatprep.subr.bf16.mxu0 0
        %4109 = vmatpush1.bf16.msra.mxu0 0
        %4110 = vmatprep.subr.bf16.mxu0 0
        %4111 = vmatpush1.bf16.msra.mxu0 0
        %4112 = vmatprep.subr.bf16.mxu0 0
        %4113 = vmatpush1.bf16.msra.mxu0 0
        %4114 = vmatprep.subr.bf16.mxu0 0
        %4115 = vmatpush1.bf16.msra.mxu0 0
        %4116 = vmatprep.subr.bf16.mxu0 0
        %4117 = vmatpush1.bf16.msra.mxu0 0
        %4118 = vmatprep.subr.bf16.mxu0 0
        %4119 = vmatpush1.bf16.msra.mxu0 0
        %4120 = vmatprep.subr.bf16.mxu0 0
        %4121 = vmatpush1.bf16.msra.mxu0 0
        %4122 = vmatprep.subr.bf16.mxu0 0
        %4123 = vmatpush1.bf16.msra.mxu0 0
        %4124 = vmatprep.mubr.bf16.mxu0 0
        %4125 = vmatmul.mubr.bf16.gmra.mrb[0].mxu0 %v3809
        %v4126 = vpop.f32.mrb[0].mxu0
        %v4127 = vadd.f32 0.0, %v4126
        %v4128 = vpop.f32.mrb[0].mxu0
        %v4129 = vadd.f32 0.0, %v4128
        %v4130 = vpop.f32.mrb[0].mxu0
        %v4131 = vpop.f32.mrb[0].mxu0
        %4132 = vdwg.mxu0
        %4133 = vmatprep.subr.bf16.mxu0 %v3960
        %4134 = vmatpush1.bf16.msra.mxu0 %v3959
        %4135 = vmatprep.subr.bf16.mxu0 %v3966
        %4136 = vmatpush1.bf16.msra.mxu0 %v3965
        %4137 = vmatprep.subr.bf16.mxu0 %v3972
        %4138 = vmatpush1.bf16.msra.mxu0 %v3971
        %4139 = vmatprep.subr.bf16.mxu0 %v3978
        %4140 = vmatpush1.bf16.msra.mxu0 %v3977
        %4141 = vmatprep.subr.bf16.mxu0 %v3984
        %4142 = vmatpush1.bf16.msra.mxu0 %v3983
        %4143 = vmatprep.subr.bf16.mxu0 %v3990
        %4144 = vmatpush1.bf16.msra.mxu0 %v3989
        %4145 = vmatprep.subr.bf16.mxu0 %v3996
        %4146 = vmatpush1.bf16.msra.mxu0 %v3995
        %4147 = vmatprep.subr.bf16.mxu0 %v4002
        %4148 = vmatpush1.bf16.msra.mxu0 %v4001
        %4149 = vmatprep.subr.bf16.mxu0 0
        %4150 = vmatpush1.bf16.msra.mxu0 0
        %4151 = vmatprep.subr.bf16.mxu0 0
        %4152 = vmatpush1.bf16.msra.mxu0 0
        %4153 = vmatprep.subr.bf16.mxu0 0
        %4154 = vmatpush1.bf16.msra.mxu0 0
        %4155 = vmatprep.subr.bf16.mxu0 0
        %4156 = vmatpush1.bf16.msra.mxu0 0
        %4157 = vmatprep.subr.bf16.mxu0 0
        %4158 = vmatpush1.bf16.msra.mxu0 0
        %4159 = vmatprep.subr.bf16.mxu0 0
        %4160 = vmatpush1.bf16.msra.mxu0 0
        %4161 = vmatprep.subr.bf16.mxu0 0
        %4162 = vmatpush1.bf16.msra.mxu0 0
        %4163 = vmatprep.subr.bf16.mxu0 0
        %4164 = vmatpush1.bf16.msra.mxu0 0
        %4165 = vmatprep.mubr.bf16.mxu0 0
        %4166 = vmatmul.mubr.bf16.gmra.mrb[0].mxu0 %v3809
        %v4167 = vpop.f32.mrb[0].mxu0
        %v4168 = vadd.f32 0.0, %v4167
        %v4169 = vpop.f32.mrb[0].mxu0
        %v4170 = vadd.f32 0.0, %v4169
        %v4171 = vpop.f32.mrb[0].mxu0
        %v4172 = vpop.f32.mrb[0].mxu0
        %4173 = vdwg.mxu0
        %v4174 = vadd.f32 %v3751, %v4086
        %v4175 = vadd.f32 %v3752, %v4088
        %v4176 = vadd.f32 %v3753, %v4127
        %v4177 = vadd.f32 %v3754, %v4129
        %v4178 = vadd.f32 %v3755, %v4168
        %v4179 = vadd.f32 %v3756, %v4170
        %s4180 = scalar_lea.vmem %s5, 3072
        %v4181 = vld [vmem:[%s4180] sm:$0xff]
        %v4182 = vld [vmem:[%s4180 + $0x8] sm:$0xff]
        %v4183 = vld [vmem:[%s4180 + $0x10] sm:$0xff]
        %v4184 = vld [vmem:[%s4180 + $0x18] sm:$0xff]
        %v4185 = vld [vmem:[%s4180 + $0x20] sm:$0xff]
        %v4186 = vld [vmem:[%s4180 + $0x28] sm:$0xff]
        %v4187 = vld [vmem:[%s4180 + $0x30] sm:$0xff]
        %v4188 = vld [vmem:[%s4180 + $0x38] sm:$0xff]
        %v4189 = vld [vmem:[%s4180 + $0x40] sm:$0xff]
        %v4190 = vld [vmem:[%s4180 + $0x48] sm:$0xff]
        %v4191 = vld [vmem:[%s4180 + $0x50] sm:$0xff]
        %v4192 = vld [vmem:[%s4180 + $0x58] sm:$0xff]
        %v4193 = vld [vmem:[%s4180 + $0x60] sm:$0xff]
        %v4194 = vld [vmem:[%s4180 + $0x68] sm:$0xff]
        %v4195 = vld [vmem:[%s4180 + $0x70] sm:$0xff]
        %v4196 = vld [vmem:[%s4180 + $0x78] sm:$0xff]
        %v4197 = vld [vmem:[%s4180 + $0x80] sm:$0xff]
        %v4198 = vld [vmem:[%s4180 + $0x88] sm:$0xff]
        %v4199 = vld [vmem:[%s4180 + $0x90] sm:$0xff]
        %v4200 = vld [vmem:[%s4180 + $0x98] sm:$0xff]
        %v4201 = vld [vmem:[%s4180 + $0xa0] sm:$0xff]
        %v4202 = vld [vmem:[%s4180 + $0xa8] sm:$0xff]
        %v4203 = vld [vmem:[%s4180 + $0xb0] sm:$0xff]
        %v4204 = vld [vmem:[%s4180 + $0xb8] sm:$0xff]
        %v4205 = vld [vmem:[%s4180 + $0xc0] sm:$0xff]
        %v4206 = vld [vmem:[%s4180 + $0xc8] sm:$0xff]
        %v4207 = vld [vmem:[%s4180 + $0xd0] sm:$0xff]
        %v4208 = vld [vmem:[%s4180 + $0xd8] sm:$0xff]
        %v4209 = vld [vmem:[%s4180 + $0xe0] sm:$0xff]
        %v4210 = vld [vmem:[%s4180 + $0xe8] sm:$0xff]
        %v4211 = vld [vmem:[%s4180 + $0xf0] sm:$0xff]
        %v4212 = vld [vmem:[%s4180 + $0xf8] sm:$0xff]
        %v4213 = vld [vmem:[%s4180 + $0x100] sm:$0xff]
        %v4214 = vld [vmem:[%s4180 + $0x108] sm:$0xff]
        %v4215 = vld [vmem:[%s4180 + $0x110] sm:$0xff]
        %v4216 = vld [vmem:[%s4180 + $0x118] sm:$0xff]
        %v4217 = vld [vmem:[%s4180 + $0x120] sm:$0xff]
        %v4218 = vld [vmem:[%s4180 + $0x128] sm:$0xff]
        %v4219 = vld [vmem:[%s4180 + $0x130] sm:$0xff]
        %v4220 = vld [vmem:[%s4180 + $0x138] sm:$0xff]
        %v4221 = vld [vmem:[%s4180 + $0x140] sm:$0xff]
        %v4222 = vld [vmem:[%s4180 + $0x148] sm:$0xff]
        %v4223 = vld [vmem:[%s4180 + $0x150] sm:$0xff]
        %v4224 = vld [vmem:[%s4180 + $0x158] sm:$0xff]
        %v4225 = vld [vmem:[%s4180 + $0x160] sm:$0xff]
        %v4226 = vld [vmem:[%s4180 + $0x168] sm:$0xff]
        %v4227 = vld [vmem:[%s4180 + $0x170] sm:$0xff]
        %v4228 = vld [vmem:[%s4180 + $0x178] sm:$0xff]
        %v4229 = vld [vmem:[#allocation2 + $0x4] sm:$0x1]
        %v4278 = vunpack.c.l.b16 %v4181
        %v4279 = vunpack.c.h.b16 %v4181
        %v4280 = vunpack.c.l.b16 %v4182
        %v4281 = vunpack.c.h.b16 %v4182
        %v4282 = vunpack.c.l.b16 %v4183
        %v4283 = vunpack.c.h.b16 %v4183
        %v4284 = vunpack.c.l.b16 %v4184
        %v4285 = vunpack.c.h.b16 %v4184
        %v4286 = vunpack.c.l.b16 %v4185
        %v4287 = vunpack.c.h.b16 %v4185
        %v4288 = vunpack.c.l.b16 %v4186
        %v4289 = vunpack.c.h.b16 %v4186
        %v4290 = vunpack.c.l.b16 %v4187
        %v4291 = vunpack.c.h.b16 %v4187
        %v4292 = vunpack.c.l.b16 %v4188
        %v4293 = vunpack.c.h.b16 %v4188
        %v4294 = vunpack.c.l.b16 %v4189
        %v4295 = vunpack.c.h.b16 %v4189
        %v4296 = vunpack.c.l.b16 %v4190
        %v4297 = vunpack.c.h.b16 %v4190
        %v4298 = vunpack.c.l.b16 %v4191
        %v4299 = vunpack.c.h.b16 %v4191
        %v4300 = vunpack.c.l.b16 %v4192
        %v4301 = vunpack.c.h.b16 %v4192
        %v4302 = vunpack.c.l.b16 %v4193
        %v4303 = vunpack.c.h.b16 %v4193
        %v4304 = vunpack.c.l.b16 %v4194
        %v4305 = vunpack.c.h.b16 %v4194
        %v4306 = vunpack.c.l.b16 %v4195
        %v4307 = vunpack.c.h.b16 %v4195
        %v4308 = vunpack.c.l.b16 %v4196
        %v4309 = vunpack.c.h.b16 %v4196
        %v4310 = vunpack.c.l.b16 %v4197
        %v4311 = vunpack.c.h.b16 %v4197
        %v4312 = vunpack.c.l.b16 %v4198
        %v4313 = vunpack.c.h.b16 %v4198
        %v4314 = vunpack.c.l.b16 %v4199
        %v4315 = vunpack.c.h.b16 %v4199
        %v4316 = vunpack.c.l.b16 %v4200
        %v4317 = vunpack.c.h.b16 %v4200
        %v4318 = vunpack.c.l.b16 %v4201
        %v4319 = vunpack.c.h.b16 %v4201
        %v4320 = vunpack.c.l.b16 %v4202
        %v4321 = vunpack.c.h.b16 %v4202
        %v4322 = vunpack.c.l.b16 %v4203
        %v4323 = vunpack.c.h.b16 %v4203
        %v4324 = vunpack.c.l.b16 %v4204
        %v4325 = vunpack.c.h.b16 %v4204
        %v4326 = vunpack.c.l.b16 %v4205
        %v4327 = vunpack.c.h.b16 %v4205
        %v4328 = vunpack.c.l.b16 %v4206
        %v4329 = vunpack.c.h.b16 %v4206
        %v4330 = vunpack.c.l.b16 %v4207
        %v4331 = vunpack.c.h.b16 %v4207
        %v4332 = vunpack.c.l.b16 %v4208
        %v4333 = vunpack.c.h.b16 %v4208
        %v4334 = vunpack.c.l.b16 %v4209
        %v4335 = vunpack.c.h.b16 %v4209
        %v4336 = vunpack.c.l.b16 %v4210
        %v4337 = vunpack.c.h.b16 %v4210
        %v4338 = vunpack.c.l.b16 %v4211
        %v4339 = vunpack.c.h.b16 %v4211
        %v4340 = vunpack.c.l.b16 %v4212
        %v4341 = vunpack.c.h.b16 %v4212
        %v4342 = vunpack.c.l.b16 %v4213
        %v4343 = vunpack.c.h.b16 %v4213
        %v4344 = vunpack.c.l.b16 %v4214
        %v4345 = vunpack.c.h.b16 %v4214
        %v4346 = vunpack.c.l.b16 %v4215
        %v4347 = vunpack.c.h.b16 %v4215
        %v4348 = vunpack.c.l.b16 %v4216
        %v4349 = vunpack.c.h.b16 %v4216
        %v4350 = vunpack.c.l.b16 %v4217
        %v4351 = vunpack.c.h.b16 %v4217
        %v4352 = vunpack.c.l.b16 %v4218
        %v4353 = vunpack.c.h.b16 %v4218
        %v4354 = vunpack.c.l.b16 %v4219
        %v4355 = vunpack.c.h.b16 %v4219
        %v4356 = vunpack.c.l.b16 %v4220
        %v4357 = vunpack.c.h.b16 %v4220
        %v4358 = vunpack.c.l.b16 %v4221
        %v4359 = vunpack.c.h.b16 %v4221
        %v4360 = vunpack.c.l.b16 %v4222
        %v4361 = vunpack.c.h.b16 %v4222
        %v4362 = vunpack.c.l.b16 %v4223
        %v4363 = vunpack.c.h.b16 %v4223
        %v4364 = vunpack.c.l.b16 %v4224
        %v4365 = vunpack.c.h.b16 %v4224
        %v4366 = vunpack.c.l.b16 %v4225
        %v4367 = vunpack.c.h.b16 %v4225
        %v4368 = vunpack.c.l.b16 %v4226
        %v4369 = vunpack.c.h.b16 %v4226
        %v4370 = vunpack.c.l.b16 %v4227
        %v4371 = vunpack.c.h.b16 %v4227
        %v4372 = vunpack.c.l.b16 %v4228
        %v4373 = vunpack.c.h.b16 %v4228
        %v4374 = vpack.c.b16 %v4284, %v4278
        %v4375 = vpack.c.b16 %v4285, %v4279
        %v4376 = vpack.c.b16 %v4286, %v4280
        %v4377 = vpack.c.b16 %v4287, %v4281
        %v4378 = vpack.c.b16 %v4288, %v4282
        %v4379 = vpack.c.b16 %v4289, %v4283
        %v4380 = vpack.c.b16 %v4296, %v4290
        %v4381 = vpack.c.b16 %v4297, %v4291
        %v4382 = vpack.c.b16 %v4298, %v4292
        %v4383 = vpack.c.b16 %v4299, %v4293
        %v4384 = vpack.c.b16 %v4300, %v4294
        %v4385 = vpack.c.b16 %v4301, %v4295
        %v4386 = vpack.c.b16 %v4308, %v4302
        %v4387 = vpack.c.b16 %v4309, %v4303
        %v4388 = vpack.c.b16 %v4310, %v4304
        %v4389 = vpack.c.b16 %v4311, %v4305
        %v4390 = vpack.c.b16 %v4312, %v4306
        %v4391 = vpack.c.b16 %v4313, %v4307
        %v4392 = vpack.c.b16 %v4320, %v4314
        %v4393 = vpack.c.b16 %v4321, %v4315
        %v4394 = vpack.c.b16 %v4322, %v4316
        %v4395 = vpack.c.b16 %v4323, %v4317
        %v4396 = vpack.c.b16 %v4324, %v4318
        %v4397 = vpack.c.b16 %v4325, %v4319
        %v4398 = vpack.c.b16 %v4332, %v4326
        %v4399 = vpack.c.b16 %v4333, %v4327
        %v4400 = vpack.c.b16 %v4334, %v4328
        %v4401 = vpack.c.b16 %v4335, %v4329
        %v4402 = vpack.c.b16 %v4336, %v4330
        %v4403 = vpack.c.b16 %v4337, %v4331
        %v4404 = vpack.c.b16 %v4344, %v4338
        %v4405 = vpack.c.b16 %v4345, %v4339
        %v4406 = vpack.c.b16 %v4346, %v4340
        %v4407 = vpack.c.b16 %v4347, %v4341
        %v4408 = vpack.c.b16 %v4348, %v4342
        %v4409 = vpack.c.b16 %v4349, %v4343
        %v4410 = vpack.c.b16 %v4356, %v4350
        %v4411 = vpack.c.b16 %v4357, %v4351
        %v4412 = vpack.c.b16 %v4358, %v4352
        %v4413 = vpack.c.b16 %v4359, %v4353
        %v4414 = vpack.c.b16 %v4360, %v4354
        %v4415 = vpack.c.b16 %v4361, %v4355
        %v4416 = vpack.c.b16 %v4368, %v4362
        %v4417 = vpack.c.b16 %v4369, %v4363
        %v4418 = vpack.c.b16 %v4370, %v4364
        %v4419 = vpack.c.b16 %v4371, %v4365
        %v4420 = vpack.c.b16 %v4372, %v4366
        %v4421 = vpack.c.b16 %v4373, %v4367
        %4470 = vmatprep.subr.bf16.mxu0 %v4375
        %4471 = vmatpush1.bf16.msra.mxu0 %v4374
        %4472 = vmatprep.subr.bf16.mxu0 %v4381
        %4473 = vmatpush1.bf16.msra.mxu0 %v4380
        %4474 = vmatprep.subr.bf16.mxu0 %v4387
        %4475 = vmatpush1.bf16.msra.mxu0 %v4386
        %4476 = vmatprep.subr.bf16.mxu0 %v4393
        %4477 = vmatpush1.bf16.msra.mxu0 %v4392
        %4478 = vmatprep.subr.bf16.mxu0 %v4399
        %4479 = vmatpush1.bf16.msra.mxu0 %v4398
        %4480 = vmatprep.subr.bf16.mxu0 %v4405
        %4481 = vmatpush1.bf16.msra.mxu0 %v4404
        %4482 = vmatprep.subr.bf16.mxu0 %v4411
        %4483 = vmatpush1.bf16.msra.mxu0 %v4410
        %4484 = vmatprep.subr.bf16.mxu0 %v4417
        %4485 = vmatpush1.bf16.msra.mxu0 %v4416
        %4486 = vmatprep.subr.bf16.mxu0 0
        %4487 = vmatpush1.bf16.msra.mxu0 0
        %4488 = vmatprep.subr.bf16.mxu0 0
        %4489 = vmatpush1.bf16.msra.mxu0 0
        %4490 = vmatprep.subr.bf16.mxu0 0
        %4491 = vmatpush1.bf16.msra.mxu0 0
        %4492 = vmatprep.subr.bf16.mxu0 0
        %4493 = vmatpush1.bf16.msra.mxu0 0
        %4494 = vmatprep.subr.bf16.mxu0 0
        %4495 = vmatpush1.bf16.msra.mxu0 0
        %4496 = vmatprep.subr.bf16.mxu0 0
        %4497 = vmatpush1.bf16.msra.mxu0 0
        %4498 = vmatprep.subr.bf16.mxu0 0
        %4499 = vmatpush1.bf16.msra.mxu0 0
        %4500 = vmatprep.subr.bf16.mxu0 0
        %4501 = vmatpush1.bf16.msra.mxu0 0
        %4502 = vmatprep.mubr.bf16.mxu0 0
        %4503 = vmatmul.mubr.bf16.gmra.mrb[0].mxu0 %v4229
        %v4504 = vpop.f32.mrb[0].mxu0
        %v4505 = vadd.f32 0.0, %v4504
        %v4506 = vpop.f32.mrb[0].mxu0
        %v4507 = vadd.f32 0.0, %v4506
        %v4508 = vpop.f32.mrb[0].mxu0
        %v4509 = vpop.f32.mrb[0].mxu0
        %4510 = vdwg.mxu0
        %4511 = vmatprep.subr.bf16.mxu0 %v4377
        %4512 = vmatpush1.bf16.msra.mxu0 %v4376
        %4513 = vmatprep.subr.bf16.mxu0 %v4383
        %4514 = vmatpush1.bf16.msra.mxu0 %v4382
        %4515 = vmatprep.subr.bf16.mxu0 %v4389
        %4516 = vmatpush1.bf16.msra.mxu0 %v4388
        %4517 = vmatprep.subr.bf16.mxu0 %v4395
        %4518 = vmatpush1.bf16.msra.mxu0 %v4394
        %4519 = vmatprep.subr.bf16.mxu0 %v4401
        %4520 = vmatpush1.bf16.msra.mxu0 %v4400
        %4521 = vmatprep.subr.bf16.mxu0 %v4407
        %4522 = vmatpush1.bf16.msra.mxu0 %v4406
        %4523 = vmatprep.subr.bf16.mxu0 %v4413
        %4524 = vmatpush1.bf16.msra.mxu0 %v4412
        %4525 = vmatprep.subr.bf16.mxu0 %v4419
        %4526 = vmatpush1.bf16.msra.mxu0 %v4418
        %4527 = vmatprep.subr.bf16.mxu0 0
        %4528 = vmatpush1.bf16.msra.mxu0 0
        %4529 = vmatprep.subr.bf16.mxu0 0
        %4530 = vmatpush1.bf16.msra.mxu0 0
        %4531 = vmatprep.subr.bf16.mxu0 0
        %4532 = vmatpush1.bf16.msra.mxu0 0
        %4533 = vmatprep.subr.bf16.mxu0 0
        %4534 = vmatpush1.bf16.msra.mxu0 0
        %4535 = vmatprep.subr.bf16.mxu0 0
        %4536 = vmatpush1.bf16.msra.mxu0 0
        %4537 = vmatprep.subr.bf16.mxu0 0
        %4538 = vmatpush1.bf16.msra.mxu0 0
        %4539 = vmatprep.subr.bf16.mxu0 0
        %4540 = vmatpush1.bf16.msra.mxu0 0
        %4541 = vmatprep.subr.bf16.mxu0 0
        %4542 = vmatpush1.bf16.msra.mxu0 0
        %4543 = vmatprep.mubr.bf16.mxu0 0
        %4544 = vmatmul.mubr.bf16.gmra.mrb[0].mxu0 %v4229
        %v4545 = vpop.f32.mrb[0].mxu0
        %v4546 = vadd.f32 0.0, %v4545
        %v4547 = vpop.f32.mrb[0].mxu0
        %v4548 = vadd.f32 0.0, %v4547
        %v4549 = vpop.f32.mrb[0].mxu0
        %v4550 = vpop.f32.mrb[0].mxu0
        %4551 = vdwg.mxu0
        %4552 = vmatprep.subr.bf16.mxu0 %v4379
        %4553 = vmatpush1.bf16.msra.mxu0 %v4378
        %4554 = vmatprep.subr.bf16.mxu0 %v4385
        %4555 = vmatpush1.bf16.msra.mxu0 %v4384
        %4556 = vmatprep.subr.bf16.mxu0 %v4391
        %4557 = vmatpush1.bf16.msra.mxu0 %v4390
        %4558 = vmatprep.subr.bf16.mxu0 %v4397
        %4559 = vmatpush1.bf16.msra.mxu0 %v4396
        %4560 = vmatprep.subr.bf16.mxu0 %v4403
        %4561 = vmatpush1.bf16.msra.mxu0 %v4402
        %4562 = vmatprep.subr.bf16.mxu0 %v4409
        %4563 = vmatpush1.bf16.msra.mxu0 %v4408
        %4564 = vmatprep.subr.bf16.mxu0 %v4415
        %4565 = vmatpush1.bf16.msra.mxu0 %v4414
        %4566 = vmatprep.subr.bf16.mxu0 %v4421
        %4567 = vmatpush1.bf16.msra.mxu0 %v4420
        %4568 = vmatprep.subr.bf16.mxu0 0
        %4569 = vmatpush1.bf16.msra.mxu0 0
        %4570 = vmatprep.subr.bf16.mxu0 0
        %4571 = vmatpush1.bf16.msra.mxu0 0
        %4572 = vmatprep.subr.bf16.mxu0 0
        %4573 = vmatpush1.bf16.msra.mxu0 0
        %4574 = vmatprep.subr.bf16.mxu0 0
        %4575 = vmatpush1.bf16.msra.mxu0 0
        %4576 = vmatprep.subr.bf16.mxu0 0
        %4577 = vmatpush1.bf16.msra.mxu0 0
        %4578 = vmatprep.subr.bf16.mxu0 0
        %4579 = vmatpush1.bf16.msra.mxu0 0
        %4580 = vmatprep.subr.bf16.mxu0 0
        %4581 = vmatpush1.bf16.msra.mxu0 0
        %4582 = vmatprep.subr.bf16.mxu0 0
        %4583 = vmatpush1.bf16.msra.mxu0 0
        %4584 = vmatprep.mubr.bf16.mxu0 0
        %4585 = vmatmul.mubr.bf16.gmra.mrb[0].mxu0 %v4229
        %v4586 = vpop.f32.mrb[0].mxu0
        %v4587 = vadd.f32 0.0, %v4586
        %v4588 = vpop.f32.mrb[0].mxu0
        %v4589 = vadd.f32 0.0, %v4588
        %v4590 = vpop.f32.mrb[0].mxu0
        %v4591 = vpop.f32.mrb[0].mxu0
        %4592 = vdwg.mxu0
        %v4593 = vadd.f32 %v4174, %v4505
        %v4594 = vadd.f32 %v4175, %v4507
        %v4595 = vadd.f32 %v4176, %v4546
        %v4596 = vadd.f32 %v4177, %v4548
        %v4597 = vadd.f32 %v4178, %v4587
        %v4598 = vadd.f32 %v4179, %v4589
        %s4599 = scalar_lea.vmem %s5, 3456
        %v4600 = vld [vmem:[%s4599] sm:$0xff]
        %v4601 = vld [vmem:[%s4599 + $0x8] sm:$0xff]
        %v4602 = vld [vmem:[%s4599 + $0x10] sm:$0xff]
        %v4603 = vld [vmem:[%s4599 + $0x18] sm:$0xff]
        %v4604 = vld [vmem:[%s4599 + $0x20] sm:$0xff]
        %v4605 = vld [vmem:[%s4599 + $0x28] sm:$0xff]
        %v4606 = vld [vmem:[%s4599 + $0x30] sm:$0xff]
        %v4607 = vld [vmem:[%s4599 + $0x38] sm:$0xff]
        %v4608 = vld [vmem:[%s4599 + $0x40] sm:$0xff]
        %v4609 = vld [vmem:[%s4599 + $0x48] sm:$0xff]
        %v4610 = vld [vmem:[%s4599 + $0x50] sm:$0xff]
        %v4611 = vld [vmem:[%s4599 + $0x58] sm:$0xff]
        %v4612 = vld [vmem:[%s4599 + $0x60] sm:$0xff]
        %v4613 = vld [vmem:[%s4599 + $0x68] sm:$0xff]
        %v4614 = vld [vmem:[%s4599 + $0x70] sm:$0xff]
        %v4615 = vld [vmem:[%s4599 + $0x78] sm:$0xff]
        %v4616 = vld [vmem:[%s4599 + $0x80] sm:$0xff]
        %v4617 = vld [vmem:[%s4599 + $0x88] sm:$0xff]
        %v4618 = vld [vmem:[%s4599 + $0x90] sm:$0xff]
        %v4619 = vld [vmem:[%s4599 + $0x98] sm:$0xff]
        %v4620 = vld [vmem:[%s4599 + $0xa0] sm:$0xff]
        %v4621 = vld [vmem:[%s4599 + $0xa8] sm:$0xff]
        %v4622 = vld [vmem:[%s4599 + $0xb0] sm:$0xff]
        %v4623 = vld [vmem:[%s4599 + $0xb8] sm:$0xff]
        %v4624 = vld [vmem:[%s4599 + $0xc0] sm:$0xff]
        %v4625 = vld [vmem:[%s4599 + $0xc8] sm:$0xff]
        %v4626 = vld [vmem:[%s4599 + $0xd0] sm:$0xff]
        %v4627 = vld [vmem:[%s4599 + $0xd8] sm:$0xff]
        %v4628 = vld [vmem:[%s4599 + $0xe0] sm:$0xff]
        %v4629 = vld [vmem:[%s4599 + $0xe8] sm:$0xff]
        %v4630 = vld [vmem:[%s4599 + $0xf0] sm:$0xff]
        %v4631 = vld [vmem:[%s4599 + $0xf8] sm:$0xff]
        %v4632 = vld [vmem:[%s4599 + $0x100] sm:$0xff]
        %v4633 = vld [vmem:[%s4599 + $0x108] sm:$0xff]
        %v4634 = vld [vmem:[%s4599 + $0x110] sm:$0xff]
        %v4635 = vld [vmem:[%s4599 + $0x118] sm:$0xff]
        %v4636 = vld [vmem:[%s4599 + $0x120] sm:$0xff]
        %v4637 = vld [vmem:[%s4599 + $0x128] sm:$0xff]
        %v4638 = vld [vmem:[%s4599 + $0x130] sm:$0xff]
        %v4639 = vld [vmem:[%s4599 + $0x138] sm:$0xff]
        %v4640 = vld [vmem:[%s4599 + $0x140] sm:$0xff]
        %v4641 = vld [vmem:[%s4599 + $0x148] sm:$0xff]
        %v4642 = vld [vmem:[%s4599 + $0x150] sm:$0xff]
        %v4643 = vld [vmem:[%s4599 + $0x158] sm:$0xff]
        %v4644 = vld [vmem:[%s4599 + $0x160] sm:$0xff]
        %v4645 = vld [vmem:[%s4599 + $0x168] sm:$0xff]
        %v4646 = vld [vmem:[%s4599 + $0x170] sm:$0xff]
        %v4647 = vld [vmem:[%s4599 + $0x178] sm:$0xff]
        %v4649 = vunpack.c.l.b16 %v4229
        %v4650 = vpack.c.b16 %v4649, %v4649
        %v4652 = vshrl.u32 %v4650, 16
        %v4703 = vunpack.c.l.b16 %v4600
        %v4704 = vunpack.c.h.b16 %v4600
        %v4705 = vunpack.c.l.b16 %v4601
        %v4706 = vunpack.c.h.b16 %v4601
        %v4707 = vunpack.c.l.b16 %v4602
        %v4708 = vunpack.c.h.b16 %v4602
        %v4709 = vunpack.c.l.b16 %v4603
        %v4710 = vunpack.c.h.b16 %v4603
        %v4711 = vunpack.c.l.b16 %v4604
        %v4712 = vunpack.c.h.b16 %v4604
        %v4713 = vunpack.c.l.b16 %v4605
        %v4714 = vunpack.c.h.b16 %v4605
        %v4715 = vunpack.c.l.b16 %v4606
        %v4716 = vunpack.c.h.b16 %v4606
        %v4717 = vunpack.c.l.b16 %v4607
        %v4718 = vunpack.c.h.b16 %v4607
        %v4719 = vunpack.c.l.b16 %v4608
        %v4720 = vunpack.c.h.b16 %v4608
        %v4721 = vunpack.c.l.b16 %v4609
        %v4722 = vunpack.c.h.b16 %v4609
        %v4723 = vunpack.c.l.b16 %v4610
        %v4724 = vunpack.c.h.b16 %v4610
        %v4725 = vunpack.c.l.b16 %v4611
        %v4726 = vunpack.c.h.b16 %v4611
        %v4727 = vunpack.c.l.b16 %v4612
        %v4728 = vunpack.c.h.b16 %v4612
        %v4729 = vunpack.c.l.b16 %v4613
        %v4730 = vunpack.c.h.b16 %v4613
        %v4731 = vunpack.c.l.b16 %v4614
        %v4732 = vunpack.c.h.b16 %v4614
        %v4733 = vunpack.c.l.b16 %v4615
        %v4734 = vunpack.c.h.b16 %v4615
        %v4735 = vunpack.c.l.b16 %v4616
        %v4736 = vunpack.c.h.b16 %v4616
        %v4737 = vunpack.c.l.b16 %v4617
        %v4738 = vunpack.c.h.b16 %v4617
        %v4739 = vunpack.c.l.b16 %v4618
        %v4740 = vunpack.c.h.b16 %v4618
        %v4741 = vunpack.c.l.b16 %v4619
        %v4742 = vunpack.c.h.b16 %v4619
        %v4743 = vunpack.c.l.b16 %v4620
        %v4744 = vunpack.c.h.b16 %v4620
        %v4745 = vunpack.c.l.b16 %v4621
        %v4746 = vunpack.c.h.b16 %v4621
        %v4747 = vunpack.c.l.b16 %v4622
        %v4748 = vunpack.c.h.b16 %v4622
        %v4749 = vunpack.c.l.b16 %v4623
        %v4750 = vunpack.c.h.b16 %v4623
        %v4751 = vunpack.c.l.b16 %v4624
        %v4752 = vunpack.c.h.b16 %v4624
        %v4753 = vunpack.c.l.b16 %v4625
        %v4754 = vunpack.c.h.b16 %v4625
        %v4755 = vunpack.c.l.b16 %v4626
        %v4756 = vunpack.c.h.b16 %v4626
        %v4757 = vunpack.c.l.b16 %v4627
        %v4758 = vunpack.c.h.b16 %v4627
        %v4759 = vunpack.c.l.b16 %v4628
        %v4760 = vunpack.c.h.b16 %v4628
        %v4761 = vunpack.c.l.b16 %v4629
        %v4762 = vunpack.c.h.b16 %v4629
        %v4763 = vunpack.c.l.b16 %v4630
        %v4764 = vunpack.c.h.b16 %v4630
        %v4765 = vunpack.c.l.b16 %v4631
        %v4766 = vunpack.c.h.b16 %v4631
        %v4767 = vunpack.c.l.b16 %v4632
        %v4768 = vunpack.c.h.b16 %v4632
        %v4769 = vunpack.c.l.b16 %v4633
        %v4770 = vunpack.c.h.b16 %v4633
        %v4771 = vunpack.c.l.b16 %v4634
        %v4772 = vunpack.c.h.b16 %v4634
        %v4773 = vunpack.c.l.b16 %v4635
        %v4774 = vunpack.c.h.b16 %v4635
        %v4775 = vunpack.c.l.b16 %v4636
        %v4776 = vunpack.c.h.b16 %v4636
        %v4777 = vunpack.c.l.b16 %v4637
        %v4778 = vunpack.c.h.b16 %v4637
        %v4779 = vunpack.c.l.b16 %v4638
        %v4780 = vunpack.c.h.b16 %v4638
        %v4781 = vunpack.c.l.b16 %v4639
        %v4782 = vunpack.c.h.b16 %v4639
        %v4783 = vunpack.c.l.b16 %v4640
        %v4784 = vunpack.c.h.b16 %v4640
        %v4785 = vunpack.c.l.b16 %v4641
        %v4786 = vunpack.c.h.b16 %v4641
        %v4787 = vunpack.c.l.b16 %v4642
        %v4788 = vunpack.c.h.b16 %v4642
        %v4789 = vunpack.c.l.b16 %v4643
        %v4790 = vunpack.c.h.b16 %v4643
        %v4791 = vunpack.c.l.b16 %v4644
        %v4792 = vunpack.c.h.b16 %v4644
        %v4793 = vunpack.c.l.b16 %v4645
        %v4794 = vunpack.c.h.b16 %v4645
        %v4795 = vunpack.c.l.b16 %v4646
        %v4796 = vunpack.c.h.b16 %v4646
        %v4797 = vunpack.c.l.b16 %v4647
        %v4798 = vunpack.c.h.b16 %v4647
        %v4799 = vpack.c.b16 %v4709, %v4703
        %v4800 = vpack.c.b16 %v4710, %v4704
        %v4801 = vpack.c.b16 %v4711, %v4705
        %v4802 = vpack.c.b16 %v4712, %v4706
        %v4803 = vpack.c.b16 %v4713, %v4707
        %v4804 = vpack.c.b16 %v4714, %v4708
        %v4805 = vpack.c.b16 %v4721, %v4715
        %v4806 = vpack.c.b16 %v4722, %v4716
        %v4807 = vpack.c.b16 %v4723, %v4717
        %v4808 = vpack.c.b16 %v4724, %v4718
        %v4809 = vpack.c.b16 %v4725, %v4719
        %v4810 = vpack.c.b16 %v4726, %v4720
        %v4811 = vpack.c.b16 %v4733, %v4727
        %v4812 = vpack.c.b16 %v4734, %v4728
        %v4813 = vpack.c.b16 %v4735, %v4729
        %v4814 = vpack.c.b16 %v4736, %v4730
        %v4815 = vpack.c.b16 %v4737, %v4731
        %v4816 = vpack.c.b16 %v4738, %v4732
        %v4817 = vpack.c.b16 %v4745, %v4739
        %v4818 = vpack.c.b16 %v4746, %v4740
        %v4819 = vpack.c.b16 %v4747, %v4741
        %v4820 = vpack.c.b16 %v4748, %v4742
        %v4821 = vpack.c.b16 %v4749, %v4743
        %v4822 = vpack.c.b16 %v4750, %v4744
        %v4823 = vpack.c.b16 %v4757, %v4751
        %v4824 = vpack.c.b16 %v4758, %v4752
        %v4825 = vpack.c.b16 %v4759, %v4753
        %v4826 = vpack.c.b16 %v4760, %v4754
        %v4827 = vpack.c.b16 %v4761, %v4755
        %v4828 = vpack.c.b16 %v4762, %v4756
        %v4829 = vpack.c.b16 %v4769, %v4763
        %v4830 = vpack.c.b16 %v4770, %v4764
        %v4831 = vpack.c.b16 %v4771, %v4765
        %v4832 = vpack.c.b16 %v4772, %v4766
        %v4833 = vpack.c.b16 %v4773, %v4767
        %v4834 = vpack.c.b16 %v4774, %v4768
        %v4835 = vpack.c.b16 %v4781, %v4775
        %v4836 = vpack.c.b16 %v4782, %v4776
        %v4837 = vpack.c.b16 %v4783, %v4777
        %v4838 = vpack.c.b16 %v4784, %v4778
        %v4839 = vpack.c.b16 %v4785, %v4779
        %v4840 = vpack.c.b16 %v4786, %v4780
        %v4841 = vpack.c.b16 %v4793, %v4787
        %v4842 = vpack.c.b16 %v4794, %v4788
        %v4843 = vpack.c.b16 %v4795, %v4789
        %v4844 = vpack.c.b16 %v4796, %v4790
        %v4845 = vpack.c.b16 %v4797, %v4791
        %v4846 = vpack.c.b16 %v4798, %v4792
        %4895 = vmatprep.subr.bf16.mxu0 %v4800
        %4896 = vmatpush1.bf16.msra.mxu0 %v4799
        %4897 = vmatprep.subr.bf16.mxu0 %v4806
        %4898 = vmatpush1.bf16.msra.mxu0 %v4805
        %4899 = vmatprep.subr.bf16.mxu0 %v4812
        %4900 = vmatpush1.bf16.msra.mxu0 %v4811
        %4901 = vmatprep.subr.bf16.mxu0 %v4818
        %4902 = vmatpush1.bf16.msra.mxu0 %v4817
        %4903 = vmatprep.subr.bf16.mxu0 %v4824
        %4904 = vmatpush1.bf16.msra.mxu0 %v4823
        %4905 = vmatprep.subr.bf16.mxu0 %v4830
        %4906 = vmatpush1.bf16.msra.mxu0 %v4829
        %4907 = vmatprep.subr.bf16.mxu0 %v4836
        %4908 = vmatpush1.bf16.msra.mxu0 %v4835
        %4909 = vmatprep.subr.bf16.mxu0 %v4842
        %4910 = vmatpush1.bf16.msra.mxu0 %v4841
        %4911 = vmatprep.subr.bf16.mxu0 0
        %4912 = vmatpush1.bf16.msra.mxu0 0
        %4913 = vmatprep.subr.bf16.mxu0 0
        %4914 = vmatpush1.bf16.msra.mxu0 0
        %4915 = vmatprep.subr.bf16.mxu0 0
        %4916 = vmatpush1.bf16.msra.mxu0 0
        %4917 = vmatprep.subr.bf16.mxu0 0
        %4918 = vmatpush1.bf16.msra.mxu0 0
        %4919 = vmatprep.subr.bf16.mxu0 0
        %4920 = vmatpush1.bf16.msra.mxu0 0
        %4921 = vmatprep.subr.bf16.mxu0 0
        %4922 = vmatpush1.bf16.msra.mxu0 0
        %4923 = vmatprep.subr.bf16.mxu0 0
        %4924 = vmatpush1.bf16.msra.mxu0 0
        %4925 = vmatprep.subr.bf16.mxu0 0
        %4926 = vmatpush1.bf16.msra.mxu0 0
        %4927 = vmatprep.mubr.bf16.mxu0 0
        %4928 = vmatmul.mubr.bf16.gmra.mrb[0].mxu0 %v4652
        %v4929 = vpop.f32.mrb[0].mxu0
        %v4930 = vadd.f32 0.0, %v4929
        %v4931 = vpop.f32.mrb[0].mxu0
        %v4932 = vadd.f32 0.0, %v4931
        %v4933 = vpop.f32.mrb[0].mxu0
        %v4934 = vpop.f32.mrb[0].mxu0
        %4935 = vdwg.mxu0
        %4936 = vmatprep.subr.bf16.mxu0 %v4802
        %4937 = vmatpush1.bf16.msra.mxu0 %v4801
        %4938 = vmatprep.subr.bf16.mxu0 %v4808
        %4939 = vmatpush1.bf16.msra.mxu0 %v4807
        %4940 = vmatprep.subr.bf16.mxu0 %v4814
        %4941 = vmatpush1.bf16.msra.mxu0 %v4813
        %4942 = vmatprep.subr.bf16.mxu0 %v4820
        %4943 = vmatpush1.bf16.msra.mxu0 %v4819
        %4944 = vmatprep.subr.bf16.mxu0 %v4826
        %4945 = vmatpush1.bf16.msra.mxu0 %v4825
        %4946 = vmatprep.subr.bf16.mxu0 %v4832
        %4947 = vmatpush1.bf16.msra.mxu0 %v4831
        %4948 = vmatprep.subr.bf16.mxu0 %v4838
        %4949 = vmatpush1.bf16.msra.mxu0 %v4837
        %4950 = vmatprep.subr.bf16.mxu0 %v4844
        %4951 = vmatpush1.bf16.msra.mxu0 %v4843
        %4952 = vmatprep.subr.bf16.mxu0 0
        %4953 = vmatpush1.bf16.msra.mxu0 0
        %4954 = vmatprep.subr.bf16.mxu0 0
        %4955 = vmatpush1.bf16.msra.mxu0 0
        %4956 = vmatprep.subr.bf16.mxu0 0
        %4957 = vmatpush1.bf16.msra.mxu0 0
        %4958 = vmatprep.subr.bf16.mxu0 0
        %4959 = vmatpush1.bf16.msra.mxu0 0
        %4960 = vmatprep.subr.bf16.mxu0 0
        %4961 = vmatpush1.bf16.msra.mxu0 0
        %4962 = vmatprep.subr.bf16.mxu0 0
        %4963 = vmatpush1.bf16.msra.mxu0 0
        %4964 = vmatprep.subr.bf16.mxu0 0
        %4965 = vmatpush1.bf16.msra.mxu0 0
        %4966 = vmatprep.subr.bf16.mxu0 0
        %4967 = vmatpush1.bf16.msra.mxu0 0
        %4968 = vmatprep.mubr.bf16.mxu0 0
        %4969 = vmatmul.mubr.bf16.gmra.mrb[0].mxu0 %v4652
        %v4970 = vpop.f32.mrb[0].mxu0
        %v4971 = vadd.f32 0.0, %v4970
        %v4972 = vpop.f32.mrb[0].mxu0
        %v4973 = vadd.f32 0.0, %v4972
        %v4974 = vpop.f32.mrb[0].mxu0
        %v4975 = vpop.f32.mrb[0].mxu0
        %4976 = vdwg.mxu0
        %4977 = vmatprep.subr.bf16.mxu0 %v4804
        %4978 = vmatpush1.bf16.msra.mxu0 %v4803
        %4979 = vmatprep.subr.bf16.mxu0 %v4810
        %4980 = vmatpush1.bf16.msra.mxu0 %v4809
        %4981 = vmatprep.subr.bf16.mxu0 %v4816
        %4982 = vmatpush1.bf16.msra.mxu0 %v4815
        %4983 = vmatprep.subr.bf16.mxu0 %v4822
        %4984 = vmatpush1.bf16.msra.mxu0 %v4821
        %4985 = vmatprep.subr.bf16.mxu0 %v4828
        %4986 = vmatpush1.bf16.msra.mxu0 %v4827
        %4987 = vmatprep.subr.bf16.mxu0 %v4834
        %4988 = vmatpush1.bf16.msra.mxu0 %v4833
        %4989 = vmatprep.subr.bf16.mxu0 %v4840
        %4990 = vmatpush1.bf16.msra.mxu0 %v4839
        %4991 = vmatprep.subr.bf16.mxu0 %v4846
        %4992 = vmatpush1.bf16.msra.mxu0 %v4845
        %4993 = vmatprep.subr.bf16.mxu0 0
        %4994 = vmatpush1.bf16.msra.mxu0 0
        %4995 = vmatprep.subr.bf16.mxu0 0
        %4996 = vmatpush1.bf16.msra.mxu0 0
        %4997 = vmatprep.subr.bf16.mxu0 0
        %4998 = vmatpush1.bf16.msra.mxu0 0
        %4999 = vmatprep.subr.bf16.mxu0 0
        %5000 = vmatpush1.bf16.msra.mxu0 0
        %5001 = vmatprep.subr.bf16.mxu0 0
        %5002 = vmatpush1.bf16.msra.mxu0 0
        %5003 = vmatprep.subr.bf16.mxu0 0
        %5004 = vmatpush1.bf16.msra.mxu0 0
        %5005 = vmatprep.subr.bf16.mxu0 0
        %5006 = vmatpush1.bf16.msra.mxu0 0
        %5007 = vmatprep.subr.bf16.mxu0 0
        %5008 = vmatpush1.bf16.msra.mxu0 0
        %5009 = vmatprep.mubr.bf16.mxu0 0
        %5010 = vmatmul.mubr.bf16.gmra.mrb[0].mxu0 %v4652
        %v5011 = vpop.f32.mrb[0].mxu0
        %v5012 = vadd.f32 0.0, %v5011
        %v5013 = vpop.f32.mrb[0].mxu0
        %v5014 = vadd.f32 0.0, %v5013
        %v5015 = vpop.f32.mrb[0].mxu0
        %v5016 = vpop.f32.mrb[0].mxu0
        %5017 = vdwg.mxu0
        %v5018 = vadd.f32 %v4593, %v4930
        %v5019 = vadd.f32 %v4594, %v4932
        %v5020 = vadd.f32 %v4595, %v4971
        %v5021 = vadd.f32 %v4596, %v4973
        %v5022 = vadd.f32 %v4597, %v5012
        %v5023 = vadd.f32 %v4598, %v5014
        %s5024 = scalar_lea.vmem %s5, 3840
        %v5025 = vld [vmem:[%s5024] sm:$0xff]
        %v5026 = vld [vmem:[%s5024 + $0x8] sm:$0xff]
        %v5027 = vld [vmem:[%s5024 + $0x10] sm:$0xff]
        %v5028 = vld [vmem:[%s5024 + $0x18] sm:$0xff]
        %v5029 = vld [vmem:[%s5024 + $0x20] sm:$0xff]
        %v5030 = vld [vmem:[%s5024 + $0x28] sm:$0xff]
        %v5031 = vld [vmem:[%s5024 + $0x30] sm:$0xff]
        %v5032 = vld [vmem:[%s5024 + $0x38] sm:$0xff]
        %v5033 = vld [vmem:[%s5024 + $0x40] sm:$0xff]
        %v5034 = vld [vmem:[%s5024 + $0x48] sm:$0xff]
        %v5035 = vld [vmem:[%s5024 + $0x50] sm:$0xff]
        %v5036 = vld [vmem:[%s5024 + $0x58] sm:$0xff]
        %v5037 = vld [vmem:[%s5024 + $0x60] sm:$0xff]
        %v5038 = vld [vmem:[%s5024 + $0x68] sm:$0xff]
        %v5039 = vld [vmem:[%s5024 + $0x70] sm:$0xff]
        %v5040 = vld [vmem:[%s5024 + $0x78] sm:$0xff]
        %v5041 = vld [vmem:[%s5024 + $0x80] sm:$0xff]
        %v5042 = vld [vmem:[%s5024 + $0x88] sm:$0xff]
        %v5043 = vld [vmem:[%s5024 + $0x90] sm:$0xff]
        %v5044 = vld [vmem:[%s5024 + $0x98] sm:$0xff]
        %v5045 = vld [vmem:[%s5024 + $0xa0] sm:$0xff]
        %v5046 = vld [vmem:[%s5024 + $0xa8] sm:$0xff]
        %v5047 = vld [vmem:[%s5024 + $0xb0] sm:$0xff]
        %v5048 = vld [vmem:[%s5024 + $0xb8] sm:$0xff]
        %v5049 = vld [vmem:[%s5024 + $0xc0] sm:$0xff]
        %v5050 = vld [vmem:[%s5024 + $0xc8] sm:$0xff]
        %v5051 = vld [vmem:[%s5024 + $0xd0] sm:$0xff]
        %v5052 = vld [vmem:[%s5024 + $0xd8] sm:$0xff]
        %v5053 = vld [vmem:[%s5024 + $0xe0] sm:$0xff]
        %v5054 = vld [vmem:[%s5024 + $0xe8] sm:$0xff]
        %v5055 = vld [vmem:[%s5024 + $0xf0] sm:$0xff]
        %v5056 = vld [vmem:[%s5024 + $0xf8] sm:$0xff]
        %v5057 = vld [vmem:[%s5024 + $0x100] sm:$0xff]
        %v5058 = vld [vmem:[%s5024 + $0x108] sm:$0xff]
        %v5059 = vld [vmem:[%s5024 + $0x110] sm:$0xff]
        %v5060 = vld [vmem:[%s5024 + $0x118] sm:$0xff]
        %v5061 = vld [vmem:[%s5024 + $0x120] sm:$0xff]
        %v5062 = vld [vmem:[%s5024 + $0x128] sm:$0xff]
        %v5063 = vld [vmem:[%s5024 + $0x130] sm:$0xff]
        %v5064 = vld [vmem:[%s5024 + $0x138] sm:$0xff]
        %v5065 = vld [vmem:[%s5024 + $0x140] sm:$0xff]
        %v5066 = vld [vmem:[%s5024 + $0x148] sm:$0xff]
        %v5067 = vld [vmem:[%s5024 + $0x150] sm:$0xff]
        %v5068 = vld [vmem:[%s5024 + $0x158] sm:$0xff]
        %v5069 = vld [vmem:[%s5024 + $0x160] sm:$0xff]
        %v5070 = vld [vmem:[%s5024 + $0x168] sm:$0xff]
        %v5071 = vld [vmem:[%s5024 + $0x170] sm:$0xff]
        %v5072 = vld [vmem:[%s5024 + $0x178] sm:$0xff]
        %v5073 = vld [vmem:[#allocation2 + $0x4] sm:$0x2]
        %v5075 = vunpack.c.l.b16 %v5073
        %v5076 = vpack.c.b16 %v5075, %v5075
        %v5077 = vrot.slane %v5076, 1
        %v5127 = vunpack.c.l.b16 %v5025
        %v5128 = vunpack.c.h.b16 %v5025
        %v5129 = vunpack.c.l.b16 %v5026
        %v5130 = vunpack.c.h.b16 %v5026
        %v5131 = vunpack.c.l.b16 %v5027
        %v5132 = vunpack.c.h.b16 %v5027
        %v5133 = vunpack.c.l.b16 %v5028
        %v5134 = vunpack.c.h.b16 %v5028
        %v5135 = vunpack.c.l.b16 %v5029
        %v5136 = vunpack.c.h.b16 %v5029
        %v5137 = vunpack.c.l.b16 %v5030
        %v5138 = vunpack.c.h.b16 %v5030
        %v5139 = vunpack.c.l.b16 %v5031
        %v5140 = vunpack.c.h.b16 %v5031
        %v5141 = vunpack.c.l.b16 %v5032
        %v5142 = vunpack.c.h.b16 %v5032
        %v5143 = vunpack.c.l.b16 %v5033
        %v5144 = vunpack.c.h.b16 %v5033
        %v5145 = vunpack.c.l.b16 %v5034
        %v5146 = vunpack.c.h.b16 %v5034
        %v5147 = vunpack.c.l.b16 %v5035
        %v5148 = vunpack.c.h.b16 %v5035
        %v5149 = vunpack.c.l.b16 %v5036
        %v5150 = vunpack.c.h.b16 %v5036
        %v5151 = vunpack.c.l.b16 %v5037
        %v5152 = vunpack.c.h.b16 %v5037
        %v5153 = vunpack.c.l.b16 %v5038
        %v5154 = vunpack.c.h.b16 %v5038
        %v5155 = vunpack.c.l.b16 %v5039
        %v5156 = vunpack.c.h.b16 %v5039
        %v5157 = vunpack.c.l.b16 %v5040
        %v5158 = vunpack.c.h.b16 %v5040
        %v5159 = vunpack.c.l.b16 %v5041
        %v5160 = vunpack.c.h.b16 %v5041
        %v5161 = vunpack.c.l.b16 %v5042
        %v5162 = vunpack.c.h.b16 %v5042
        %v5163 = vunpack.c.l.b16 %v5043
        %v5164 = vunpack.c.h.b16 %v5043
        %v5165 = vunpack.c.l.b16 %v5044
        %v5166 = vunpack.c.h.b16 %v5044
        %v5167 = vunpack.c.l.b16 %v5045
        %v5168 = vunpack.c.h.b16 %v5045
        %v5169 = vunpack.c.l.b16 %v5046
        %v5170 = vunpack.c.h.b16 %v5046
        %v5171 = vunpack.c.l.b16 %v5047
        %v5172 = vunpack.c.h.b16 %v5047
        %v5173 = vunpack.c.l.b16 %v5048
        %v5174 = vunpack.c.h.b16 %v5048
        %v5175 = vunpack.c.l.b16 %v5049
        %v5176 = vunpack.c.h.b16 %v5049
        %v5177 = vunpack.c.l.b16 %v5050
        %v5178 = vunpack.c.h.b16 %v5050
        %v5179 = vunpack.c.l.b16 %v5051
        %v5180 = vunpack.c.h.b16 %v5051
        %v5181 = vunpack.c.l.b16 %v5052
        %v5182 = vunpack.c.h.b16 %v5052
        %v5183 = vunpack.c.l.b16 %v5053
        %v5184 = vunpack.c.h.b16 %v5053
        %v5185 = vunpack.c.l.b16 %v5054
        %v5186 = vunpack.c.h.b16 %v5054
        %v5187 = vunpack.c.l.b16 %v5055
        %v5188 = vunpack.c.h.b16 %v5055
        %v5189 = vunpack.c.l.b16 %v5056
        %v5190 = vunpack.c.h.b16 %v5056
        %v5191 = vunpack.c.l.b16 %v5057
        %v5192 = vunpack.c.h.b16 %v5057
        %v5193 = vunpack.c.l.b16 %v5058
        %v5194 = vunpack.c.h.b16 %v5058
        %v5195 = vunpack.c.l.b16 %v5059
        %v5196 = vunpack.c.h.b16 %v5059
        %v5197 = vunpack.c.l.b16 %v5060
        %v5198 = vunpack.c.h.b16 %v5060
        %v5199 = vunpack.c.l.b16 %v5061
        %v5200 = vunpack.c.h.b16 %v5061
        %v5201 = vunpack.c.l.b16 %v5062
        %v5202 = vunpack.c.h.b16 %v5062
        %v5203 = vunpack.c.l.b16 %v5063
        %v5204 = vunpack.c.h.b16 %v5063
        %v5205 = vunpack.c.l.b16 %v5064
        %v5206 = vunpack.c.h.b16 %v5064
        %v5207 = vunpack.c.l.b16 %v5065
        %v5208 = vunpack.c.h.b16 %v5065
        %v5209 = vunpack.c.l.b16 %v5066
        %v5210 = vunpack.c.h.b16 %v5066
        %v5211 = vunpack.c.l.b16 %v5067
        %v5212 = vunpack.c.h.b16 %v5067
        %v5213 = vunpack.c.l.b16 %v5068
        %v5214 = vunpack.c.h.b16 %v5068
        %v5215 = vunpack.c.l.b16 %v5069
        %v5216 = vunpack.c.h.b16 %v5069
        %v5217 = vunpack.c.l.b16 %v5070
        %v5218 = vunpack.c.h.b16 %v5070
        %v5219 = vunpack.c.l.b16 %v5071
        %v5220 = vunpack.c.h.b16 %v5071
        %v5221 = vunpack.c.l.b16 %v5072
        %v5222 = vunpack.c.h.b16 %v5072
        %v5223 = vpack.c.b16 %v5133, %v5127
        %v5224 = vpack.c.b16 %v5134, %v5128
        %v5225 = vpack.c.b16 %v5135, %v5129
        %v5226 = vpack.c.b16 %v5136, %v5130
        %v5227 = vpack.c.b16 %v5137, %v5131
        %v5228 = vpack.c.b16 %v5138, %v5132
        %v5229 = vpack.c.b16 %v5145, %v5139
        %v5230 = vpack.c.b16 %v5146, %v5140
        %v5231 = vpack.c.b16 %v5147, %v5141
        %v5232 = vpack.c.b16 %v5148, %v5142
        %v5233 = vpack.c.b16 %v5149, %v5143
        %v5234 = vpack.c.b16 %v5150, %v5144
        %v5235 = vpack.c.b16 %v5157, %v5151
        %v5236 = vpack.c.b16 %v5158, %v5152
        %v5237 = vpack.c.b16 %v5159, %v5153
        %v5238 = vpack.c.b16 %v5160, %v5154
        %v5239 = vpack.c.b16 %v5161, %v5155
        %v5240 = vpack.c.b16 %v5162, %v5156
        %v5241 = vpack.c.b16 %v5169, %v5163
        %v5242 = vpack.c.b16 %v5170, %v5164
        %v5243 = vpack.c.b16 %v5171, %v5165
        %v5244 = vpack.c.b16 %v5172, %v5166
        %v5245 = vpack.c.b16 %v5173, %v5167
        %v5246 = vpack.c.b16 %v5174, %v5168
        %v5247 = vpack.c.b16 %v5181, %v5175
        %v5248 = vpack.c.b16 %v5182, %v5176
        %v5249 = vpack.c.b16 %v5183, %v5177
        %v5250 = vpack.c.b16 %v5184, %v5178
        %v5251 = vpack.c.b16 %v5185, %v5179
        %v5252 = vpack.c.b16 %v5186, %v5180
        %v5253 = vpack.c.b16 %v5193, %v5187
        %v5254 = vpack.c.b16 %v5194, %v5188
        %v5255 = vpack.c.b16 %v5195, %v5189
        %v5256 = vpack.c.b16 %v5196, %v5190
        %v5257 = vpack.c.b16 %v5197, %v5191
        %v5258 = vpack.c.b16 %v5198, %v5192
        %v5259 = vpack.c.b16 %v5205, %v5199
        %v5260 = vpack.c.b16 %v5206, %v5200
        %v5261 = vpack.c.b16 %v5207, %v5201
        %v5262 = vpack.c.b16 %v5208, %v5202
        %v5263 = vpack.c.b16 %v5209, %v5203
        %v5264 = vpack.c.b16 %v5210, %v5204
        %v5265 = vpack.c.b16 %v5217, %v5211
        %v5266 = vpack.c.b16 %v5218, %v5212
        %v5267 = vpack.c.b16 %v5219, %v5213
        %v5268 = vpack.c.b16 %v5220, %v5214
        %v5269 = vpack.c.b16 %v5221, %v5215
        %v5270 = vpack.c.b16 %v5222, %v5216
        %5319 = vmatprep.subr.bf16.mxu0 %v5224
        %5320 = vmatpush1.bf16.msra.mxu0 %v5223
        %5321 = vmatprep.subr.bf16.mxu0 %v5230
        %5322 = vmatpush1.bf16.msra.mxu0 %v5229
        %5323 = vmatprep.subr.bf16.mxu0 %v5236
        %5324 = vmatpush1.bf16.msra.mxu0 %v5235
        %5325 = vmatprep.subr.bf16.mxu0 %v5242
        %5326 = vmatpush1.bf16.msra.mxu0 %v5241
        %5327 = vmatprep.subr.bf16.mxu0 %v5248
        %5328 = vmatpush1.bf16.msra.mxu0 %v5247
        %5329 = vmatprep.subr.bf16.mxu0 %v5254
        %5330 = vmatpush1.bf16.msra.mxu0 %v5253
        %5331 = vmatprep.subr.bf16.mxu0 %v5260
        %5332 = vmatpush1.bf16.msra.mxu0 %v5259
        %5333 = vmatprep.subr.bf16.mxu0 %v5266
        %5334 = vmatpush1.bf16.msra.mxu0 %v5265
        %5335 = vmatprep.subr.bf16.mxu0 0
        %5336 = vmatpush1.bf16.msra.mxu0 0
        %5337 = vmatprep.subr.bf16.mxu0 0
        %5338 = vmatpush1.bf16.msra.mxu0 0
        %5339 = vmatprep.subr.bf16.mxu0 0
        %5340 = vmatpush1.bf16.msra.mxu0 0
        %5341 = vmatprep.subr.bf16.mxu0 0
        %5342 = vmatpush1.bf16.msra.mxu0 0
        %5343 = vmatprep.subr.bf16.mxu0 0
        %5344 = vmatpush1.bf16.msra.mxu0 0
        %5345 = vmatprep.subr.bf16.mxu0 0
        %5346 = vmatpush1.bf16.msra.mxu0 0
        %5347 = vmatprep.subr.bf16.mxu0 0
        %5348 = vmatpush1.bf16.msra.mxu0 0
        %5349 = vmatprep.subr.bf16.mxu0 0
        %5350 = vmatpush1.bf16.msra.mxu0 0
        %5351 = vmatprep.mubr.bf16.mxu0 0
        %5352 = vmatmul.mubr.bf16.gmra.mrb[0].mxu0 %v5077
        %v5353 = vpop.f32.mrb[0].mxu0
        %v5354 = vadd.f32 0.0, %v5353
        %v5355 = vpop.f32.mrb[0].mxu0
        %v5356 = vadd.f32 0.0, %v5355
        %v5357 = vpop.f32.mrb[0].mxu0
        %v5358 = vpop.f32.mrb[0].mxu0
        %5359 = vdwg.mxu0
        %5360 = vmatprep.subr.bf16.mxu0 %v5226
        %5361 = vmatpush1.bf16.msra.mxu0 %v5225
        %5362 = vmatprep.subr.bf16.mxu0 %v5232
        %5363 = vmatpush1.bf16.msra.mxu0 %v5231
        %5364 = vmatprep.subr.bf16.mxu0 %v5238
        %5365 = vmatpush1.bf16.msra.mxu0 %v5237
        %5366 = vmatprep.subr.bf16.mxu0 %v5244
        %5367 = vmatpush1.bf16.msra.mxu0 %v5243
        %5368 = vmatprep.subr.bf16.mxu0 %v5250
        %5369 = vmatpush1.bf16.msra.mxu0 %v5249
        %5370 = vmatprep.subr.bf16.mxu0 %v5256
        %5371 = vmatpush1.bf16.msra.mxu0 %v5255
        %5372 = vmatprep.subr.bf16.mxu0 %v5262
        %5373 = vmatpush1.bf16.msra.mxu0 %v5261
        %5374 = vmatprep.subr.bf16.mxu0 %v5268
        %5375 = vmatpush1.bf16.msra.mxu0 %v5267
        %5376 = vmatprep.subr.bf16.mxu0 0
        %5377 = vmatpush1.bf16.msra.mxu0 0
        %5378 = vmatprep.subr.bf16.mxu0 0
        %5379 = vmatpush1.bf16.msra.mxu0 0
        %5380 = vmatprep.subr.bf16.mxu0 0
        %5381 = vmatpush1.bf16.msra.mxu0 0
        %5382 = vmatprep.subr.bf16.mxu0 0
        %5383 = vmatpush1.bf16.msra.mxu0 0
        %5384 = vmatprep.subr.bf16.mxu0 0
        %5385 = vmatpush1.bf16.msra.mxu0 0
        %5386 = vmatprep.subr.bf16.mxu0 0
        %5387 = vmatpush1.bf16.msra.mxu0 0
        %5388 = vmatprep.subr.bf16.mxu0 0
        %5389 = vmatpush1.bf16.msra.mxu0 0
        %5390 = vmatprep.subr.bf16.mxu0 0
        %5391 = vmatpush1.bf16.msra.mxu0 0
        %5392 = vmatprep.mubr.bf16.mxu0 0
        %5393 = vmatmul.mubr.bf16.gmra.mrb[0].mxu0 %v5077
        %v5394 = vpop.f32.mrb[0].mxu0
        %v5395 = vadd.f32 0.0, %v5394
        %v5396 = vpop.f32.mrb[0].mxu0
        %v5397 = vadd.f32 0.0, %v5396
        %v5398 = vpop.f32.mrb[0].mxu0
        %v5399 = vpop.f32.mrb[0].mxu0
        %5400 = vdwg.mxu0
        %5401 = vmatprep.subr.bf16.mxu0 %v5228
        %5402 = vmatpush1.bf16.msra.mxu0 %v5227
        %5403 = vmatprep.subr.bf16.mxu0 %v5234
        %5404 = vmatpush1.bf16.msra.mxu0 %v5233
        %5405 = vmatprep.subr.bf16.mxu0 %v5240
        %5406 = vmatpush1.bf16.msra.mxu0 %v5239
        %5407 = vmatprep.subr.bf16.mxu0 %v5246
        %5408 = vmatpush1.bf16.msra.mxu0 %v5245
        %5409 = vmatprep.subr.bf16.mxu0 %v5252
        %5410 = vmatpush1.bf16.msra.mxu0 %v5251
        %5411 = vmatprep.subr.bf16.mxu0 %v5258
        %5412 = vmatpush1.bf16.msra.mxu0 %v5257
        %5413 = vmatprep.subr.bf16.mxu0 %v5264
        %5414 = vmatpush1.bf16.msra.mxu0 %v5263
        %5415 = vmatprep.subr.bf16.mxu0 %v5270
        %5416 = vmatpush1.bf16.msra.mxu0 %v5269
        %5417 = vmatprep.subr.bf16.mxu0 0
        %5418 = vmatpush1.bf16.msra.mxu0 0
        %5419 = vmatprep.subr.bf16.mxu0 0
        %5420 = vmatpush1.bf16.msra.mxu0 0
        %5421 = vmatprep.subr.bf16.mxu0 0
        %5422 = vmatpush1.bf16.msra.mxu0 0
        %5423 = vmatprep.subr.bf16.mxu0 0
        %5424 = vmatpush1.bf16.msra.mxu0 0
        %5425 = vmatprep.subr.bf16.mxu0 0
        %5426 = vmatpush1.bf16.msra.mxu0 0
        %5427 = vmatprep.subr.bf16.mxu0 0
        %5428 = vmatpush1.bf16.msra.mxu0 0
        %5429 = vmatprep.subr.bf16.mxu0 0
        %5430 = vmatpush1.bf16.msra.mxu0 0
        %5431 = vmatprep.subr.bf16.mxu0 0
        %5432 = vmatpush1.bf16.msra.mxu0 0
        %5433 = vmatprep.mubr.bf16.mxu0 0
        %5434 = vmatmul.mubr.bf16.gmra.mrb[0].mxu0 %v5077
        %v5435 = vpop.f32.mrb[0].mxu0
        %v5436 = vadd.f32 0.0, %v5435
        %v5437 = vpop.f32.mrb[0].mxu0
        %v5438 = vadd.f32 0.0, %v5437
        %v5439 = vpop.f32.mrb[0].mxu0
        %v5440 = vpop.f32.mrb[0].mxu0
        %5441 = vdwg.mxu0
        %v5442 = vadd.f32 %v5018, %v5354
        %v5443 = vadd.f32 %v5019, %v5356
        %v5444 = vadd.f32 %v5020, %v5395
        %v5445 = vadd.f32 %v5021, %v5397
        %v5446 = vadd.f32 %v5022, %v5436
        %v5447 = vadd.f32 %v5023, %v5438
        %s5448 = scalar_lea.vmem %s5, 4224
        %v5449 = vld [vmem:[%s5448] sm:$0xff]
        %v5450 = vld [vmem:[%s5448 + $0x8] sm:$0xff]
        %v5451 = vld [vmem:[%s5448 + $0x10] sm:$0xff]
        %v5452 = vld [vmem:[%s5448 + $0x18] sm:$0xff]
        %v5453 = vld [vmem:[%s5448 + $0x20] sm:$0xff]
        %v5454 = vld [vmem:[%s5448 + $0x28] sm:$0xff]
        %v5455 = vld [vmem:[%s5448 + $0x30] sm:$0xff]
        %v5456 = vld [vmem:[%s5448 + $0x38] sm:$0xff]
        %v5457 = vld [vmem:[%s5448 + $0x40] sm:$0xff]
        %v5458 = vld [vmem:[%s5448 + $0x48] sm:$0xff]
        %v5459 = vld [vmem:[%s5448 + $0x50] sm:$0xff]
        %v5460 = vld [vmem:[%s5448 + $0x58] sm:$0xff]
        %v5461 = vld [vmem:[%s5448 + $0x60] sm:$0xff]
        %v5462 = vld [vmem:[%s5448 + $0x68] sm:$0xff]
        %v5463 = vld [vmem:[%s5448 + $0x70] sm:$0xff]
        %v5464 = vld [vmem:[%s5448 + $0x78] sm:$0xff]
        %v5465 = vld [vmem:[%s5448 + $0x80] sm:$0xff]
        %v5466 = vld [vmem:[%s5448 + $0x88] sm:$0xff]
        %v5467 = vld [vmem:[%s5448 + $0x90] sm:$0xff]
        %v5468 = vld [vmem:[%s5448 + $0x98] sm:$0xff]
        %v5469 = vld [vmem:[%s5448 + $0xa0] sm:$0xff]
        %v5470 = vld [vmem:[%s5448 + $0xa8] sm:$0xff]
        %v5471 = vld [vmem:[%s5448 + $0xb0] sm:$0xff]
        %v5472 = vld [vmem:[%s5448 + $0xb8] sm:$0xff]
        %v5473 = vld [vmem:[%s5448 + $0xc0] sm:$0xff]
        %v5474 = vld [vmem:[%s5448 + $0xc8] sm:$0xff]
        %v5475 = vld [vmem:[%s5448 + $0xd0] sm:$0xff]
        %v5476 = vld [vmem:[%s5448 + $0xd8] sm:$0xff]
        %v5477 = vld [vmem:[%s5448 + $0xe0] sm:$0xff]
        %v5478 = vld [vmem:[%s5448 + $0xe8] sm:$0xff]
        %v5479 = vld [vmem:[%s5448 + $0xf0] sm:$0xff]
        %v5480 = vld [vmem:[%s5448 + $0xf8] sm:$0xff]
        %v5481 = vld [vmem:[%s5448 + $0x100] sm:$0xff]
        %v5482 = vld [vmem:[%s5448 + $0x108] sm:$0xff]
        %v5483 = vld [vmem:[%s5448 + $0x110] sm:$0xff]
        %v5484 = vld [vmem:[%s5448 + $0x118] sm:$0xff]
        %v5485 = vld [vmem:[%s5448 + $0x120] sm:$0xff]
        %v5486 = vld [vmem:[%s5448 + $0x128] sm:$0xff]
        %v5487 = vld [vmem:[%s5448 + $0x130] sm:$0xff]
        %v5488 = vld [vmem:[%s5448 + $0x138] sm:$0xff]
        %v5489 = vld [vmem:[%s5448 + $0x140] sm:$0xff]
        %v5490 = vld [vmem:[%s5448 + $0x148] sm:$0xff]
        %v5491 = vld [vmem:[%s5448 + $0x150] sm:$0xff]
        %v5492 = vld [vmem:[%s5448 + $0x158] sm:$0xff]
        %v5493 = vld [vmem:[%s5448 + $0x160] sm:$0xff]
        %v5494 = vld [vmem:[%s5448 + $0x168] sm:$0xff]
        %v5495 = vld [vmem:[%s5448 + $0x170] sm:$0xff]
        %v5496 = vld [vmem:[%s5448 + $0x178] sm:$0xff]
        %v5498 = vshrl.u32 %v5076, 16
        %v5500 = vrot.slane %v5498, 1
        %v5550 = vunpack.c.l.b16 %v5449
        %v5551 = vunpack.c.h.b16 %v5449
        %v5552 = vunpack.c.l.b16 %v5450
        %v5553 = vunpack.c.h.b16 %v5450
        %v5554 = vunpack.c.l.b16 %v5451
        %v5555 = vunpack.c.h.b16 %v5451
        %v5556 = vunpack.c.l.b16 %v5452
        %v5557 = vunpack.c.h.b16 %v5452
        %v5558 = vunpack.c.l.b16 %v5453
        %v5559 = vunpack.c.h.b16 %v5453
        %v5560 = vunpack.c.l.b16 %v5454
        %v5561 = vunpack.c.h.b16 %v5454
        %v5562 = vunpack.c.l.b16 %v5455
        %v5563 = vunpack.c.h.b16 %v5455
        %v5564 = vunpack.c.l.b16 %v5456
        %v5565 = vunpack.c.h.b16 %v5456
        %v5566 = vunpack.c.l.b16 %v5457
        %v5567 = vunpack.c.h.b16 %v5457
        %v5568 = vunpack.c.l.b16 %v5458
        %v5569 = vunpack.c.h.b16 %v5458
        %v5570 = vunpack.c.l.b16 %v5459
        %v5571 = vunpack.c.h.b16 %v5459
        %v5572 = vunpack.c.l.b16 %v5460
        %v5573 = vunpack.c.h.b16 %v5460
        %v5574 = vunpack.c.l.b16 %v5461
        %v5575 = vunpack.c.h.b16 %v5461
        %v5576 = vunpack.c.l.b16 %v5462
        %v5577 = vunpack.c.h.b16 %v5462
        %v5578 = vunpack.c.l.b16 %v5463
        %v5579 = vunpack.c.h.b16 %v5463
        %v5580 = vunpack.c.l.b16 %v5464
        %v5581 = vunpack.c.h.b16 %v5464
        %v5582 = vunpack.c.l.b16 %v5465
        %v5583 = vunpack.c.h.b16 %v5465
        %v5584 = vunpack.c.l.b16 %v5466
        %v5585 = vunpack.c.h.b16 %v5466
        %v5586 = vunpack.c.l.b16 %v5467
        %v5587 = vunpack.c.h.b16 %v5467
        %v5588 = vunpack.c.l.b16 %v5468
        %v5589 = vunpack.c.h.b16 %v5468
        %v5590 = vunpack.c.l.b16 %v5469
        %v5591 = vunpack.c.h.b16 %v5469
        %v5592 = vunpack.c.l.b16 %v5470
        %v5593 = vunpack.c.h.b16 %v5470
        %v5594 = vunpack.c.l.b16 %v5471
        %v5595 = vunpack.c.h.b16 %v5471
        %v5596 = vunpack.c.l.b16 %v5472
        %v5597 = vunpack.c.h.b16 %v5472
        %v5598 = vunpack.c.l.b16 %v5473
        %v5599 = vunpack.c.h.b16 %v5473
        %v5600 = vunpack.c.l.b16 %v5474
        %v5601 = vunpack.c.h.b16 %v5474
        %v5602 = vunpack.c.l.b16 %v5475
        %v5603 = vunpack.c.h.b16 %v5475
        %v5604 = vunpack.c.l.b16 %v5476
        %v5605 = vunpack.c.h.b16 %v5476
        %v5606 = vunpack.c.l.b16 %v5477
        %v5607 = vunpack.c.h.b16 %v5477
        %v5608 = vunpack.c.l.b16 %v5478
        %v5609 = vunpack.c.h.b16 %v5478
        %v5610 = vunpack.c.l.b16 %v5479
        %v5611 = vunpack.c.h.b16 %v5479
        %v5612 = vunpack.c.l.b16 %v5480
        %v5613 = vunpack.c.h.b16 %v5480
        %v5614 = vunpack.c.l.b16 %v5481
        %v5615 = vunpack.c.h.b16 %v5481
        %v5616 = vunpack.c.l.b16 %v5482
        %v5617 = vunpack.c.h.b16 %v5482
        %v5618 = vunpack.c.l.b16 %v5483
        %v5619 = vunpack.c.h.b16 %v5483
        %v5620 = vunpack.c.l.b16 %v5484
        %v5621 = vunpack.c.h.b16 %v5484
        %v5622 = vunpack.c.l.b16 %v5485
        %v5623 = vunpack.c.h.b16 %v5485
        %v5624 = vunpack.c.l.b16 %v5486
        %v5625 = vunpack.c.h.b16 %v5486
        %v5626 = vunpack.c.l.b16 %v5487
        %v5627 = vunpack.c.h.b16 %v5487
        %v5628 = vunpack.c.l.b16 %v5488
        %v5629 = vunpack.c.h.b16 %v5488
        %v5630 = vunpack.c.l.b16 %v5489
        %v5631 = vunpack.c.h.b16 %v5489
        %v5632 = vunpack.c.l.b16 %v5490
        %v5633 = vunpack.c.h.b16 %v5490
        %v5634 = vunpack.c.l.b16 %v5491
        %v5635 = vunpack.c.h.b16 %v5491
        %v5636 = vunpack.c.l.b16 %v5492
        %v5637 = vunpack.c.h.b16 %v5492
        %v5638 = vunpack.c.l.b16 %v5493
        %v5639 = vunpack.c.h.b16 %v5493
        %v5640 = vunpack.c.l.b16 %v5494
        %v5641 = vunpack.c.h.b16 %v5494
        %v5642 = vunpack.c.l.b16 %v5495
        %v5643 = vunpack.c.h.b16 %v5495
        %v5644 = vunpack.c.l.b16 %v5496
        %v5645 = vunpack.c.h.b16 %v5496
        %v5646 = vpack.c.b16 %v5556, %v5550
        %v5647 = vpack.c.b16 %v5557, %v5551
        %v5648 = vpack.c.b16 %v5558, %v5552
        %v5649 = vpack.c.b16 %v5559, %v5553
        %v5650 = vpack.c.b16 %v5560, %v5554
        %v5651 = vpack.c.b16 %v5561, %v5555
        %v5652 = vpack.c.b16 %v5568, %v5562
        %v5653 = vpack.c.b16 %v5569, %v5563
        %v5654 = vpack.c.b16 %v5570, %v5564
        %v5655 = vpack.c.b16 %v5571, %v5565
        %v5656 = vpack.c.b16 %v5572, %v5566
        %v5657 = vpack.c.b16 %v5573, %v5567
        %v5658 = vpack.c.b16 %v5580, %v5574
        %v5659 = vpack.c.b16 %v5581, %v5575
        %v5660 = vpack.c.b16 %v5582, %v5576
        %v5661 = vpack.c.b16 %v5583, %v5577
        %v5662 = vpack.c.b16 %v5584, %v5578
        %v5663 = vpack.c.b16 %v5585, %v5579
        %v5664 = vpack.c.b16 %v5592, %v5586
        %v5665 = vpack.c.b16 %v5593, %v5587
        %v5666 = vpack.c.b16 %v5594, %v5588
        %v5667 = vpack.c.b16 %v5595, %v5589
        %v5668 = vpack.c.b16 %v5596, %v5590
        %v5669 = vpack.c.b16 %v5597, %v5591
        %v5670 = vpack.c.b16 %v5604, %v5598
        %v5671 = vpack.c.b16 %v5605, %v5599
        %v5672 = vpack.c.b16 %v5606, %v5600
        %v5673 = vpack.c.b16 %v5607, %v5601
        %v5674 = vpack.c.b16 %v5608, %v5602
        %v5675 = vpack.c.b16 %v5609, %v5603
        %v5676 = vpack.c.b16 %v5616, %v5610
        %v5677 = vpack.c.b16 %v5617, %v5611
        %v5678 = vpack.c.b16 %v5618, %v5612
        %v5679 = vpack.c.b16 %v5619, %v5613
        %v5680 = vpack.c.b16 %v5620, %v5614
        %v5681 = vpack.c.b16 %v5621, %v5615
        %v5682 = vpack.c.b16 %v5628, %v5622
        %v5683 = vpack.c.b16 %v5629, %v5623
        %v5684 = vpack.c.b16 %v5630, %v5624
        %v5685 = vpack.c.b16 %v5631, %v5625
        %v5686 = vpack.c.b16 %v5632, %v5626
        %v5687 = vpack.c.b16 %v5633, %v5627
        %v5688 = vpack.c.b16 %v5640, %v5634
        %v5689 = vpack.c.b16 %v5641, %v5635
        %v5690 = vpack.c.b16 %v5642, %v5636
        %v5691 = vpack.c.b16 %v5643, %v5637
        %v5692 = vpack.c.b16 %v5644, %v5638
        %v5693 = vpack.c.b16 %v5645, %v5639
        %5742 = vmatprep.subr.bf16.mxu0 %v5647
        %5743 = vmatpush1.bf16.msra.mxu0 %v5646
        %5744 = vmatprep.subr.bf16.mxu0 %v5653
        %5745 = vmatpush1.bf16.msra.mxu0 %v5652
        %5746 = vmatprep.subr.bf16.mxu0 %v5659
        %5747 = vmatpush1.bf16.msra.mxu0 %v5658
        %5748 = vmatprep.subr.bf16.mxu0 %v5665
        %5749 = vmatpush1.bf16.msra.mxu0 %v5664
        %5750 = vmatprep.subr.bf16.mxu0 %v5671
        %5751 = vmatpush1.bf16.msra.mxu0 %v5670
        %5752 = vmatprep.subr.bf16.mxu0 %v5677
        %5753 = vmatpush1.bf16.msra.mxu0 %v5676
        %5754 = vmatprep.subr.bf16.mxu0 %v5683
        %5755 = vmatpush1.bf16.msra.mxu0 %v5682
        %5756 = vmatprep.subr.bf16.mxu0 %v5689
        %5757 = vmatpush1.bf16.msra.mxu0 %v5688
        %5758 = vmatprep.subr.bf16.mxu0 0
        %5759 = vmatpush1.bf16.msra.mxu0 0
        %5760 = vmatprep.subr.bf16.mxu0 0
        %5761 = vmatpush1.bf16.msra.mxu0 0
        %5762 = vmatprep.subr.bf16.mxu0 0
        %5763 = vmatpush1.bf16.msra.mxu0 0
        %5764 = vmatprep.subr.bf16.mxu0 0
        %5765 = vmatpush1.bf16.msra.mxu0 0
        %5766 = vmatprep.subr.bf16.mxu0 0
        %5767 = vmatpush1.bf16.msra.mxu0 0
        %5768 = vmatprep.subr.bf16.mxu0 0
        %5769 = vmatpush1.bf16.msra.mxu0 0
        %5770 = vmatprep.subr.bf16.mxu0 0
        %5771 = vmatpush1.bf16.msra.mxu0 0
        %5772 = vmatprep.subr.bf16.mxu0 0
        %5773 = vmatpush1.bf16.msra.mxu0 0
        %5774 = vmatprep.mubr.bf16.mxu0 0
        %5775 = vmatmul.mubr.bf16.gmra.mrb[0].mxu0 %v5500
        %v5776 = vpop.f32.mrb[0].mxu0
        %v5777 = vadd.f32 0.0, %v5776
        %v5778 = vpop.f32.mrb[0].mxu0
        %v5779 = vadd.f32 0.0, %v5778
        %v5780 = vpop.f32.mrb[0].mxu0
        %v5781 = vpop.f32.mrb[0].mxu0
        %5782 = vdwg.mxu0
        %5783 = vmatprep.subr.bf16.mxu0 %v5649
        %5784 = vmatpush1.bf16.msra.mxu0 %v5648
        %5785 = vmatprep.subr.bf16.mxu0 %v5655
        %5786 = vmatpush1.bf16.msra.mxu0 %v5654
        %5787 = vmatprep.subr.bf16.mxu0 %v5661
        %5788 = vmatpush1.bf16.msra.mxu0 %v5660
        %5789 = vmatprep.subr.bf16.mxu0 %v5667
        %5790 = vmatpush1.bf16.msra.mxu0 %v5666
        %5791 = vmatprep.subr.bf16.mxu0 %v5673
        %5792 = vmatpush1.bf16.msra.mxu0 %v5672
        %5793 = vmatprep.subr.bf16.mxu0 %v5679
        %5794 = vmatpush1.bf16.msra.mxu0 %v5678
        %5795 = vmatprep.subr.bf16.mxu0 %v5685
        %5796 = vmatpush1.bf16.msra.mxu0 %v5684
        %5797 = vmatprep.subr.bf16.mxu0 %v5691
        %5798 = vmatpush1.bf16.msra.mxu0 %v5690
        %5799 = vmatprep.subr.bf16.mxu0 0
        %5800 = vmatpush1.bf16.msra.mxu0 0
        %5801 = vmatprep.subr.bf16.mxu0 0
        %5802 = vmatpush1.bf16.msra.mxu0 0
        %5803 = vmatprep.subr.bf16.mxu0 0
        %5804 = vmatpush1.bf16.msra.mxu0 0
        %5805 = vmatprep.subr.bf16.mxu0 0
        %5806 = vmatpush1.bf16.msra.mxu0 0
        %5807 = vmatprep.subr.bf16.mxu0 0
        %5808 = vmatpush1.bf16.msra.mxu0 0
        %5809 = vmatprep.subr.bf16.mxu0 0
        %5810 = vmatpush1.bf16.msra.mxu0 0
        %5811 = vmatprep.subr.bf16.mxu0 0
        %5812 = vmatpush1.bf16.msra.mxu0 0
        %5813 = vmatprep.subr.bf16.mxu0 0
        %5814 = vmatpush1.bf16.msra.mxu0 0
        %5815 = vmatprep.mubr.bf16.mxu0 0
        %5816 = vmatmul.mubr.bf16.gmra.mrb[0].mxu0 %v5500
        %v5817 = vpop.f32.mrb[0].mxu0
        %v5818 = vadd.f32 0.0, %v5817
        %v5819 = vpop.f32.mrb[0].mxu0
        %v5820 = vadd.f32 0.0, %v5819
        %v5821 = vpop.f32.mrb[0].mxu0
        %v5822 = vpop.f32.mrb[0].mxu0
        %5823 = vdwg.mxu0
        %5824 = vmatprep.subr.bf16.mxu0 %v5651
        %5825 = vmatpush1.bf16.msra.mxu0 %v5650
        %5826 = vmatprep.subr.bf16.mxu0 %v5657
        %5827 = vmatpush1.bf16.msra.mxu0 %v5656
        %5828 = vmatprep.subr.bf16.mxu0 %v5663
        %5829 = vmatpush1.bf16.msra.mxu0 %v5662
        %5830 = vmatprep.subr.bf16.mxu0 %v5669
        %5831 = vmatpush1.bf16.msra.mxu0 %v5668
        %5832 = vmatprep.subr.bf16.mxu0 %v5675
        %5833 = vmatpush1.bf16.msra.mxu0 %v5674
        %5834 = vmatprep.subr.bf16.mxu0 %v5681
        %5835 = vmatpush1.bf16.msra.mxu0 %v5680
        %5836 = vmatprep.subr.bf16.mxu0 %v5687
        %5837 = vmatpush1.bf16.msra.mxu0 %v5686
        %5838 = vmatprep.subr.bf16.mxu0 %v5693
        %5839 = vmatpush1.bf16.msra.mxu0 %v5692
        %5840 = vmatprep.subr.bf16.mxu0 0
        %5841 = vmatpush1.bf16.msra.mxu0 0
        %5842 = vmatprep.subr.bf16.mxu0 0
        %5843 = vmatpush1.bf16.msra.mxu0 0
        %5844 = vmatprep.subr.bf16.mxu0 0
        %5845 = vmatpush1.bf16.msra.mxu0 0
        %5846 = vmatprep.subr.bf16.mxu0 0
        %5847 = vmatpush1.bf16.msra.mxu0 0
        %5848 = vmatprep.subr.bf16.mxu0 0
        %5849 = vmatpush1.bf16.msra.mxu0 0
        %5850 = vmatprep.subr.bf16.mxu0 0
        %5851 = vmatpush1.bf16.msra.mxu0 0
        %5852 = vmatprep.subr.bf16.mxu0 0
        %5853 = vmatpush1.bf16.msra.mxu0 0
        %5854 = vmatprep.subr.bf16.mxu0 0
        %5855 = vmatpush1.bf16.msra.mxu0 0
        %5856 = vmatprep.mubr.bf16.mxu0 0
        %5857 = vmatmul.mubr.bf16.gmra.mrb[0].mxu0 %v5500
        %v5858 = vpop.f32.mrb[0].mxu0
        %v5859 = vadd.f32 0.0, %v5858
        %v5860 = vpop.f32.mrb[0].mxu0
        %v5861 = vadd.f32 0.0, %v5860
        %v5862 = vpop.f32.mrb[0].mxu0
        %v5863 = vpop.f32.mrb[0].mxu0
        %5864 = vdwg.mxu0
        %v5865 = vadd.f32 %v5442, %v5777
        %v5866 = vadd.f32 %v5443, %v5779
        %v5867 = vadd.f32 %v5444, %v5818
        %v5868 = vadd.f32 %v5445, %v5820
        %v5869 = vadd.f32 %v5446, %v5859
        %v5870 = vadd.f32 %v5447, %v5861
        %s5871 = scalar_lea.vmem %s5, 4608
        %v5872 = vld [vmem:[%s5871] sm:$0xff]
        %v5873 = vld [vmem:[%s5871 + $0x8] sm:$0xff]
        %v5874 = vld [vmem:[%s5871 + $0x10] sm:$0xff]
        %v5875 = vld [vmem:[%s5871 + $0x18] sm:$0xff]
        %v5876 = vld [vmem:[%s5871 + $0x20] sm:$0xff]
        %v5877 = vld [vmem:[%s5871 + $0x28] sm:$0xff]
        %v5878 = vld [vmem:[%s5871 + $0x30] sm:$0xff]
        %v5879 = vld [vmem:[%s5871 + $0x38] sm:$0xff]
        %v5880 = vld [vmem:[%s5871 + $0x40] sm:$0xff]
        %v5881 = vld [vmem:[%s5871 + $0x48] sm:$0xff]
        %v5882 = vld [vmem:[%s5871 + $0x50] sm:$0xff]
        %v5883 = vld [vmem:[%s5871 + $0x58] sm:$0xff]
        %v5884 = vld [vmem:[%s5871 + $0x60] sm:$0xff]
        %v5885 = vld [vmem:[%s5871 + $0x68] sm:$0xff]
        %v5886 = vld [vmem:[%s5871 + $0x70] sm:$0xff]
        %v5887 = vld [vmem:[%s5871 + $0x78] sm:$0xff]
        %v5888 = vld [vmem:[%s5871 + $0x80] sm:$0xff]
        %v5889 = vld [vmem:[%s5871 + $0x88] sm:$0xff]
        %v5890 = vld [vmem:[%s5871 + $0x90] sm:$0xff]
        %v5891 = vld [vmem:[%s5871 + $0x98] sm:$0xff]
        %v5892 = vld [vmem:[%s5871 + $0xa0] sm:$0xff]
        %v5893 = vld [vmem:[%s5871 + $0xa8] sm:$0xff]
        %v5894 = vld [vmem:[%s5871 + $0xb0] sm:$0xff]
        %v5895 = vld [vmem:[%s5871 + $0xb8] sm:$0xff]
        %v5896 = vld [vmem:[%s5871 + $0xc0] sm:$0xff]
        %v5897 = vld [vmem:[%s5871 + $0xc8] sm:$0xff]
        %v5898 = vld [vmem:[%s5871 + $0xd0] sm:$0xff]
        %v5899 = vld [vmem:[%s5871 + $0xd8] sm:$0xff]
        %v5900 = vld [vmem:[%s5871 + $0xe0] sm:$0xff]
        %v5901 = vld [vmem:[%s5871 + $0xe8] sm:$0xff]
        %v5902 = vld [vmem:[%s5871 + $0xf0] sm:$0xff]
        %v5903 = vld [vmem:[%s5871 + $0xf8] sm:$0xff]
        %v5904 = vld [vmem:[%s5871 + $0x100] sm:$0xff]
        %v5905 = vld [vmem:[%s5871 + $0x108] sm:$0xff]
        %v5906 = vld [vmem:[%s5871 + $0x110] sm:$0xff]
        %v5907 = vld [vmem:[%s5871 + $0x118] sm:$0xff]
        %v5908 = vld [vmem:[%s5871 + $0x120] sm:$0xff]
        %v5909 = vld [vmem:[%s5871 + $0x128] sm:$0xff]
        %v5910 = vld [vmem:[%s5871 + $0x130] sm:$0xff]
        %v5911 = vld [vmem:[%s5871 + $0x138] sm:$0xff]
        %v5912 = vld [vmem:[%s5871 + $0x140] sm:$0xff]
        %v5913 = vld [vmem:[%s5871 + $0x148] sm:$0xff]
        %v5914 = vld [vmem:[%s5871 + $0x150] sm:$0xff]
        %v5915 = vld [vmem:[%s5871 + $0x158] sm:$0xff]
        %v5916 = vld [vmem:[%s5871 + $0x160] sm:$0xff]
        %v5917 = vld [vmem:[%s5871 + $0x168] sm:$0xff]
        %v5918 = vld [vmem:[%s5871 + $0x170] sm:$0xff]
        %v5919 = vld [vmem:[%s5871 + $0x178] sm:$0xff]
        %v5920 = vld [vmem:[#allocation2 + $0x4] sm:$0x4]
        %v5922 = vunpack.c.l.b16 %v5920
        %v5923 = vpack.c.b16 %v5922, %v5922
        %v5924 = vrot.slane %v5923, 2
        %v5974 = vunpack.c.l.b16 %v5872
        %v5975 = vunpack.c.h.b16 %v5872
        %v5976 = vunpack.c.l.b16 %v5873
        %v5977 = vunpack.c.h.b16 %v5873
        %v5978 = vunpack.c.l.b16 %v5874
        %v5979 = vunpack.c.h.b16 %v5874
        %v5980 = vunpack.c.l.b16 %v5875
        %v5981 = vunpack.c.h.b16 %v5875
        %v5982 = vunpack.c.l.b16 %v5876
        %v5983 = vunpack.c.h.b16 %v5876
        %v5984 = vunpack.c.l.b16 %v5877
        %v5985 = vunpack.c.h.b16 %v5877
        %v5986 = vunpack.c.l.b16 %v5878
        %v5987 = vunpack.c.h.b16 %v5878
        %v5988 = vunpack.c.l.b16 %v5879
        %v5989 = vunpack.c.h.b16 %v5879
        %v5990 = vunpack.c.l.b16 %v5880
        %v5991 = vunpack.c.h.b16 %v5880
        %v5992 = vunpack.c.l.b16 %v5881
        %v5993 = vunpack.c.h.b16 %v5881
        %v5994 = vunpack.c.l.b16 %v5882
        %v5995 = vunpack.c.h.b16 %v5882
        %v5996 = vunpack.c.l.b16 %v5883
        %v5997 = vunpack.c.h.b16 %v5883
        %v5998 = vunpack.c.l.b16 %v5884
        %v5999 = vunpack.c.h.b16 %v5884
        %v6000 = vunpack.c.l.b16 %v5885
        %v6001 = vunpack.c.h.b16 %v5885
        %v6002 = vunpack.c.l.b16 %v5886
        %v6003 = vunpack.c.h.b16 %v5886
        %v6004 = vunpack.c.l.b16 %v5887
        %v6005 = vunpack.c.h.b16 %v5887
        %v6006 = vunpack.c.l.b16 %v5888
        %v6007 = vunpack.c.h.b16 %v5888
        %v6008 = vunpack.c.l.b16 %v5889
        %v6009 = vunpack.c.h.b16 %v5889
        %v6010 = vunpack.c.l.b16 %v5890
        %v6011 = vunpack.c.h.b16 %v5890
        %v6012 = vunpack.c.l.b16 %v5891
        %v6013 = vunpack.c.h.b16 %v5891
        %v6014 = vunpack.c.l.b16 %v5892
        %v6015 = vunpack.c.h.b16 %v5892
        %v6016 = vunpack.c.l.b16 %v5893
        %v6017 = vunpack.c.h.b16 %v5893
        %v6018 = vunpack.c.l.b16 %v5894
        %v6019 = vunpack.c.h.b16 %v5894
        %v6020 = vunpack.c.l.b16 %v5895
        %v6021 = vunpack.c.h.b16 %v5895
        %v6022 = vunpack.c.l.b16 %v5896
        %v6023 = vunpack.c.h.b16 %v5896
        %v6024 = vunpack.c.l.b16 %v5897
        %v6025 = vunpack.c.h.b16 %v5897
        %v6026 = vunpack.c.l.b16 %v5898
        %v6027 = vunpack.c.h.b16 %v5898
        %v6028 = vunpack.c.l.b16 %v5899
        %v6029 = vunpack.c.h.b16 %v5899
        %v6030 = vunpack.c.l.b16 %v5900
        %v6031 = vunpack.c.h.b16 %v5900
        %v6032 = vunpack.c.l.b16 %v5901
        %v6033 = vunpack.c.h.b16 %v5901
        %v6034 = vunpack.c.l.b16 %v5902
        %v6035 = vunpack.c.h.b16 %v5902
        %v6036 = vunpack.c.l.b16 %v5903
        %v6037 = vunpack.c.h.b16 %v5903
        %v6038 = vunpack.c.l.b16 %v5904
        %v6039 = vunpack.c.h.b16 %v5904
        %v6040 = vunpack.c.l.b16 %v5905
        %v6041 = vunpack.c.h.b16 %v5905
        %v6042 = vunpack.c.l.b16 %v5906
        %v6043 = vunpack.c.h.b16 %v5906
        %v6044 = vunpack.c.l.b16 %v5907
        %v6045 = vunpack.c.h.b16 %v5907
        %v6046 = vunpack.c.l.b16 %v5908
        %v6047 = vunpack.c.h.b16 %v5908
        %v6048 = vunpack.c.l.b16 %v5909
        %v6049 = vunpack.c.h.b16 %v5909
        %v6050 = vunpack.c.l.b16 %v5910
        %v6051 = vunpack.c.h.b16 %v5910
        %v6052 = vunpack.c.l.b16 %v5911
        %v6053 = vunpack.c.h.b16 %v5911
        %v6054 = vunpack.c.l.b16 %v5912
        %v6055 = vunpack.c.h.b16 %v5912
        %v6056 = vunpack.c.l.b16 %v5913
        %v6057 = vunpack.c.h.b16 %v5913
        %v6058 = vunpack.c.l.b16 %v5914
        %v6059 = vunpack.c.h.b16 %v5914
        %v6060 = vunpack.c.l.b16 %v5915
        %v6061 = vunpack.c.h.b16 %v5915
        %v6062 = vunpack.c.l.b16 %v5916
        %v6063 = vunpack.c.h.b16 %v5916
        %v6064 = vunpack.c.l.b16 %v5917
        %v6065 = vunpack.c.h.b16 %v5917
        %v6066 = vunpack.c.l.b16 %v5918
        %v6067 = vunpack.c.h.b16 %v5918
        %v6068 = vunpack.c.l.b16 %v5919
        %v6069 = vunpack.c.h.b16 %v5919
        %v6070 = vpack.c.b16 %v5980, %v5974
        %v6071 = vpack.c.b16 %v5981, %v5975
        %v6072 = vpack.c.b16 %v5982, %v5976
        %v6073 = vpack.c.b16 %v5983, %v5977
        %v6074 = vpack.c.b16 %v5984, %v5978
        %v6075 = vpack.c.b16 %v5985, %v5979
        %v6076 = vpack.c.b16 %v5992, %v5986
        %v6077 = vpack.c.b16 %v5993, %v5987
        %v6078 = vpack.c.b16 %v5994, %v5988
        %v6079 = vpack.c.b16 %v5995, %v5989
        %v6080 = vpack.c.b16 %v5996, %v5990
        %v6081 = vpack.c.b16 %v5997, %v5991
        %v6082 = vpack.c.b16 %v6004, %v5998
        %v6083 = vpack.c.b16 %v6005, %v5999
        %v6084 = vpack.c.b16 %v6006, %v6000
        %v6085 = vpack.c.b16 %v6007, %v6001
        %v6086 = vpack.c.b16 %v6008, %v6002
        %v6087 = vpack.c.b16 %v6009, %v6003
        %v6088 = vpack.c.b16 %v6016, %v6010
        %v6089 = vpack.c.b16 %v6017, %v6011
        %v6090 = vpack.c.b16 %v6018, %v6012
        %v6091 = vpack.c.b16 %v6019, %v6013
        %v6092 = vpack.c.b16 %v6020, %v6014
        %v6093 = vpack.c.b16 %v6021, %v6015
        %v6094 = vpack.c.b16 %v6028, %v6022
        %v6095 = vpack.c.b16 %v6029, %v6023
        %v6096 = vpack.c.b16 %v6030, %v6024
        %v6097 = vpack.c.b16 %v6031, %v6025
        %v6098 = vpack.c.b16 %v6032, %v6026
        %v6099 = vpack.c.b16 %v6033, %v6027
        %v6100 = vpack.c.b16 %v6040, %v6034
        %v6101 = vpack.c.b16 %v6041, %v6035
        %v6102 = vpack.c.b16 %v6042, %v6036
        %v6103 = vpack.c.b16 %v6043, %v6037
        %v6104 = vpack.c.b16 %v6044, %v6038
        %v6105 = vpack.c.b16 %v6045, %v6039
        %v6106 = vpack.c.b16 %v6052, %v6046
        %v6107 = vpack.c.b16 %v6053, %v6047
        %v6108 = vpack.c.b16 %v6054, %v6048
        %v6109 = vpack.c.b16 %v6055, %v6049
        %v6110 = vpack.c.b16 %v6056, %v6050
        %v6111 = vpack.c.b16 %v6057, %v6051
        %v6112 = vpack.c.b16 %v6064, %v6058
        %v6113 = vpack.c.b16 %v6065, %v6059
        %v6114 = vpack.c.b16 %v6066, %v6060
        %v6115 = vpack.c.b16 %v6067, %v6061
        %v6116 = vpack.c.b16 %v6068, %v6062
        %v6117 = vpack.c.b16 %v6069, %v6063
        %6166 = vmatprep.subr.bf16.mxu0 %v6071
        %6167 = vmatpush1.bf16.msra.mxu0 %v6070
        %6168 = vmatprep.subr.bf16.mxu0 %v6077
        %6169 = vmatpush1.bf16.msra.mxu0 %v6076
        %6170 = vmatprep.subr.bf16.mxu0 %v6083
        %6171 = vmatpush1.bf16.msra.mxu0 %v6082
        %6172 = vmatprep.subr.bf16.mxu0 %v6089
        %6173 = vmatpush1.bf16.msra.mxu0 %v6088
        %6174 = vmatprep.subr.bf16.mxu0 %v6095
        %6175 = vmatpush1.bf16.msra.mxu0 %v6094
        %6176 = vmatprep.subr.bf16.mxu0 %v6101
        %6177 = vmatpush1.bf16.msra.mxu0 %v6100
        %6178 = vmatprep.subr.bf16.mxu0 %v6107
        %6179 = vmatpush1.bf16.msra.mxu0 %v6106
        %6180 = vmatprep.subr.bf16.mxu0 %v6113
        %6181 = vmatpush1.bf16.msra.mxu0 %v6112
        %6182 = vmatprep.subr.bf16.mxu0 0
        %6183 = vmatpush1.bf16.msra.mxu0 0
        %6184 = vmatprep.subr.bf16.mxu0 0
        %6185 = vmatpush1.bf16.msra.mxu0 0
        %6186 = vmatprep.subr.bf16.mxu0 0
        %6187 = vmatpush1.bf16.msra.mxu0 0
        %6188 = vmatprep.subr.bf16.mxu0 0
        %6189 = vmatpush1.bf16.msra.mxu0 0
        %6190 = vmatprep.subr.bf16.mxu0 0
        %6191 = vmatpush1.bf16.msra.mxu0 0
        %6192 = vmatprep.subr.bf16.mxu0 0
        %6193 = vmatpush1.bf16.msra.mxu0 0
        %6194 = vmatprep.subr.bf16.mxu0 0
        %6195 = vmatpush1.bf16.msra.mxu0 0
        %6196 = vmatprep.subr.bf16.mxu0 0
        %6197 = vmatpush1.bf16.msra.mxu0 0
        %6198 = vmatprep.mubr.bf16.mxu0 0
        %6199 = vmatmul.mubr.bf16.gmra.mrb[0].mxu0 %v5924
        %v6200 = vpop.f32.mrb[0].mxu0
        %v6201 = vadd.f32 0.0, %v6200
        %v6202 = vpop.f32.mrb[0].mxu0
        %v6203 = vadd.f32 0.0, %v6202
        %v6204 = vpop.f32.mrb[0].mxu0
        %v6205 = vpop.f32.mrb[0].mxu0
        %6206 = vdwg.mxu0
        %6207 = vmatprep.subr.bf16.mxu0 %v6073
        %6208 = vmatpush1.bf16.msra.mxu0 %v6072
        %6209 = vmatprep.subr.bf16.mxu0 %v6079
        %6210 = vmatpush1.bf16.msra.mxu0 %v6078
        %6211 = vmatprep.subr.bf16.mxu0 %v6085
        %6212 = vmatpush1.bf16.msra.mxu0 %v6084
        %6213 = vmatprep.subr.bf16.mxu0 %v6091
        %6214 = vmatpush1.bf16.msra.mxu0 %v6090
        %6215 = vmatprep.subr.bf16.mxu0 %v6097
        %6216 = vmatpush1.bf16.msra.mxu0 %v6096
        %6217 = vmatprep.subr.bf16.mxu0 %v6103
        %6218 = vmatpush1.bf16.msra.mxu0 %v6102
        %6219 = vmatprep.subr.bf16.mxu0 %v6109
        %6220 = vmatpush1.bf16.msra.mxu0 %v6108
        %6221 = vmatprep.subr.bf16.mxu0 %v6115
        %6222 = vmatpush1.bf16.msra.mxu0 %v6114
        %6223 = vmatprep.subr.bf16.mxu0 0
        %6224 = vmatpush1.bf16.msra.mxu0 0
        %6225 = vmatprep.subr.bf16.mxu0 0
        %6226 = vmatpush1.bf16.msra.mxu0 0
        %6227 = vmatprep.subr.bf16.mxu0 0
        %6228 = vmatpush1.bf16.msra.mxu0 0
        %6229 = vmatprep.subr.bf16.mxu0 0
        %6230 = vmatpush1.bf16.msra.mxu0 0
        %6231 = vmatprep.subr.bf16.mxu0 0
        %6232 = vmatpush1.bf16.msra.mxu0 0
        %6233 = vmatprep.subr.bf16.mxu0 0
        %6234 = vmatpush1.bf16.msra.mxu0 0
        %6235 = vmatprep.subr.bf16.mxu0 0
        %6236 = vmatpush1.bf16.msra.mxu0 0
        %6237 = vmatprep.subr.bf16.mxu0 0
        %6238 = vmatpush1.bf16.msra.mxu0 0
        %6239 = vmatprep.mubr.bf16.mxu0 0
        %6240 = vmatmul.mubr.bf16.gmra.mrb[0].mxu0 %v5924
        %v6241 = vpop.f32.mrb[0].mxu0
        %v6242 = vadd.f32 0.0, %v6241
        %v6243 = vpop.f32.mrb[0].mxu0
        %v6244 = vadd.f32 0.0, %v6243
        %v6245 = vpop.f32.mrb[0].mxu0
        %v6246 = vpop.f32.mrb[0].mxu0
        %6247 = vdwg.mxu0
        %6248 = vmatprep.subr.bf16.mxu0 %v6075
        %6249 = vmatpush1.bf16.msra.mxu0 %v6074
        %6250 = vmatprep.subr.bf16.mxu0 %v6081
        %6251 = vmatpush1.bf16.msra.mxu0 %v6080
        %6252 = vmatprep.subr.bf16.mxu0 %v6087
        %6253 = vmatpush1.bf16.msra.mxu0 %v6086
        %6254 = vmatprep.subr.bf16.mxu0 %v6093
        %6255 = vmatpush1.bf16.msra.mxu0 %v6092
        %6256 = vmatprep.subr.bf16.mxu0 %v6099
        %6257 = vmatpush1.bf16.msra.mxu0 %v6098
        %6258 = vmatprep.subr.bf16.mxu0 %v6105
        %6259 = vmatpush1.bf16.msra.mxu0 %v6104
        %6260 = vmatprep.subr.bf16.mxu0 %v6111
        %6261 = vmatpush1.bf16.msra.mxu0 %v6110
        %6262 = vmatprep.subr.bf16.mxu0 %v6117
        %6263 = vmatpush1.bf16.msra.mxu0 %v6116
        %6264 = vmatprep.subr.bf16.mxu0 0
        %6265 = vmatpush1.bf16.msra.mxu0 0
        %6266 = vmatprep.subr.bf16.mxu0 0
        %6267 = vmatpush1.bf16.msra.mxu0 0
        %6268 = vmatprep.subr.bf16.mxu0 0
        %6269 = vmatpush1.bf16.msra.mxu0 0
        %6270 = vmatprep.subr.bf16.mxu0 0
        %6271 = vmatpush1.bf16.msra.mxu0 0
        %6272 = vmatprep.subr.bf16.mxu0 0
        %6273 = vmatpush1.bf16.msra.mxu0 0
        %6274 = vmatprep.subr.bf16.mxu0 0
        %6275 = vmatpush1.bf16.msra.mxu0 0
        %6276 = vmatprep.subr.bf16.mxu0 0
        %6277 = vmatpush1.bf16.msra.mxu0 0
        %6278 = vmatprep.subr.bf16.mxu0 0
        %6279 = vmatpush1.bf16.msra.mxu0 0
        %6280 = vmatprep.mubr.bf16.mxu0 0
        %6281 = vmatmul.mubr.bf16.gmra.mrb[0].mxu0 %v5924
        %v6282 = vpop.f32.mrb[0].mxu0
        %v6283 = vadd.f32 0.0, %v6282
        %v6284 = vpop.f32.mrb[0].mxu0
        %v6285 = vadd.f32 0.0, %v6284
        %v6286 = vpop.f32.mrb[0].mxu0
        %v6287 = vpop.f32.mrb[0].mxu0
        %6288 = vdwg.mxu0
        %v6289 = vadd.f32 %v5865, %v6201
        %v6290 = vadd.f32 %v5866, %v6203
        %v6291 = vadd.f32 %v5867, %v6242
        %v6292 = vadd.f32 %v5868, %v6244
        %v6293 = vadd.f32 %v5869, %v6283
        %v6294 = vadd.f32 %v5870, %v6285
        %s6295 = scalar_lea.vmem %s5, 4992
        %v6296 = vld [vmem:[%s6295] sm:$0xff]
        %v6297 = vld [vmem:[%s6295 + $0x8] sm:$0xff]
        %v6298 = vld [vmem:[%s6295 + $0x10] sm:$0xff]
        %v6299 = vld [vmem:[%s6295 + $0x18] sm:$0xff]
        %v6300 = vld [vmem:[%s6295 + $0x20] sm:$0xff]
        %v6301 = vld [vmem:[%s6295 + $0x28] sm:$0xff]
        %v6302 = vld [vmem:[%s6295 + $0x30] sm:$0xff]
        %v6303 = vld [vmem:[%s6295 + $0x38] sm:$0xff]
        %v6304 = vld [vmem:[%s6295 + $0x40] sm:$0xff]
        %v6305 = vld [vmem:[%s6295 + $0x48] sm:$0xff]
        %v6306 = vld [vmem:[%s6295 + $0x50] sm:$0xff]
        %v6307 = vld [vmem:[%s6295 + $0x58] sm:$0xff]
        %v6308 = vld [vmem:[%s6295 + $0x60] sm:$0xff]
        %v6309 = vld [vmem:[%s6295 + $0x68] sm:$0xff]
        %v6310 = vld [vmem:[%s6295 + $0x70] sm:$0xff]
        %v6311 = vld [vmem:[%s6295 + $0x78] sm:$0xff]
        %v6312 = vld [vmem:[%s6295 + $0x80] sm:$0xff]
        %v6313 = vld [vmem:[%s6295 + $0x88] sm:$0xff]
        %v6314 = vld [vmem:[%s6295 + $0x90] sm:$0xff]
        %v6315 = vld [vmem:[%s6295 + $0x98] sm:$0xff]
        %v6316 = vld [vmem:[%s6295 + $0xa0] sm:$0xff]
        %v6317 = vld [vmem:[%s6295 + $0xa8] sm:$0xff]
        %v6318 = vld [vmem:[%s6295 + $0xb0] sm:$0xff]
        %v6319 = vld [vmem:[%s6295 + $0xb8] sm:$0xff]
        %v6320 = vld [vmem:[%s6295 + $0xc0] sm:$0xff]
        %v6321 = vld [vmem:[%s6295 + $0xc8] sm:$0xff]
        %v6322 = vld [vmem:[%s6295 + $0xd0] sm:$0xff]
        %v6323 = vld [vmem:[%s6295 + $0xd8] sm:$0xff]
        %v6324 = vld [vmem:[%s6295 + $0xe0] sm:$0xff]
        %v6325 = vld [vmem:[%s6295 + $0xe8] sm:$0xff]
        %v6326 = vld [vmem:[%s6295 + $0xf0] sm:$0xff]
        %v6327 = vld [vmem:[%s6295 + $0xf8] sm:$0xff]
        %v6328 = vld [vmem:[%s6295 + $0x100] sm:$0xff]
        %v6329 = vld [vmem:[%s6295 + $0x108] sm:$0xff]
        %v6330 = vld [vmem:[%s6295 + $0x110] sm:$0xff]
        %v6331 = vld [vmem:[%s6295 + $0x118] sm:$0xff]
        %v6332 = vld [vmem:[%s6295 + $0x120] sm:$0xff]
        %v6333 = vld [vmem:[%s6295 + $0x128] sm:$0xff]
        %v6334 = vld [vmem:[%s6295 + $0x130] sm:$0xff]
        %v6335 = vld [vmem:[%s6295 + $0x138] sm:$0xff]
        %v6336 = vld [vmem:[%s6295 + $0x140] sm:$0xff]
        %v6337 = vld [vmem:[%s6295 + $0x148] sm:$0xff]
        %v6338 = vld [vmem:[%s6295 + $0x150] sm:$0xff]
        %v6339 = vld [vmem:[%s6295 + $0x158] sm:$0xff]
        %v6340 = vld [vmem:[%s6295 + $0x160] sm:$0xff]
        %v6341 = vld [vmem:[%s6295 + $0x168] sm:$0xff]
        %v6342 = vld [vmem:[%s6295 + $0x170] sm:$0xff]
        %v6343 = vld [vmem:[%s6295 + $0x178] sm:$0xff]
        %v6345 = vshrl.u32 %v5923, 16
        %v6347 = vrot.slane %v6345, 2
        %v6397 = vunpack.c.l.b16 %v6296
        %v6398 = vunpack.c.h.b16 %v6296
        %v6399 = vunpack.c.l.b16 %v6297
        %v6400 = vunpack.c.h.b16 %v6297
        %v6401 = vunpack.c.l.b16 %v6298
        %v6402 = vunpack.c.h.b16 %v6298
        %v6403 = vunpack.c.l.b16 %v6299
        %v6404 = vunpack.c.h.b16 %v6299
        %v6405 = vunpack.c.l.b16 %v6300
        %v6406 = vunpack.c.h.b16 %v6300
        %v6407 = vunpack.c.l.b16 %v6301
        %v6408 = vunpack.c.h.b16 %v6301
        %v6409 = vunpack.c.l.b16 %v6302
        %v6410 = vunpack.c.h.b16 %v6302
        %v6411 = vunpack.c.l.b16 %v6303
        %v6412 = vunpack.c.h.b16 %v6303
        %v6413 = vunpack.c.l.b16 %v6304
        %v6414 = vunpack.c.h.b16 %v6304
        %v6415 = vunpack.c.l.b16 %v6305
        %v6416 = vunpack.c.h.b16 %v6305
        %v6417 = vunpack.c.l.b16 %v6306
        %v6418 = vunpack.c.h.b16 %v6306
        %v6419 = vunpack.c.l.b16 %v6307
        %v6420 = vunpack.c.h.b16 %v6307
        %v6421 = vunpack.c.l.b16 %v6308
        %v6422 = vunpack.c.h.b16 %v6308
        %v6423 = vunpack.c.l.b16 %v6309
        %v6424 = vunpack.c.h.b16 %v6309
        %v6425 = vunpack.c.l.b16 %v6310
        %v6426 = vunpack.c.h.b16 %v6310
        %v6427 = vunpack.c.l.b16 %v6311
        %v6428 = vunpack.c.h.b16 %v6311
        %v6429 = vunpack.c.l.b16 %v6312
        %v6430 = vunpack.c.h.b16 %v6312
        %v6431 = vunpack.c.l.b16 %v6313
        %v6432 = vunpack.c.h.b16 %v6313
        %v6433 = vunpack.c.l.b16 %v6314
        %v6434 = vunpack.c.h.b16 %v6314
        %v6435 = vunpack.c.l.b16 %v6315
        %v6436 = vunpack.c.h.b16 %v6315
        %v6437 = vunpack.c.l.b16 %v6316
        %v6438 = vunpack.c.h.b16 %v6316
        %v6439 = vunpack.c.l.b16 %v6317
        %v6440 = vunpack.c.h.b16 %v6317
        %v6441 = vunpack.c.l.b16 %v6318
        %v6442 = vunpack.c.h.b16 %v6318
        %v6443 = vunpack.c.l.b16 %v6319
        %v6444 = vunpack.c.h.b16 %v6319
        %v6445 = vunpack.c.l.b16 %v6320
        %v6446 = vunpack.c.h.b16 %v6320
        %v6447 = vunpack.c.l.b16 %v6321
        %v6448 = vunpack.c.h.b16 %v6321
        %v6449 = vunpack.c.l.b16 %v6322
        %v6450 = vunpack.c.h.b16 %v6322
        %v6451 = vunpack.c.l.b16 %v6323
        %v6452 = vunpack.c.h.b16 %v6323
        %v6453 = vunpack.c.l.b16 %v6324
        %v6454 = vunpack.c.h.b16 %v6324
        %v6455 = vunpack.c.l.b16 %v6325
        %v6456 = vunpack.c.h.b16 %v6325
        %v6457 = vunpack.c.l.b16 %v6326
        %v6458 = vunpack.c.h.b16 %v6326
        %v6459 = vunpack.c.l.b16 %v6327
        %v6460 = vunpack.c.h.b16 %v6327
        %v6461 = vunpack.c.l.b16 %v6328
        %v6462 = vunpack.c.h.b16 %v6328
        %v6463 = vunpack.c.l.b16 %v6329
        %v6464 = vunpack.c.h.b16 %v6329
        %v6465 = vunpack.c.l.b16 %v6330
        %v6466 = vunpack.c.h.b16 %v6330
        %v6467 = vunpack.c.l.b16 %v6331
        %v6468 = vunpack.c.h.b16 %v6331
        %v6469 = vunpack.c.l.b16 %v6332
        %v6470 = vunpack.c.h.b16 %v6332
        %v6471 = vunpack.c.l.b16 %v6333
        %v6472 = vunpack.c.h.b16 %v6333
        %v6473 = vunpack.c.l.b16 %v6334
        %v6474 = vunpack.c.h.b16 %v6334
        %v6475 = vunpack.c.l.b16 %v6335
        %v6476 = vunpack.c.h.b16 %v6335
        %v6477 = vunpack.c.l.b16 %v6336
        %v6478 = vunpack.c.h.b16 %v6336
        %v6479 = vunpack.c.l.b16 %v6337
        %v6480 = vunpack.c.h.b16 %v6337
        %v6481 = vunpack.c.l.b16 %v6338
        %v6482 = vunpack.c.h.b16 %v6338
        %v6483 = vunpack.c.l.b16 %v6339
        %v6484 = vunpack.c.h.b16 %v6339
        %v6485 = vunpack.c.l.b16 %v6340
        %v6486 = vunpack.c.h.b16 %v6340
        %v6487 = vunpack.c.l.b16 %v6341
        %v6488 = vunpack.c.h.b16 %v6341
        %v6489 = vunpack.c.l.b16 %v6342
        %v6490 = vunpack.c.h.b16 %v6342
        %v6491 = vunpack.c.l.b16 %v6343
        %v6492 = vunpack.c.h.b16 %v6343
        %v6493 = vpack.c.b16 %v6403, %v6397
        %v6494 = vpack.c.b16 %v6404, %v6398
        %v6495 = vpack.c.b16 %v6405, %v6399
        %v6496 = vpack.c.b16 %v6406, %v6400
        %v6497 = vpack.c.b16 %v6407, %v6401
        %v6498 = vpack.c.b16 %v6408, %v6402
        %v6499 = vpack.c.b16 %v6415, %v6409
        %v6500 = vpack.c.b16 %v6416, %v6410
        %v6501 = vpack.c.b16 %v6417, %v6411
        %v6502 = vpack.c.b16 %v6418, %v6412
        %v6503 = vpack.c.b16 %v6419, %v6413
        %v6504 = vpack.c.b16 %v6420, %v6414
        %v6505 = vpack.c.b16 %v6427, %v6421
        %v6506 = vpack.c.b16 %v6428, %v6422
        %v6507 = vpack.c.b16 %v6429, %v6423
        %v6508 = vpack.c.b16 %v6430, %v6424
        %v6509 = vpack.c.b16 %v6431, %v6425
        %v6510 = vpack.c.b16 %v6432, %v6426
        %v6511 = vpack.c.b16 %v6439, %v6433
        %v6512 = vpack.c.b16 %v6440, %v6434
        %v6513 = vpack.c.b16 %v6441, %v6435
        %v6514 = vpack.c.b16 %v6442, %v6436
        %v6515 = vpack.c.b16 %v6443, %v6437
        %v6516 = vpack.c.b16 %v6444, %v6438
        %v6517 = vpack.c.b16 %v6451, %v6445
        %v6518 = vpack.c.b16 %v6452, %v6446
        %v6519 = vpack.c.b16 %v6453, %v6447
        %v6520 = vpack.c.b16 %v6454, %v6448
        %v6521 = vpack.c.b16 %v6455, %v6449
        %v6522 = vpack.c.b16 %v6456, %v6450
        %v6523 = vpack.c.b16 %v6463, %v6457
        %v6524 = vpack.c.b16 %v6464, %v6458
        %v6525 = vpack.c.b16 %v6465, %v6459
        %v6526 = vpack.c.b16 %v6466, %v6460
        %v6527 = vpack.c.b16 %v6467, %v6461
        %v6528 = vpack.c.b16 %v6468, %v6462
        %v6529 = vpack.c.b16 %v6475, %v6469
        %v6530 = vpack.c.b16 %v6476, %v6470
        %v6531 = vpack.c.b16 %v6477, %v6471
        %v6532 = vpack.c.b16 %v6478, %v6472
        %v6533 = vpack.c.b16 %v6479, %v6473
        %v6534 = vpack.c.b16 %v6480, %v6474
        %v6535 = vpack.c.b16 %v6487, %v6481
        %v6536 = vpack.c.b16 %v6488, %v6482
        %v6537 = vpack.c.b16 %v6489, %v6483
        %v6538 = vpack.c.b16 %v6490, %v6484
        %v6539 = vpack.c.b16 %v6491, %v6485
        %v6540 = vpack.c.b16 %v6492, %v6486
        %6589 = vmatprep.subr.bf16.mxu0 %v6494
        %6590 = vmatpush1.bf16.msra.mxu0 %v6493
        %6591 = vmatprep.subr.bf16.mxu0 %v6500
        %6592 = vmatpush1.bf16.msra.mxu0 %v6499
        %6593 = vmatprep.subr.bf16.mxu0 %v6506
        %6594 = vmatpush1.bf16.msra.mxu0 %v6505
        %6595 = vmatprep.subr.bf16.mxu0 %v6512
        %6596 = vmatpush1.bf16.msra.mxu0 %v6511
        %6597 = vmatprep.subr.bf16.mxu0 %v6518
        %6598 = vmatpush1.bf16.msra.mxu0 %v6517
        %6599 = vmatprep.subr.bf16.mxu0 %v6524
        %6600 = vmatpush1.bf16.msra.mxu0 %v6523
        %6601 = vmatprep.subr.bf16.mxu0 %v6530
        %6602 = vmatpush1.bf16.msra.mxu0 %v6529
        %6603 = vmatprep.subr.bf16.mxu0 %v6536
        %6604 = vmatpush1.bf16.msra.mxu0 %v6535
        %6605 = vmatprep.subr.bf16.mxu0 0
        %6606 = vmatpush1.bf16.msra.mxu0 0
        %6607 = vmatprep.subr.bf16.mxu0 0
        %6608 = vmatpush1.bf16.msra.mxu0 0
        %6609 = vmatprep.subr.bf16.mxu0 0
        %6610 = vmatpush1.bf16.msra.mxu0 0
        %6611 = vmatprep.subr.bf16.mxu0 0
        %6612 = vmatpush1.bf16.msra.mxu0 0
        %6613 = vmatprep.subr.bf16.mxu0 0
        %6614 = vmatpush1.bf16.msra.mxu0 0
        %6615 = vmatprep.subr.bf16.mxu0 0
        %6616 = vmatpush1.bf16.msra.mxu0 0
        %6617 = vmatprep.subr.bf16.mxu0 0
        %6618 = vmatpush1.bf16.msra.mxu0 0
        %6619 = vmatprep.subr.bf16.mxu0 0
        %6620 = vmatpush1.bf16.msra.mxu0 0
        %6621 = vmatprep.mubr.bf16.mxu0 0
        %6622 = vmatmul.mubr.bf16.gmra.mrb[0].mxu0 %v6347
        %v6623 = vpop.f32.mrb[0].mxu0
        %v6624 = vadd.f32 0.0, %v6623
        %v6625 = vpop.f32.mrb[0].mxu0
        %v6626 = vadd.f32 0.0, %v6625
        %v6627 = vpop.f32.mrb[0].mxu0
        %v6628 = vpop.f32.mrb[0].mxu0
        %6629 = vdwg.mxu0
        %6630 = vmatprep.subr.bf16.mxu0 %v6496
        %6631 = vmatpush1.bf16.msra.mxu0 %v6495
        %6632 = vmatprep.subr.bf16.mxu0 %v6502
        %6633 = vmatpush1.bf16.msra.mxu0 %v6501
        %6634 = vmatprep.subr.bf16.mxu0 %v6508
        %6635 = vmatpush1.bf16.msra.mxu0 %v6507
        %6636 = vmatprep.subr.bf16.mxu0 %v6514
        %6637 = vmatpush1.bf16.msra.mxu0 %v6513
        %6638 = vmatprep.subr.bf16.mxu0 %v6520
        %6639 = vmatpush1.bf16.msra.mxu0 %v6519
        %6640 = vmatprep.subr.bf16.mxu0 %v6526
        %6641 = vmatpush1.bf16.msra.mxu0 %v6525
        %6642 = vmatprep.subr.bf16.mxu0 %v6532
        %6643 = vmatpush1.bf16.msra.mxu0 %v6531
        %6644 = vmatprep.subr.bf16.mxu0 %v6538
        %6645 = vmatpush1.bf16.msra.mxu0 %v6537
        %6646 = vmatprep.subr.bf16.mxu0 0
        %6647 = vmatpush1.bf16.msra.mxu0 0
        %6648 = vmatprep.subr.bf16.mxu0 0
        %6649 = vmatpush1.bf16.msra.mxu0 0
        %6650 = vmatprep.subr.bf16.mxu0 0
        %6651 = vmatpush1.bf16.msra.mxu0 0
        %6652 = vmatprep.subr.bf16.mxu0 0
        %6653 = vmatpush1.bf16.msra.mxu0 0
        %6654 = vmatprep.subr.bf16.mxu0 0
        %6655 = vmatpush1.bf16.msra.mxu0 0
        %6656 = vmatprep.subr.bf16.mxu0 0
        %6657 = vmatpush1.bf16.msra.mxu0 0
        %6658 = vmatprep.subr.bf16.mxu0 0
        %6659 = vmatpush1.bf16.msra.mxu0 0
        %6660 = vmatprep.subr.bf16.mxu0 0
        %6661 = vmatpush1.bf16.msra.mxu0 0
        %6662 = vmatprep.mubr.bf16.mxu0 0
        %6663 = vmatmul.mubr.bf16.gmra.mrb[0].mxu0 %v6347
        %v6664 = vpop.f32.mrb[0].mxu0
        %v6665 = vadd.f32 0.0, %v6664
        %v6666 = vpop.f32.mrb[0].mxu0
        %v6667 = vadd.f32 0.0, %v6666
        %v6668 = vpop.f32.mrb[0].mxu0
        %v6669 = vpop.f32.mrb[0].mxu0
        %6670 = vdwg.mxu0
        %6671 = vmatprep.subr.bf16.mxu0 %v6498
        %6672 = vmatpush1.bf16.msra.mxu0 %v6497
        %6673 = vmatprep.subr.bf16.mxu0 %v6504
        %6674 = vmatpush1.bf16.msra.mxu0 %v6503
        %6675 = vmatprep.subr.bf16.mxu0 %v6510
        %6676 = vmatpush1.bf16.msra.mxu0 %v6509
        %6677 = vmatprep.subr.bf16.mxu0 %v6516
        %6678 = vmatpush1.bf16.msra.mxu0 %v6515
        %6679 = vmatprep.subr.bf16.mxu0 %v6522
        %6680 = vmatpush1.bf16.msra.mxu0 %v6521
        %6681 = vmatprep.subr.bf16.mxu0 %v6528
        %6682 = vmatpush1.bf16.msra.mxu0 %v6527
        %6683 = vmatprep.subr.bf16.mxu0 %v6534
        %6684 = vmatpush1.bf16.msra.mxu0 %v6533
        %6685 = vmatprep.subr.bf16.mxu0 %v6540
        %6686 = vmatpush1.bf16.msra.mxu0 %v6539
        %6687 = vmatprep.subr.bf16.mxu0 0
        %6688 = vmatpush1.bf16.msra.mxu0 0
        %6689 = vmatprep.subr.bf16.mxu0 0
        %6690 = vmatpush1.bf16.msra.mxu0 0
        %6691 = vmatprep.subr.bf16.mxu0 0
        %6692 = vmatpush1.bf16.msra.mxu0 0
        %6693 = vmatprep.subr.bf16.mxu0 0
        %6694 = vmatpush1.bf16.msra.mxu0 0
        %6695 = vmatprep.subr.bf16.mxu0 0
        %6696 = vmatpush1.bf16.msra.mxu0 0
        %6697 = vmatprep.subr.bf16.mxu0 0
        %6698 = vmatpush1.bf16.msra.mxu0 0
        %6699 = vmatprep.subr.bf16.mxu0 0
        %6700 = vmatpush1.bf16.msra.mxu0 0
        %6701 = vmatprep.subr.bf16.mxu0 0
        %6702 = vmatpush1.bf16.msra.mxu0 0
        %6703 = vmatprep.mubr.bf16.mxu0 0
        %6704 = vmatmul.mubr.bf16.gmra.mrb[0].mxu0 %v6347
        %v6705 = vpop.f32.mrb[0].mxu0
        %v6706 = vadd.f32 0.0, %v6705
        %v6707 = vpop.f32.mrb[0].mxu0
        %v6708 = vadd.f32 0.0, %v6707
        %v6709 = vpop.f32.mrb[0].mxu0
        %v6710 = vpop.f32.mrb[0].mxu0
        %6711 = vdwg.mxu0
        %v6712 = vadd.f32 %v6289, %v6624
        %v6713 = vadd.f32 %v6290, %v6626
        %v6714 = vadd.f32 %v6291, %v6665
        %v6715 = vadd.f32 %v6292, %v6667
        %v6716 = vadd.f32 %v6293, %v6706
        %v6717 = vadd.f32 %v6294, %v6708
        %s6718 = scalar_lea.vmem %s5, 5376
        %v6719 = vld [vmem:[%s6718] sm:$0xff]
        %v6720 = vld [vmem:[%s6718 + $0x8] sm:$0xff]
        %v6721 = vld [vmem:[%s6718 + $0x10] sm:$0xff]
        %v6722 = vld [vmem:[%s6718 + $0x18] sm:$0xff]
        %v6723 = vld [vmem:[%s6718 + $0x20] sm:$0xff]
        %v6724 = vld [vmem:[%s6718 + $0x28] sm:$0xff]
        %v6725 = vld [vmem:[%s6718 + $0x30] sm:$0xff]
        %v6726 = vld [vmem:[%s6718 + $0x38] sm:$0xff]
        %v6727 = vld [vmem:[%s6718 + $0x40] sm:$0xff]
        %v6728 = vld [vmem:[%s6718 + $0x48] sm:$0xff]
        %v6729 = vld [vmem:[%s6718 + $0x50] sm:$0xff]
        %v6730 = vld [vmem:[%s6718 + $0x58] sm:$0xff]
        %v6731 = vld [vmem:[%s6718 + $0x60] sm:$0xff]
        %v6732 = vld [vmem:[%s6718 + $0x68] sm:$0xff]
        %v6733 = vld [vmem:[%s6718 + $0x70] sm:$0xff]
        %v6734 = vld [vmem:[%s6718 + $0x78] sm:$0xff]
        %v6735 = vld [vmem:[%s6718 + $0x80] sm:$0xff]
        %v6736 = vld [vmem:[%s6718 + $0x88] sm:$0xff]
        %v6737 = vld [vmem:[%s6718 + $0x90] sm:$0xff]
        %v6738 = vld [vmem:[%s6718 + $0x98] sm:$0xff]
        %v6739 = vld [vmem:[%s6718 + $0xa0] sm:$0xff]
        %v6740 = vld [vmem:[%s6718 + $0xa8] sm:$0xff]
        %v6741 = vld [vmem:[%s6718 + $0xb0] sm:$0xff]
        %v6742 = vld [vmem:[%s6718 + $0xb8] sm:$0xff]
        %v6743 = vld [vmem:[%s6718 + $0xc0] sm:$0xff]
        %v6744 = vld [vmem:[%s6718 + $0xc8] sm:$0xff]
        %v6745 = vld [vmem:[%s6718 + $0xd0] sm:$0xff]
        %v6746 = vld [vmem:[%s6718 + $0xd8] sm:$0xff]
        %v6747 = vld [vmem:[%s6718 + $0xe0] sm:$0xff]
        %v6748 = vld [vmem:[%s6718 + $0xe8] sm:$0xff]
        %v6749 = vld [vmem:[%s6718 + $0xf0] sm:$0xff]
        %v6750 = vld [vmem:[%s6718 + $0xf8] sm:$0xff]
        %v6751 = vld [vmem:[%s6718 + $0x100] sm:$0xff]
        %v6752 = vld [vmem:[%s6718 + $0x108] sm:$0xff]
        %v6753 = vld [vmem:[%s6718 + $0x110] sm:$0xff]
        %v6754 = vld [vmem:[%s6718 + $0x118] sm:$0xff]
        %v6755 = vld [vmem:[%s6718 + $0x120] sm:$0xff]
        %v6756 = vld [vmem:[%s6718 + $0x128] sm:$0xff]
        %v6757 = vld [vmem:[%s6718 + $0x130] sm:$0xff]
        %v6758 = vld [vmem:[%s6718 + $0x138] sm:$0xff]
        %v6759 = vld [vmem:[%s6718 + $0x140] sm:$0xff]
        %v6760 = vld [vmem:[%s6718 + $0x148] sm:$0xff]
        %v6761 = vld [vmem:[%s6718 + $0x150] sm:$0xff]
        %v6762 = vld [vmem:[%s6718 + $0x158] sm:$0xff]
        %v6763 = vld [vmem:[%s6718 + $0x160] sm:$0xff]
        %v6764 = vld [vmem:[%s6718 + $0x168] sm:$0xff]
        %v6765 = vld [vmem:[%s6718 + $0x170] sm:$0xff]
        %v6766 = vld [vmem:[%s6718 + $0x178] sm:$0xff]
        %v6767 = vld [vmem:[#allocation2 + $0x4] sm:$0x8]
        %v6769 = vunpack.c.l.b16 %v6767
        %v6770 = vpack.c.b16 %v6769, %v6769
        %v6771 = vrot.slane %v6770, 3
        %v6821 = vunpack.c.l.b16 %v6719
        %v6822 = vunpack.c.h.b16 %v6719
        %v6823 = vunpack.c.l.b16 %v6720
        %v6824 = vunpack.c.h.b16 %v6720
        %v6825 = vunpack.c.l.b16 %v6721
        %v6826 = vunpack.c.h.b16 %v6721
        %v6827 = vunpack.c.l.b16 %v6722
        %v6828 = vunpack.c.h.b16 %v6722
        %v6829 = vunpack.c.l.b16 %v6723
        %v6830 = vunpack.c.h.b16 %v6723
        %v6831 = vunpack.c.l.b16 %v6724
        %v6832 = vunpack.c.h.b16 %v6724
        %v6833 = vunpack.c.l.b16 %v6725
        %v6834 = vunpack.c.h.b16 %v6725
        %v6835 = vunpack.c.l.b16 %v6726
        %v6836 = vunpack.c.h.b16 %v6726
        %v6837 = vunpack.c.l.b16 %v6727
        %v6838 = vunpack.c.h.b16 %v6727
        %v6839 = vunpack.c.l.b16 %v6728
        %v6840 = vunpack.c.h.b16 %v6728
        %v6841 = vunpack.c.l.b16 %v6729
        %v6842 = vunpack.c.h.b16 %v6729
        %v6843 = vunpack.c.l.b16 %v6730
        %v6844 = vunpack.c.h.b16 %v6730
        %v6845 = vunpack.c.l.b16 %v6731
        %v6846 = vunpack.c.h.b16 %v6731
        %v6847 = vunpack.c.l.b16 %v6732
        %v6848 = vunpack.c.h.b16 %v6732
        %v6849 = vunpack.c.l.b16 %v6733
        %v6850 = vunpack.c.h.b16 %v6733
        %v6851 = vunpack.c.l.b16 %v6734
        %v6852 = vunpack.c.h.b16 %v6734
        %v6853 = vunpack.c.l.b16 %v6735
        %v6854 = vunpack.c.h.b16 %v6735
        %v6855 = vunpack.c.l.b16 %v6736
        %v6856 = vunpack.c.h.b16 %v6736
        %v6857 = vunpack.c.l.b16 %v6737
        %v6858 = vunpack.c.h.b16 %v6737
        %v6859 = vunpack.c.l.b16 %v6738
        %v6860 = vunpack.c.h.b16 %v6738
        %v6861 = vunpack.c.l.b16 %v6739
        %v6862 = vunpack.c.h.b16 %v6739
        %v6863 = vunpack.c.l.b16 %v6740
        %v6864 = vunpack.c.h.b16 %v6740
        %v6865 = vunpack.c.l.b16 %v6741
        %v6866 = vunpack.c.h.b16 %v6741
        %v6867 = vunpack.c.l.b16 %v6742
        %v6868 = vunpack.c.h.b16 %v6742
        %v6869 = vunpack.c.l.b16 %v6743
        %v6870 = vunpack.c.h.b16 %v6743
        %v6871 = vunpack.c.l.b16 %v6744
        %v6872 = vunpack.c.h.b16 %v6744
        %v6873 = vunpack.c.l.b16 %v6745
        %v6874 = vunpack.c.h.b16 %v6745
        %v6875 = vunpack.c.l.b16 %v6746
        %v6876 = vunpack.c.h.b16 %v6746
        %v6877 = vunpack.c.l.b16 %v6747
        %v6878 = vunpack.c.h.b16 %v6747
        %v6879 = vunpack.c.l.b16 %v6748
        %v6880 = vunpack.c.h.b16 %v6748
        %v6881 = vunpack.c.l.b16 %v6749
        %v6882 = vunpack.c.h.b16 %v6749
        %v6883 = vunpack.c.l.b16 %v6750
        %v6884 = vunpack.c.h.b16 %v6750
        %v6885 = vunpack.c.l.b16 %v6751
        %v6886 = vunpack.c.h.b16 %v6751
        %v6887 = vunpack.c.l.b16 %v6752
        %v6888 = vunpack.c.h.b16 %v6752
        %v6889 = vunpack.c.l.b16 %v6753
        %v6890 = vunpack.c.h.b16 %v6753
        %v6891 = vunpack.c.l.b16 %v6754
        %v6892 = vunpack.c.h.b16 %v6754
        %v6893 = vunpack.c.l.b16 %v6755
        %v6894 = vunpack.c.h.b16 %v6755
        %v6895 = vunpack.c.l.b16 %v6756
        %v6896 = vunpack.c.h.b16 %v6756
        %v6897 = vunpack.c.l.b16 %v6757
        %v6898 = vunpack.c.h.b16 %v6757
        %v6899 = vunpack.c.l.b16 %v6758
        %v6900 = vunpack.c.h.b16 %v6758
        %v6901 = vunpack.c.l.b16 %v6759
        %v6902 = vunpack.c.h.b16 %v6759
        %v6903 = vunpack.c.l.b16 %v6760
        %v6904 = vunpack.c.h.b16 %v6760
        %v6905 = vunpack.c.l.b16 %v6761
        %v6906 = vunpack.c.h.b16 %v6761
        %v6907 = vunpack.c.l.b16 %v6762
        %v6908 = vunpack.c.h.b16 %v6762
        %v6909 = vunpack.c.l.b16 %v6763
        %v6910 = vunpack.c.h.b16 %v6763
        %v6911 = vunpack.c.l.b16 %v6764
        %v6912 = vunpack.c.h.b16 %v6764
        %v6913 = vunpack.c.l.b16 %v6765
        %v6914 = vunpack.c.h.b16 %v6765
        %v6915 = vunpack.c.l.b16 %v6766
        %v6916 = vunpack.c.h.b16 %v6766
        %v6917 = vpack.c.b16 %v6827, %v6821
        %v6918 = vpack.c.b16 %v6828, %v6822
        %v6919 = vpack.c.b16 %v6829, %v6823
        %v6920 = vpack.c.b16 %v6830, %v6824
        %v6921 = vpack.c.b16 %v6831, %v6825
        %v6922 = vpack.c.b16 %v6832, %v6826
        %v6923 = vpack.c.b16 %v6839, %v6833
        %v6924 = vpack.c.b16 %v6840, %v6834
        %v6925 = vpack.c.b16 %v6841, %v6835
        %v6926 = vpack.c.b16 %v6842, %v6836
        %v6927 = vpack.c.b16 %v6843, %v6837
        %v6928 = vpack.c.b16 %v6844, %v6838
        %v6929 = vpack.c.b16 %v6851, %v6845
        %v6930 = vpack.c.b16 %v6852, %v6846
        %v6931 = vpack.c.b16 %v6853, %v6847
        %v6932 = vpack.c.b16 %v6854, %v6848
        %v6933 = vpack.c.b16 %v6855, %v6849
        %v6934 = vpack.c.b16 %v6856, %v6850
        %v6935 = vpack.c.b16 %v6863, %v6857
        %v6936 = vpack.c.b16 %v6864, %v6858
        %v6937 = vpack.c.b16 %v6865, %v6859
        %v6938 = vpack.c.b16 %v6866, %v6860
        %v6939 = vpack.c.b16 %v6867, %v6861
        %v6940 = vpack.c.b16 %v6868, %v6862
        %v6941 = vpack.c.b16 %v6875, %v6869
        %v6942 = vpack.c.b16 %v6876, %v6870
        %v6943 = vpack.c.b16 %v6877, %v6871
        %v6944 = vpack.c.b16 %v6878, %v6872
        %v6945 = vpack.c.b16 %v6879, %v6873
        %v6946 = vpack.c.b16 %v6880, %v6874
        %v6947 = vpack.c.b16 %v6887, %v6881
        %v6948 = vpack.c.b16 %v6888, %v6882
        %v6949 = vpack.c.b16 %v6889, %v6883
        %v6950 = vpack.c.b16 %v6890, %v6884
        %v6951 = vpack.c.b16 %v6891, %v6885
        %v6952 = vpack.c.b16 %v6892, %v6886
        %v6953 = vpack.c.b16 %v6899, %v6893
        %v6954 = vpack.c.b16 %v6900, %v6894
        %v6955 = vpack.c.b16 %v6901, %v6895
        %v6956 = vpack.c.b16 %v6902, %v6896
        %v6957 = vpack.c.b16 %v6903, %v6897
        %v6958 = vpack.c.b16 %v6904, %v6898
        %v6959 = vpack.c.b16 %v6911, %v6905
        %v6960 = vpack.c.b16 %v6912, %v6906
        %v6961 = vpack.c.b16 %v6913, %v6907
        %v6962 = vpack.c.b16 %v6914, %v6908
        %v6963 = vpack.c.b16 %v6915, %v6909
        %v6964 = vpack.c.b16 %v6916, %v6910
        %7013 = vmatprep.subr.bf16.mxu0 %v6918
        %7014 = vmatpush1.bf16.msra.mxu0 %v6917
        %7015 = vmatprep.subr.bf16.mxu0 %v6924
        %7016 = vmatpush1.bf16.msra.mxu0 %v6923
        %7017 = vmatprep.subr.bf16.mxu0 %v6930
        %7018 = vmatpush1.bf16.msra.mxu0 %v6929
        %7019 = vmatprep.subr.bf16.mxu0 %v6936
        %7020 = vmatpush1.bf16.msra.mxu0 %v6935
        %7021 = vmatprep.subr.bf16.mxu0 %v6942
        %7022 = vmatpush1.bf16.msra.mxu0 %v6941
        %7023 = vmatprep.subr.bf16.mxu0 %v6948
        %7024 = vmatpush1.bf16.msra.mxu0 %v6947
        %7025 = vmatprep.subr.bf16.mxu0 %v6954
        %7026 = vmatpush1.bf16.msra.mxu0 %v6953
        %7027 = vmatprep.subr.bf16.mxu0 %v6960
        %7028 = vmatpush1.bf16.msra.mxu0 %v6959
        %7029 = vmatprep.subr.bf16.mxu0 0
        %7030 = vmatpush1.bf16.msra.mxu0 0
        %7031 = vmatprep.subr.bf16.mxu0 0
        %7032 = vmatpush1.bf16.msra.mxu0 0
        %7033 = vmatprep.subr.bf16.mxu0 0
        %7034 = vmatpush1.bf16.msra.mxu0 0
        %7035 = vmatprep.subr.bf16.mxu0 0
        %7036 = vmatpush1.bf16.msra.mxu0 0
        %7037 = vmatprep.subr.bf16.mxu0 0
        %7038 = vmatpush1.bf16.msra.mxu0 0
        %7039 = vmatprep.subr.bf16.mxu0 0
        %7040 = vmatpush1.bf16.msra.mxu0 0
        %7041 = vmatprep.subr.bf16.mxu0 0
        %7042 = vmatpush1.bf16.msra.mxu0 0
        %7043 = vmatprep.subr.bf16.mxu0 0
        %7044 = vmatpush1.bf16.msra.mxu0 0
        %7045 = vmatprep.mubr.bf16.mxu0 0
        %7046 = vmatmul.mubr.bf16.gmra.mrb[0].mxu0 %v6771
        %v7047 = vpop.f32.mrb[0].mxu0
        %v7048 = vadd.f32 0.0, %v7047
        %v7049 = vpop.f32.mrb[0].mxu0
        %v7050 = vadd.f32 0.0, %v7049
        %v7051 = vpop.f32.mrb[0].mxu0
        %v7052 = vpop.f32.mrb[0].mxu0
        %7053 = vdwg.mxu0
        %7054 = vmatprep.subr.bf16.mxu0 %v6920
        %7055 = vmatpush1.bf16.msra.mxu0 %v6919
        %7056 = vmatprep.subr.bf16.mxu0 %v6926
        %7057 = vmatpush1.bf16.msra.mxu0 %v6925
        %7058 = vmatprep.subr.bf16.mxu0 %v6932
        %7059 = vmatpush1.bf16.msra.mxu0 %v6931
        %7060 = vmatprep.subr.bf16.mxu0 %v6938
        %7061 = vmatpush1.bf16.msra.mxu0 %v6937
        %7062 = vmatprep.subr.bf16.mxu0 %v6944
        %7063 = vmatpush1.bf16.msra.mxu0 %v6943
        %7064 = vmatprep.subr.bf16.mxu0 %v6950
        %7065 = vmatpush1.bf16.msra.mxu0 %v6949
        %7066 = vmatprep.subr.bf16.mxu0 %v6956
        %7067 = vmatpush1.bf16.msra.mxu0 %v6955
        %7068 = vmatprep.subr.bf16.mxu0 %v6962
        %7069 = vmatpush1.bf16.msra.mxu0 %v6961
        %7070 = vmatprep.subr.bf16.mxu0 0
        %7071 = vmatpush1.bf16.msra.mxu0 0
        %7072 = vmatprep.subr.bf16.mxu0 0
        %7073 = vmatpush1.bf16.msra.mxu0 0
        %7074 = vmatprep.subr.bf16.mxu0 0
        %7075 = vmatpush1.bf16.msra.mxu0 0
        %7076 = vmatprep.subr.bf16.mxu0 0
        %7077 = vmatpush1.bf16.msra.mxu0 0
        %7078 = vmatprep.subr.bf16.mxu0 0
        %7079 = vmatpush1.bf16.msra.mxu0 0
        %7080 = vmatprep.subr.bf16.mxu0 0
        %7081 = vmatpush1.bf16.msra.mxu0 0
        %7082 = vmatprep.subr.bf16.mxu0 0
        %7083 = vmatpush1.bf16.msra.mxu0 0
        %7084 = vmatprep.subr.bf16.mxu0 0
        %7085 = vmatpush1.bf16.msra.mxu0 0
        %7086 = vmatprep.mubr.bf16.mxu0 0
        %7087 = vmatmul.mubr.bf16.gmra.mrb[0].mxu0 %v6771
        %v7088 = vpop.f32.mrb[0].mxu0
        %v7089 = vadd.f32 0.0, %v7088
        %v7090 = vpop.f32.mrb[0].mxu0
        %v7091 = vadd.f32 0.0, %v7090
        %v7092 = vpop.f32.mrb[0].mxu0
        %v7093 = vpop.f32.mrb[0].mxu0
        %7094 = vdwg.mxu0
        %7095 = vmatprep.subr.bf16.mxu0 %v6922
        %7096 = vmatpush1.bf16.msra.mxu0 %v6921
        %7097 = vmatprep.subr.bf16.mxu0 %v6928
        %7098 = vmatpush1.bf16.msra.mxu0 %v6927
        %7099 = vmatprep.subr.bf16.mxu0 %v6934
        %7100 = vmatpush1.bf16.msra.mxu0 %v6933
        %7101 = vmatprep.subr.bf16.mxu0 %v6940
        %7102 = vmatpush1.bf16.msra.mxu0 %v6939
        %7103 = vmatprep.subr.bf16.mxu0 %v6946
        %7104 = vmatpush1.bf16.msra.mxu0 %v6945
        %7105 = vmatprep.subr.bf16.mxu0 %v6952
        %7106 = vmatpush1.bf16.msra.mxu0 %v6951
        %7107 = vmatprep.subr.bf16.mxu0 %v6958
        %7108 = vmatpush1.bf16.msra.mxu0 %v6957
        %7109 = vmatprep.subr.bf16.mxu0 %v6964
        %7110 = vmatpush1.bf16.msra.mxu0 %v6963
        %7111 = vmatprep.subr.bf16.mxu0 0
        %7112 = vmatpush1.bf16.msra.mxu0 0
        %7113 = vmatprep.subr.bf16.mxu0 0
        %7114 = vmatpush1.bf16.msra.mxu0 0
        %7115 = vmatprep.subr.bf16.mxu0 0
        %7116 = vmatpush1.bf16.msra.mxu0 0
        %7117 = vmatprep.subr.bf16.mxu0 0
        %7118 = vmatpush1.bf16.msra.mxu0 0
        %7119 = vmatprep.subr.bf16.mxu0 0
        %7120 = vmatpush1.bf16.msra.mxu0 0
        %7121 = vmatprep.subr.bf16.mxu0 0
        %7122 = vmatpush1.bf16.msra.mxu0 0
        %7123 = vmatprep.subr.bf16.mxu0 0
        %7124 = vmatpush1.bf16.msra.mxu0 0
        %7125 = vmatprep.subr.bf16.mxu0 0
        %7126 = vmatpush1.bf16.msra.mxu0 0
        %7127 = vmatprep.mubr.bf16.mxu0 0
        %7128 = vmatmul.mubr.bf16.gmra.mrb[0].mxu0 %v6771
        %v7129 = vpop.f32.mrb[0].mxu0
        %v7130 = vadd.f32 0.0, %v7129
        %v7131 = vpop.f32.mrb[0].mxu0
        %v7132 = vadd.f32 0.0, %v7131
        %v7133 = vpop.f32.mrb[0].mxu0
        %v7134 = vpop.f32.mrb[0].mxu0
        %7135 = vdwg.mxu0
        %v7136 = vadd.f32 %v6712, %v7048
        %v7137 = vadd.f32 %v6713, %v7050
        %v7138 = vadd.f32 %v6714, %v7089
        %v7139 = vadd.f32 %v6715, %v7091
        %v7140 = vadd.f32 %v6716, %v7130
        %v7141 = vadd.f32 %v6717, %v7132
        %s7142 = scalar_lea.vmem %s5, 5760
        %v7143 = vld [vmem:[%s7142] sm:$0xff]
        %v7144 = vld [vmem:[%s7142 + $0x8] sm:$0xff]
        %v7145 = vld [vmem:[%s7142 + $0x10] sm:$0xff]
        %v7146 = vld [vmem:[%s7142 + $0x18] sm:$0xff]
        %v7147 = vld [vmem:[%s7142 + $0x20] sm:$0xff]
        %v7148 = vld [vmem:[%s7142 + $0x28] sm:$0xff]
        %v7149 = vld [vmem:[%s7142 + $0x30] sm:$0xff]
        %v7150 = vld [vmem:[%s7142 + $0x38] sm:$0xff]
        %v7151 = vld [vmem:[%s7142 + $0x40] sm:$0xff]
        %v7152 = vld [vmem:[%s7142 + $0x48] sm:$0xff]
        %v7153 = vld [vmem:[%s7142 + $0x50] sm:$0xff]
        %v7154 = vld [vmem:[%s7142 + $0x58] sm:$0xff]
        %v7155 = vld [vmem:[%s7142 + $0x60] sm:$0xff]
        %v7156 = vld [vmem:[%s7142 + $0x68] sm:$0xff]
        %v7157 = vld [vmem:[%s7142 + $0x70] sm:$0xff]
        %v7158 = vld [vmem:[%s7142 + $0x78] sm:$0xff]
        %v7159 = vld [vmem:[%s7142 + $0x80] sm:$0xff]
        %v7160 = vld [vmem:[%s7142 + $0x88] sm:$0xff]
        %v7161 = vld [vmem:[%s7142 + $0x90] sm:$0xff]
        %v7162 = vld [vmem:[%s7142 + $0x98] sm:$0xff]
        %v7163 = vld [vmem:[%s7142 + $0xa0] sm:$0xff]
        %v7164 = vld [vmem:[%s7142 + $0xa8] sm:$0xff]
        %v7165 = vld [vmem:[%s7142 + $0xb0] sm:$0xff]
        %v7166 = vld [vmem:[%s7142 + $0xb8] sm:$0xff]
        %v7167 = vld [vmem:[%s7142 + $0xc0] sm:$0xff]
        %v7168 = vld [vmem:[%s7142 + $0xc8] sm:$0xff]
        %v7169 = vld [vmem:[%s7142 + $0xd0] sm:$0xff]
        %v7170 = vld [vmem:[%s7142 + $0xd8] sm:$0xff]
        %v7171 = vld [vmem:[%s7142 + $0xe0] sm:$0xff]
        %v7172 = vld [vmem:[%s7142 + $0xe8] sm:$0xff]
        %v7173 = vld [vmem:[%s7142 + $0xf0] sm:$0xff]
        %v7174 = vld [vmem:[%s7142 + $0xf8] sm:$0xff]
        %v7175 = vld [vmem:[%s7142 + $0x100] sm:$0xff]
        %v7176 = vld [vmem:[%s7142 + $0x108] sm:$0xff]
        %v7177 = vld [vmem:[%s7142 + $0x110] sm:$0xff]
        %v7178 = vld [vmem:[%s7142 + $0x118] sm:$0xff]
        %v7179 = vld [vmem:[%s7142 + $0x120] sm:$0xff]
        %v7180 = vld [vmem:[%s7142 + $0x128] sm:$0xff]
        %v7181 = vld [vmem:[%s7142 + $0x130] sm:$0xff]
        %v7182 = vld [vmem:[%s7142 + $0x138] sm:$0xff]
        %v7183 = vld [vmem:[%s7142 + $0x140] sm:$0xff]
        %v7184 = vld [vmem:[%s7142 + $0x148] sm:$0xff]
        %v7185 = vld [vmem:[%s7142 + $0x150] sm:$0xff]
        %v7186 = vld [vmem:[%s7142 + $0x158] sm:$0xff]
        %v7187 = vld [vmem:[%s7142 + $0x160] sm:$0xff]
        %v7188 = vld [vmem:[%s7142 + $0x168] sm:$0xff]
        %v7189 = vld [vmem:[%s7142 + $0x170] sm:$0xff]
        %v7190 = vld [vmem:[%s7142 + $0x178] sm:$0xff]
        %v7192 = vshrl.u32 %v6770, 16
        %v7194 = vrot.slane %v7192, 3
        %v7244 = vunpack.c.l.b16 %v7143
        %v7245 = vunpack.c.h.b16 %v7143
        %v7246 = vunpack.c.l.b16 %v7144
        %v7247 = vunpack.c.h.b16 %v7144
        %v7248 = vunpack.c.l.b16 %v7145
        %v7249 = vunpack.c.h.b16 %v7145
        %v7250 = vunpack.c.l.b16 %v7146
        %v7251 = vunpack.c.h.b16 %v7146
        %v7252 = vunpack.c.l.b16 %v7147
        %v7253 = vunpack.c.h.b16 %v7147
        %v7254 = vunpack.c.l.b16 %v7148
        %v7255 = vunpack.c.h.b16 %v7148
        %v7256 = vunpack.c.l.b16 %v7149
        %v7257 = vunpack.c.h.b16 %v7149
        %v7258 = vunpack.c.l.b16 %v7150
        %v7259 = vunpack.c.h.b16 %v7150
        %v7260 = vunpack.c.l.b16 %v7151
        %v7261 = vunpack.c.h.b16 %v7151
        %v7262 = vunpack.c.l.b16 %v7152
        %v7263 = vunpack.c.h.b16 %v7152
        %v7264 = vunpack.c.l.b16 %v7153
        %v7265 = vunpack.c.h.b16 %v7153
        %v7266 = vunpack.c.l.b16 %v7154
        %v7267 = vunpack.c.h.b16 %v7154
        %v7268 = vunpack.c.l.b16 %v7155
        %v7269 = vunpack.c.h.b16 %v7155
        %v7270 = vunpack.c.l.b16 %v7156
        %v7271 = vunpack.c.h.b16 %v7156
        %v7272 = vunpack.c.l.b16 %v7157
        %v7273 = vunpack.c.h.b16 %v7157
        %v7274 = vunpack.c.l.b16 %v7158
        %v7275 = vunpack.c.h.b16 %v7158
        %v7276 = vunpack.c.l.b16 %v7159
        %v7277 = vunpack.c.h.b16 %v7159
        %v7278 = vunpack.c.l.b16 %v7160
        %v7279 = vunpack.c.h.b16 %v7160
        %v7280 = vunpack.c.l.b16 %v7161
        %v7281 = vunpack.c.h.b16 %v7161
        %v7282 = vunpack.c.l.b16 %v7162
        %v7283 = vunpack.c.h.b16 %v7162
        %v7284 = vunpack.c.l.b16 %v7163
        %v7285 = vunpack.c.h.b16 %v7163
        %v7286 = vunpack.c.l.b16 %v7164
        %v7287 = vunpack.c.h.b16 %v7164
        %v7288 = vunpack.c.l.b16 %v7165
        %v7289 = vunpack.c.h.b16 %v7165
        %v7290 = vunpack.c.l.b16 %v7166
        %v7291 = vunpack.c.h.b16 %v7166
        %v7292 = vunpack.c.l.b16 %v7167
        %v7293 = vunpack.c.h.b16 %v7167
        %v7294 = vunpack.c.l.b16 %v7168
        %v7295 = vunpack.c.h.b16 %v7168
        %v7296 = vunpack.c.l.b16 %v7169
        %v7297 = vunpack.c.h.b16 %v7169
        %v7298 = vunpack.c.l.b16 %v7170
        %v7299 = vunpack.c.h.b16 %v7170
        %v7300 = vunpack.c.l.b16 %v7171
        %v7301 = vunpack.c.h.b16 %v7171
        %v7302 = vunpack.c.l.b16 %v7172
        %v7303 = vunpack.c.h.b16 %v7172
        %v7304 = vunpack.c.l.b16 %v7173
        %v7305 = vunpack.c.h.b16 %v7173
        %v7306 = vunpack.c.l.b16 %v7174
        %v7307 = vunpack.c.h.b16 %v7174
        %v7308 = vunpack.c.l.b16 %v7175
        %v7309 = vunpack.c.h.b16 %v7175
        %v7310 = vunpack.c.l.b16 %v7176
        %v7311 = vunpack.c.h.b16 %v7176
        %v7312 = vunpack.c.l.b16 %v7177
        %v7313 = vunpack.c.h.b16 %v7177
        %v7314 = vunpack.c.l.b16 %v7178
        %v7315 = vunpack.c.h.b16 %v7178
        %v7316 = vunpack.c.l.b16 %v7179
        %v7317 = vunpack.c.h.b16 %v7179
        %v7318 = vunpack.c.l.b16 %v7180
        %v7319 = vunpack.c.h.b16 %v7180
        %v7320 = vunpack.c.l.b16 %v7181
        %v7321 = vunpack.c.h.b16 %v7181
        %v7322 = vunpack.c.l.b16 %v7182
        %v7323 = vunpack.c.h.b16 %v7182
        %v7324 = vunpack.c.l.b16 %v7183
        %v7325 = vunpack.c.h.b16 %v7183
        %v7326 = vunpack.c.l.b16 %v7184
        %v7327 = vunpack.c.h.b16 %v7184
        %v7328 = vunpack.c.l.b16 %v7185
        %v7329 = vunpack.c.h.b16 %v7185
        %v7330 = vunpack.c.l.b16 %v7186
        %v7331 = vunpack.c.h.b16 %v7186
        %v7332 = vunpack.c.l.b16 %v7187
        %v7333 = vunpack.c.h.b16 %v7187
        %v7334 = vunpack.c.l.b16 %v7188
        %v7335 = vunpack.c.h.b16 %v7188
        %v7336 = vunpack.c.l.b16 %v7189
        %v7337 = vunpack.c.h.b16 %v7189
        %v7338 = vunpack.c.l.b16 %v7190
        %v7339 = vunpack.c.h.b16 %v7190
        %v7340 = vpack.c.b16 %v7250, %v7244
        %v7341 = vpack.c.b16 %v7251, %v7245
        %v7342 = vpack.c.b16 %v7252, %v7246
        %v7343 = vpack.c.b16 %v7253, %v7247
        %v7344 = vpack.c.b16 %v7254, %v7248
        %v7345 = vpack.c.b16 %v7255, %v7249
        %v7346 = vpack.c.b16 %v7262, %v7256
        %v7347 = vpack.c.b16 %v7263, %v7257
        %v7348 = vpack.c.b16 %v7264, %v7258
        %v7349 = vpack.c.b16 %v7265, %v7259
        %v7350 = vpack.c.b16 %v7266, %v7260
        %v7351 = vpack.c.b16 %v7267, %v7261
        %v7352 = vpack.c.b16 %v7274, %v7268
        %v7353 = vpack.c.b16 %v7275, %v7269
        %v7354 = vpack.c.b16 %v7276, %v7270
        %v7355 = vpack.c.b16 %v7277, %v7271
        %v7356 = vpack.c.b16 %v7278, %v7272
        %v7357 = vpack.c.b16 %v7279, %v7273
        %v7358 = vpack.c.b16 %v7286, %v7280
        %v7359 = vpack.c.b16 %v7287, %v7281
        %v7360 = vpack.c.b16 %v7288, %v7282
        %v7361 = vpack.c.b16 %v7289, %v7283
        %v7362 = vpack.c.b16 %v7290, %v7284
        %v7363 = vpack.c.b16 %v7291, %v7285
        %v7364 = vpack.c.b16 %v7298, %v7292
        %v7365 = vpack.c.b16 %v7299, %v7293
        %v7366 = vpack.c.b16 %v7300, %v7294
        %v7367 = vpack.c.b16 %v7301, %v7295
        %v7368 = vpack.c.b16 %v7302, %v7296
        %v7369 = vpack.c.b16 %v7303, %v7297
        %v7370 = vpack.c.b16 %v7310, %v7304
        %v7371 = vpack.c.b16 %v7311, %v7305
        %v7372 = vpack.c.b16 %v7312, %v7306
        %v7373 = vpack.c.b16 %v7313, %v7307
        %v7374 = vpack.c.b16 %v7314, %v7308
        %v7375 = vpack.c.b16 %v7315, %v7309
        %v7376 = vpack.c.b16 %v7322, %v7316
        %v7377 = vpack.c.b16 %v7323, %v7317
        %v7378 = vpack.c.b16 %v7324, %v7318
        %v7379 = vpack.c.b16 %v7325, %v7319
        %v7380 = vpack.c.b16 %v7326, %v7320
        %v7381 = vpack.c.b16 %v7327, %v7321
        %v7382 = vpack.c.b16 %v7334, %v7328
        %v7383 = vpack.c.b16 %v7335, %v7329
        %v7384 = vpack.c.b16 %v7336, %v7330
        %v7385 = vpack.c.b16 %v7337, %v7331
        %v7386 = vpack.c.b16 %v7338, %v7332
        %v7387 = vpack.c.b16 %v7339, %v7333
        %7436 = vmatprep.subr.bf16.mxu0 %v7341
        %7437 = vmatpush1.bf16.msra.mxu0 %v7340
        %7438 = vmatprep.subr.bf16.mxu0 %v7347
        %7439 = vmatpush1.bf16.msra.mxu0 %v7346
        %7440 = vmatprep.subr.bf16.mxu0 %v7353
        %7441 = vmatpush1.bf16.msra.mxu0 %v7352
        %7442 = vmatprep.subr.bf16.mxu0 %v7359
        %7443 = vmatpush1.bf16.msra.mxu0 %v7358
        %7444 = vmatprep.subr.bf16.mxu0 %v7365
        %7445 = vmatpush1.bf16.msra.mxu0 %v7364
        %7446 = vmatprep.subr.bf16.mxu0 %v7371
        %7447 = vmatpush1.bf16.msra.mxu0 %v7370
        %7448 = vmatprep.subr.bf16.mxu0 %v7377
        %7449 = vmatpush1.bf16.msra.mxu0 %v7376
        %7450 = vmatprep.subr.bf16.mxu0 %v7383
        %7451 = vmatpush1.bf16.msra.mxu0 %v7382
        %7452 = vmatprep.subr.bf16.mxu0 0
        %7453 = vmatpush1.bf16.msra.mxu0 0
        %7454 = vmatprep.subr.bf16.mxu0 0
        %7455 = vmatpush1.bf16.msra.mxu0 0
        %7456 = vmatprep.subr.bf16.mxu0 0
        %7457 = vmatpush1.bf16.msra.mxu0 0
        %7458 = vmatprep.subr.bf16.mxu0 0
        %7459 = vmatpush1.bf16.msra.mxu0 0
        %7460 = vmatprep.subr.bf16.mxu0 0
        %7461 = vmatpush1.bf16.msra.mxu0 0
        %7462 = vmatprep.subr.bf16.mxu0 0
        %7463 = vmatpush1.bf16.msra.mxu0 0
        %7464 = vmatprep.subr.bf16.mxu0 0
        %7465 = vmatpush1.bf16.msra.mxu0 0
        %7466 = vmatprep.subr.bf16.mxu0 0
        %7467 = vmatpush1.bf16.msra.mxu0 0
        %7468 = vmatprep.mubr.bf16.mxu0 0
        %7469 = vmatmul.mubr.bf16.gmra.mrb[0].mxu0 %v7194
        %v7470 = vpop.f32.mrb[0].mxu0
        %v7471 = vadd.f32 0.0, %v7470
        %v7472 = vpop.f32.mrb[0].mxu0
        %v7473 = vadd.f32 0.0, %v7472
        %v7474 = vpop.f32.mrb[0].mxu0
        %v7475 = vpop.f32.mrb[0].mxu0
        %7476 = vdwg.mxu0
        %7477 = vmatprep.subr.bf16.mxu0 %v7343
        %7478 = vmatpush1.bf16.msra.mxu0 %v7342
        %7479 = vmatprep.subr.bf16.mxu0 %v7349
        %7480 = vmatpush1.bf16.msra.mxu0 %v7348
        %7481 = vmatprep.subr.bf16.mxu0 %v7355
        %7482 = vmatpush1.bf16.msra.mxu0 %v7354
        %7483 = vmatprep.subr.bf16.mxu0 %v7361
        %7484 = vmatpush1.bf16.msra.mxu0 %v7360
        %7485 = vmatprep.subr.bf16.mxu0 %v7367
        %7486 = vmatpush1.bf16.msra.mxu0 %v7366
        %7487 = vmatprep.subr.bf16.mxu0 %v7373
        %7488 = vmatpush1.bf16.msra.mxu0 %v7372
        %7489 = vmatprep.subr.bf16.mxu0 %v7379
        %7490 = vmatpush1.bf16.msra.mxu0 %v7378
        %7491 = vmatprep.subr.bf16.mxu0 %v7385
        %7492 = vmatpush1.bf16.msra.mxu0 %v7384
        %7493 = vmatprep.subr.bf16.mxu0 0
        %7494 = vmatpush1.bf16.msra.mxu0 0
        %7495 = vmatprep.subr.bf16.mxu0 0
        %7496 = vmatpush1.bf16.msra.mxu0 0
        %7497 = vmatprep.subr.bf16.mxu0 0
        %7498 = vmatpush1.bf16.msra.mxu0 0
        %7499 = vmatprep.subr.bf16.mxu0 0
        %7500 = vmatpush1.bf16.msra.mxu0 0
        %7501 = vmatprep.subr.bf16.mxu0 0
        %7502 = vmatpush1.bf16.msra.mxu0 0
        %7503 = vmatprep.subr.bf16.mxu0 0
        %7504 = vmatpush1.bf16.msra.mxu0 0
        %7505 = vmatprep.subr.bf16.mxu0 0
        %7506 = vmatpush1.bf16.msra.mxu0 0
        %7507 = vmatprep.subr.bf16.mxu0 0
        %7508 = vmatpush1.bf16.msra.mxu0 0
        %7509 = vmatprep.mubr.bf16.mxu0 0
        %7510 = vmatmul.mubr.bf16.gmra.mrb[0].mxu0 %v7194
        %v7511 = vpop.f32.mrb[0].mxu0
        %v7512 = vadd.f32 0.0, %v7511
        %v7513 = vpop.f32.mrb[0].mxu0
        %v7514 = vadd.f32 0.0, %v7513
        %v7515 = vpop.f32.mrb[0].mxu0
        %v7516 = vpop.f32.mrb[0].mxu0
        %7517 = vdwg.mxu0
        %7518 = vmatprep.subr.bf16.mxu0 %v7345
        %7519 = vmatpush1.bf16.msra.mxu0 %v7344
        %7520 = vmatprep.subr.bf16.mxu0 %v7351
        %7521 = vmatpush1.bf16.msra.mxu0 %v7350
        %7522 = vmatprep.subr.bf16.mxu0 %v7357
        %7523 = vmatpush1.bf16.msra.mxu0 %v7356
        %7524 = vmatprep.subr.bf16.mxu0 %v7363
        %7525 = vmatpush1.bf16.msra.mxu0 %v7362
        %7526 = vmatprep.subr.bf16.mxu0 %v7369
        %7527 = vmatpush1.bf16.msra.mxu0 %v7368
        %7528 = vmatprep.subr.bf16.mxu0 %v7375
        %7529 = vmatpush1.bf16.msra.mxu0 %v7374
        %7530 = vmatprep.subr.bf16.mxu0 %v7381
        %7531 = vmatpush1.bf16.msra.mxu0 %v7380
        %7532 = vmatprep.subr.bf16.mxu0 %v7387
        %7533 = vmatpush1.bf16.msra.mxu0 %v7386
        %7534 = vmatprep.subr.bf16.mxu0 0
        %7535 = vmatpush1.bf16.msra.mxu0 0
        %7536 = vmatprep.subr.bf16.mxu0 0
        %7537 = vmatpush1.bf16.msra.mxu0 0
        %7538 = vmatprep.subr.bf16.mxu0 0
        %7539 = vmatpush1.bf16.msra.mxu0 0
        %7540 = vmatprep.subr.bf16.mxu0 0
        %7541 = vmatpush1.bf16.msra.mxu0 0
        %7542 = vmatprep.subr.bf16.mxu0 0
        %7543 = vmatpush1.bf16.msra.mxu0 0
        %7544 = vmatprep.subr.bf16.mxu0 0
        %7545 = vmatpush1.bf16.msra.mxu0 0
        %7546 = vmatprep.subr.bf16.mxu0 0
        %7547 = vmatpush1.bf16.msra.mxu0 0
        %7548 = vmatprep.subr.bf16.mxu0 0
        %7549 = vmatpush1.bf16.msra.mxu0 0
        %7550 = vmatprep.mubr.bf16.mxu0 0
        %7551 = vmatmul.mubr.bf16.gmra.mrb[0].mxu0 %v7194
        %v7552 = vpop.f32.mrb[0].mxu0
        %v7553 = vadd.f32 0.0, %v7552
        %v7554 = vpop.f32.mrb[0].mxu0
        %v7555 = vadd.f32 0.0, %v7554
        %v7556 = vpop.f32.mrb[0].mxu0
        %v7557 = vpop.f32.mrb[0].mxu0
        %7558 = vdwg.mxu0
        %v7559 = vadd.f32 %v7136, %v7471
        %v7560 = vadd.f32 %v7137, %v7473
        %v7561 = vadd.f32 %v7138, %v7512
        %v7562 = vadd.f32 %v7139, %v7514
        %v7563 = vadd.f32 %v7140, %v7553
        %v7564 = vadd.f32 %v7141, %v7555
        %s7565 = scalar_lea.vmem %s5, 6144
        %v7566 = vld [vmem:[%s7565] sm:$0xff]
        %v7567 = vld [vmem:[%s7565 + $0x8] sm:$0xff]
        %v7568 = vld [vmem:[%s7565 + $0x10] sm:$0xff]
        %v7569 = vld [vmem:[%s7565 + $0x18] sm:$0xff]
        %v7570 = vld [vmem:[%s7565 + $0x20] sm:$0xff]
        %v7571 = vld [vmem:[%s7565 + $0x28] sm:$0xff]
        %v7572 = vld [vmem:[%s7565 + $0x30] sm:$0xff]
        %v7573 = vld [vmem:[%s7565 + $0x38] sm:$0xff]
        %v7574 = vld [vmem:[%s7565 + $0x40] sm:$0xff]
        %v7575 = vld [vmem:[%s7565 + $0x48] sm:$0xff]
        %v7576 = vld [vmem:[%s7565 + $0x50] sm:$0xff]
        %v7577 = vld [vmem:[%s7565 + $0x58] sm:$0xff]
        %v7578 = vld [vmem:[%s7565 + $0x60] sm:$0xff]
        %v7579 = vld [vmem:[%s7565 + $0x68] sm:$0xff]
        %v7580 = vld [vmem:[%s7565 + $0x70] sm:$0xff]
        %v7581 = vld [vmem:[%s7565 + $0x78] sm:$0xff]
        %v7582 = vld [vmem:[%s7565 + $0x80] sm:$0xff]
        %v7583 = vld [vmem:[%s7565 + $0x88] sm:$0xff]
        %v7584 = vld [vmem:[%s7565 + $0x90] sm:$0xff]
        %v7585 = vld [vmem:[%s7565 + $0x98] sm:$0xff]
        %v7586 = vld [vmem:[%s7565 + $0xa0] sm:$0xff]
        %v7587 = vld [vmem:[%s7565 + $0xa8] sm:$0xff]
        %v7588 = vld [vmem:[%s7565 + $0xb0] sm:$0xff]
        %v7589 = vld [vmem:[%s7565 + $0xb8] sm:$0xff]
        %v7590 = vld [vmem:[%s7565 + $0xc0] sm:$0xff]
        %v7591 = vld [vmem:[%s7565 + $0xc8] sm:$0xff]
        %v7592 = vld [vmem:[%s7565 + $0xd0] sm:$0xff]
        %v7593 = vld [vmem:[%s7565 + $0xd8] sm:$0xff]
        %v7594 = vld [vmem:[%s7565 + $0xe0] sm:$0xff]
        %v7595 = vld [vmem:[%s7565 + $0xe8] sm:$0xff]
        %v7596 = vld [vmem:[%s7565 + $0xf0] sm:$0xff]
        %v7597 = vld [vmem:[%s7565 + $0xf8] sm:$0xff]
        %v7598 = vld [vmem:[%s7565 + $0x100] sm:$0xff]
        %v7599 = vld [vmem:[%s7565 + $0x108] sm:$0xff]
        %v7600 = vld [vmem:[%s7565 + $0x110] sm:$0xff]
        %v7601 = vld [vmem:[%s7565 + $0x118] sm:$0xff]
        %v7602 = vld [vmem:[%s7565 + $0x120] sm:$0xff]
        %v7603 = vld [vmem:[%s7565 + $0x128] sm:$0xff]
        %v7604 = vld [vmem:[%s7565 + $0x130] sm:$0xff]
        %v7605 = vld [vmem:[%s7565 + $0x138] sm:$0xff]
        %v7606 = vld [vmem:[%s7565 + $0x140] sm:$0xff]
        %v7607 = vld [vmem:[%s7565 + $0x148] sm:$0xff]
        %v7608 = vld [vmem:[%s7565 + $0x150] sm:$0xff]
        %v7609 = vld [vmem:[%s7565 + $0x158] sm:$0xff]
        %v7610 = vld [vmem:[%s7565 + $0x160] sm:$0xff]
        %v7611 = vld [vmem:[%s7565 + $0x168] sm:$0xff]
        %v7612 = vld [vmem:[%s7565 + $0x170] sm:$0xff]
        %v7613 = vld [vmem:[%s7565 + $0x178] sm:$0xff]
        %v7614 = vld [vmem:[#allocation2 + $0x8] sm:$0x1]
        %v7663 = vunpack.c.l.b16 %v7566
        %v7664 = vunpack.c.h.b16 %v7566
        %v7665 = vunpack.c.l.b16 %v7567
        %v7666 = vunpack.c.h.b16 %v7567
        %v7667 = vunpack.c.l.b16 %v7568
        %v7668 = vunpack.c.h.b16 %v7568
        %v7669 = vunpack.c.l.b16 %v7569
        %v7670 = vunpack.c.h.b16 %v7569
        %v7671 = vunpack.c.l.b16 %v7570
        %v7672 = vunpack.c.h.b16 %v7570
        %v7673 = vunpack.c.l.b16 %v7571
        %v7674 = vunpack.c.h.b16 %v7571
        %v7675 = vunpack.c.l.b16 %v7572
        %v7676 = vunpack.c.h.b16 %v7572
        %v7677 = vunpack.c.l.b16 %v7573
        %v7678 = vunpack.c.h.b16 %v7573
        %v7679 = vunpack.c.l.b16 %v7574
        %v7680 = vunpack.c.h.b16 %v7574
        %v7681 = vunpack.c.l.b16 %v7575
        %v7682 = vunpack.c.h.b16 %v7575
        %v7683 = vunpack.c.l.b16 %v7576
        %v7684 = vunpack.c.h.b16 %v7576
        %v7685 = vunpack.c.l.b16 %v7577
        %v7686 = vunpack.c.h.b16 %v7577
        %v7687 = vunpack.c.l.b16 %v7578
        %v7688 = vunpack.c.h.b16 %v7578
        %v7689 = vunpack.c.l.b16 %v7579
        %v7690 = vunpack.c.h.b16 %v7579
        %v7691 = vunpack.c.l.b16 %v7580
        %v7692 = vunpack.c.h.b16 %v7580
        %v7693 = vunpack.c.l.b16 %v7581
        %v7694 = vunpack.c.h.b16 %v7581
        %v7695 = vunpack.c.l.b16 %v7582
        %v7696 = vunpack.c.h.b16 %v7582
        %v7697 = vunpack.c.l.b16 %v7583
        %v7698 = vunpack.c.h.b16 %v7583
        %v7699 = vunpack.c.l.b16 %v7584
        %v7700 = vunpack.c.h.b16 %v7584
        %v7701 = vunpack.c.l.b16 %v7585
        %v7702 = vunpack.c.h.b16 %v7585
        %v7703 = vunpack.c.l.b16 %v7586
        %v7704 = vunpack.c.h.b16 %v7586
        %v7705 = vunpack.c.l.b16 %v7587
        %v7706 = vunpack.c.h.b16 %v7587
        %v7707 = vunpack.c.l.b16 %v7588
        %v7708 = vunpack.c.h.b16 %v7588
        %v7709 = vunpack.c.l.b16 %v7589
        %v7710 = vunpack.c.h.b16 %v7589
        %v7711 = vunpack.c.l.b16 %v7590
        %v7712 = vunpack.c.h.b16 %v7590
        %v7713 = vunpack.c.l.b16 %v7591
        %v7714 = vunpack.c.h.b16 %v7591
        %v7715 = vunpack.c.l.b16 %v7592
        %v7716 = vunpack.c.h.b16 %v7592
        %v7717 = vunpack.c.l.b16 %v7593
        %v7718 = vunpack.c.h.b16 %v7593
        %v7719 = vunpack.c.l.b16 %v7594
        %v7720 = vunpack.c.h.b16 %v7594
        %v7721 = vunpack.c.l.b16 %v7595
        %v7722 = vunpack.c.h.b16 %v7595
        %v7723 = vunpack.c.l.b16 %v7596
        %v7724 = vunpack.c.h.b16 %v7596
        %v7725 = vunpack.c.l.b16 %v7597
        %v7726 = vunpack.c.h.b16 %v7597
        %v7727 = vunpack.c.l.b16 %v7598
        %v7728 = vunpack.c.h.b16 %v7598
        %v7729 = vunpack.c.l.b16 %v7599
        %v7730 = vunpack.c.h.b16 %v7599
        %v7731 = vunpack.c.l.b16 %v7600
        %v7732 = vunpack.c.h.b16 %v7600
        %v7733 = vunpack.c.l.b16 %v7601
        %v7734 = vunpack.c.h.b16 %v7601
        %v7735 = vunpack.c.l.b16 %v7602
        %v7736 = vunpack.c.h.b16 %v7602
        %v7737 = vunpack.c.l.b16 %v7603
        %v7738 = vunpack.c.h.b16 %v7603
        %v7739 = vunpack.c.l.b16 %v7604
        %v7740 = vunpack.c.h.b16 %v7604
        %v7741 = vunpack.c.l.b16 %v7605
        %v7742 = vunpack.c.h.b16 %v7605
        %v7743 = vunpack.c.l.b16 %v7606
        %v7744 = vunpack.c.h.b16 %v7606
        %v7745 = vunpack.c.l.b16 %v7607
        %v7746 = vunpack.c.h.b16 %v7607
        %v7747 = vunpack.c.l.b16 %v7608
        %v7748 = vunpack.c.h.b16 %v7608
        %v7749 = vunpack.c.l.b16 %v7609
        %v7750 = vunpack.c.h.b16 %v7609
        %v7751 = vunpack.c.l.b16 %v7610
        %v7752 = vunpack.c.h.b16 %v7610
        %v7753 = vunpack.c.l.b16 %v7611
        %v7754 = vunpack.c.h.b16 %v7611
        %v7755 = vunpack.c.l.b16 %v7612
        %v7756 = vunpack.c.h.b16 %v7612
        %v7757 = vunpack.c.l.b16 %v7613
        %v7758 = vunpack.c.h.b16 %v7613
        %v7759 = vpack.c.b16 %v7669, %v7663
        %v7760 = vpack.c.b16 %v7670, %v7664
        %v7761 = vpack.c.b16 %v7671, %v7665
        %v7762 = vpack.c.b16 %v7672, %v7666
        %v7763 = vpack.c.b16 %v7673, %v7667
        %v7764 = vpack.c.b16 %v7674, %v7668
        %v7765 = vpack.c.b16 %v7681, %v7675
        %v7766 = vpack.c.b16 %v7682, %v7676
        %v7767 = vpack.c.b16 %v7683, %v7677
        %v7768 = vpack.c.b16 %v7684, %v7678
        %v7769 = vpack.c.b16 %v7685, %v7679
        %v7770 = vpack.c.b16 %v7686, %v7680
        %v7771 = vpack.c.b16 %v7693, %v7687
        %v7772 = vpack.c.b16 %v7694, %v7688
        %v7773 = vpack.c.b16 %v7695, %v7689
        %v7774 = vpack.c.b16 %v7696, %v7690
        %v7775 = vpack.c.b16 %v7697, %v7691
        %v7776 = vpack.c.b16 %v7698, %v7692
        %v7777 = vpack.c.b16 %v7705, %v7699
        %v7778 = vpack.c.b16 %v7706, %v7700
        %v7779 = vpack.c.b16 %v7707, %v7701
        %v7780 = vpack.c.b16 %v7708, %v7702
        %v7781 = vpack.c.b16 %v7709, %v7703
        %v7782 = vpack.c.b16 %v7710, %v7704
        %v7783 = vpack.c.b16 %v7717, %v7711
        %v7784 = vpack.c.b16 %v7718, %v7712
        %v7785 = vpack.c.b16 %v7719, %v7713
        %v7786 = vpack.c.b16 %v7720, %v7714
        %v7787 = vpack.c.b16 %v7721, %v7715
        %v7788 = vpack.c.b16 %v7722, %v7716
        %v7789 = vpack.c.b16 %v7729, %v7723
        %v7790 = vpack.c.b16 %v7730, %v7724
        %v7791 = vpack.c.b16 %v7731, %v7725
        %v7792 = vpack.c.b16 %v7732, %v7726
        %v7793 = vpack.c.b16 %v7733, %v7727
        %v7794 = vpack.c.b16 %v7734, %v7728
        %v7795 = vpack.c.b16 %v7741, %v7735
        %v7796 = vpack.c.b16 %v7742, %v7736
        %v7797 = vpack.c.b16 %v7743, %v7737
        %v7798 = vpack.c.b16 %v7744, %v7738
        %v7799 = vpack.c.b16 %v7745, %v7739
        %v7800 = vpack.c.b16 %v7746, %v7740
        %v7801 = vpack.c.b16 %v7753, %v7747
        %v7802 = vpack.c.b16 %v7754, %v7748
        %v7803 = vpack.c.b16 %v7755, %v7749
        %v7804 = vpack.c.b16 %v7756, %v7750
        %v7805 = vpack.c.b16 %v7757, %v7751
        %v7806 = vpack.c.b16 %v7758, %v7752
        %7855 = vmatprep.subr.bf16.mxu0 %v7760
        %7856 = vmatpush1.bf16.msra.mxu0 %v7759
        %7857 = vmatprep.subr.bf16.mxu0 %v7766
        %7858 = vmatpush1.bf16.msra.mxu0 %v7765
        %7859 = vmatprep.subr.bf16.mxu0 %v7772
        %7860 = vmatpush1.bf16.msra.mxu0 %v7771
        %7861 = vmatprep.subr.bf16.mxu0 %v7778
        %7862 = vmatpush1.bf16.msra.mxu0 %v7777
        %7863 = vmatprep.subr.bf16.mxu0 %v7784
        %7864 = vmatpush1.bf16.msra.mxu0 %v7783
        %7865 = vmatprep.subr.bf16.mxu0 %v7790
        %7866 = vmatpush1.bf16.msra.mxu0 %v7789
        %7867 = vmatprep.subr.bf16.mxu0 %v7796
        %7868 = vmatpush1.bf16.msra.mxu0 %v7795
        %7869 = vmatprep.subr.bf16.mxu0 %v7802
        %7870 = vmatpush1.bf16.msra.mxu0 %v7801
        %7871 = vmatprep.subr.bf16.mxu0 0
        %7872 = vmatpush1.bf16.msra.mxu0 0
        %7873 = vmatprep.subr.bf16.mxu0 0
        %7874 = vmatpush1.bf16.msra.mxu0 0
        %7875 = vmatprep.subr.bf16.mxu0 0
        %7876 = vmatpush1.bf16.msra.mxu0 0
        %7877 = vmatprep.subr.bf16.mxu0 0
        %7878 = vmatpush1.bf16.msra.mxu0 0
        %7879 = vmatprep.subr.bf16.mxu0 0
        %7880 = vmatpush1.bf16.msra.mxu0 0
        %7881 = vmatprep.subr.bf16.mxu0 0
        %7882 = vmatpush1.bf16.msra.mxu0 0
        %7883 = vmatprep.subr.bf16.mxu0 0
        %7884 = vmatpush1.bf16.msra.mxu0 0
        %7885 = vmatprep.subr.bf16.mxu0 0
        %7886 = vmatpush1.bf16.msra.mxu0 0
        %7887 = vmatprep.mubr.bf16.mxu0 0
        %7888 = vmatmul.mubr.bf16.gmra.mrb[0].mxu0 %v7614
        %v7889 = vpop.f32.mrb[0].mxu0
        %v7890 = vadd.f32 0.0, %v7889
        %v7891 = vpop.f32.mrb[0].mxu0
        %v7892 = vadd.f32 0.0, %v7891
        %v7893 = vpop.f32.mrb[0].mxu0
        %v7894 = vpop.f32.mrb[0].mxu0
        %7895 = vdwg.mxu0
        %7896 = vmatprep.subr.bf16.mxu0 %v7762
        %7897 = vmatpush1.bf16.msra.mxu0 %v7761
        %7898 = vmatprep.subr.bf16.mxu0 %v7768
        %7899 = vmatpush1.bf16.msra.mxu0 %v7767
        %7900 = vmatprep.subr.bf16.mxu0 %v7774
        %7901 = vmatpush1.bf16.msra.mxu0 %v7773
        %7902 = vmatprep.subr.bf16.mxu0 %v7780
        %7903 = vmatpush1.bf16.msra.mxu0 %v7779
        %7904 = vmatprep.subr.bf16.mxu0 %v7786
        %7905 = vmatpush1.bf16.msra.mxu0 %v7785
        %7906 = vmatprep.subr.bf16.mxu0 %v7792
        %7907 = vmatpush1.bf16.msra.mxu0 %v7791
        %7908 = vmatprep.subr.bf16.mxu0 %v7798
        %7909 = vmatpush1.bf16.msra.mxu0 %v7797
        %7910 = vmatprep.subr.bf16.mxu0 %v7804
        %7911 = vmatpush1.bf16.msra.mxu0 %v7803
        %7912 = vmatprep.subr.bf16.mxu0 0
        %7913 = vmatpush1.bf16.msra.mxu0 0
        %7914 = vmatprep.subr.bf16.mxu0 0
        %7915 = vmatpush1.bf16.msra.mxu0 0
        %7916 = vmatprep.subr.bf16.mxu0 0
        %7917 = vmatpush1.bf16.msra.mxu0 0
        %7918 = vmatprep.subr.bf16.mxu0 0
        %7919 = vmatpush1.bf16.msra.mxu0 0
        %7920 = vmatprep.subr.bf16.mxu0 0
        %7921 = vmatpush1.bf16.msra.mxu0 0
        %7922 = vmatprep.subr.bf16.mxu0 0
        %7923 = vmatpush1.bf16.msra.mxu0 0
        %7924 = vmatprep.subr.bf16.mxu0 0
        %7925 = vmatpush1.bf16.msra.mxu0 0
        %7926 = vmatprep.subr.bf16.mxu0 0
        %7927 = vmatpush1.bf16.msra.mxu0 0
        %7928 = vmatprep.mubr.bf16.mxu0 0
        %7929 = vmatmul.mubr.bf16.gmra.mrb[0].mxu0 %v7614
        %v7930 = vpop.f32.mrb[0].mxu0
        %v7931 = vadd.f32 0.0, %v7930
        %v7932 = vpop.f32.mrb[0].mxu0
        %v7933 = vadd.f32 0.0, %v7932
        %v7934 = vpop.f32.mrb[0].mxu0
        %v7935 = vpop.f32.mrb[0].mxu0
        %7936 = vdwg.mxu0
        %7937 = vmatprep.subr.bf16.mxu0 %v7764
        %7938 = vmatpush1.bf16.msra.mxu0 %v7763
        %7939 = vmatprep.subr.bf16.mxu0 %v7770
        %7940 = vmatpush1.bf16.msra.mxu0 %v7769
        %7941 = vmatprep.subr.bf16.mxu0 %v7776
        %7942 = vmatpush1.bf16.msra.mxu0 %v7775
        %7943 = vmatprep.subr.bf16.mxu0 %v7782
        %7944 = vmatpush1.bf16.msra.mxu0 %v7781
        %7945 = vmatprep.subr.bf16.mxu0 %v7788
        %7946 = vmatpush1.bf16.msra.mxu0 %v7787
        %7947 = vmatprep.subr.bf16.mxu0 %v7794
        %7948 = vmatpush1.bf16.msra.mxu0 %v7793
        %7949 = vmatprep.subr.bf16.mxu0 %v7800
        %7950 = vmatpush1.bf16.msra.mxu0 %v7799
        %7951 = vmatprep.subr.bf16.mxu0 %v7806
        %7952 = vmatpush1.bf16.msra.mxu0 %v7805
        %7953 = vmatprep.subr.bf16.mxu0 0
        %7954 = vmatpush1.bf16.msra.mxu0 0
        %7955 = vmatprep.subr.bf16.mxu0 0
        %7956 = vmatpush1.bf16.msra.mxu0 0
        %7957 = vmatprep.subr.bf16.mxu0 0
        %7958 = vmatpush1.bf16.msra.mxu0 0
        %7959 = vmatprep.subr.bf16.mxu0 0
        %7960 = vmatpush1.bf16.msra.mxu0 0
        %7961 = vmatprep.subr.bf16.mxu0 0
        %7962 = vmatpush1.bf16.msra.mxu0 0
        %7963 = vmatprep.subr.bf16.mxu0 0
        %7964 = vmatpush1.bf16.msra.mxu0 0
        %7965 = vmatprep.subr.bf16.mxu0 0
        %7966 = vmatpush1.bf16.msra.mxu0 0
        %7967 = vmatprep.subr.bf16.mxu0 0
        %7968 = vmatpush1.bf16.msra.mxu0 0
        %7969 = vmatprep.mubr.bf16.mxu0 0
        %7970 = vmatmul.mubr.bf16.gmra.mrb[0].mxu0 %v7614
        %v7971 = vpop.f32.mrb[0].mxu0
        %v7972 = vadd.f32 0.0, %v7971
        %v7973 = vpop.f32.mrb[0].mxu0
        %v7974 = vadd.f32 0.0, %v7973
        %v7975 = vpop.f32.mrb[0].mxu0
        %v7976 = vpop.f32.mrb[0].mxu0
        %7977 = vdwg.mxu0
        %v7978 = vadd.f32 %v7559, %v7890
        %v7979 = vadd.f32 %v7560, %v7892
        %v7980 = vadd.f32 %v7561, %v7931
        %v7981 = vadd.f32 %v7562, %v7933
        %v7982 = vadd.f32 %v7563, %v7972
        %v7983 = vadd.f32 %v7564, %v7974
        %s7984 = scalar_lea.vmem %s5, 6528
        %v7985 = vld [vmem:[%s7984] sm:$0xff]
        %v7986 = vld [vmem:[%s7984 + $0x8] sm:$0xff]
        %v7987 = vld [vmem:[%s7984 + $0x10] sm:$0xff]
        %v7988 = vld [vmem:[%s7984 + $0x18] sm:$0xff]
        %v7989 = vld [vmem:[%s7984 + $0x20] sm:$0xff]
        %v7990 = vld [vmem:[%s7984 + $0x28] sm:$0xff]
        %v7991 = vld [vmem:[%s7984 + $0x30] sm:$0xff]
        %v7992 = vld [vmem:[%s7984 + $0x38] sm:$0xff]
        %v7993 = vld [vmem:[%s7984 + $0x40] sm:$0xff]
        %v7994 = vld [vmem:[%s7984 + $0x48] sm:$0xff]
        %v7995 = vld [vmem:[%s7984 + $0x50] sm:$0xff]
        %v7996 = vld [vmem:[%s7984 + $0x58] sm:$0xff]
        %v7997 = vld [vmem:[%s7984 + $0x60] sm:$0xff]
        %v7998 = vld [vmem:[%s7984 + $0x68] sm:$0xff]
        %v7999 = vld [vmem:[%s7984 + $0x70] sm:$0xff]
        %v8000 = vld [vmem:[%s7984 + $0x78] sm:$0xff]
        %v8001 = vld [vmem:[%s7984 + $0x80] sm:$0xff]
        %v8002 = vld [vmem:[%s7984 + $0x88] sm:$0xff]
        %v8003 = vld [vmem:[%s7984 + $0x90] sm:$0xff]
        %v8004 = vld [vmem:[%s7984 + $0x98] sm:$0xff]
        %v8005 = vld [vmem:[%s7984 + $0xa0] sm:$0xff]
        %v8006 = vld [vmem:[%s7984 + $0xa8] sm:$0xff]
        %v8007 = vld [vmem:[%s7984 + $0xb0] sm:$0xff]
        %v8008 = vld [vmem:[%s7984 + $0xb8] sm:$0xff]
        %v8009 = vld [vmem:[%s7984 + $0xc0] sm:$0xff]
        %v8010 = vld [vmem:[%s7984 + $0xc8] sm:$0xff]
        %v8011 = vld [vmem:[%s7984 + $0xd0] sm:$0xff]
        %v8012 = vld [vmem:[%s7984 + $0xd8] sm:$0xff]
        %v8013 = vld [vmem:[%s7984 + $0xe0] sm:$0xff]
        %v8014 = vld [vmem:[%s7984 + $0xe8] sm:$0xff]
        %v8015 = vld [vmem:[%s7984 + $0xf0] sm:$0xff]
        %v8016 = vld [vmem:[%s7984 + $0xf8] sm:$0xff]
        %v8017 = vld [vmem:[%s7984 + $0x100] sm:$0xff]
        %v8018 = vld [vmem:[%s7984 + $0x108] sm:$0xff]
        %v8019 = vld [vmem:[%s7984 + $0x110] sm:$0xff]
        %v8020 = vld [vmem:[%s7984 + $0x118] sm:$0xff]
        %v8021 = vld [vmem:[%s7984 + $0x120] sm:$0xff]
        %v8022 = vld [vmem:[%s7984 + $0x128] sm:$0xff]
        %v8023 = vld [vmem:[%s7984 + $0x130] sm:$0xff]
        %v8024 = vld [vmem:[%s7984 + $0x138] sm:$0xff]
        %v8025 = vld [vmem:[%s7984 + $0x140] sm:$0xff]
        %v8026 = vld [vmem:[%s7984 + $0x148] sm:$0xff]
        %v8027 = vld [vmem:[%s7984 + $0x150] sm:$0xff]
        %v8028 = vld [vmem:[%s7984 + $0x158] sm:$0xff]
        %v8029 = vld [vmem:[%s7984 + $0x160] sm:$0xff]
        %v8030 = vld [vmem:[%s7984 + $0x168] sm:$0xff]
        %v8031 = vld [vmem:[%s7984 + $0x170] sm:$0xff]
        %v8032 = vld [vmem:[%s7984 + $0x178] sm:$0xff]
        %v8034 = vunpack.c.l.b16 %v7614
        %v8035 = vpack.c.b16 %v8034, %v8034
        %v8037 = vshrl.u32 %v8035, 16
        %v8088 = vunpack.c.l.b16 %v7985
        %v8089 = vunpack.c.h.b16 %v7985
        %v8090 = vunpack.c.l.b16 %v7986
        %v8091 = vunpack.c.h.b16 %v7986
        %v8092 = vunpack.c.l.b16 %v7987
        %v8093 = vunpack.c.h.b16 %v7987
        %v8094 = vunpack.c.l.b16 %v7988
        %v8095 = vunpack.c.h.b16 %v7988
        %v8096 = vunpack.c.l.b16 %v7989
        %v8097 = vunpack.c.h.b16 %v7989
        %v8098 = vunpack.c.l.b16 %v7990
        %v8099 = vunpack.c.h.b16 %v7990
        %v8100 = vunpack.c.l.b16 %v7991
        %v8101 = vunpack.c.h.b16 %v7991
        %v8102 = vunpack.c.l.b16 %v7992
        %v8103 = vunpack.c.h.b16 %v7992
        %v8104 = vunpack.c.l.b16 %v7993
        %v8105 = vunpack.c.h.b16 %v7993
        %v8106 = vunpack.c.l.b16 %v7994
        %v8107 = vunpack.c.h.b16 %v7994
        %v8108 = vunpack.c.l.b16 %v7995
        %v8109 = vunpack.c.h.b16 %v7995
        %v8110 = vunpack.c.l.b16 %v7996
        %v8111 = vunpack.c.h.b16 %v7996
        %v8112 = vunpack.c.l.b16 %v7997
        %v8113 = vunpack.c.h.b16 %v7997
        %v8114 = vunpack.c.l.b16 %v7998
        %v8115 = vunpack.c.h.b16 %v7998
        %v8116 = vunpack.c.l.b16 %v7999
        %v8117 = vunpack.c.h.b16 %v7999
        %v8118 = vunpack.c.l.b16 %v8000
        %v8119 = vunpack.c.h.b16 %v8000
        %v8120 = vunpack.c.l.b16 %v8001
        %v8121 = vunpack.c.h.b16 %v8001
        %v8122 = vunpack.c.l.b16 %v8002
        %v8123 = vunpack.c.h.b16 %v8002
        %v8124 = vunpack.c.l.b16 %v8003
        %v8125 = vunpack.c.h.b16 %v8003
        %v8126 = vunpack.c.l.b16 %v8004
        %v8127 = vunpack.c.h.b16 %v8004
        %v8128 = vunpack.c.l.b16 %v8005
        %v8129 = vunpack.c.h.b16 %v8005
        %v8130 = vunpack.c.l.b16 %v8006
        %v8131 = vunpack.c.h.b16 %v8006
        %v8132 = vunpack.c.l.b16 %v8007
        %v8133 = vunpack.c.h.b16 %v8007
        %v8134 = vunpack.c.l.b16 %v8008
        %v8135 = vunpack.c.h.b16 %v8008
        %v8136 = vunpack.c.l.b16 %v8009
        %v8137 = vunpack.c.h.b16 %v8009
        %v8138 = vunpack.c.l.b16 %v8010
        %v8139 = vunpack.c.h.b16 %v8010
        %v8140 = vunpack.c.l.b16 %v8011
        %v8141 = vunpack.c.h.b16 %v8011
        %v8142 = vunpack.c.l.b16 %v8012
        %v8143 = vunpack.c.h.b16 %v8012
        %v8144 = vunpack.c.l.b16 %v8013
        %v8145 = vunpack.c.h.b16 %v8013
        %v8146 = vunpack.c.l.b16 %v8014
        %v8147 = vunpack.c.h.b16 %v8014
        %v8148 = vunpack.c.l.b16 %v8015
        %v8149 = vunpack.c.h.b16 %v8015
        %v8150 = vunpack.c.l.b16 %v8016
        %v8151 = vunpack.c.h.b16 %v8016
        %v8152 = vunpack.c.l.b16 %v8017
        %v8153 = vunpack.c.h.b16 %v8017
        %v8154 = vunpack.c.l.b16 %v8018
        %v8155 = vunpack.c.h.b16 %v8018
        %v8156 = vunpack.c.l.b16 %v8019
        %v8157 = vunpack.c.h.b16 %v8019
        %v8158 = vunpack.c.l.b16 %v8020
        %v8159 = vunpack.c.h.b16 %v8020
        %v8160 = vunpack.c.l.b16 %v8021
        %v8161 = vunpack.c.h.b16 %v8021
        %v8162 = vunpack.c.l.b16 %v8022
        %v8163 = vunpack.c.h.b16 %v8022
        %v8164 = vunpack.c.l.b16 %v8023
        %v8165 = vunpack.c.h.b16 %v8023
        %v8166 = vunpack.c.l.b16 %v8024
        %v8167 = vunpack.c.h.b16 %v8024
        %v8168 = vunpack.c.l.b16 %v8025
        %v8169 = vunpack.c.h.b16 %v8025
        %v8170 = vunpack.c.l.b16 %v8026
        %v8171 = vunpack.c.h.b16 %v8026
        %v8172 = vunpack.c.l.b16 %v8027
        %v8173 = vunpack.c.h.b16 %v8027
        %v8174 = vunpack.c.l.b16 %v8028
        %v8175 = vunpack.c.h.b16 %v8028
        %v8176 = vunpack.c.l.b16 %v8029
        %v8177 = vunpack.c.h.b16 %v8029
        %v8178 = vunpack.c.l.b16 %v8030
        %v8179 = vunpack.c.h.b16 %v8030
        %v8180 = vunpack.c.l.b16 %v8031
        %v8181 = vunpack.c.h.b16 %v8031
        %v8182 = vunpack.c.l.b16 %v8032
        %v8183 = vunpack.c.h.b16 %v8032
        %v8184 = vpack.c.b16 %v8094, %v8088
        %v8185 = vpack.c.b16 %v8095, %v8089
        %v8186 = vpack.c.b16 %v8096, %v8090
        %v8187 = vpack.c.b16 %v8097, %v8091
        %v8188 = vpack.c.b16 %v8098, %v8092
        %v8189 = vpack.c.b16 %v8099, %v8093
        %v8190 = vpack.c.b16 %v8106, %v8100
        %v8191 = vpack.c.b16 %v8107, %v8101
        %v8192 = vpack.c.b16 %v8108, %v8102
        %v8193 = vpack.c.b16 %v8109, %v8103
        %v8194 = vpack.c.b16 %v8110, %v8104
        %v8195 = vpack.c.b16 %v8111, %v8105
        %v8196 = vpack.c.b16 %v8118, %v8112
        %v8197 = vpack.c.b16 %v8119, %v8113
        %v8198 = vpack.c.b16 %v8120, %v8114
        %v8199 = vpack.c.b16 %v8121, %v8115
        %v8200 = vpack.c.b16 %v8122, %v8116
        %v8201 = vpack.c.b16 %v8123, %v8117
        %v8202 = vpack.c.b16 %v8130, %v8124
        %v8203 = vpack.c.b16 %v8131, %v8125
        %v8204 = vpack.c.b16 %v8132, %v8126
        %v8205 = vpack.c.b16 %v8133, %v8127
        %v8206 = vpack.c.b16 %v8134, %v8128
        %v8207 = vpack.c.b16 %v8135, %v8129
        %v8208 = vpack.c.b16 %v8142, %v8136
        %v8209 = vpack.c.b16 %v8143, %v8137
        %v8210 = vpack.c.b16 %v8144, %v8138
        %v8211 = vpack.c.b16 %v8145, %v8139
        %v8212 = vpack.c.b16 %v8146, %v8140
        %v8213 = vpack.c.b16 %v8147, %v8141
        %v8214 = vpack.c.b16 %v8154, %v8148
        %v8215 = vpack.c.b16 %v8155, %v8149
        %v8216 = vpack.c.b16 %v8156, %v8150
        %v8217 = vpack.c.b16 %v8157, %v8151
        %v8218 = vpack.c.b16 %v8158, %v8152
        %v8219 = vpack.c.b16 %v8159, %v8153
        %v8220 = vpack.c.b16 %v8166, %v8160
        %v8221 = vpack.c.b16 %v8167, %v8161
        %v8222 = vpack.c.b16 %v8168, %v8162
        %v8223 = vpack.c.b16 %v8169, %v8163
        %v8224 = vpack.c.b16 %v8170, %v8164
        %v8225 = vpack.c.b16 %v8171, %v8165
        %v8226 = vpack.c.b16 %v8178, %v8172
        %v8227 = vpack.c.b16 %v8179, %v8173
        %v8228 = vpack.c.b16 %v8180, %v8174
        %v8229 = vpack.c.b16 %v8181, %v8175
        %v8230 = vpack.c.b16 %v8182, %v8176
        %v8231 = vpack.c.b16 %v8183, %v8177
        %8280 = vmatprep.subr.bf16.mxu0 %v8185
        %8281 = vmatpush1.bf16.msra.mxu0 %v8184
        %8282 = vmatprep.subr.bf16.mxu0 %v8191
        %8283 = vmatpush1.bf16.msra.mxu0 %v8190
        %8284 = vmatprep.subr.bf16.mxu0 %v8197
        %8285 = vmatpush1.bf16.msra.mxu0 %v8196
        %8286 = vmatprep.subr.bf16.mxu0 %v8203
        %8287 = vmatpush1.bf16.msra.mxu0 %v8202
        %8288 = vmatprep.subr.bf16.mxu0 %v8209
        %8289 = vmatpush1.bf16.msra.mxu0 %v8208
        %8290 = vmatprep.subr.bf16.mxu0 %v8215
        %8291 = vmatpush1.bf16.msra.mxu0 %v8214
        %8292 = vmatprep.subr.bf16.mxu0 %v8221
        %8293 = vmatpush1.bf16.msra.mxu0 %v8220
        %8294 = vmatprep.subr.bf16.mxu0 %v8227
        %8295 = vmatpush1.bf16.msra.mxu0 %v8226
        %8296 = vmatprep.subr.bf16.mxu0 0
        %8297 = vmatpush1.bf16.msra.mxu0 0
        %8298 = vmatprep.subr.bf16.mxu0 0
        %8299 = vmatpush1.bf16.msra.mxu0 0
        %8300 = vmatprep.subr.bf16.mxu0 0
        %8301 = vmatpush1.bf16.msra.mxu0 0
        %8302 = vmatprep.subr.bf16.mxu0 0
        %8303 = vmatpush1.bf16.msra.mxu0 0
        %8304 = vmatprep.subr.bf16.mxu0 0
        %8305 = vmatpush1.bf16.msra.mxu0 0
        %8306 = vmatprep.subr.bf16.mxu0 0
        %8307 = vmatpush1.bf16.msra.mxu0 0
        %8308 = vmatprep.subr.bf16.mxu0 0
        %8309 = vmatpush1.bf16.msra.mxu0 0
        %8310 = vmatprep.subr.bf16.mxu0 0
        %8311 = vmatpush1.bf16.msra.mxu0 0
        %8312 = vmatprep.mubr.bf16.mxu0 0
        %8313 = vmatmul.mubr.bf16.gmra.mrb[0].mxu0 %v8037
        %v8314 = vpop.f32.mrb[0].mxu0
        %v8315 = vadd.f32 0.0, %v8314
        %v8316 = vpop.f32.mrb[0].mxu0
        %v8317 = vadd.f32 0.0, %v8316
        %v8318 = vpop.f32.mrb[0].mxu0
        %v8319 = vpop.f32.mrb[0].mxu0
        %8320 = vdwg.mxu0
        %8321 = vmatprep.subr.bf16.mxu0 %v8187
        %8322 = vmatpush1.bf16.msra.mxu0 %v8186
        %8323 = vmatprep.subr.bf16.mxu0 %v8193
        %8324 = vmatpush1.bf16.msra.mxu0 %v8192
        %8325 = vmatprep.subr.bf16.mxu0 %v8199
        %8326 = vmatpush1.bf16.msra.mxu0 %v8198
        %8327 = vmatprep.subr.bf16.mxu0 %v8205
        %8328 = vmatpush1.bf16.msra.mxu0 %v8204
        %8329 = vmatprep.subr.bf16.mxu0 %v8211
        %8330 = vmatpush1.bf16.msra.mxu0 %v8210
        %8331 = vmatprep.subr.bf16.mxu0 %v8217
        %8332 = vmatpush1.bf16.msra.mxu0 %v8216
        %8333 = vmatprep.subr.bf16.mxu0 %v8223
        %8334 = vmatpush1.bf16.msra.mxu0 %v8222
        %8335 = vmatprep.subr.bf16.mxu0 %v8229
        %8336 = vmatpush1.bf16.msra.mxu0 %v8228
        %8337 = vmatprep.subr.bf16.mxu0 0
        %8338 = vmatpush1.bf16.msra.mxu0 0
        %8339 = vmatprep.subr.bf16.mxu0 0
        %8340 = vmatpush1.bf16.msra.mxu0 0
        %8341 = vmatprep.subr.bf16.mxu0 0
        %8342 = vmatpush1.bf16.msra.mxu0 0
        %8343 = vmatprep.subr.bf16.mxu0 0
        %8344 = vmatpush1.bf16.msra.mxu0 0
        %8345 = vmatprep.subr.bf16.mxu0 0
        %8346 = vmatpush1.bf16.msra.mxu0 0
        %8347 = vmatprep.subr.bf16.mxu0 0
        %8348 = vmatpush1.bf16.msra.mxu0 0
        %8349 = vmatprep.subr.bf16.mxu0 0
        %8350 = vmatpush1.bf16.msra.mxu0 0
        %8351 = vmatprep.subr.bf16.mxu0 0
        %8352 = vmatpush1.bf16.msra.mxu0 0
        %8353 = vmatprep.mubr.bf16.mxu0 0
        %8354 = vmatmul.mubr.bf16.gmra.mrb[0].mxu0 %v8037
        %v8355 = vpop.f32.mrb[0].mxu0
        %v8356 = vadd.f32 0.0, %v8355
        %v8357 = vpop.f32.mrb[0].mxu0
        %v8358 = vadd.f32 0.0, %v8357
        %v8359 = vpop.f32.mrb[0].mxu0
        %v8360 = vpop.f32.mrb[0].mxu0
        %8361 = vdwg.mxu0
        %8362 = vmatprep.subr.bf16.mxu0 %v8189
        %8363 = vmatpush1.bf16.msra.mxu0 %v8188
        %8364 = vmatprep.subr.bf16.mxu0 %v8195
        %8365 = vmatpush1.bf16.msra.mxu0 %v8194
        %8366 = vmatprep.subr.bf16.mxu0 %v8201
        %8367 = vmatpush1.bf16.msra.mxu0 %v8200
        %8368 = vmatprep.subr.bf16.mxu0 %v8207
        %8369 = vmatpush1.bf16.msra.mxu0 %v8206
        %8370 = vmatprep.subr.bf16.mxu0 %v8213
        %8371 = vmatpush1.bf16.msra.mxu0 %v8212
        %8372 = vmatprep.subr.bf16.mxu0 %v8219
        %8373 = vmatpush1.bf16.msra.mxu0 %v8218
        %8374 = vmatprep.subr.bf16.mxu0 %v8225
        %8375 = vmatpush1.bf16.msra.mxu0 %v8224
        %8376 = vmatprep.subr.bf16.mxu0 %v8231
        %8377 = vmatpush1.bf16.msra.mxu0 %v8230
        %8378 = vmatprep.subr.bf16.mxu0 0
        %8379 = vmatpush1.bf16.msra.mxu0 0
        %8380 = vmatprep.subr.bf16.mxu0 0
        %8381 = vmatpush1.bf16.msra.mxu0 0
        %8382 = vmatprep.subr.bf16.mxu0 0
        %8383 = vmatpush1.bf16.msra.mxu0 0
        %8384 = vmatprep.subr.bf16.mxu0 0
        %8385 = vmatpush1.bf16.msra.mxu0 0
        %8386 = vmatprep.subr.bf16.mxu0 0
        %8387 = vmatpush1.bf16.msra.mxu0 0
        %8388 = vmatprep.subr.bf16.mxu0 0
        %8389 = vmatpush1.bf16.msra.mxu0 0
        %8390 = vmatprep.subr.bf16.mxu0 0
        %8391 = vmatpush1.bf16.msra.mxu0 0
        %8392 = vmatprep.subr.bf16.mxu0 0
        %8393 = vmatpush1.bf16.msra.mxu0 0
        %8394 = vmatprep.mubr.bf16.mxu0 0
        %8395 = vmatmul.mubr.bf16.gmra.mrb[0].mxu0 %v8037
        %v8396 = vpop.f32.mrb[0].mxu0
        %v8397 = vadd.f32 0.0, %v8396
        %v8398 = vpop.f32.mrb[0].mxu0
        %v8399 = vadd.f32 0.0, %v8398
        %v8400 = vpop.f32.mrb[0].mxu0
        %v8401 = vpop.f32.mrb[0].mxu0
        %8402 = vdwg.mxu0
        %v8403 = vadd.f32 %v7978, %v8315
        %v8404 = vadd.f32 %v7979, %v8317
        %v8405 = vadd.f32 %v7980, %v8356
        %v8406 = vadd.f32 %v7981, %v8358
        %v8407 = vadd.f32 %v7982, %v8397
        %v8408 = vadd.f32 %v7983, %v8399
        %s8409 = scalar_lea.vmem %s5, 6912
        %v8410 = vld [vmem:[%s8409] sm:$0xff]
        %v8411 = vld [vmem:[%s8409 + $0x8] sm:$0xff]
        %v8412 = vld [vmem:[%s8409 + $0x10] sm:$0xff]
        %v8413 = vld [vmem:[%s8409 + $0x18] sm:$0xff]
        %v8414 = vld [vmem:[%s8409 + $0x20] sm:$0xff]
        %v8415 = vld [vmem:[%s8409 + $0x28] sm:$0xff]
        %v8416 = vld [vmem:[%s8409 + $0x30] sm:$0xff]
        %v8417 = vld [vmem:[%s8409 + $0x38] sm:$0xff]
        %v8418 = vld [vmem:[%s8409 + $0x40] sm:$0xff]
        %v8419 = vld [vmem:[%s8409 + $0x48] sm:$0xff]
        %v8420 = vld [vmem:[%s8409 + $0x50] sm:$0xff]
        %v8421 = vld [vmem:[%s8409 + $0x58] sm:$0xff]
        %v8422 = vld [vmem:[%s8409 + $0x60] sm:$0xff]
        %v8423 = vld [vmem:[%s8409 + $0x68] sm:$0xff]
        %v8424 = vld [vmem:[%s8409 + $0x70] sm:$0xff]
        %v8425 = vld [vmem:[%s8409 + $0x78] sm:$0xff]
        %v8426 = vld [vmem:[%s8409 + $0x80] sm:$0xff]
        %v8427 = vld [vmem:[%s8409 + $0x88] sm:$0xff]
        %v8428 = vld [vmem:[%s8409 + $0x90] sm:$0xff]
        %v8429 = vld [vmem:[%s8409 + $0x98] sm:$0xff]
        %v8430 = vld [vmem:[%s8409 + $0xa0] sm:$0xff]
        %v8431 = vld [vmem:[%s8409 + $0xa8] sm:$0xff]
        %v8432 = vld [vmem:[%s8409 + $0xb0] sm:$0xff]
        %v8433 = vld [vmem:[%s8409 + $0xb8] sm:$0xff]
        %v8434 = vld [vmem:[%s8409 + $0xc0] sm:$0xff]
        %v8435 = vld [vmem:[%s8409 + $0xc8] sm:$0xff]
        %v8436 = vld [vmem:[%s8409 + $0xd0] sm:$0xff]
        %v8437 = vld [vmem:[%s8409 + $0xd8] sm:$0xff]
        %v8438 = vld [vmem:[%s8409 + $0xe0] sm:$0xff]
        %v8439 = vld [vmem:[%s8409 + $0xe8] sm:$0xff]
        %v8440 = vld [vmem:[%s8409 + $0xf0] sm:$0xff]
        %v8441 = vld [vmem:[%s8409 + $0xf8] sm:$0xff]
        %v8442 = vld [vmem:[%s8409 + $0x100] sm:$0xff]
        %v8443 = vld [vmem:[%s8409 + $0x108] sm:$0xff]
        %v8444 = vld [vmem:[%s8409 + $0x110] sm:$0xff]
        %v8445 = vld [vmem:[%s8409 + $0x118] sm:$0xff]
        %v8446 = vld [vmem:[%s8409 + $0x120] sm:$0xff]
        %v8447 = vld [vmem:[%s8409 + $0x128] sm:$0xff]
        %v8448 = vld [vmem:[%s8409 + $0x130] sm:$0xff]
        %v8449 = vld [vmem:[%s8409 + $0x138] sm:$0xff]
        %v8450 = vld [vmem:[%s8409 + $0x140] sm:$0xff]
        %v8451 = vld [vmem:[%s8409 + $0x148] sm:$0xff]
        %v8452 = vld [vmem:[%s8409 + $0x150] sm:$0xff]
        %v8453 = vld [vmem:[%s8409 + $0x158] sm:$0xff]
        %v8454 = vld [vmem:[%s8409 + $0x160] sm:$0xff]
        %v8455 = vld [vmem:[%s8409 + $0x168] sm:$0xff]
        %v8456 = vld [vmem:[%s8409 + $0x170] sm:$0xff]
        %v8457 = vld [vmem:[%s8409 + $0x178] sm:$0xff]
        %v8458 = vld [vmem:[#allocation2 + $0x8] sm:$0x2]
        %v8460 = vunpack.c.l.b16 %v8458
        %v8461 = vpack.c.b16 %v8460, %v8460
        %v8462 = vrot.slane %v8461, 1
        %v8512 = vunpack.c.l.b16 %v8410
        %v8513 = vunpack.c.h.b16 %v8410
        %v8514 = vunpack.c.l.b16 %v8411
        %v8515 = vunpack.c.h.b16 %v8411
        %v8516 = vunpack.c.l.b16 %v8412
        %v8517 = vunpack.c.h.b16 %v8412
        %v8518 = vunpack.c.l.b16 %v8413
        %v8519 = vunpack.c.h.b16 %v8413
        %v8520 = vunpack.c.l.b16 %v8414
        %v8521 = vunpack.c.h.b16 %v8414
        %v8522 = vunpack.c.l.b16 %v8415
        %v8523 = vunpack.c.h.b16 %v8415
        %v8524 = vunpack.c.l.b16 %v8416
        %v8525 = vunpack.c.h.b16 %v8416
        %v8526 = vunpack.c.l.b16 %v8417
        %v8527 = vunpack.c.h.b16 %v8417
        %v8528 = vunpack.c.l.b16 %v8418
        %v8529 = vunpack.c.h.b16 %v8418
        %v8530 = vunpack.c.l.b16 %v8419
        %v8531 = vunpack.c.h.b16 %v8419
        %v8532 = vunpack.c.l.b16 %v8420
        %v8533 = vunpack.c.h.b16 %v8420
        %v8534 = vunpack.c.l.b16 %v8421
        %v8535 = vunpack.c.h.b16 %v8421
        %v8536 = vunpack.c.l.b16 %v8422
        %v8537 = vunpack.c.h.b16 %v8422
        %v8538 = vunpack.c.l.b16 %v8423
        %v8539 = vunpack.c.h.b16 %v8423
        %v8540 = vunpack.c.l.b16 %v8424
        %v8541 = vunpack.c.h.b16 %v8424
        %v8542 = vunpack.c.l.b16 %v8425
        %v8543 = vunpack.c.h.b16 %v8425
        %v8544 = vunpack.c.l.b16 %v8426
        %v8545 = vunpack.c.h.b16 %v8426
        %v8546 = vunpack.c.l.b16 %v8427
        %v8547 = vunpack.c.h.b16 %v8427
        %v8548 = vunpack.c.l.b16 %v8428
        %v8549 = vunpack.c.h.b16 %v8428
        %v8550 = vunpack.c.l.b16 %v8429
        %v8551 = vunpack.c.h.b16 %v8429
        %v8552 = vunpack.c.l.b16 %v8430
        %v8553 = vunpack.c.h.b16 %v8430
        %v8554 = vunpack.c.l.b16 %v8431
        %v8555 = vunpack.c.h.b16 %v8431
        %v8556 = vunpack.c.l.b16 %v8432
        %v8557 = vunpack.c.h.b16 %v8432
        %v8558 = vunpack.c.l.b16 %v8433
        %v8559 = vunpack.c.h.b16 %v8433
        %v8560 = vunpack.c.l.b16 %v8434
        %v8561 = vunpack.c.h.b16 %v8434
        %v8562 = vunpack.c.l.b16 %v8435
        %v8563 = vunpack.c.h.b16 %v8435
        %v8564 = vunpack.c.l.b16 %v8436
        %v8565 = vunpack.c.h.b16 %v8436
        %v8566 = vunpack.c.l.b16 %v8437
        %v8567 = vunpack.c.h.b16 %v8437
        %v8568 = vunpack.c.l.b16 %v8438
        %v8569 = vunpack.c.h.b16 %v8438
        %v8570 = vunpack.c.l.b16 %v8439
        %v8571 = vunpack.c.h.b16 %v8439
        %v8572 = vunpack.c.l.b16 %v8440
        %v8573 = vunpack.c.h.b16 %v8440
        %v8574 = vunpack.c.l.b16 %v8441
        %v8575 = vunpack.c.h.b16 %v8441
        %v8576 = vunpack.c.l.b16 %v8442
        %v8577 = vunpack.c.h.b16 %v8442
        %v8578 = vunpack.c.l.b16 %v8443
        %v8579 = vunpack.c.h.b16 %v8443
        %v8580 = vunpack.c.l.b16 %v8444
        %v8581 = vunpack.c.h.b16 %v8444
        %v8582 = vunpack.c.l.b16 %v8445
        %v8583 = vunpack.c.h.b16 %v8445
        %v8584 = vunpack.c.l.b16 %v8446
        %v8585 = vunpack.c.h.b16 %v8446
        %v8586 = vunpack.c.l.b16 %v8447
        %v8587 = vunpack.c.h.b16 %v8447
        %v8588 = vunpack.c.l.b16 %v8448
        %v8589 = vunpack.c.h.b16 %v8448
        %v8590 = vunpack.c.l.b16 %v8449
        %v8591 = vunpack.c.h.b16 %v8449
        %v8592 = vunpack.c.l.b16 %v8450
        %v8593 = vunpack.c.h.b16 %v8450
        %v8594 = vunpack.c.l.b16 %v8451
        %v8595 = vunpack.c.h.b16 %v8451
        %v8596 = vunpack.c.l.b16 %v8452
        %v8597 = vunpack.c.h.b16 %v8452
        %v8598 = vunpack.c.l.b16 %v8453
        %v8599 = vunpack.c.h.b16 %v8453
        %v8600 = vunpack.c.l.b16 %v8454
        %v8601 = vunpack.c.h.b16 %v8454
        %v8602 = vunpack.c.l.b16 %v8455
        %v8603 = vunpack.c.h.b16 %v8455
        %v8604 = vunpack.c.l.b16 %v8456
        %v8605 = vunpack.c.h.b16 %v8456
        %v8606 = vunpack.c.l.b16 %v8457
        %v8607 = vunpack.c.h.b16 %v8457
        %v8608 = vpack.c.b16 %v8518, %v8512
        %v8609 = vpack.c.b16 %v8519, %v8513
        %v8610 = vpack.c.b16 %v8520, %v8514
        %v8611 = vpack.c.b16 %v8521, %v8515
        %v8612 = vpack.c.b16 %v8522, %v8516
        %v8613 = vpack.c.b16 %v8523, %v8517
        %v8614 = vpack.c.b16 %v8530, %v8524
        %v8615 = vpack.c.b16 %v8531, %v8525
        %v8616 = vpack.c.b16 %v8532, %v8526
        %v8617 = vpack.c.b16 %v8533, %v8527
        %v8618 = vpack.c.b16 %v8534, %v8528
        %v8619 = vpack.c.b16 %v8535, %v8529
        %v8620 = vpack.c.b16 %v8542, %v8536
        %v8621 = vpack.c.b16 %v8543, %v8537
        %v8622 = vpack.c.b16 %v8544, %v8538
        %v8623 = vpack.c.b16 %v8545, %v8539
        %v8624 = vpack.c.b16 %v8546, %v8540
        %v8625 = vpack.c.b16 %v8547, %v8541
        %v8626 = vpack.c.b16 %v8554, %v8548
        %v8627 = vpack.c.b16 %v8555, %v8549
        %v8628 = vpack.c.b16 %v8556, %v8550
        %v8629 = vpack.c.b16 %v8557, %v8551
        %v8630 = vpack.c.b16 %v8558, %v8552
        %v8631 = vpack.c.b16 %v8559, %v8553
        %v8632 = vpack.c.b16 %v8566, %v8560
        %v8633 = vpack.c.b16 %v8567, %v8561
        %v8634 = vpack.c.b16 %v8568, %v8562
        %v8635 = vpack.c.b16 %v8569, %v8563
        %v8636 = vpack.c.b16 %v8570, %v8564
        %v8637 = vpack.c.b16 %v8571, %v8565
        %v8638 = vpack.c.b16 %v8578, %v8572
        %v8639 = vpack.c.b16 %v8579, %v8573
        %v8640 = vpack.c.b16 %v8580, %v8574
        %v8641 = vpack.c.b16 %v8581, %v8575
        %v8642 = vpack.c.b16 %v8582, %v8576
        %v8643 = vpack.c.b16 %v8583, %v8577
        %v8644 = vpack.c.b16 %v8590, %v8584
        %v8645 = vpack.c.b16 %v8591, %v8585
        %v8646 = vpack.c.b16 %v8592, %v8586
        %v8647 = vpack.c.b16 %v8593, %v8587
        %v8648 = vpack.c.b16 %v8594, %v8588
        %v8649 = vpack.c.b16 %v8595, %v8589
        %v8650 = vpack.c.b16 %v8602, %v8596
        %v8651 = vpack.c.b16 %v8603, %v8597
        %v8652 = vpack.c.b16 %v8604, %v8598
        %v8653 = vpack.c.b16 %v8605, %v8599
        %v8654 = vpack.c.b16 %v8606, %v8600
        %v8655 = vpack.c.b16 %v8607, %v8601
        %8704 = vmatprep.subr.bf16.mxu0 %v8609
        %8705 = vmatpush1.bf16.msra.mxu0 %v8608
        %8706 = vmatprep.subr.bf16.mxu0 %v8615
        %8707 = vmatpush1.bf16.msra.mxu0 %v8614
        %8708 = vmatprep.subr.bf16.mxu0 %v8621
        %8709 = vmatpush1.bf16.msra.mxu0 %v8620
        %8710 = vmatprep.subr.bf16.mxu0 %v8627
        %8711 = vmatpush1.bf16.msra.mxu0 %v8626
        %8712 = vmatprep.subr.bf16.mxu0 %v8633
        %8713 = vmatpush1.bf16.msra.mxu0 %v8632
        %8714 = vmatprep.subr.bf16.mxu0 %v8639
        %8715 = vmatpush1.bf16.msra.mxu0 %v8638
        %8716 = vmatprep.subr.bf16.mxu0 %v8645
        %8717 = vmatpush1.bf16.msra.mxu0 %v8644
        %8718 = vmatprep.subr.bf16.mxu0 %v8651
        %8719 = vmatpush1.bf16.msra.mxu0 %v8650
        %8720 = vmatprep.subr.bf16.mxu0 0
        %8721 = vmatpush1.bf16.msra.mxu0 0
        %8722 = vmatprep.subr.bf16.mxu0 0
        %8723 = vmatpush1.bf16.msra.mxu0 0
        %8724 = vmatprep.subr.bf16.mxu0 0
        %8725 = vmatpush1.bf16.msra.mxu0 0
        %8726 = vmatprep.subr.bf16.mxu0 0
        %8727 = vmatpush1.bf16.msra.mxu0 0
        %8728 = vmatprep.subr.bf16.mxu0 0
        %8729 = vmatpush1.bf16.msra.mxu0 0
        %8730 = vmatprep.subr.bf16.mxu0 0
        %8731 = vmatpush1.bf16.msra.mxu0 0
        %8732 = vmatprep.subr.bf16.mxu0 0
        %8733 = vmatpush1.bf16.msra.mxu0 0
        %8734 = vmatprep.subr.bf16.mxu0 0
        %8735 = vmatpush1.bf16.msra.mxu0 0
        %8736 = vmatprep.mubr.bf16.mxu0 0
        %8737 = vmatmul.mubr.bf16.gmra.mrb[0].mxu0 %v8462
        %v8738 = vpop.f32.mrb[0].mxu0
        %v8739 = vadd.f32 0.0, %v8738
        %v8740 = vpop.f32.mrb[0].mxu0
        %v8741 = vadd.f32 0.0, %v8740
        %v8742 = vpop.f32.mrb[0].mxu0
        %v8743 = vpop.f32.mrb[0].mxu0
        %8744 = vdwg.mxu0
        %8745 = vmatprep.subr.bf16.mxu0 %v8611
        %8746 = vmatpush1.bf16.msra.mxu0 %v8610
        %8747 = vmatprep.subr.bf16.mxu0 %v8617
        %8748 = vmatpush1.bf16.msra.mxu0 %v8616
        %8749 = vmatprep.subr.bf16.mxu0 %v8623
        %8750 = vmatpush1.bf16.msra.mxu0 %v8622
        %8751 = vmatprep.subr.bf16.mxu0 %v8629
        %8752 = vmatpush1.bf16.msra.mxu0 %v8628
        %8753 = vmatprep.subr.bf16.mxu0 %v8635
        %8754 = vmatpush1.bf16.msra.mxu0 %v8634
        %8755 = vmatprep.subr.bf16.mxu0 %v8641
        %8756 = vmatpush1.bf16.msra.mxu0 %v8640
        %8757 = vmatprep.subr.bf16.mxu0 %v8647
        %8758 = vmatpush1.bf16.msra.mxu0 %v8646
        %8759 = vmatprep.subr.bf16.mxu0 %v8653
        %8760 = vmatpush1.bf16.msra.mxu0 %v8652
        %8761 = vmatprep.subr.bf16.mxu0 0
        %8762 = vmatpush1.bf16.msra.mxu0 0
        %8763 = vmatprep.subr.bf16.mxu0 0
        %8764 = vmatpush1.bf16.msra.mxu0 0
        %8765 = vmatprep.subr.bf16.mxu0 0
        %8766 = vmatpush1.bf16.msra.mxu0 0
        %8767 = vmatprep.subr.bf16.mxu0 0
        %8768 = vmatpush1.bf16.msra.mxu0 0
        %8769 = vmatprep.subr.bf16.mxu0 0
        %8770 = vmatpush1.bf16.msra.mxu0 0
        %8771 = vmatprep.subr.bf16.mxu0 0
        %8772 = vmatpush1.bf16.msra.mxu0 0
        %8773 = vmatprep.subr.bf16.mxu0 0
        %8774 = vmatpush1.bf16.msra.mxu0 0
        %8775 = vmatprep.subr.bf16.mxu0 0
        %8776 = vmatpush1.bf16.msra.mxu0 0
        %8777 = vmatprep.mubr.bf16.mxu0 0
        %8778 = vmatmul.mubr.bf16.gmra.mrb[0].mxu0 %v8462
        %v8779 = vpop.f32.mrb[0].mxu0
        %v8780 = vadd.f32 0.0, %v8779
        %v8781 = vpop.f32.mrb[0].mxu0
        %v8782 = vadd.f32 0.0, %v8781
        %v8783 = vpop.f32.mrb[0].mxu0
        %v8784 = vpop.f32.mrb[0].mxu0
        %8785 = vdwg.mxu0
        %8786 = vmatprep.subr.bf16.mxu0 %v8613
        %8787 = vmatpush1.bf16.msra.mxu0 %v8612
        %8788 = vmatprep.subr.bf16.mxu0 %v8619
        %8789 = vmatpush1.bf16.msra.mxu0 %v8618
        %8790 = vmatprep.subr.bf16.mxu0 %v8625
        %8791 = vmatpush1.bf16.msra.mxu0 %v8624
        %8792 = vmatprep.subr.bf16.mxu0 %v8631
        %8793 = vmatpush1.bf16.msra.mxu0 %v8630
        %8794 = vmatprep.subr.bf16.mxu0 %v8637
        %8795 = vmatpush1.bf16.msra.mxu0 %v8636
        %8796 = vmatprep.subr.bf16.mxu0 %v8643
        %8797 = vmatpush1.bf16.msra.mxu0 %v8642
        %8798 = vmatprep.subr.bf16.mxu0 %v8649
        %8799 = vmatpush1.bf16.msra.mxu0 %v8648
        %8800 = vmatprep.subr.bf16.mxu0 %v8655
        %8801 = vmatpush1.bf16.msra.mxu0 %v8654
        %8802 = vmatprep.subr.bf16.mxu0 0
        %8803 = vmatpush1.bf16.msra.mxu0 0
        %8804 = vmatprep.subr.bf16.mxu0 0
        %8805 = vmatpush1.bf16.msra.mxu0 0
        %8806 = vmatprep.subr.bf16.mxu0 0
        %8807 = vmatpush1.bf16.msra.mxu0 0
        %8808 = vmatprep.subr.bf16.mxu0 0
        %8809 = vmatpush1.bf16.msra.mxu0 0
        %8810 = vmatprep.subr.bf16.mxu0 0
        %8811 = vmatpush1.bf16.msra.mxu0 0
        %8812 = vmatprep.subr.bf16.mxu0 0
        %8813 = vmatpush1.bf16.msra.mxu0 0
        %8814 = vmatprep.subr.bf16.mxu0 0
        %8815 = vmatpush1.bf16.msra.mxu0 0
        %8816 = vmatprep.subr.bf16.mxu0 0
        %8817 = vmatpush1.bf16.msra.mxu0 0
        %8818 = vmatprep.mubr.bf16.mxu0 0
        %8819 = vmatmul.mubr.bf16.gmra.mrb[0].mxu0 %v8462
        %v8820 = vpop.f32.mrb[0].mxu0
        %v8821 = vadd.f32 0.0, %v8820
        %v8822 = vpop.f32.mrb[0].mxu0
        %v8823 = vadd.f32 0.0, %v8822
        %v8824 = vpop.f32.mrb[0].mxu0
        %v8825 = vpop.f32.mrb[0].mxu0
        %8826 = vdwg.mxu0
        %v8827 = vadd.f32 %v8403, %v8739
        %v8828 = vadd.f32 %v8404, %v8741
        %v8829 = vadd.f32 %v8405, %v8780
        %v8830 = vadd.f32 %v8406, %v8782
        %v8831 = vadd.f32 %v8407, %v8821
        %v8832 = vadd.f32 %v8408, %v8823
        %s8833 = scalar_lea.vmem %s5, 7296
        %v8834 = vld [vmem:[%s8833] sm:$0xff]
        %v8835 = vld [vmem:[%s8833 + $0x8] sm:$0xff]
        %v8836 = vld [vmem:[%s8833 + $0x10] sm:$0xff]
        %v8837 = vld [vmem:[%s8833 + $0x18] sm:$0xff]
        %v8838 = vld [vmem:[%s8833 + $0x20] sm:$0xff]
        %v8839 = vld [vmem:[%s8833 + $0x28] sm:$0xff]
        %v8840 = vld [vmem:[%s8833 + $0x30] sm:$0xff]
        %v8841 = vld [vmem:[%s8833 + $0x38] sm:$0xff]
        %v8842 = vld [vmem:[%s8833 + $0x40] sm:$0xff]
        %v8843 = vld [vmem:[%s8833 + $0x48] sm:$0xff]
        %v8844 = vld [vmem:[%s8833 + $0x50] sm:$0xff]
        %v8845 = vld [vmem:[%s8833 + $0x58] sm:$0xff]
        %v8846 = vld [vmem:[%s8833 + $0x60] sm:$0xff]
        %v8847 = vld [vmem:[%s8833 + $0x68] sm:$0xff]
        %v8848 = vld [vmem:[%s8833 + $0x70] sm:$0xff]
        %v8849 = vld [vmem:[%s8833 + $0x78] sm:$0xff]
        %v8850 = vld [vmem:[%s8833 + $0x80] sm:$0xff]
        %v8851 = vld [vmem:[%s8833 + $0x88] sm:$0xff]
        %v8852 = vld [vmem:[%s8833 + $0x90] sm:$0xff]
        %v8853 = vld [vmem:[%s8833 + $0x98] sm:$0xff]
        %v8854 = vld [vmem:[%s8833 + $0xa0] sm:$0xff]
        %v8855 = vld [vmem:[%s8833 + $0xa8] sm:$0xff]
        %v8856 = vld [vmem:[%s8833 + $0xb0] sm:$0xff]
        %v8857 = vld [vmem:[%s8833 + $0xb8] sm:$0xff]
        %v8858 = vld [vmem:[%s8833 + $0xc0] sm:$0xff]
        %v8859 = vld [vmem:[%s8833 + $0xc8] sm:$0xff]
        %v8860 = vld [vmem:[%s8833 + $0xd0] sm:$0xff]
        %v8861 = vld [vmem:[%s8833 + $0xd8] sm:$0xff]
        %v8862 = vld [vmem:[%s8833 + $0xe0] sm:$0xff]
        %v8863 = vld [vmem:[%s8833 + $0xe8] sm:$0xff]
        %v8864 = vld [vmem:[%s8833 + $0xf0] sm:$0xff]
        %v8865 = vld [vmem:[%s8833 + $0xf8] sm:$0xff]
        %v8866 = vld [vmem:[%s8833 + $0x100] sm:$0xff]
        %v8867 = vld [vmem:[%s8833 + $0x108] sm:$0xff]
        %v8868 = vld [vmem:[%s8833 + $0x110] sm:$0xff]
        %v8869 = vld [vmem:[%s8833 + $0x118] sm:$0xff]
        %v8870 = vld [vmem:[%s8833 + $0x120] sm:$0xff]
        %v8871 = vld [vmem:[%s8833 + $0x128] sm:$0xff]
        %v8872 = vld [vmem:[%s8833 + $0x130] sm:$0xff]
        %v8873 = vld [vmem:[%s8833 + $0x138] sm:$0xff]
        %v8874 = vld [vmem:[%s8833 + $0x140] sm:$0xff]
        %v8875 = vld [vmem:[%s8833 + $0x148] sm:$0xff]
        %v8876 = vld [vmem:[%s8833 + $0x150] sm:$0xff]
        %v8877 = vld [vmem:[%s8833 + $0x158] sm:$0xff]
        %v8878 = vld [vmem:[%s8833 + $0x160] sm:$0xff]
        %v8879 = vld [vmem:[%s8833 + $0x168] sm:$0xff]
        %v8880 = vld [vmem:[%s8833 + $0x170] sm:$0xff]
        %v8881 = vld [vmem:[%s8833 + $0x178] sm:$0xff]
        %v8883 = vshrl.u32 %v8461, 16
        %v8885 = vrot.slane %v8883, 1
        %v8935 = vunpack.c.l.b16 %v8834
        %v8936 = vunpack.c.h.b16 %v8834
        %v8937 = vunpack.c.l.b16 %v8835
        %v8938 = vunpack.c.h.b16 %v8835
        %v8939 = vunpack.c.l.b16 %v8836
        %v8940 = vunpack.c.h.b16 %v8836
        %v8941 = vunpack.c.l.b16 %v8837
        %v8942 = vunpack.c.h.b16 %v8837
        %v8943 = vunpack.c.l.b16 %v8838
        %v8944 = vunpack.c.h.b16 %v8838
        %v8945 = vunpack.c.l.b16 %v8839
        %v8946 = vunpack.c.h.b16 %v8839
        %v8947 = vunpack.c.l.b16 %v8840
        %v8948 = vunpack.c.h.b16 %v8840
        %v8949 = vunpack.c.l.b16 %v8841
        %v8950 = vunpack.c.h.b16 %v8841
        %v8951 = vunpack.c.l.b16 %v8842
        %v8952 = vunpack.c.h.b16 %v8842
        %v8953 = vunpack.c.l.b16 %v8843
        %v8954 = vunpack.c.h.b16 %v8843
        %v8955 = vunpack.c.l.b16 %v8844
        %v8956 = vunpack.c.h.b16 %v8844
        %v8957 = vunpack.c.l.b16 %v8845
        %v8958 = vunpack.c.h.b16 %v8845
        %v8959 = vunpack.c.l.b16 %v8846
        %v8960 = vunpack.c.h.b16 %v8846
        %v8961 = vunpack.c.l.b16 %v8847
        %v8962 = vunpack.c.h.b16 %v8847
        %v8963 = vunpack.c.l.b16 %v8848
        %v8964 = vunpack.c.h.b16 %v8848
        %v8965 = vunpack.c.l.b16 %v8849
        %v8966 = vunpack.c.h.b16 %v8849
        %v8967 = vunpack.c.l.b16 %v8850
        %v8968 = vunpack.c.h.b16 %v8850
        %v8969 = vunpack.c.l.b16 %v8851
        %v8970 = vunpack.c.h.b16 %v8851
        %v8971 = vunpack.c.l.b16 %v8852
        %v8972 = vunpack.c.h.b16 %v8852
        %v8973 = vunpack.c.l.b16 %v8853
        %v8974 = vunpack.c.h.b16 %v8853
        %v8975 = vunpack.c.l.b16 %v8854
        %v8976 = vunpack.c.h.b16 %v8854
        %v8977 = vunpack.c.l.b16 %v8855
        %v8978 = vunpack.c.h.b16 %v8855
        %v8979 = vunpack.c.l.b16 %v8856
        %v8980 = vunpack.c.h.b16 %v8856
        %v8981 = vunpack.c.l.b16 %v8857
        %v8982 = vunpack.c.h.b16 %v8857
        %v8983 = vunpack.c.l.b16 %v8858
        %v8984 = vunpack.c.h.b16 %v8858
        %v8985 = vunpack.c.l.b16 %v8859
        %v8986 = vunpack.c.h.b16 %v8859
        %v8987 = vunpack.c.l.b16 %v8860
        %v8988 = vunpack.c.h.b16 %v8860
        %v8989 = vunpack.c.l.b16 %v8861
        %v8990 = vunpack.c.h.b16 %v8861
        %v8991 = vunpack.c.l.b16 %v8862
        %v8992 = vunpack.c.h.b16 %v8862
        %v8993 = vunpack.c.l.b16 %v8863
        %v8994 = vunpack.c.h.b16 %v8863
        %v8995 = vunpack.c.l.b16 %v8864
        %v8996 = vunpack.c.h.b16 %v8864
        %v8997 = vunpack.c.l.b16 %v8865
        %v8998 = vunpack.c.h.b16 %v8865
        %v8999 = vunpack.c.l.b16 %v8866
        %v9000 = vunpack.c.h.b16 %v8866
        %v9001 = vunpack.c.l.b16 %v8867
        %v9002 = vunpack.c.h.b16 %v8867
        %v9003 = vunpack.c.l.b16 %v8868
        %v9004 = vunpack.c.h.b16 %v8868
        %v9005 = vunpack.c.l.b16 %v8869
        %v9006 = vunpack.c.h.b16 %v8869
        %v9007 = vunpack.c.l.b16 %v8870
        %v9008 = vunpack.c.h.b16 %v8870
        %v9009 = vunpack.c.l.b16 %v8871
        %v9010 = vunpack.c.h.b16 %v8871
        %v9011 = vunpack.c.l.b16 %v8872
        %v9012 = vunpack.c.h.b16 %v8872
        %v9013 = vunpack.c.l.b16 %v8873
        %v9014 = vunpack.c.h.b16 %v8873
        %v9015 = vunpack.c.l.b16 %v8874
        %v9016 = vunpack.c.h.b16 %v8874
        %v9017 = vunpack.c.l.b16 %v8875
        %v9018 = vunpack.c.h.b16 %v8875
        %v9019 = vunpack.c.l.b16 %v8876
        %v9020 = vunpack.c.h.b16 %v8876
        %v9021 = vunpack.c.l.b16 %v8877
        %v9022 = vunpack.c.h.b16 %v8877
        %v9023 = vunpack.c.l.b16 %v8878
        %v9024 = vunpack.c.h.b16 %v8878
        %v9025 = vunpack.c.l.b16 %v8879
        %v9026 = vunpack.c.h.b16 %v8879
        %v9027 = vunpack.c.l.b16 %v8880
        %v9028 = vunpack.c.h.b16 %v8880
        %v9029 = vunpack.c.l.b16 %v8881
        %v9030 = vunpack.c.h.b16 %v8881
        %v9031 = vpack.c.b16 %v8941, %v8935
        %v9032 = vpack.c.b16 %v8942, %v8936
        %v9033 = vpack.c.b16 %v8943, %v8937
        %v9034 = vpack.c.b16 %v8944, %v8938
        %v9035 = vpack.c.b16 %v8945, %v8939
        %v9036 = vpack.c.b16 %v8946, %v8940
        %v9037 = vpack.c.b16 %v8953, %v8947
        %v9038 = vpack.c.b16 %v8954, %v8948
        %v9039 = vpack.c.b16 %v8955, %v8949
        %v9040 = vpack.c.b16 %v8956, %v8950
        %v9041 = vpack.c.b16 %v8957, %v8951
        %v9042 = vpack.c.b16 %v8958, %v8952
        %v9043 = vpack.c.b16 %v8965, %v8959
        %v9044 = vpack.c.b16 %v8966, %v8960
        %v9045 = vpack.c.b16 %v8967, %v8961
        %v9046 = vpack.c.b16 %v8968, %v8962
        %v9047 = vpack.c.b16 %v8969, %v8963
        %v9048 = vpack.c.b16 %v8970, %v8964
        %v9049 = vpack.c.b16 %v8977, %v8971
        %v9050 = vpack.c.b16 %v8978, %v8972
        %v9051 = vpack.c.b16 %v8979, %v8973
        %v9052 = vpack.c.b16 %v8980, %v8974
        %v9053 = vpack.c.b16 %v8981, %v8975
        %v9054 = vpack.c.b16 %v8982, %v8976
        %v9055 = vpack.c.b16 %v8989, %v8983
        %v9056 = vpack.c.b16 %v8990, %v8984
        %v9057 = vpack.c.b16 %v8991, %v8985
        %v9058 = vpack.c.b16 %v8992, %v8986
        %v9059 = vpack.c.b16 %v8993, %v8987
        %v9060 = vpack.c.b16 %v8994, %v8988
        %v9061 = vpack.c.b16 %v9001, %v8995
        %v9062 = vpack.c.b16 %v9002, %v8996
        %v9063 = vpack.c.b16 %v9003, %v8997
        %v9064 = vpack.c.b16 %v9004, %v8998
        %v9065 = vpack.c.b16 %v9005, %v8999
        %v9066 = vpack.c.b16 %v9006, %v9000
        %v9067 = vpack.c.b16 %v9013, %v9007
        %v9068 = vpack.c.b16 %v9014, %v9008
        %v9069 = vpack.c.b16 %v9015, %v9009
        %v9070 = vpack.c.b16 %v9016, %v9010
        %v9071 = vpack.c.b16 %v9017, %v9011
        %v9072 = vpack.c.b16 %v9018, %v9012
        %v9073 = vpack.c.b16 %v9025, %v9019
        %v9074 = vpack.c.b16 %v9026, %v9020
        %v9075 = vpack.c.b16 %v9027, %v9021
        %v9076 = vpack.c.b16 %v9028, %v9022
        %v9077 = vpack.c.b16 %v9029, %v9023
        %v9078 = vpack.c.b16 %v9030, %v9024
        %9127 = vmatprep.subr.bf16.mxu0 %v9032
        %9128 = vmatpush1.bf16.msra.mxu0 %v9031
        %9129 = vmatprep.subr.bf16.mxu0 %v9038
        %9130 = vmatpush1.bf16.msra.mxu0 %v9037
        %9131 = vmatprep.subr.bf16.mxu0 %v9044
        %9132 = vmatpush1.bf16.msra.mxu0 %v9043
        %9133 = vmatprep.subr.bf16.mxu0 %v9050
        %9134 = vmatpush1.bf16.msra.mxu0 %v9049
        %9135 = vmatprep.subr.bf16.mxu0 %v9056
        %9136 = vmatpush1.bf16.msra.mxu0 %v9055
        %9137 = vmatprep.subr.bf16.mxu0 %v9062
        %9138 = vmatpush1.bf16.msra.mxu0 %v9061
        %9139 = vmatprep.subr.bf16.mxu0 %v9068
        %9140 = vmatpush1.bf16.msra.mxu0 %v9067
        %9141 = vmatprep.subr.bf16.mxu0 %v9074
        %9142 = vmatpush1.bf16.msra.mxu0 %v9073
        %9143 = vmatprep.subr.bf16.mxu0 0
        %9144 = vmatpush1.bf16.msra.mxu0 0
        %9145 = vmatprep.subr.bf16.mxu0 0
        %9146 = vmatpush1.bf16.msra.mxu0 0
        %9147 = vmatprep.subr.bf16.mxu0 0
        %9148 = vmatpush1.bf16.msra.mxu0 0
        %9149 = vmatprep.subr.bf16.mxu0 0
        %9150 = vmatpush1.bf16.msra.mxu0 0
        %9151 = vmatprep.subr.bf16.mxu0 0
        %9152 = vmatpush1.bf16.msra.mxu0 0
        %9153 = vmatprep.subr.bf16.mxu0 0
        %9154 = vmatpush1.bf16.msra.mxu0 0
        %9155 = vmatprep.subr.bf16.mxu0 0
        %9156 = vmatpush1.bf16.msra.mxu0 0
        %9157 = vmatprep.subr.bf16.mxu0 0
        %9158 = vmatpush1.bf16.msra.mxu0 0
        %9159 = vmatprep.mubr.bf16.mxu0 0
        %9160 = vmatmul.mubr.bf16.gmra.mrb[0].mxu0 %v8885
        %v9161 = vpop.f32.mrb[0].mxu0
        %v9162 = vadd.f32 0.0, %v9161
        %v9163 = vpop.f32.mrb[0].mxu0
        %v9164 = vadd.f32 0.0, %v9163
        %v9165 = vpop.f32.mrb[0].mxu0
        %v9166 = vpop.f32.mrb[0].mxu0
        %9167 = vdwg.mxu0
        %9168 = vmatprep.subr.bf16.mxu0 %v9034
        %9169 = vmatpush1.bf16.msra.mxu0 %v9033
        %9170 = vmatprep.subr.bf16.mxu0 %v9040
        %9171 = vmatpush1.bf16.msra.mxu0 %v9039
        %9172 = vmatprep.subr.bf16.mxu0 %v9046
        %9173 = vmatpush1.bf16.msra.mxu0 %v9045
        %9174 = vmatprep.subr.bf16.mxu0 %v9052
        %9175 = vmatpush1.bf16.msra.mxu0 %v9051
        %9176 = vmatprep.subr.bf16.mxu0 %v9058
        %9177 = vmatpush1.bf16.msra.mxu0 %v9057
        %9178 = vmatprep.subr.bf16.mxu0 %v9064
        %9179 = vmatpush1.bf16.msra.mxu0 %v9063
        %9180 = vmatprep.subr.bf16.mxu0 %v9070
        %9181 = vmatpush1.bf16.msra.mxu0 %v9069
        %9182 = vmatprep.subr.bf16.mxu0 %v9076
        %9183 = vmatpush1.bf16.msra.mxu0 %v9075
        %9184 = vmatprep.subr.bf16.mxu0 0
        %9185 = vmatpush1.bf16.msra.mxu0 0
        %9186 = vmatprep.subr.bf16.mxu0 0
        %9187 = vmatpush1.bf16.msra.mxu0 0
        %9188 = vmatprep.subr.bf16.mxu0 0
        %9189 = vmatpush1.bf16.msra.mxu0 0
        %9190 = vmatprep.subr.bf16.mxu0 0
        %9191 = vmatpush1.bf16.msra.mxu0 0
        %9192 = vmatprep.subr.bf16.mxu0 0
        %9193 = vmatpush1.bf16.msra.mxu0 0
        %9194 = vmatprep.subr.bf16.mxu0 0
        %9195 = vmatpush1.bf16.msra.mxu0 0
        %9196 = vmatprep.subr.bf16.mxu0 0
        %9197 = vmatpush1.bf16.msra.mxu0 0
        %9198 = vmatprep.subr.bf16.mxu0 0
        %9199 = vmatpush1.bf16.msra.mxu0 0
        %9200 = vmatprep.mubr.bf16.mxu0 0
        %9201 = vmatmul.mubr.bf16.gmra.mrb[0].mxu0 %v8885
        %v9202 = vpop.f32.mrb[0].mxu0
        %v9203 = vadd.f32 0.0, %v9202
        %v9204 = vpop.f32.mrb[0].mxu0
        %v9205 = vadd.f32 0.0, %v9204
        %v9206 = vpop.f32.mrb[0].mxu0
        %v9207 = vpop.f32.mrb[0].mxu0
        %9208 = vdwg.mxu0
        %9209 = vmatprep.subr.bf16.mxu0 %v9036
        %9210 = vmatpush1.bf16.msra.mxu0 %v9035
        %9211 = vmatprep.subr.bf16.mxu0 %v9042
        %9212 = vmatpush1.bf16.msra.mxu0 %v9041
        %9213 = vmatprep.subr.bf16.mxu0 %v9048
        %9214 = vmatpush1.bf16.msra.mxu0 %v9047
        %9215 = vmatprep.subr.bf16.mxu0 %v9054
        %9216 = vmatpush1.bf16.msra.mxu0 %v9053
        %9217 = vmatprep.subr.bf16.mxu0 %v9060
        %9218 = vmatpush1.bf16.msra.mxu0 %v9059
        %9219 = vmatprep.subr.bf16.mxu0 %v9066
        %9220 = vmatpush1.bf16.msra.mxu0 %v9065
        %9221 = vmatprep.subr.bf16.mxu0 %v9072
        %9222 = vmatpush1.bf16.msra.mxu0 %v9071
        %9223 = vmatprep.subr.bf16.mxu0 %v9078
        %9224 = vmatpush1.bf16.msra.mxu0 %v9077
        %9225 = vmatprep.subr.bf16.mxu0 0
        %9226 = vmatpush1.bf16.msra.mxu0 0
        %9227 = vmatprep.subr.bf16.mxu0 0
        %9228 = vmatpush1.bf16.msra.mxu0 0
        %9229 = vmatprep.subr.bf16.mxu0 0
        %9230 = vmatpush1.bf16.msra.mxu0 0
        %9231 = vmatprep.subr.bf16.mxu0 0
        %9232 = vmatpush1.bf16.msra.mxu0 0
        %9233 = vmatprep.subr.bf16.mxu0 0
        %9234 = vmatpush1.bf16.msra.mxu0 0
        %9235 = vmatprep.subr.bf16.mxu0 0
        %9236 = vmatpush1.bf16.msra.mxu0 0
        %9237 = vmatprep.subr.bf16.mxu0 0
        %9238 = vmatpush1.bf16.msra.mxu0 0
        %9239 = vmatprep.subr.bf16.mxu0 0
        %9240 = vmatpush1.bf16.msra.mxu0 0
        %9241 = vmatprep.mubr.bf16.mxu0 0
        %9242 = vmatmul.mubr.bf16.gmra.mrb[0].mxu0 %v8885
        %v9243 = vpop.f32.mrb[0].mxu0
        %v9244 = vadd.f32 0.0, %v9243
        %v9245 = vpop.f32.mrb[0].mxu0
        %v9246 = vadd.f32 0.0, %v9245
        %v9247 = vpop.f32.mrb[0].mxu0
        %v9248 = vpop.f32.mrb[0].mxu0
        %9249 = vdwg.mxu0
        %v9250 = vadd.f32 %v8827, %v9162
        %v9251 = vadd.f32 %v8828, %v9164
        %v9252 = vadd.f32 %v8829, %v9203
        %v9253 = vadd.f32 %v8830, %v9205
        %v9254 = vadd.f32 %v8831, %v9244
        %v9255 = vadd.f32 %v8832, %v9246
        %s9256 = scalar_lea.vmem %s5, 7680
        %v9257 = vld [vmem:[%s9256] sm:$0xff]
        %v9258 = vld [vmem:[%s9256 + $0x8] sm:$0xff]
        %v9259 = vld [vmem:[%s9256 + $0x10] sm:$0xff]
        %v9260 = vld [vmem:[%s9256 + $0x18] sm:$0xff]
        %v9261 = vld [vmem:[%s9256 + $0x20] sm:$0xff]
        %v9262 = vld [vmem:[%s9256 + $0x28] sm:$0xff]
        %v9263 = vld [vmem:[%s9256 + $0x30] sm:$0xff]
        %v9264 = vld [vmem:[%s9256 + $0x38] sm:$0xff]
        %v9265 = vld [vmem:[%s9256 + $0x40] sm:$0xff]
        %v9266 = vld [vmem:[%s9256 + $0x48] sm:$0xff]
        %v9267 = vld [vmem:[%s9256 + $0x50] sm:$0xff]
        %v9268 = vld [vmem:[%s9256 + $0x58] sm:$0xff]
        %v9269 = vld [vmem:[%s9256 + $0x60] sm:$0xff]
        %v9270 = vld [vmem:[%s9256 + $0x68] sm:$0xff]
        %v9271 = vld [vmem:[%s9256 + $0x70] sm:$0xff]
        %v9272 = vld [vmem:[%s9256 + $0x78] sm:$0xff]
        %v9273 = vld [vmem:[%s9256 + $0x80] sm:$0xff]
        %v9274 = vld [vmem:[%s9256 + $0x88] sm:$0xff]
        %v9275 = vld [vmem:[%s9256 + $0x90] sm:$0xff]
        %v9276 = vld [vmem:[%s9256 + $0x98] sm:$0xff]
        %v9277 = vld [vmem:[%s9256 + $0xa0] sm:$0xff]
        %v9278 = vld [vmem:[%s9256 + $0xa8] sm:$0xff]
        %v9279 = vld [vmem:[%s9256 + $0xb0] sm:$0xff]
        %v9280 = vld [vmem:[%s9256 + $0xb8] sm:$0xff]
        %v9281 = vld [vmem:[%s9256 + $0xc0] sm:$0xff]
        %v9282 = vld [vmem:[%s9256 + $0xc8] sm:$0xff]
        %v9283 = vld [vmem:[%s9256 + $0xd0] sm:$0xff]
        %v9284 = vld [vmem:[%s9256 + $0xd8] sm:$0xff]
        %v9285 = vld [vmem:[%s9256 + $0xe0] sm:$0xff]
        %v9286 = vld [vmem:[%s9256 + $0xe8] sm:$0xff]
        %v9287 = vld [vmem:[%s9256 + $0xf0] sm:$0xff]
        %v9288 = vld [vmem:[%s9256 + $0xf8] sm:$0xff]
        %v9289 = vld [vmem:[%s9256 + $0x100] sm:$0xff]
        %v9290 = vld [vmem:[%s9256 + $0x108] sm:$0xff]
        %v9291 = vld [vmem:[%s9256 + $0x110] sm:$0xff]
        %v9292 = vld [vmem:[%s9256 + $0x118] sm:$0xff]
        %v9293 = vld [vmem:[%s9256 + $0x120] sm:$0xff]
        %v9294 = vld [vmem:[%s9256 + $0x128] sm:$0xff]
        %v9295 = vld [vmem:[%s9256 + $0x130] sm:$0xff]
        %v9296 = vld [vmem:[%s9256 + $0x138] sm:$0xff]
        %v9297 = vld [vmem:[%s9256 + $0x140] sm:$0xff]
        %v9298 = vld [vmem:[%s9256 + $0x148] sm:$0xff]
        %v9299 = vld [vmem:[%s9256 + $0x150] sm:$0xff]
        %v9300 = vld [vmem:[%s9256 + $0x158] sm:$0xff]
        %v9301 = vld [vmem:[%s9256 + $0x160] sm:$0xff]
        %v9302 = vld [vmem:[%s9256 + $0x168] sm:$0xff]
        %v9303 = vld [vmem:[%s9256 + $0x170] sm:$0xff]
        %v9304 = vld [vmem:[%s9256 + $0x178] sm:$0xff]
        %v9305 = vld [vmem:[#allocation2 + $0x8] sm:$0x4]
        %v9307 = vunpack.c.l.b16 %v9305
        %v9308 = vpack.c.b16 %v9307, %v9307
        %v9309 = vrot.slane %v9308, 2
        %v9359 = vunpack.c.l.b16 %v9257
        %v9360 = vunpack.c.h.b16 %v9257
        %v9361 = vunpack.c.l.b16 %v9258
        %v9362 = vunpack.c.h.b16 %v9258
        %v9363 = vunpack.c.l.b16 %v9259
        %v9364 = vunpack.c.h.b16 %v9259
        %v9365 = vunpack.c.l.b16 %v9260
        %v9366 = vunpack.c.h.b16 %v9260
        %v9367 = vunpack.c.l.b16 %v9261
        %v9368 = vunpack.c.h.b16 %v9261
        %v9369 = vunpack.c.l.b16 %v9262
        %v9370 = vunpack.c.h.b16 %v9262
        %v9371 = vunpack.c.l.b16 %v9263
        %v9372 = vunpack.c.h.b16 %v9263
        %v9373 = vunpack.c.l.b16 %v9264
        %v9374 = vunpack.c.h.b16 %v9264
        %v9375 = vunpack.c.l.b16 %v9265
        %v9376 = vunpack.c.h.b16 %v9265
        %v9377 = vunpack.c.l.b16 %v9266
        %v9378 = vunpack.c.h.b16 %v9266
        %v9379 = vunpack.c.l.b16 %v9267
        %v9380 = vunpack.c.h.b16 %v9267
        %v9381 = vunpack.c.l.b16 %v9268
        %v9382 = vunpack.c.h.b16 %v9268
        %v9383 = vunpack.c.l.b16 %v9269
        %v9384 = vunpack.c.h.b16 %v9269
        %v9385 = vunpack.c.l.b16 %v9270
        %v9386 = vunpack.c.h.b16 %v9270
        %v9387 = vunpack.c.l.b16 %v9271
        %v9388 = vunpack.c.h.b16 %v9271
        %v9389 = vunpack.c.l.b16 %v9272
        %v9390 = vunpack.c.h.b16 %v9272
        %v9391 = vunpack.c.l.b16 %v9273
        %v9392 = vunpack.c.h.b16 %v9273
        %v9393 = vunpack.c.l.b16 %v9274
        %v9394 = vunpack.c.h.b16 %v9274
        %v9395 = vunpack.c.l.b16 %v9275
        %v9396 = vunpack.c.h.b16 %v9275
        %v9397 = vunpack.c.l.b16 %v9276
        %v9398 = vunpack.c.h.b16 %v9276
        %v9399 = vunpack.c.l.b16 %v9277
        %v9400 = vunpack.c.h.b16 %v9277
        %v9401 = vunpack.c.l.b16 %v9278
        %v9402 = vunpack.c.h.b16 %v9278
        %v9403 = vunpack.c.l.b16 %v9279
        %v9404 = vunpack.c.h.b16 %v9279
        %v9405 = vunpack.c.l.b16 %v9280
        %v9406 = vunpack.c.h.b16 %v9280
        %v9407 = vunpack.c.l.b16 %v9281
        %v9408 = vunpack.c.h.b16 %v9281
        %v9409 = vunpack.c.l.b16 %v9282
        %v9410 = vunpack.c.h.b16 %v9282
        %v9411 = vunpack.c.l.b16 %v9283
        %v9412 = vunpack.c.h.b16 %v9283
        %v9413 = vunpack.c.l.b16 %v9284
        %v9414 = vunpack.c.h.b16 %v9284
        %v9415 = vunpack.c.l.b16 %v9285
        %v9416 = vunpack.c.h.b16 %v9285
        %v9417 = vunpack.c.l.b16 %v9286
        %v9418 = vunpack.c.h.b16 %v9286
        %v9419 = vunpack.c.l.b16 %v9287
        %v9420 = vunpack.c.h.b16 %v9287
        %v9421 = vunpack.c.l.b16 %v9288
        %v9422 = vunpack.c.h.b16 %v9288
        %v9423 = vunpack.c.l.b16 %v9289
        %v9424 = vunpack.c.h.b16 %v9289
        %v9425 = vunpack.c.l.b16 %v9290
        %v9426 = vunpack.c.h.b16 %v9290
        %v9427 = vunpack.c.l.b16 %v9291
        %v9428 = vunpack.c.h.b16 %v9291
        %v9429 = vunpack.c.l.b16 %v9292
        %v9430 = vunpack.c.h.b16 %v9292
        %v9431 = vunpack.c.l.b16 %v9293
        %v9432 = vunpack.c.h.b16 %v9293
        %v9433 = vunpack.c.l.b16 %v9294
        %v9434 = vunpack.c.h.b16 %v9294
        %v9435 = vunpack.c.l.b16 %v9295
        %v9436 = vunpack.c.h.b16 %v9295
        %v9437 = vunpack.c.l.b16 %v9296
        %v9438 = vunpack.c.h.b16 %v9296
        %v9439 = vunpack.c.l.b16 %v9297
        %v9440 = vunpack.c.h.b16 %v9297
        %v9441 = vunpack.c.l.b16 %v9298
        %v9442 = vunpack.c.h.b16 %v9298
        %v9443 = vunpack.c.l.b16 %v9299
        %v9444 = vunpack.c.h.b16 %v9299
        %v9445 = vunpack.c.l.b16 %v9300
        %v9446 = vunpack.c.h.b16 %v9300
        %v9447 = vunpack.c.l.b16 %v9301
        %v9448 = vunpack.c.h.b16 %v9301
        %v9449 = vunpack.c.l.b16 %v9302
        %v9450 = vunpack.c.h.b16 %v9302
        %v9451 = vunpack.c.l.b16 %v9303
        %v9452 = vunpack.c.h.b16 %v9303
        %v9453 = vunpack.c.l.b16 %v9304
        %v9454 = vunpack.c.h.b16 %v9304
        %v9455 = vpack.c.b16 %v9365, %v9359
        %v9456 = vpack.c.b16 %v9366, %v9360
        %v9457 = vpack.c.b16 %v9367, %v9361
        %v9458 = vpack.c.b16 %v9368, %v9362
        %v9459 = vpack.c.b16 %v9369, %v9363
        %v9460 = vpack.c.b16 %v9370, %v9364
        %v9461 = vpack.c.b16 %v9377, %v9371
        %v9462 = vpack.c.b16 %v9378, %v9372
        %v9463 = vpack.c.b16 %v9379, %v9373
        %v9464 = vpack.c.b16 %v9380, %v9374
        %v9465 = vpack.c.b16 %v9381, %v9375
        %v9466 = vpack.c.b16 %v9382, %v9376
        %v9467 = vpack.c.b16 %v9389, %v9383
        %v9468 = vpack.c.b16 %v9390, %v9384
        %v9469 = vpack.c.b16 %v9391, %v9385
        %v9470 = vpack.c.b16 %v9392, %v9386
        %v9471 = vpack.c.b16 %v9393, %v9387
        %v9472 = vpack.c.b16 %v9394, %v9388
        %v9473 = vpack.c.b16 %v9401, %v9395
        %v9474 = vpack.c.b16 %v9402, %v9396
        %v9475 = vpack.c.b16 %v9403, %v9397
        %v9476 = vpack.c.b16 %v9404, %v9398
        %v9477 = vpack.c.b16 %v9405, %v9399
        %v9478 = vpack.c.b16 %v9406, %v9400
        %v9479 = vpack.c.b16 %v9413, %v9407
        %v9480 = vpack.c.b16 %v9414, %v9408
        %v9481 = vpack.c.b16 %v9415, %v9409
        %v9482 = vpack.c.b16 %v9416, %v9410
        %v9483 = vpack.c.b16 %v9417, %v9411
        %v9484 = vpack.c.b16 %v9418, %v9412
        %v9485 = vpack.c.b16 %v9425, %v9419
        %v9486 = vpack.c.b16 %v9426, %v9420
        %v9487 = vpack.c.b16 %v9427, %v9421
        %v9488 = vpack.c.b16 %v9428, %v9422
        %v9489 = vpack.c.b16 %v9429, %v9423
        %v9490 = vpack.c.b16 %v9430, %v9424
        %v9491 = vpack.c.b16 %v9437, %v9431
        %v9492 = vpack.c.b16 %v9438, %v9432
        %v9493 = vpack.c.b16 %v9439, %v9433
        %v9494 = vpack.c.b16 %v9440, %v9434
        %v9495 = vpack.c.b16 %v9441, %v9435
        %v9496 = vpack.c.b16 %v9442, %v9436
        %v9497 = vpack.c.b16 %v9449, %v9443
        %v9498 = vpack.c.b16 %v9450, %v9444
        %v9499 = vpack.c.b16 %v9451, %v9445
        %v9500 = vpack.c.b16 %v9452, %v9446
        %v9501 = vpack.c.b16 %v9453, %v9447
        %v9502 = vpack.c.b16 %v9454, %v9448
        %9551 = vmatprep.subr.bf16.mxu0 %v9456
        %9552 = vmatpush1.bf16.msra.mxu0 %v9455
        %9553 = vmatprep.subr.bf16.mxu0 %v9462
        %9554 = vmatpush1.bf16.msra.mxu0 %v9461
        %9555 = vmatprep.subr.bf16.mxu0 %v9468
        %9556 = vmatpush1.bf16.msra.mxu0 %v9467
        %9557 = vmatprep.subr.bf16.mxu0 %v9474
        %9558 = vmatpush1.bf16.msra.mxu0 %v9473
        %9559 = vmatprep.subr.bf16.mxu0 %v9480
        %9560 = vmatpush1.bf16.msra.mxu0 %v9479
        %9561 = vmatprep.subr.bf16.mxu0 %v9486
        %9562 = vmatpush1.bf16.msra.mxu0 %v9485
        %9563 = vmatprep.subr.bf16.mxu0 %v9492
        %9564 = vmatpush1.bf16.msra.mxu0 %v9491
        %9565 = vmatprep.subr.bf16.mxu0 %v9498
        %9566 = vmatpush1.bf16.msra.mxu0 %v9497
        %9567 = vmatprep.subr.bf16.mxu0 0
        %9568 = vmatpush1.bf16.msra.mxu0 0
        %9569 = vmatprep.subr.bf16.mxu0 0
        %9570 = vmatpush1.bf16.msra.mxu0 0
        %9571 = vmatprep.subr.bf16.mxu0 0
        %9572 = vmatpush1.bf16.msra.mxu0 0
        %9573 = vmatprep.subr.bf16.mxu0 0
        %9574 = vmatpush1.bf16.msra.mxu0 0
        %9575 = vmatprep.subr.bf16.mxu0 0
        %9576 = vmatpush1.bf16.msra.mxu0 0
        %9577 = vmatprep.subr.bf16.mxu0 0
        %9578 = vmatpush1.bf16.msra.mxu0 0
        %9579 = vmatprep.subr.bf16.mxu0 0
        %9580 = vmatpush1.bf16.msra.mxu0 0
        %9581 = vmatprep.subr.bf16.mxu0 0
        %9582 = vmatpush1.bf16.msra.mxu0 0
        %9583 = vmatprep.mubr.bf16.mxu0 0
        %9584 = vmatmul.mubr.bf16.gmra.mrb[0].mxu0 %v9309
        %v9585 = vpop.f32.mrb[0].mxu0
        %v9586 = vadd.f32 0.0, %v9585
        %v9587 = vpop.f32.mrb[0].mxu0
        %v9588 = vadd.f32 0.0, %v9587
        %v9589 = vpop.f32.mrb[0].mxu0
        %v9590 = vpop.f32.mrb[0].mxu0
        %9591 = vdwg.mxu0
        %9592 = vmatprep.subr.bf16.mxu0 %v9458
        %9593 = vmatpush1.bf16.msra.mxu0 %v9457
        %9594 = vmatprep.subr.bf16.mxu0 %v9464
        %9595 = vmatpush1.bf16.msra.mxu0 %v9463
        %9596 = vmatprep.subr.bf16.mxu0 %v9470
        %9597 = vmatpush1.bf16.msra.mxu0 %v9469
        %9598 = vmatprep.subr.bf16.mxu0 %v9476
        %9599 = vmatpush1.bf16.msra.mxu0 %v9475
        %9600 = vmatprep.subr.bf16.mxu0 %v9482
        %9601 = vmatpush1.bf16.msra.mxu0 %v9481
        %9602 = vmatprep.subr.bf16.mxu0 %v9488
        %9603 = vmatpush1.bf16.msra.mxu0 %v9487
        %9604 = vmatprep.subr.bf16.mxu0 %v9494
        %9605 = vmatpush1.bf16.msra.mxu0 %v9493
        %9606 = vmatprep.subr.bf16.mxu0 %v9500
        %9607 = vmatpush1.bf16.msra.mxu0 %v9499
        %9608 = vmatprep.subr.bf16.mxu0 0
        %9609 = vmatpush1.bf16.msra.mxu0 0
        %9610 = vmatprep.subr.bf16.mxu0 0
        %9611 = vmatpush1.bf16.msra.mxu0 0
        %9612 = vmatprep.subr.bf16.mxu0 0
        %9613 = vmatpush1.bf16.msra.mxu0 0
        %9614 = vmatprep.subr.bf16.mxu0 0
        %9615 = vmatpush1.bf16.msra.mxu0 0
        %9616 = vmatprep.subr.bf16.mxu0 0
        %9617 = vmatpush1.bf16.msra.mxu0 0
        %9618 = vmatprep.subr.bf16.mxu0 0
        %9619 = vmatpush1.bf16.msra.mxu0 0
        %9620 = vmatprep.subr.bf16.mxu0 0
        %9621 = vmatpush1.bf16.msra.mxu0 0
        %9622 = vmatprep.subr.bf16.mxu0 0
        %9623 = vmatpush1.bf16.msra.mxu0 0
        %9624 = vmatprep.mubr.bf16.mxu0 0
        %9625 = vmatmul.mubr.bf16.gmra.mrb[0].mxu0 %v9309
        %v9626 = vpop.f32.mrb[0].mxu0
        %v9627 = vadd.f32 0.0, %v9626
        %v9628 = vpop.f32.mrb[0].mxu0
        %v9629 = vadd.f32 0.0, %v9628
        %v9630 = vpop.f32.mrb[0].mxu0
        %v9631 = vpop.f32.mrb[0].mxu0
        %9632 = vdwg.mxu0
        %9633 = vmatprep.subr.bf16.mxu0 %v9460
        %9634 = vmatpush1.bf16.msra.mxu0 %v9459
        %9635 = vmatprep.subr.bf16.mxu0 %v9466
        %9636 = vmatpush1.bf16.msra.mxu0 %v9465
        %9637 = vmatprep.subr.bf16.mxu0 %v9472
        %9638 = vmatpush1.bf16.msra.mxu0 %v9471
        %9639 = vmatprep.subr.bf16.mxu0 %v9478
        %9640 = vmatpush1.bf16.msra.mxu0 %v9477
        %9641 = vmatprep.subr.bf16.mxu0 %v9484
        %9642 = vmatpush1.bf16.msra.mxu0 %v9483
        %9643 = vmatprep.subr.bf16.mxu0 %v9490
        %9644 = vmatpush1.bf16.msra.mxu0 %v9489
        %9645 = vmatprep.subr.bf16.mxu0 %v9496
        %9646 = vmatpush1.bf16.msra.mxu0 %v9495
        %9647 = vmatprep.subr.bf16.mxu0 %v9502
        %9648 = vmatpush1.bf16.msra.mxu0 %v9501
        %9649 = vmatprep.subr.bf16.mxu0 0
        %9650 = vmatpush1.bf16.msra.mxu0 0
        %9651 = vmatprep.subr.bf16.mxu0 0
        %9652 = vmatpush1.bf16.msra.mxu0 0
        %9653 = vmatprep.subr.bf16.mxu0 0
        %9654 = vmatpush1.bf16.msra.mxu0 0
        %9655 = vmatprep.subr.bf16.mxu0 0
        %9656 = vmatpush1.bf16.msra.mxu0 0
        %9657 = vmatprep.subr.bf16.mxu0 0
        %9658 = vmatpush1.bf16.msra.mxu0 0
        %9659 = vmatprep.subr.bf16.mxu0 0
        %9660 = vmatpush1.bf16.msra.mxu0 0
        %9661 = vmatprep.subr.bf16.mxu0 0
        %9662 = vmatpush1.bf16.msra.mxu0 0
        %9663 = vmatprep.subr.bf16.mxu0 0
        %9664 = vmatpush1.bf16.msra.mxu0 0
        %9665 = vmatprep.mubr.bf16.mxu0 0
        %9666 = vmatmul.mubr.bf16.gmra.mrb[0].mxu0 %v9309
        %v9667 = vpop.f32.mrb[0].mxu0
        %v9668 = vadd.f32 0.0, %v9667
        %v9669 = vpop.f32.mrb[0].mxu0
        %v9670 = vadd.f32 0.0, %v9669
        %v9671 = vpop.f32.mrb[0].mxu0
        %v9672 = vpop.f32.mrb[0].mxu0
        %9673 = vdwg.mxu0
        %v9674 = vadd.f32 %v9250, %v9586
        %v9675 = vadd.f32 %v9251, %v9588
        %v9676 = vadd.f32 %v9252, %v9627
        %v9677 = vadd.f32 %v9253, %v9629
        %v9678 = vadd.f32 %v9254, %v9668
        %v9679 = vadd.f32 %v9255, %v9670
        %s9680 = scalar_lea.vmem %s5, 8064
        %v9681 = vld [vmem:[%s9680] sm:$0xff]
        %v9682 = vld [vmem:[%s9680 + $0x8] sm:$0xff]
        %v9683 = vld [vmem:[%s9680 + $0x10] sm:$0xff]
        %v9684 = vld [vmem:[%s9680 + $0x18] sm:$0xff]
        %v9685 = vld [vmem:[%s9680 + $0x20] sm:$0xff]
        %v9686 = vld [vmem:[%s9680 + $0x28] sm:$0xff]
        %v9687 = vld [vmem:[%s9680 + $0x30] sm:$0xff]
        %v9688 = vld [vmem:[%s9680 + $0x38] sm:$0xff]
        %v9689 = vld [vmem:[%s9680 + $0x40] sm:$0xff]
        %v9690 = vld [vmem:[%s9680 + $0x48] sm:$0xff]
        %v9691 = vld [vmem:[%s9680 + $0x50] sm:$0xff]
        %v9692 = vld [vmem:[%s9680 + $0x58] sm:$0xff]
        %v9693 = vld [vmem:[%s9680 + $0x60] sm:$0xff]
        %v9694 = vld [vmem:[%s9680 + $0x68] sm:$0xff]
        %v9695 = vld [vmem:[%s9680 + $0x70] sm:$0xff]
        %v9696 = vld [vmem:[%s9680 + $0x78] sm:$0xff]
        %v9697 = vld [vmem:[%s9680 + $0x80] sm:$0xff]
        %v9698 = vld [vmem:[%s9680 + $0x88] sm:$0xff]
        %v9699 = vld [vmem:[%s9680 + $0x90] sm:$0xff]
        %v9700 = vld [vmem:[%s9680 + $0x98] sm:$0xff]
        %v9701 = vld [vmem:[%s9680 + $0xa0] sm:$0xff]
        %v9702 = vld [vmem:[%s9680 + $0xa8] sm:$0xff]
        %v9703 = vld [vmem:[%s9680 + $0xb0] sm:$0xff]
        %v9704 = vld [vmem:[%s9680 + $0xb8] sm:$0xff]
        %v9705 = vld [vmem:[%s9680 + $0xc0] sm:$0xff]
        %v9706 = vld [vmem:[%s9680 + $0xc8] sm:$0xff]
        %v9707 = vld [vmem:[%s9680 + $0xd0] sm:$0xff]
        %v9708 = vld [vmem:[%s9680 + $0xd8] sm:$0xff]
        %v9709 = vld [vmem:[%s9680 + $0xe0] sm:$0xff]
        %v9710 = vld [vmem:[%s9680 + $0xe8] sm:$0xff]
        %v9711 = vld [vmem:[%s9680 + $0xf0] sm:$0xff]
        %v9712 = vld [vmem:[%s9680 + $0xf8] sm:$0xff]
        %v9713 = vld [vmem:[%s9680 + $0x100] sm:$0xff]
        %v9714 = vld [vmem:[%s9680 + $0x108] sm:$0xff]
        %v9715 = vld [vmem:[%s9680 + $0x110] sm:$0xff]
        %v9716 = vld [vmem:[%s9680 + $0x118] sm:$0xff]
        %v9717 = vld [vmem:[%s9680 + $0x120] sm:$0xff]
        %v9718 = vld [vmem:[%s9680 + $0x128] sm:$0xff]
        %v9719 = vld [vmem:[%s9680 + $0x130] sm:$0xff]
        %v9720 = vld [vmem:[%s9680 + $0x138] sm:$0xff]
        %v9721 = vld [vmem:[%s9680 + $0x140] sm:$0xff]
        %v9722 = vld [vmem:[%s9680 + $0x148] sm:$0xff]
        %v9723 = vld [vmem:[%s9680 + $0x150] sm:$0xff]
        %v9724 = vld [vmem:[%s9680 + $0x158] sm:$0xff]
        %v9725 = vld [vmem:[%s9680 + $0x160] sm:$0xff]
        %v9726 = vld [vmem:[%s9680 + $0x168] sm:$0xff]
        %v9727 = vld [vmem:[%s9680 + $0x170] sm:$0xff]
        %v9728 = vld [vmem:[%s9680 + $0x178] sm:$0xff]
        %v9730 = vshrl.u32 %v9308, 16
        %v9732 = vrot.slane %v9730, 2
        %v9782 = vunpack.c.l.b16 %v9681
        %v9783 = vunpack.c.h.b16 %v9681
        %v9784 = vunpack.c.l.b16 %v9682
        %v9785 = vunpack.c.h.b16 %v9682
        %v9786 = vunpack.c.l.b16 %v9683
        %v9787 = vunpack.c.h.b16 %v9683
        %v9788 = vunpack.c.l.b16 %v9684
        %v9789 = vunpack.c.h.b16 %v9684
        %v9790 = vunpack.c.l.b16 %v9685
        %v9791 = vunpack.c.h.b16 %v9685
        %v9792 = vunpack.c.l.b16 %v9686
        %v9793 = vunpack.c.h.b16 %v9686
        %v9794 = vunpack.c.l.b16 %v9687
        %v9795 = vunpack.c.h.b16 %v9687
        %v9796 = vunpack.c.l.b16 %v9688
        %v9797 = vunpack.c.h.b16 %v9688
        %v9798 = vunpack.c.l.b16 %v9689
        %v9799 = vunpack.c.h.b16 %v9689
        %v9800 = vunpack.c.l.b16 %v9690
        %v9801 = vunpack.c.h.b16 %v9690
        %v9802 = vunpack.c.l.b16 %v9691
        %v9803 = vunpack.c.h.b16 %v9691
        %v9804 = vunpack.c.l.b16 %v9692
        %v9805 = vunpack.c.h.b16 %v9692
        %v9806 = vunpack.c.l.b16 %v9693
        %v9807 = vunpack.c.h.b16 %v9693
        %v9808 = vunpack.c.l.b16 %v9694
        %v9809 = vunpack.c.h.b16 %v9694
        %v9810 = vunpack.c.l.b16 %v9695
        %v9811 = vunpack.c.h.b16 %v9695
        %v9812 = vunpack.c.l.b16 %v9696
        %v9813 = vunpack.c.h.b16 %v9696
        %v9814 = vunpack.c.l.b16 %v9697
        %v9815 = vunpack.c.h.b16 %v9697
        %v9816 = vunpack.c.l.b16 %v9698
        %v9817 = vunpack.c.h.b16 %v9698
        %v9818 = vunpack.c.l.b16 %v9699
        %v9819 = vunpack.c.h.b16 %v9699
        %v9820 = vunpack.c.l.b16 %v9700
        %v9821 = vunpack.c.h.b16 %v9700
        %v9822 = vunpack.c.l.b16 %v9701
        %v9823 = vunpack.c.h.b16 %v9701
        %v9824 = vunpack.c.l.b16 %v9702
        %v9825 = vunpack.c.h.b16 %v9702
        %v9826 = vunpack.c.l.b16 %v9703
        %v9827 = vunpack.c.h.b16 %v9703
        %v9828 = vunpack.c.l.b16 %v9704
        %v9829 = vunpack.c.h.b16 %v9704
        %v9830 = vunpack.c.l.b16 %v9705
        %v9831 = vunpack.c.h.b16 %v9705
        %v9832 = vunpack.c.l.b16 %v9706
        %v9833 = vunpack.c.h.b16 %v9706
        %v9834 = vunpack.c.l.b16 %v9707
        %v9835 = vunpack.c.h.b16 %v9707
        %v9836 = vunpack.c.l.b16 %v9708
        %v9837 = vunpack.c.h.b16 %v9708
        %v9838 = vunpack.c.l.b16 %v9709
        %v9839 = vunpack.c.h.b16 %v9709
        %v9840 = vunpack.c.l.b16 %v9710
        %v9841 = vunpack.c.h.b16 %v9710
        %v9842 = vunpack.c.l.b16 %v9711
        %v9843 = vunpack.c.h.b16 %v9711
        %v9844 = vunpack.c.l.b16 %v9712
        %v9845 = vunpack.c.h.b16 %v9712
        %v9846 = vunpack.c.l.b16 %v9713
        %v9847 = vunpack.c.h.b16 %v9713
        %v9848 = vunpack.c.l.b16 %v9714
        %v9849 = vunpack.c.h.b16 %v9714
        %v9850 = vunpack.c.l.b16 %v9715
        %v9851 = vunpack.c.h.b16 %v9715
        %v9852 = vunpack.c.l.b16 %v9716
        %v9853 = vunpack.c.h.b16 %v9716
        %v9854 = vunpack.c.l.b16 %v9717
        %v9855 = vunpack.c.h.b16 %v9717
        %v9856 = vunpack.c.l.b16 %v9718
        %v9857 = vunpack.c.h.b16 %v9718
        %v9858 = vunpack.c.l.b16 %v9719
        %v9859 = vunpack.c.h.b16 %v9719
        %v9860 = vunpack.c.l.b16 %v9720
        %v9861 = vunpack.c.h.b16 %v9720
        %v9862 = vunpack.c.l.b16 %v9721
        %v9863 = vunpack.c.h.b16 %v9721
        %v9864 = vunpack.c.l.b16 %v9722
        %v9865 = vunpack.c.h.b16 %v9722
        %v9866 = vunpack.c.l.b16 %v9723
        %v9867 = vunpack.c.h.b16 %v9723
        %v9868 = vunpack.c.l.b16 %v9724
        %v9869 = vunpack.c.h.b16 %v9724
        %v9870 = vunpack.c.l.b16 %v9725
        %v9871 = vunpack.c.h.b16 %v9725
        %v9872 = vunpack.c.l.b16 %v9726
        %v9873 = vunpack.c.h.b16 %v9726
        %v9874 = vunpack.c.l.b16 %v9727
        %v9875 = vunpack.c.h.b16 %v9727
        %v9876 = vunpack.c.l.b16 %v9728
        %v9877 = vunpack.c.h.b16 %v9728
        %v9878 = vpack.c.b16 %v9788, %v9782
        %v9879 = vpack.c.b16 %v9789, %v9783
        %v9880 = vpack.c.b16 %v9790, %v9784
        %v9881 = vpack.c.b16 %v9791, %v9785
        %v9882 = vpack.c.b16 %v9792, %v9786
        %v9883 = vpack.c.b16 %v9793, %v9787
        %v9884 = vpack.c.b16 %v9800, %v9794
        %v9885 = vpack.c.b16 %v9801, %v9795
        %v9886 = vpack.c.b16 %v9802, %v9796
        %v9887 = vpack.c.b16 %v9803, %v9797
        %v9888 = vpack.c.b16 %v9804, %v9798
        %v9889 = vpack.c.b16 %v9805, %v9799
        %v9890 = vpack.c.b16 %v9812, %v9806
        %v9891 = vpack.c.b16 %v9813, %v9807
        %v9892 = vpack.c.b16 %v9814, %v9808
        %v9893 = vpack.c.b16 %v9815, %v9809
        %v9894 = vpack.c.b16 %v9816, %v9810
        %v9895 = vpack.c.b16 %v9817, %v9811
        %v9896 = vpack.c.b16 %v9824, %v9818
        %v9897 = vpack.c.b16 %v9825, %v9819
        %v9898 = vpack.c.b16 %v9826, %v9820
        %v9899 = vpack.c.b16 %v9827, %v9821
        %v9900 = vpack.c.b16 %v9828, %v9822
        %v9901 = vpack.c.b16 %v9829, %v9823
        %v9902 = vpack.c.b16 %v9836, %v9830
        %v9903 = vpack.c.b16 %v9837, %v9831
        %v9904 = vpack.c.b16 %v9838, %v9832
        %v9905 = vpack.c.b16 %v9839, %v9833
        %v9906 = vpack.c.b16 %v9840, %v9834
        %v9907 = vpack.c.b16 %v9841, %v9835
        %v9908 = vpack.c.b16 %v9848, %v9842
        %v9909 = vpack.c.b16 %v9849, %v9843
        %v9910 = vpack.c.b16 %v9850, %v9844
        %v9911 = vpack.c.b16 %v9851, %v9845
        %v9912 = vpack.c.b16 %v9852, %v9846
        %v9913 = vpack.c.b16 %v9853, %v9847
        %v9914 = vpack.c.b16 %v9860, %v9854
        %v9915 = vpack.c.b16 %v9861, %v9855
        %v9916 = vpack.c.b16 %v9862, %v9856
        %v9917 = vpack.c.b16 %v9863, %v9857
        %v9918 = vpack.c.b16 %v9864, %v9858
        %v9919 = vpack.c.b16 %v9865, %v9859
        %v9920 = vpack.c.b16 %v9872, %v9866
        %v9921 = vpack.c.b16 %v9873, %v9867
        %v9922 = vpack.c.b16 %v9874, %v9868
        %v9923 = vpack.c.b16 %v9875, %v9869
        %v9924 = vpack.c.b16 %v9876, %v9870
        %v9925 = vpack.c.b16 %v9877, %v9871
        %9974 = vmatprep.subr.bf16.mxu0 %v9879
        %9975 = vmatpush1.bf16.msra.mxu0 %v9878
        %9976 = vmatprep.subr.bf16.mxu0 %v9885
        %9977 = vmatpush1.bf16.msra.mxu0 %v9884
        %9978 = vmatprep.subr.bf16.mxu0 %v9891
        %9979 = vmatpush1.bf16.msra.mxu0 %v9890
        %9980 = vmatprep.subr.bf16.mxu0 %v9897
        %9981 = vmatpush1.bf16.msra.mxu0 %v9896
        %9982 = vmatprep.subr.bf16.mxu0 %v9903
        %9983 = vmatpush1.bf16.msra.mxu0 %v9902
        %9984 = vmatprep.subr.bf16.mxu0 %v9909
        %9985 = vmatpush1.bf16.msra.mxu0 %v9908
        %9986 = vmatprep.subr.bf16.mxu0 %v9915
        %9987 = vmatpush1.bf16.msra.mxu0 %v9914
        %9988 = vmatprep.subr.bf16.mxu0 %v9921
        %9989 = vmatpush1.bf16.msra.mxu0 %v9920
        %9990 = vmatprep.subr.bf16.mxu0 0
        %9991 = vmatpush1.bf16.msra.mxu0 0
        %9992 = vmatprep.subr.bf16.mxu0 0
        %9993 = vmatpush1.bf16.msra.mxu0 0
        %9994 = vmatprep.subr.bf16.mxu0 0
        %9995 = vmatpush1.bf16.msra.mxu0 0
        %9996 = vmatprep.subr.bf16.mxu0 0
        %9997 = vmatpush1.bf16.msra.mxu0 0
        %9998 = vmatprep.subr.bf16.mxu0 0
        %9999 = vmatpush1.bf16.msra.mxu0 0
        %10000 = vmatprep.subr.bf16.mxu0 0
        %10001 = vmatpush1.bf16.msra.mxu0 0
        %10002 = vmatprep.subr.bf16.mxu0 0
        %10003 = vmatpush1.bf16.msra.mxu0 0
        %10004 = vmatprep.subr.bf16.mxu0 0
        %10005 = vmatpush1.bf16.msra.mxu0 0
        %10006 = vmatprep.mubr.bf16.mxu0 0
        %10007 = vmatmul.mubr.bf16.gmra.mrb[0].mxu0 %v9732
        %v10008 = vpop.f32.mrb[0].mxu0
        %v10009 = vadd.f32 0.0, %v10008
        %v10010 = vpop.f32.mrb[0].mxu0
        %v10011 = vadd.f32 0.0, %v10010
        %v10012 = vpop.f32.mrb[0].mxu0
        %v10013 = vpop.f32.mrb[0].mxu0
        %10014 = vdwg.mxu0
        %10015 = vmatprep.subr.bf16.mxu0 %v9881
        %10016 = vmatpush1.bf16.msra.mxu0 %v9880
        %10017 = vmatprep.subr.bf16.mxu0 %v9887
        %10018 = vmatpush1.bf16.msra.mxu0 %v9886
        %10019 = vmatprep.subr.bf16.mxu0 %v9893
        %10020 = vmatpush1.bf16.msra.mxu0 %v9892
        %10021 = vmatprep.subr.bf16.mxu0 %v9899
        %10022 = vmatpush1.bf16.msra.mxu0 %v9898
        %10023 = vmatprep.subr.bf16.mxu0 %v9905
        %10024 = vmatpush1.bf16.msra.mxu0 %v9904
        %10025 = vmatprep.subr.bf16.mxu0 %v9911
        %10026 = vmatpush1.bf16.msra.mxu0 %v9910
        %10027 = vmatprep.subr.bf16.mxu0 %v9917
        %10028 = vmatpush1.bf16.msra.mxu0 %v9916
        %10029 = vmatprep.subr.bf16.mxu0 %v9923
        %10030 = vmatpush1.bf16.msra.mxu0 %v9922
        %10031 = vmatprep.subr.bf16.mxu0 0
        %10032 = vmatpush1.bf16.msra.mxu0 0
        %10033 = vmatprep.subr.bf16.mxu0 0
        %10034 = vmatpush1.bf16.msra.mxu0 0
        %10035 = vmatprep.subr.bf16.mxu0 0
        %10036 = vmatpush1.bf16.msra.mxu0 0
        %10037 = vmatprep.subr.bf16.mxu0 0
        %10038 = vmatpush1.bf16.msra.mxu0 0
        %10039 = vmatprep.subr.bf16.mxu0 0
        %10040 = vmatpush1.bf16.msra.mxu0 0
        %10041 = vmatprep.subr.bf16.mxu0 0
        %10042 = vmatpush1.bf16.msra.mxu0 0
        %10043 = vmatprep.subr.bf16.mxu0 0
        %10044 = vmatpush1.bf16.msra.mxu0 0
        %10045 = vmatprep.subr.bf16.mxu0 0
        %10046 = vmatpush1.bf16.msra.mxu0 0
        %10047 = vmatprep.mubr.bf16.mxu0 0
        %10048 = vmatmul.mubr.bf16.gmra.mrb[0].mxu0 %v9732
        %v10049 = vpop.f32.mrb[0].mxu0
        %v10050 = vadd.f32 0.0, %v10049
        %v10051 = vpop.f32.mrb[0].mxu0
        %v10052 = vadd.f32 0.0, %v10051
        %v10053 = vpop.f32.mrb[0].mxu0
        %v10054 = vpop.f32.mrb[0].mxu0
        %10055 = vdwg.mxu0
        %10056 = vmatprep.subr.bf16.mxu0 %v9883
        %10057 = vmatpush1.bf16.msra.mxu0 %v9882
        %10058 = vmatprep.subr.bf16.mxu0 %v9889
        %10059 = vmatpush1.bf16.msra.mxu0 %v9888
        %10060 = vmatprep.subr.bf16.mxu0 %v9895
        %10061 = vmatpush1.bf16.msra.mxu0 %v9894
        %10062 = vmatprep.subr.bf16.mxu0 %v9901
        %10063 = vmatpush1.bf16.msra.mxu0 %v9900
        %10064 = vmatprep.subr.bf16.mxu0 %v9907
        %10065 = vmatpush1.bf16.msra.mxu0 %v9906
        %10066 = vmatprep.subr.bf16.mxu0 %v9913
        %10067 = vmatpush1.bf16.msra.mxu0 %v9912
        %10068 = vmatprep.subr.bf16.mxu0 %v9919
        %10069 = vmatpush1.bf16.msra.mxu0 %v9918
        %10070 = vmatprep.subr.bf16.mxu0 %v9925
        %10071 = vmatpush1.bf16.msra.mxu0 %v9924
        %10072 = vmatprep.subr.bf16.mxu0 0
        %10073 = vmatpush1.bf16.msra.mxu0 0
        %10074 = vmatprep.subr.bf16.mxu0 0
        %10075 = vmatpush1.bf16.msra.mxu0 0
        %10076 = vmatprep.subr.bf16.mxu0 0
        %10077 = vmatpush1.bf16.msra.mxu0 0
        %10078 = vmatprep.subr.bf16.mxu0 0
        %10079 = vmatpush1.bf16.msra.mxu0 0
        %10080 = vmatprep.subr.bf16.mxu0 0
        %10081 = vmatpush1.bf16.msra.mxu0 0
        %10082 = vmatprep.subr.bf16.mxu0 0
        %10083 = vmatpush1.bf16.msra.mxu0 0
        %10084 = vmatprep.subr.bf16.mxu0 0
        %10085 = vmatpush1.bf16.msra.mxu0 0
        %10086 = vmatprep.subr.bf16.mxu0 0
        %10087 = vmatpush1.bf16.msra.mxu0 0
        %10088 = vmatprep.mubr.bf16.mxu0 0
        %10089 = vmatmul.mubr.bf16.gmra.mrb[0].mxu0 %v9732
        %v10090 = vpop.f32.mrb[0].mxu0
        %v10091 = vadd.f32 0.0, %v10090
        %v10092 = vpop.f32.mrb[0].mxu0
        %v10093 = vadd.f32 0.0, %v10092
        %v10094 = vpop.f32.mrb[0].mxu0
        %v10095 = vpop.f32.mrb[0].mxu0
        %10096 = vdwg.mxu0
        %v10097 = vadd.f32 %v9674, %v10009
        %v10098 = vadd.f32 %v9675, %v10011
        %v10099 = vadd.f32 %v9676, %v10050
        %v10100 = vadd.f32 %v9677, %v10052
        %v10101 = vadd.f32 %v9678, %v10091
        %v10102 = vadd.f32 %v9679, %v10093
        %s10103 = scalar_lea.vmem %s5, 8448
        %v10104 = vld [vmem:[%s10103] sm:$0xff]
        %v10105 = vld [vmem:[%s10103 + $0x8] sm:$0xff]
        %v10106 = vld [vmem:[%s10103 + $0x10] sm:$0xff]
        %v10107 = vld [vmem:[%s10103 + $0x18] sm:$0xff]
        %v10108 = vld [vmem:[%s10103 + $0x20] sm:$0xff]
        %v10109 = vld [vmem:[%s10103 + $0x28] sm:$0xff]
        %v10110 = vld [vmem:[%s10103 + $0x30] sm:$0xff]
        %v10111 = vld [vmem:[%s10103 + $0x38] sm:$0xff]
        %v10112 = vld [vmem:[%s10103 + $0x40] sm:$0xff]
        %v10113 = vld [vmem:[%s10103 + $0x48] sm:$0xff]
        %v10114 = vld [vmem:[%s10103 + $0x50] sm:$0xff]
        %v10115 = vld [vmem:[%s10103 + $0x58] sm:$0xff]
        %v10116 = vld [vmem:[%s10103 + $0x60] sm:$0xff]
        %v10117 = vld [vmem:[%s10103 + $0x68] sm:$0xff]
        %v10118 = vld [vmem:[%s10103 + $0x70] sm:$0xff]
        %v10119 = vld [vmem:[%s10103 + $0x78] sm:$0xff]
        %v10120 = vld [vmem:[%s10103 + $0x80] sm:$0xff]
        %v10121 = vld [vmem:[%s10103 + $0x88] sm:$0xff]
        %v10122 = vld [vmem:[%s10103 + $0x90] sm:$0xff]
        %v10123 = vld [vmem:[%s10103 + $0x98] sm:$0xff]
        %v10124 = vld [vmem:[%s10103 + $0xa0] sm:$0xff]
        %v10125 = vld [vmem:[%s10103 + $0xa8] sm:$0xff]
        %v10126 = vld [vmem:[%s10103 + $0xb0] sm:$0xff]
        %v10127 = vld [vmem:[%s10103 + $0xb8] sm:$0xff]
        %v10128 = vld [vmem:[%s10103 + $0xc0] sm:$0xff]
        %v10129 = vld [vmem:[%s10103 + $0xc8] sm:$0xff]
        %v10130 = vld [vmem:[%s10103 + $0xd0] sm:$0xff]
        %v10131 = vld [vmem:[%s10103 + $0xd8] sm:$0xff]
        %v10132 = vld [vmem:[%s10103 + $0xe0] sm:$0xff]
        %v10133 = vld [vmem:[%s10103 + $0xe8] sm:$0xff]
        %v10134 = vld [vmem:[%s10103 + $0xf0] sm:$0xff]
        %v10135 = vld [vmem:[%s10103 + $0xf8] sm:$0xff]
        %v10136 = vld [vmem:[%s10103 + $0x100] sm:$0xff]
        %v10137 = vld [vmem:[%s10103 + $0x108] sm:$0xff]
        %v10138 = vld [vmem:[%s10103 + $0x110] sm:$0xff]
        %v10139 = vld [vmem:[%s10103 + $0x118] sm:$0xff]
        %v10140 = vld [vmem:[%s10103 + $0x120] sm:$0xff]
        %v10141 = vld [vmem:[%s10103 + $0x128] sm:$0xff]
        %v10142 = vld [vmem:[%s10103 + $0x130] sm:$0xff]
        %v10143 = vld [vmem:[%s10103 + $0x138] sm:$0xff]
        %v10144 = vld [vmem:[%s10103 + $0x140] sm:$0xff]
        %v10145 = vld [vmem:[%s10103 + $0x148] sm:$0xff]
        %v10146 = vld [vmem:[%s10103 + $0x150] sm:$0xff]
        %v10147 = vld [vmem:[%s10103 + $0x158] sm:$0xff]
        %v10148 = vld [vmem:[%s10103 + $0x160] sm:$0xff]
        %v10149 = vld [vmem:[%s10103 + $0x168] sm:$0xff]
        %v10150 = vld [vmem:[%s10103 + $0x170] sm:$0xff]
        %v10151 = vld [vmem:[%s10103 + $0x178] sm:$0xff]
        %v10152 = vld [vmem:[#allocation2 + $0x8] sm:$0x8]
        %v10154 = vunpack.c.l.b16 %v10152
        %v10155 = vpack.c.b16 %v10154, %v10154
        %v10156 = vrot.slane %v10155, 3
        %v10206 = vunpack.c.l.b16 %v10104
        %v10207 = vunpack.c.h.b16 %v10104
        %v10208 = vunpack.c.l.b16 %v10105
        %v10209 = vunpack.c.h.b16 %v10105
        %v10210 = vunpack.c.l.b16 %v10106
        %v10211 = vunpack.c.h.b16 %v10106
        %v10212 = vunpack.c.l.b16 %v10107
        %v10213 = vunpack.c.h.b16 %v10107
        %v10214 = vunpack.c.l.b16 %v10108
        %v10215 = vunpack.c.h.b16 %v10108
        %v10216 = vunpack.c.l.b16 %v10109
        %v10217 = vunpack.c.h.b16 %v10109
        %v10218 = vunpack.c.l.b16 %v10110
        %v10219 = vunpack.c.h.b16 %v10110
        %v10220 = vunpack.c.l.b16 %v10111
        %v10221 = vunpack.c.h.b16 %v10111
        %v10222 = vunpack.c.l.b16 %v10112
        %v10223 = vunpack.c.h.b16 %v10112
        %v10224 = vunpack.c.l.b16 %v10113
        %v10225 = vunpack.c.h.b16 %v10113
        %v10226 = vunpack.c.l.b16 %v10114
        %v10227 = vunpack.c.h.b16 %v10114
        %v10228 = vunpack.c.l.b16 %v10115
        %v10229 = vunpack.c.h.b16 %v10115
        %v10230 = vunpack.c.l.b16 %v10116
        %v10231 = vunpack.c.h.b16 %v10116
        %v10232 = vunpack.c.l.b16 %v10117
        %v10233 = vunpack.c.h.b16 %v10117
        %v10234 = vunpack.c.l.b16 %v10118
        %v10235 = vunpack.c.h.b16 %v10118
        %v10236 = vunpack.c.l.b16 %v10119
        %v10237 = vunpack.c.h.b16 %v10119
        %v10238 = vunpack.c.l.b16 %v10120
        %v10239 = vunpack.c.h.b16 %v10120
        %v10240 = vunpack.c.l.b16 %v10121
        %v10241 = vunpack.c.h.b16 %v10121
        %v10242 = vunpack.c.l.b16 %v10122
        %v10243 = vunpack.c.h.b16 %v10122
        %v10244 = vunpack.c.l.b16 %v10123
        %v10245 = vunpack.c.h.b16 %v10123
        %v10246 = vunpack.c.l.b16 %v10124
        %v10247 = vunpack.c.h.b16 %v10124
        %v10248 = vunpack.c.l.b16 %v10125
        %v10249 = vunpack.c.h.b16 %v10125
        %v10250 = vunpack.c.l.b16 %v10126
        %v10251 = vunpack.c.h.b16 %v10126
        %v10252 = vunpack.c.l.b16 %v10127
        %v10253 = vunpack.c.h.b16 %v10127
        %v10254 = vunpack.c.l.b16 %v10128
        %v10255 = vunpack.c.h.b16 %v10128
        %v10256 = vunpack.c.l.b16 %v10129
        %v10257 = vunpack.c.h.b16 %v10129
        %v10258 = vunpack.c.l.b16 %v10130
        %v10259 = vunpack.c.h.b16 %v10130
        %v10260 = vunpack.c.l.b16 %v10131
        %v10261 = vunpack.c.h.b16 %v10131
        %v10262 = vunpack.c.l.b16 %v10132
        %v10263 = vunpack.c.h.b16 %v10132
        %v10264 = vunpack.c.l.b16 %v10133
        %v10265 = vunpack.c.h.b16 %v10133
        %v10266 = vunpack.c.l.b16 %v10134
        %v10267 = vunpack.c.h.b16 %v10134
        %v10268 = vunpack.c.l.b16 %v10135
        %v10269 = vunpack.c.h.b16 %v10135
        %v10270 = vunpack.c.l.b16 %v10136
        %v10271 = vunpack.c.h.b16 %v10136
        %v10272 = vunpack.c.l.b16 %v10137
        %v10273 = vunpack.c.h.b16 %v10137
        %v10274 = vunpack.c.l.b16 %v10138
        %v10275 = vunpack.c.h.b16 %v10138
        %v10276 = vunpack.c.l.b16 %v10139
        %v10277 = vunpack.c.h.b16 %v10139
        %v10278 = vunpack.c.l.b16 %v10140
        %v10279 = vunpack.c.h.b16 %v10140
        %v10280 = vunpack.c.l.b16 %v10141
        %v10281 = vunpack.c.h.b16 %v10141
        %v10282 = vunpack.c.l.b16 %v10142
        %v10283 = vunpack.c.h.b16 %v10142
        %v10284 = vunpack.c.l.b16 %v10143
        %v10285 = vunpack.c.h.b16 %v10143
        %v10286 = vunpack.c.l.b16 %v10144
        %v10287 = vunpack.c.h.b16 %v10144
        %v10288 = vunpack.c.l.b16 %v10145
        %v10289 = vunpack.c.h.b16 %v10145
        %v10290 = vunpack.c.l.b16 %v10146
        %v10291 = vunpack.c.h.b16 %v10146
        %v10292 = vunpack.c.l.b16 %v10147
        %v10293 = vunpack.c.h.b16 %v10147
        %v10294 = vunpack.c.l.b16 %v10148
        %v10295 = vunpack.c.h.b16 %v10148
        %v10296 = vunpack.c.l.b16 %v10149
        %v10297 = vunpack.c.h.b16 %v10149
        %v10298 = vunpack.c.l.b16 %v10150
        %v10299 = vunpack.c.h.b16 %v10150
        %v10300 = vunpack.c.l.b16 %v10151
        %v10301 = vunpack.c.h.b16 %v10151
        %v10302 = vpack.c.b16 %v10212, %v10206
        %v10303 = vpack.c.b16 %v10213, %v10207
        %v10304 = vpack.c.b16 %v10214, %v10208
        %v10305 = vpack.c.b16 %v10215, %v10209
        %v10306 = vpack.c.b16 %v10216, %v10210
        %v10307 = vpack.c.b16 %v10217, %v10211
        %v10308 = vpack.c.b16 %v10224, %v10218
        %v10309 = vpack.c.b16 %v10225, %v10219
        %v10310 = vpack.c.b16 %v10226, %v10220
        %v10311 = vpack.c.b16 %v10227, %v10221
        %v10312 = vpack.c.b16 %v10228, %v10222
        %v10313 = vpack.c.b16 %v10229, %v10223
        %v10314 = vpack.c.b16 %v10236, %v10230
        %v10315 = vpack.c.b16 %v10237, %v10231
        %v10316 = vpack.c.b16 %v10238, %v10232
        %v10317 = vpack.c.b16 %v10239, %v10233
        %v10318 = vpack.c.b16 %v10240, %v10234
        %v10319 = vpack.c.b16 %v10241, %v10235
        %v10320 = vpack.c.b16 %v10248, %v10242
        %v10321 = vpack.c.b16 %v10249, %v10243
        %v10322 = vpack.c.b16 %v10250, %v10244
        %v10323 = vpack.c.b16 %v10251, %v10245
        %v10324 = vpack.c.b16 %v10252, %v10246
        %v10325 = vpack.c.b16 %v10253, %v10247
        %v10326 = vpack.c.b16 %v10260, %v10254
        %v10327 = vpack.c.b16 %v10261, %v10255
        %v10328 = vpack.c.b16 %v10262, %v10256
        %v10329 = vpack.c.b16 %v10263, %v10257
        %v10330 = vpack.c.b16 %v10264, %v10258
        %v10331 = vpack.c.b16 %v10265, %v10259
        %v10332 = vpack.c.b16 %v10272, %v10266
        %v10333 = vpack.c.b16 %v10273, %v10267
        %v10334 = vpack.c.b16 %v10274, %v10268
        %v10335 = vpack.c.b16 %v10275, %v10269
        %v10336 = vpack.c.b16 %v10276, %v10270
        %v10337 = vpack.c.b16 %v10277, %v10271
        %v10338 = vpack.c.b16 %v10284, %v10278
        %v10339 = vpack.c.b16 %v10285, %v10279
        %v10340 = vpack.c.b16 %v10286, %v10280
        %v10341 = vpack.c.b16 %v10287, %v10281
        %v10342 = vpack.c.b16 %v10288, %v10282
        %v10343 = vpack.c.b16 %v10289, %v10283
        %v10344 = vpack.c.b16 %v10296, %v10290
        %v10345 = vpack.c.b16 %v10297, %v10291
        %v10346 = vpack.c.b16 %v10298, %v10292
        %v10347 = vpack.c.b16 %v10299, %v10293
        %v10348 = vpack.c.b16 %v10300, %v10294
        %v10349 = vpack.c.b16 %v10301, %v10295
        %10398 = vmatprep.subr.bf16.mxu0 %v10303
        %10399 = vmatpush1.bf16.msra.mxu0 %v10302
        %10400 = vmatprep.subr.bf16.mxu0 %v10309
        %10401 = vmatpush1.bf16.msra.mxu0 %v10308
        %10402 = vmatprep.subr.bf16.mxu0 %v10315
        %10403 = vmatpush1.bf16.msra.mxu0 %v10314
        %10404 = vmatprep.subr.bf16.mxu0 %v10321
        %10405 = vmatpush1.bf16.msra.mxu0 %v10320
        %10406 = vmatprep.subr.bf16.mxu0 %v10327
        %10407 = vmatpush1.bf16.msra.mxu0 %v10326
        %10408 = vmatprep.subr.bf16.mxu0 %v10333
        %10409 = vmatpush1.bf16.msra.mxu0 %v10332
        %10410 = vmatprep.subr.bf16.mxu0 %v10339
        %10411 = vmatpush1.bf16.msra.mxu0 %v10338
        %10412 = vmatprep.subr.bf16.mxu0 %v10345
        %10413 = vmatpush1.bf16.msra.mxu0 %v10344
        %10414 = vmatprep.subr.bf16.mxu0 0
        %10415 = vmatpush1.bf16.msra.mxu0 0
        %10416 = vmatprep.subr.bf16.mxu0 0
        %10417 = vmatpush1.bf16.msra.mxu0 0
        %10418 = vmatprep.subr.bf16.mxu0 0
        %10419 = vmatpush1.bf16.msra.mxu0 0
        %10420 = vmatprep.subr.bf16.mxu0 0
        %10421 = vmatpush1.bf16.msra.mxu0 0
        %10422 = vmatprep.subr.bf16.mxu0 0
        %10423 = vmatpush1.bf16.msra.mxu0 0
        %10424 = vmatprep.subr.bf16.mxu0 0
        %10425 = vmatpush1.bf16.msra.mxu0 0
        %10426 = vmatprep.subr.bf16.mxu0 0
        %10427 = vmatpush1.bf16.msra.mxu0 0
        %10428 = vmatprep.subr.bf16.mxu0 0
        %10429 = vmatpush1.bf16.msra.mxu0 0
        %10430 = vmatprep.mubr.bf16.mxu0 0
        %10431 = vmatmul.mubr.bf16.gmra.mrb[0].mxu0 %v10156
        %v10432 = vpop.f32.mrb[0].mxu0
        %v10433 = vadd.f32 0.0, %v10432
        %v10434 = vpop.f32.mrb[0].mxu0
        %v10435 = vadd.f32 0.0, %v10434
        %v10436 = vpop.f32.mrb[0].mxu0
        %v10437 = vpop.f32.mrb[0].mxu0
        %10438 = vdwg.mxu0
        %10439 = vmatprep.subr.bf16.mxu0 %v10305
        %10440 = vmatpush1.bf16.msra.mxu0 %v10304
        %10441 = vmatprep.subr.bf16.mxu0 %v10311
        %10442 = vmatpush1.bf16.msra.mxu0 %v10310
        %10443 = vmatprep.subr.bf16.mxu0 %v10317
        %10444 = vmatpush1.bf16.msra.mxu0 %v10316
        %10445 = vmatprep.subr.bf16.mxu0 %v10323
        %10446 = vmatpush1.bf16.msra.mxu0 %v10322
        %10447 = vmatprep.subr.bf16.mxu0 %v10329
        %10448 = vmatpush1.bf16.msra.mxu0 %v10328
        %10449 = vmatprep.subr.bf16.mxu0 %v10335
        %10450 = vmatpush1.bf16.msra.mxu0 %v10334
        %10451 = vmatprep.subr.bf16.mxu0 %v10341
        %10452 = vmatpush1.bf16.msra.mxu0 %v10340
        %10453 = vmatprep.subr.bf16.mxu0 %v10347
        %10454 = vmatpush1.bf16.msra.mxu0 %v10346
        %10455 = vmatprep.subr.bf16.mxu0 0
        %10456 = vmatpush1.bf16.msra.mxu0 0
        %10457 = vmatprep.subr.bf16.mxu0 0
        %10458 = vmatpush1.bf16.msra.mxu0 0
        %10459 = vmatprep.subr.bf16.mxu0 0
        %10460 = vmatpush1.bf16.msra.mxu0 0
        %10461 = vmatprep.subr.bf16.mxu0 0
        %10462 = vmatpush1.bf16.msra.mxu0 0
        %10463 = vmatprep.subr.bf16.mxu0 0
        %10464 = vmatpush1.bf16.msra.mxu0 0
        %10465 = vmatprep.subr.bf16.mxu0 0
        %10466 = vmatpush1.bf16.msra.mxu0 0
        %10467 = vmatprep.subr.bf16.mxu0 0
        %10468 = vmatpush1.bf16.msra.mxu0 0
        %10469 = vmatprep.subr.bf16.mxu0 0
        %10470 = vmatpush1.bf16.msra.mxu0 0
        %10471 = vmatprep.mubr.bf16.mxu0 0
        %10472 = vmatmul.mubr.bf16.gmra.mrb[0].mxu0 %v10156
        %v10473 = vpop.f32.mrb[0].mxu0
        %v10474 = vadd.f32 0.0, %v10473
        %v10475 = vpop.f32.mrb[0].mxu0
        %v10476 = vadd.f32 0.0, %v10475
        %v10477 = vpop.f32.mrb[0].mxu0
        %v10478 = vpop.f32.mrb[0].mxu0
        %10479 = vdwg.mxu0
        %10480 = vmatprep.subr.bf16.mxu0 %v10307
        %10481 = vmatpush1.bf16.msra.mxu0 %v10306
        %10482 = vmatprep.subr.bf16.mxu0 %v10313
        %10483 = vmatpush1.bf16.msra.mxu0 %v10312
        %10484 = vmatprep.subr.bf16.mxu0 %v10319
        %10485 = vmatpush1.bf16.msra.mxu0 %v10318
        %10486 = vmatprep.subr.bf16.mxu0 %v10325
        %10487 = vmatpush1.bf16.msra.mxu0 %v10324
        %10488 = vmatprep.subr.bf16.mxu0 %v10331
        %10489 = vmatpush1.bf16.msra.mxu0 %v10330
        %10490 = vmatprep.subr.bf16.mxu0 %v10337
        %10491 = vmatpush1.bf16.msra.mxu0 %v10336
        %10492 = vmatprep.subr.bf16.mxu0 %v10343
        %10493 = vmatpush1.bf16.msra.mxu0 %v10342
        %10494 = vmatprep.subr.bf16.mxu0 %v10349
        %10495 = vmatpush1.bf16.msra.mxu0 %v10348
        %10496 = vmatprep.subr.bf16.mxu0 0
        %10497 = vmatpush1.bf16.msra.mxu0 0
        %10498 = vmatprep.subr.bf16.mxu0 0
        %10499 = vmatpush1.bf16.msra.mxu0 0
        %10500 = vmatprep.subr.bf16.mxu0 0
        %10501 = vmatpush1.bf16.msra.mxu0 0
        %10502 = vmatprep.subr.bf16.mxu0 0
        %10503 = vmatpush1.bf16.msra.mxu0 0
        %10504 = vmatprep.subr.bf16.mxu0 0
        %10505 = vmatpush1.bf16.msra.mxu0 0
        %10506 = vmatprep.subr.bf16.mxu0 0
        %10507 = vmatpush1.bf16.msra.mxu0 0
        %10508 = vmatprep.subr.bf16.mxu0 0
        %10509 = vmatpush1.bf16.msra.mxu0 0
        %10510 = vmatprep.subr.bf16.mxu0 0
        %10511 = vmatpush1.bf16.msra.mxu0 0
        %10512 = vmatprep.mubr.bf16.mxu0 0
        %10513 = vmatmul.mubr.bf16.gmra.mrb[0].mxu0 %v10156
        %v10514 = vpop.f32.mrb[0].mxu0
        %v10515 = vadd.f32 0.0, %v10514
        %v10516 = vpop.f32.mrb[0].mxu0
        %v10517 = vadd.f32 0.0, %v10516
        %v10518 = vpop.f32.mrb[0].mxu0
        %v10519 = vpop.f32.mrb[0].mxu0
        %10520 = vdwg.mxu0
        %v10521 = vadd.f32 %v10097, %v10433
        %v10522 = vadd.f32 %v10098, %v10435
        %v10523 = vadd.f32 %v10099, %v10474
        %v10524 = vadd.f32 %v10100, %v10476
        %v10525 = vadd.f32 %v10101, %v10515
        %v10526 = vadd.f32 %v10102, %v10517
        %s10527 = scalar_lea.vmem %s5, 8832
        %v10528 = vld [vmem:[%s10527] sm:$0xff]
        %v10529 = vld [vmem:[%s10527 + $0x8] sm:$0xff]
        %v10530 = vld [vmem:[%s10527 + $0x10] sm:$0xff]
        %v10531 = vld [vmem:[%s10527 + $0x18] sm:$0xff]
        %v10532 = vld [vmem:[%s10527 + $0x20] sm:$0xff]
        %v10533 = vld [vmem:[%s10527 + $0x28] sm:$0xff]
        %v10534 = vld [vmem:[%s10527 + $0x30] sm:$0xff]
        %v10535 = vld [vmem:[%s10527 + $0x38] sm:$0xff]
        %v10536 = vld [vmem:[%s10527 + $0x40] sm:$0xff]
        %v10537 = vld [vmem:[%s10527 + $0x48] sm:$0xff]
        %v10538 = vld [vmem:[%s10527 + $0x50] sm:$0xff]
        %v10539 = vld [vmem:[%s10527 + $0x58] sm:$0xff]
        %v10540 = vld [vmem:[%s10527 + $0x60] sm:$0xff]
        %v10541 = vld [vmem:[%s10527 + $0x68] sm:$0xff]
        %v10542 = vld [vmem:[%s10527 + $0x70] sm:$0xff]
        %v10543 = vld [vmem:[%s10527 + $0x78] sm:$0xff]
        %v10544 = vld [vmem:[%s10527 + $0x80] sm:$0xff]
        %v10545 = vld [vmem:[%s10527 + $0x88] sm:$0xff]
        %v10546 = vld [vmem:[%s10527 + $0x90] sm:$0xff]
        %v10547 = vld [vmem:[%s10527 + $0x98] sm:$0xff]
        %v10548 = vld [vmem:[%s10527 + $0xa0] sm:$0xff]
        %v10549 = vld [vmem:[%s10527 + $0xa8] sm:$0xff]
        %v10550 = vld [vmem:[%s10527 + $0xb0] sm:$0xff]
        %v10551 = vld [vmem:[%s10527 + $0xb8] sm:$0xff]
        %v10552 = vld [vmem:[%s10527 + $0xc0] sm:$0xff]
        %v10553 = vld [vmem:[%s10527 + $0xc8] sm:$0xff]
        %v10554 = vld [vmem:[%s10527 + $0xd0] sm:$0xff]
        %v10555 = vld [vmem:[%s10527 + $0xd8] sm:$0xff]
        %v10556 = vld [vmem:[%s10527 + $0xe0] sm:$0xff]
        %v10557 = vld [vmem:[%s10527 + $0xe8] sm:$0xff]
        %v10558 = vld [vmem:[%s10527 + $0xf0] sm:$0xff]
        %v10559 = vld [vmem:[%s10527 + $0xf8] sm:$0xff]
        %v10560 = vld [vmem:[%s10527 + $0x100] sm:$0xff]
        %v10561 = vld [vmem:[%s10527 + $0x108] sm:$0xff]
        %v10562 = vld [vmem:[%s10527 + $0x110] sm:$0xff]
        %v10563 = vld [vmem:[%s10527 + $0x118] sm:$0xff]
        %v10564 = vld [vmem:[%s10527 + $0x120] sm:$0xff]
        %v10565 = vld [vmem:[%s10527 + $0x128] sm:$0xff]
        %v10566 = vld [vmem:[%s10527 + $0x130] sm:$0xff]
        %v10567 = vld [vmem:[%s10527 + $0x138] sm:$0xff]
        %v10568 = vld [vmem:[%s10527 + $0x140] sm:$0xff]
        %v10569 = vld [vmem:[%s10527 + $0x148] sm:$0xff]
        %v10570 = vld [vmem:[%s10527 + $0x150] sm:$0xff]
        %v10571 = vld [vmem:[%s10527 + $0x158] sm:$0xff]
        %v10572 = vld [vmem:[%s10527 + $0x160] sm:$0xff]
        %v10573 = vld [vmem:[%s10527 + $0x168] sm:$0xff]
        %v10574 = vld [vmem:[%s10527 + $0x170] sm:$0xff]
        %v10575 = vld [vmem:[%s10527 + $0x178] sm:$0xff]
        %v10577 = vshrl.u32 %v10155, 16
        %v10579 = vrot.slane %v10577, 3
        %v10629 = vunpack.c.l.b16 %v10528
        %v10630 = vunpack.c.h.b16 %v10528
        %v10631 = vunpack.c.l.b16 %v10529
        %v10632 = vunpack.c.h.b16 %v10529
        %v10633 = vunpack.c.l.b16 %v10530
        %v10634 = vunpack.c.h.b16 %v10530
        %v10635 = vunpack.c.l.b16 %v10531
        %v10636 = vunpack.c.h.b16 %v10531
        %v10637 = vunpack.c.l.b16 %v10532
        %v10638 = vunpack.c.h.b16 %v10532
        %v10639 = vunpack.c.l.b16 %v10533
        %v10640 = vunpack.c.h.b16 %v10533
        %v10641 = vunpack.c.l.b16 %v10534
        %v10642 = vunpack.c.h.b16 %v10534
        %v10643 = vunpack.c.l.b16 %v10535
        %v10644 = vunpack.c.h.b16 %v10535
        %v10645 = vunpack.c.l.b16 %v10536
        %v10646 = vunpack.c.h.b16 %v10536
        %v10647 = vunpack.c.l.b16 %v10537
        %v10648 = vunpack.c.h.b16 %v10537
        %v10649 = vunpack.c.l.b16 %v10538
        %v10650 = vunpack.c.h.b16 %v10538
        %v10651 = vunpack.c.l.b16 %v10539
        %v10652 = vunpack.c.h.b16 %v10539
        %v10653 = vunpack.c.l.b16 %v10540
        %v10654 = vunpack.c.h.b16 %v10540
        %v10655 = vunpack.c.l.b16 %v10541
        %v10656 = vunpack.c.h.b16 %v10541
        %v10657 = vunpack.c.l.b16 %v10542
        %v10658 = vunpack.c.h.b16 %v10542
        %v10659 = vunpack.c.l.b16 %v10543
        %v10660 = vunpack.c.h.b16 %v10543
        %v10661 = vunpack.c.l.b16 %v10544
        %v10662 = vunpack.c.h.b16 %v10544
        %v10663 = vunpack.c.l.b16 %v10545
        %v10664 = vunpack.c.h.b16 %v10545
        %v10665 = vunpack.c.l.b16 %v10546
        %v10666 = vunpack.c.h.b16 %v10546
        %v10667 = vunpack.c.l.b16 %v10547
        %v10668 = vunpack.c.h.b16 %v10547
        %v10669 = vunpack.c.l.b16 %v10548
        %v10670 = vunpack.c.h.b16 %v10548
        %v10671 = vunpack.c.l.b16 %v10549
        %v10672 = vunpack.c.h.b16 %v10549
        %v10673 = vunpack.c.l.b16 %v10550
        %v10674 = vunpack.c.h.b16 %v10550
        %v10675 = vunpack.c.l.b16 %v10551
        %v10676 = vunpack.c.h.b16 %v10551
        %v10677 = vunpack.c.l.b16 %v10552
        %v10678 = vunpack.c.h.b16 %v10552
        %v10679 = vunpack.c.l.b16 %v10553
        %v10680 = vunpack.c.h.b16 %v10553
        %v10681 = vunpack.c.l.b16 %v10554
        %v10682 = vunpack.c.h.b16 %v10554
        %v10683 = vunpack.c.l.b16 %v10555
        %v10684 = vunpack.c.h.b16 %v10555
        %v10685 = vunpack.c.l.b16 %v10556
        %v10686 = vunpack.c.h.b16 %v10556
        %v10687 = vunpack.c.l.b16 %v10557
        %v10688 = vunpack.c.h.b16 %v10557
        %v10689 = vunpack.c.l.b16 %v10558
        %v10690 = vunpack.c.h.b16 %v10558
        %v10691 = vunpack.c.l.b16 %v10559
        %v10692 = vunpack.c.h.b16 %v10559
        %v10693 = vunpack.c.l.b16 %v10560
        %v10694 = vunpack.c.h.b16 %v10560
        %v10695 = vunpack.c.l.b16 %v10561
        %v10696 = vunpack.c.h.b16 %v10561
        %v10697 = vunpack.c.l.b16 %v10562
        %v10698 = vunpack.c.h.b16 %v10562
        %v10699 = vunpack.c.l.b16 %v10563
        %v10700 = vunpack.c.h.b16 %v10563
        %v10701 = vunpack.c.l.b16 %v10564
        %v10702 = vunpack.c.h.b16 %v10564
        %v10703 = vunpack.c.l.b16 %v10565
        %v10704 = vunpack.c.h.b16 %v10565
        %v10705 = vunpack.c.l.b16 %v10566
        %v10706 = vunpack.c.h.b16 %v10566
        %v10707 = vunpack.c.l.b16 %v10567
        %v10708 = vunpack.c.h.b16 %v10567
        %v10709 = vunpack.c.l.b16 %v10568
        %v10710 = vunpack.c.h.b16 %v10568
        %v10711 = vunpack.c.l.b16 %v10569
        %v10712 = vunpack.c.h.b16 %v10569
        %v10713 = vunpack.c.l.b16 %v10570
        %v10714 = vunpack.c.h.b16 %v10570
        %v10715 = vunpack.c.l.b16 %v10571
        %v10716 = vunpack.c.h.b16 %v10571
        %v10717 = vunpack.c.l.b16 %v10572
        %v10718 = vunpack.c.h.b16 %v10572
        %v10719 = vunpack.c.l.b16 %v10573
        %v10720 = vunpack.c.h.b16 %v10573
        %v10721 = vunpack.c.l.b16 %v10574
        %v10722 = vunpack.c.h.b16 %v10574
        %v10723 = vunpack.c.l.b16 %v10575
        %v10724 = vunpack.c.h.b16 %v10575
        %v10725 = vpack.c.b16 %v10635, %v10629
        %v10726 = vpack.c.b16 %v10636, %v10630
        %v10727 = vpack.c.b16 %v10637, %v10631
        %v10728 = vpack.c.b16 %v10638, %v10632
        %v10729 = vpack.c.b16 %v10639, %v10633
        %v10730 = vpack.c.b16 %v10640, %v10634
        %v10731 = vpack.c.b16 %v10647, %v10641
        %v10732 = vpack.c.b16 %v10648, %v10642
        %v10733 = vpack.c.b16 %v10649, %v10643
        %v10734 = vpack.c.b16 %v10650, %v10644
        %v10735 = vpack.c.b16 %v10651, %v10645
        %v10736 = vpack.c.b16 %v10652, %v10646
        %v10737 = vpack.c.b16 %v10659, %v10653
        %v10738 = vpack.c.b16 %v10660, %v10654
        %v10739 = vpack.c.b16 %v10661, %v10655
        %v10740 = vpack.c.b16 %v10662, %v10656
        %v10741 = vpack.c.b16 %v10663, %v10657
        %v10742 = vpack.c.b16 %v10664, %v10658
        %v10743 = vpack.c.b16 %v10671, %v10665
        %v10744 = vpack.c.b16 %v10672, %v10666
        %v10745 = vpack.c.b16 %v10673, %v10667
        %v10746 = vpack.c.b16 %v10674, %v10668
        %v10747 = vpack.c.b16 %v10675, %v10669
        %v10748 = vpack.c.b16 %v10676, %v10670
        %v10749 = vpack.c.b16 %v10683, %v10677
        %v10750 = vpack.c.b16 %v10684, %v10678
        %v10751 = vpack.c.b16 %v10685, %v10679
        %v10752 = vpack.c.b16 %v10686, %v10680
        %v10753 = vpack.c.b16 %v10687, %v10681
        %v10754 = vpack.c.b16 %v10688, %v10682
        %v10755 = vpack.c.b16 %v10695, %v10689
        %v10756 = vpack.c.b16 %v10696, %v10690
        %v10757 = vpack.c.b16 %v10697, %v10691
        %v10758 = vpack.c.b16 %v10698, %v10692
        %v10759 = vpack.c.b16 %v10699, %v10693
        %v10760 = vpack.c.b16 %v10700, %v10694
        %v10761 = vpack.c.b16 %v10707, %v10701
        %v10762 = vpack.c.b16 %v10708, %v10702
        %v10763 = vpack.c.b16 %v10709, %v10703
        %v10764 = vpack.c.b16 %v10710, %v10704
        %v10765 = vpack.c.b16 %v10711, %v10705
        %v10766 = vpack.c.b16 %v10712, %v10706
        %v10767 = vpack.c.b16 %v10719, %v10713
        %v10768 = vpack.c.b16 %v10720, %v10714
        %v10769 = vpack.c.b16 %v10721, %v10715
        %v10770 = vpack.c.b16 %v10722, %v10716
        %v10771 = vpack.c.b16 %v10723, %v10717
        %v10772 = vpack.c.b16 %v10724, %v10718
        %10821 = vmatprep.subr.bf16.mxu0 %v10726
        %10822 = vmatpush1.bf16.msra.mxu0 %v10725
        %10823 = vmatprep.subr.bf16.mxu0 %v10732
        %10824 = vmatpush1.bf16.msra.mxu0 %v10731
        %10825 = vmatprep.subr.bf16.mxu0 %v10738
        %10826 = vmatpush1.bf16.msra.mxu0 %v10737
        %10827 = vmatprep.subr.bf16.mxu0 %v10744
        %10828 = vmatpush1.bf16.msra.mxu0 %v10743
        %10829 = vmatprep.subr.bf16.mxu0 %v10750
        %10830 = vmatpush1.bf16.msra.mxu0 %v10749
        %10831 = vmatprep.subr.bf16.mxu0 %v10756
        %10832 = vmatpush1.bf16.msra.mxu0 %v10755
        %10833 = vmatprep.subr.bf16.mxu0 %v10762
        %10834 = vmatpush1.bf16.msra.mxu0 %v10761
        %10835 = vmatprep.subr.bf16.mxu0 %v10768
        %10836 = vmatpush1.bf16.msra.mxu0 %v10767
        %10837 = vmatprep.subr.bf16.mxu0 0
        %10838 = vmatpush1.bf16.msra.mxu0 0
        %10839 = vmatprep.subr.bf16.mxu0 0
        %10840 = vmatpush1.bf16.msra.mxu0 0
        %10841 = vmatprep.subr.bf16.mxu0 0
        %10842 = vmatpush1.bf16.msra.mxu0 0
        %10843 = vmatprep.subr.bf16.mxu0 0
        %10844 = vmatpush1.bf16.msra.mxu0 0
        %10845 = vmatprep.subr.bf16.mxu0 0
        %10846 = vmatpush1.bf16.msra.mxu0 0
        %10847 = vmatprep.subr.bf16.mxu0 0
        %10848 = vmatpush1.bf16.msra.mxu0 0
        %10849 = vmatprep.subr.bf16.mxu0 0
        %10850 = vmatpush1.bf16.msra.mxu0 0
        %10851 = vmatprep.subr.bf16.mxu0 0
        %10852 = vmatpush1.bf16.msra.mxu0 0
        %10853 = vmatprep.mubr.bf16.mxu0 0
        %10854 = vmatmul.mubr.bf16.gmra.mrb[0].mxu0 %v10579
        %v10855 = vpop.f32.mrb[0].mxu0
        %v10856 = vadd.f32 0.0, %v10855
        %v10857 = vpop.f32.mrb[0].mxu0
        %v10858 = vadd.f32 0.0, %v10857
        %v10859 = vpop.f32.mrb[0].mxu0
        %v10860 = vpop.f32.mrb[0].mxu0
        %10861 = vdwg.mxu0
        %10862 = vmatprep.subr.bf16.mxu0 %v10728
        %10863 = vmatpush1.bf16.msra.mxu0 %v10727
        %10864 = vmatprep.subr.bf16.mxu0 %v10734
        %10865 = vmatpush1.bf16.msra.mxu0 %v10733
        %10866 = vmatprep.subr.bf16.mxu0 %v10740
        %10867 = vmatpush1.bf16.msra.mxu0 %v10739
        %10868 = vmatprep.subr.bf16.mxu0 %v10746
        %10869 = vmatpush1.bf16.msra.mxu0 %v10745
        %10870 = vmatprep.subr.bf16.mxu0 %v10752
        %10871 = vmatpush1.bf16.msra.mxu0 %v10751
        %10872 = vmatprep.subr.bf16.mxu0 %v10758
        %10873 = vmatpush1.bf16.msra.mxu0 %v10757
        %10874 = vmatprep.subr.bf16.mxu0 %v10764
        %10875 = vmatpush1.bf16.msra.mxu0 %v10763
        %10876 = vmatprep.subr.bf16.mxu0 %v10770
        %10877 = vmatpush1.bf16.msra.mxu0 %v10769
        %10878 = vmatprep.subr.bf16.mxu0 0
        %10879 = vmatpush1.bf16.msra.mxu0 0
        %10880 = vmatprep.subr.bf16.mxu0 0
        %10881 = vmatpush1.bf16.msra.mxu0 0
        %10882 = vmatprep.subr.bf16.mxu0 0
        %10883 = vmatpush1.bf16.msra.mxu0 0
        %10884 = vmatprep.subr.bf16.mxu0 0
        %10885 = vmatpush1.bf16.msra.mxu0 0
        %10886 = vmatprep.subr.bf16.mxu0 0
        %10887 = vmatpush1.bf16.msra.mxu0 0
        %10888 = vmatprep.subr.bf16.mxu0 0
        %10889 = vmatpush1.bf16.msra.mxu0 0
        %10890 = vmatprep.subr.bf16.mxu0 0
        %10891 = vmatpush1.bf16.msra.mxu0 0
        %10892 = vmatprep.subr.bf16.mxu0 0
        %10893 = vmatpush1.bf16.msra.mxu0 0
        %10894 = vmatprep.mubr.bf16.mxu0 0
        %10895 = vmatmul.mubr.bf16.gmra.mrb[0].mxu0 %v10579
        %v10896 = vpop.f32.mrb[0].mxu0
        %v10897 = vadd.f32 0.0, %v10896
        %v10898 = vpop.f32.mrb[0].mxu0
        %v10899 = vadd.f32 0.0, %v10898
        %v10900 = vpop.f32.mrb[0].mxu0
        %v10901 = vpop.f32.mrb[0].mxu0
        %10902 = vdwg.mxu0
        %10903 = vmatprep.subr.bf16.mxu0 %v10730
        %10904 = vmatpush1.bf16.msra.mxu0 %v10729
        %10905 = vmatprep.subr.bf16.mxu0 %v10736
        %10906 = vmatpush1.bf16.msra.mxu0 %v10735
        %10907 = vmatprep.subr.bf16.mxu0 %v10742
        %10908 = vmatpush1.bf16.msra.mxu0 %v10741
        %10909 = vmatprep.subr.bf16.mxu0 %v10748
        %10910 = vmatpush1.bf16.msra.mxu0 %v10747
        %10911 = vmatprep.subr.bf16.mxu0 %v10754
        %10912 = vmatpush1.bf16.msra.mxu0 %v10753
        %10913 = vmatprep.subr.bf16.mxu0 %v10760
        %10914 = vmatpush1.bf16.msra.mxu0 %v10759
        %10915 = vmatprep.subr.bf16.mxu0 %v10766
        %10916 = vmatpush1.bf16.msra.mxu0 %v10765
        %10917 = vmatprep.subr.bf16.mxu0 %v10772
        %10918 = vmatpush1.bf16.msra.mxu0 %v10771
        %10919 = vmatprep.subr.bf16.mxu0 0
        %10920 = vmatpush1.bf16.msra.mxu0 0
        %10921 = vmatprep.subr.bf16.mxu0 0
        %10922 = vmatpush1.bf16.msra.mxu0 0
        %10923 = vmatprep.subr.bf16.mxu0 0
        %10924 = vmatpush1.bf16.msra.mxu0 0
        %10925 = vmatprep.subr.bf16.mxu0 0
        %10926 = vmatpush1.bf16.msra.mxu0 0
        %10927 = vmatprep.subr.bf16.mxu0 0
        %10928 = vmatpush1.bf16.msra.mxu0 0
        %10929 = vmatprep.subr.bf16.mxu0 0
        %10930 = vmatpush1.bf16.msra.mxu0 0
        %10931 = vmatprep.subr.bf16.mxu0 0
        %10932 = vmatpush1.bf16.msra.mxu0 0
        %10933 = vmatprep.subr.bf16.mxu0 0
        %10934 = vmatpush1.bf16.msra.mxu0 0
        %10935 = vmatprep.mubr.bf16.mxu0 0
        %10936 = vmatmul.mubr.bf16.gmra.mrb[0].mxu0 %v10579
        %v10937 = vpop.f32.mrb[0].mxu0
        %v10938 = vadd.f32 0.0, %v10937
        %v10939 = vpop.f32.mrb[0].mxu0
        %v10940 = vadd.f32 0.0, %v10939
        %v10941 = vpop.f32.mrb[0].mxu0
        %v10942 = vpop.f32.mrb[0].mxu0
        %10943 = vdwg.mxu0
        %v10944 = vadd.f32 %v10521, %v10856
        %v10945 = vadd.f32 %v10522, %v10858
        %v10946 = vadd.f32 %v10523, %v10897
        %v10947 = vadd.f32 %v10524, %v10899
        %v10948 = vadd.f32 %v10525, %v10938
        %v10949 = vadd.f32 %v10526, %v10940
        %s10950 = scalar_lea.vmem %s5, 9216
        %v10951 = vld [vmem:[%s10950] sm:$0xff]
        %v10952 = vld [vmem:[%s10950 + $0x8] sm:$0xff]
        %v10953 = vld [vmem:[%s10950 + $0x10] sm:$0xff]
        %v10954 = vld [vmem:[%s10950 + $0x18] sm:$0xff]
        %v10955 = vld [vmem:[%s10950 + $0x20] sm:$0xff]
        %v10956 = vld [vmem:[%s10950 + $0x28] sm:$0xff]
        %v10957 = vld [vmem:[%s10950 + $0x30] sm:$0xff]
        %v10958 = vld [vmem:[%s10950 + $0x38] sm:$0xff]
        %v10959 = vld [vmem:[%s10950 + $0x40] sm:$0xff]
        %v10960 = vld [vmem:[%s10950 + $0x48] sm:$0xff]
        %v10961 = vld [vmem:[%s10950 + $0x50] sm:$0xff]
        %v10962 = vld [vmem:[%s10950 + $0x58] sm:$0xff]
        %v10963 = vld [vmem:[%s10950 + $0x60] sm:$0xff]
        %v10964 = vld [vmem:[%s10950 + $0x68] sm:$0xff]
        %v10965 = vld [vmem:[%s10950 + $0x70] sm:$0xff]
        %v10966 = vld [vmem:[%s10950 + $0x78] sm:$0xff]
        %v10967 = vld [vmem:[%s10950 + $0x80] sm:$0xff]
        %v10968 = vld [vmem:[%s10950 + $0x88] sm:$0xff]
        %v10969 = vld [vmem:[%s10950 + $0x90] sm:$0xff]
        %v10970 = vld [vmem:[%s10950 + $0x98] sm:$0xff]
        %v10971 = vld [vmem:[%s10950 + $0xa0] sm:$0xff]
        %v10972 = vld [vmem:[%s10950 + $0xa8] sm:$0xff]
        %v10973 = vld [vmem:[%s10950 + $0xb0] sm:$0xff]
        %v10974 = vld [vmem:[%s10950 + $0xb8] sm:$0xff]
        %v10975 = vld [vmem:[%s10950 + $0xc0] sm:$0xff]
        %v10976 = vld [vmem:[%s10950 + $0xc8] sm:$0xff]
        %v10977 = vld [vmem:[%s10950 + $0xd0] sm:$0xff]
        %v10978 = vld [vmem:[%s10950 + $0xd8] sm:$0xff]
        %v10979 = vld [vmem:[%s10950 + $0xe0] sm:$0xff]
        %v10980 = vld [vmem:[%s10950 + $0xe8] sm:$0xff]
        %v10981 = vld [vmem:[%s10950 + $0xf0] sm:$0xff]
        %v10982 = vld [vmem:[%s10950 + $0xf8] sm:$0xff]
        %v10983 = vld [vmem:[%s10950 + $0x100] sm:$0xff]
        %v10984 = vld [vmem:[%s10950 + $0x108] sm:$0xff]
        %v10985 = vld [vmem:[%s10950 + $0x110] sm:$0xff]
        %v10986 = vld [vmem:[%s10950 + $0x118] sm:$0xff]
        %v10987 = vld [vmem:[%s10950 + $0x120] sm:$0xff]
        %v10988 = vld [vmem:[%s10950 + $0x128] sm:$0xff]
        %v10989 = vld [vmem:[%s10950 + $0x130] sm:$0xff]
        %v10990 = vld [vmem:[%s10950 + $0x138] sm:$0xff]
        %v10991 = vld [vmem:[%s10950 + $0x140] sm:$0xff]
        %v10992 = vld [vmem:[%s10950 + $0x148] sm:$0xff]
        %v10993 = vld [vmem:[%s10950 + $0x150] sm:$0xff]
        %v10994 = vld [vmem:[%s10950 + $0x158] sm:$0xff]
        %v10995 = vld [vmem:[%s10950 + $0x160] sm:$0xff]
        %v10996 = vld [vmem:[%s10950 + $0x168] sm:$0xff]
        %v10997 = vld [vmem:[%s10950 + $0x170] sm:$0xff]
        %v10998 = vld [vmem:[%s10950 + $0x178] sm:$0xff]
        %v10999 = vld [vmem:[#allocation2 + $0xc] sm:$0x1]
        %v11048 = vunpack.c.l.b16 %v10951
        %v11049 = vunpack.c.h.b16 %v10951
        %v11050 = vunpack.c.l.b16 %v10952
        %v11051 = vunpack.c.h.b16 %v10952
        %v11052 = vunpack.c.l.b16 %v10953
        %v11053 = vunpack.c.h.b16 %v10953
        %v11054 = vunpack.c.l.b16 %v10954
        %v11055 = vunpack.c.h.b16 %v10954
        %v11056 = vunpack.c.l.b16 %v10955
        %v11057 = vunpack.c.h.b16 %v10955
        %v11058 = vunpack.c.l.b16 %v10956
        %v11059 = vunpack.c.h.b16 %v10956
        %v11060 = vunpack.c.l.b16 %v10957
        %v11061 = vunpack.c.h.b16 %v10957
        %v11062 = vunpack.c.l.b16 %v10958
        %v11063 = vunpack.c.h.b16 %v10958
        %v11064 = vunpack.c.l.b16 %v10959
        %v11065 = vunpack.c.h.b16 %v10959
        %v11066 = vunpack.c.l.b16 %v10960
        %v11067 = vunpack.c.h.b16 %v10960
        %v11068 = vunpack.c.l.b16 %v10961
        %v11069 = vunpack.c.h.b16 %v10961
        %v11070 = vunpack.c.l.b16 %v10962
        %v11071 = vunpack.c.h.b16 %v10962
        %v11072 = vunpack.c.l.b16 %v10963
        %v11073 = vunpack.c.h.b16 %v10963
        %v11074 = vunpack.c.l.b16 %v10964
        %v11075 = vunpack.c.h.b16 %v10964
        %v11076 = vunpack.c.l.b16 %v10965
        %v11077 = vunpack.c.h.b16 %v10965
        %v11078 = vunpack.c.l.b16 %v10966
        %v11079 = vunpack.c.h.b16 %v10966
        %v11080 = vunpack.c.l.b16 %v10967
        %v11081 = vunpack.c.h.b16 %v10967
        %v11082 = vunpack.c.l.b16 %v10968
        %v11083 = vunpack.c.h.b16 %v10968
        %v11084 = vunpack.c.l.b16 %v10969
        %v11085 = vunpack.c.h.b16 %v10969
        %v11086 = vunpack.c.l.b16 %v10970
        %v11087 = vunpack.c.h.b16 %v10970
        %v11088 = vunpack.c.l.b16 %v10971
        %v11089 = vunpack.c.h.b16 %v10971
        %v11090 = vunpack.c.l.b16 %v10972
        %v11091 = vunpack.c.h.b16 %v10972
        %v11092 = vunpack.c.l.b16 %v10973
        %v11093 = vunpack.c.h.b16 %v10973
        %v11094 = vunpack.c.l.b16 %v10974
        %v11095 = vunpack.c.h.b16 %v10974
        %v11096 = vunpack.c.l.b16 %v10975
        %v11097 = vunpack.c.h.b16 %v10975
        %v11098 = vunpack.c.l.b16 %v10976
        %v11099 = vunpack.c.h.b16 %v10976
        %v11100 = vunpack.c.l.b16 %v10977
        %v11101 = vunpack.c.h.b16 %v10977
        %v11102 = vunpack.c.l.b16 %v10978
        %v11103 = vunpack.c.h.b16 %v10978
        %v11104 = vunpack.c.l.b16 %v10979
        %v11105 = vunpack.c.h.b16 %v10979
        %v11106 = vunpack.c.l.b16 %v10980
        %v11107 = vunpack.c.h.b16 %v10980
        %v11108 = vunpack.c.l.b16 %v10981
        %v11109 = vunpack.c.h.b16 %v10981
        %v11110 = vunpack.c.l.b16 %v10982
        %v11111 = vunpack.c.h.b16 %v10982
        %v11112 = vunpack.c.l.b16 %v10983
        %v11113 = vunpack.c.h.b16 %v10983
        %v11114 = vunpack.c.l.b16 %v10984
        %v11115 = vunpack.c.h.b16 %v10984
        %v11116 = vunpack.c.l.b16 %v10985
        %v11117 = vunpack.c.h.b16 %v10985
        %v11118 = vunpack.c.l.b16 %v10986
        %v11119 = vunpack.c.h.b16 %v10986
        %v11120 = vunpack.c.l.b16 %v10987
        %v11121 = vunpack.c.h.b16 %v10987
        %v11122 = vunpack.c.l.b16 %v10988
        %v11123 = vunpack.c.h.b16 %v10988
        %v11124 = vunpack.c.l.b16 %v10989
        %v11125 = vunpack.c.h.b16 %v10989
        %v11126 = vunpack.c.l.b16 %v10990
        %v11127 = vunpack.c.h.b16 %v10990
        %v11128 = vunpack.c.l.b16 %v10991
        %v11129 = vunpack.c.h.b16 %v10991
        %v11130 = vunpack.c.l.b16 %v10992
        %v11131 = vunpack.c.h.b16 %v10992
        %v11132 = vunpack.c.l.b16 %v10993
        %v11133 = vunpack.c.h.b16 %v10993
        %v11134 = vunpack.c.l.b16 %v10994
        %v11135 = vunpack.c.h.b16 %v10994
        %v11136 = vunpack.c.l.b16 %v10995
        %v11137 = vunpack.c.h.b16 %v10995
        %v11138 = vunpack.c.l.b16 %v10996
        %v11139 = vunpack.c.h.b16 %v10996
        %v11140 = vunpack.c.l.b16 %v10997
        %v11141 = vunpack.c.h.b16 %v10997
        %v11142 = vunpack.c.l.b16 %v10998
        %v11143 = vunpack.c.h.b16 %v10998
        %v11144 = vpack.c.b16 %v11054, %v11048
        %v11145 = vpack.c.b16 %v11055, %v11049
        %v11146 = vpack.c.b16 %v11056, %v11050
        %v11147 = vpack.c.b16 %v11057, %v11051
        %v11148 = vpack.c.b16 %v11058, %v11052
        %v11149 = vpack.c.b16 %v11059, %v11053
        %v11150 = vpack.c.b16 %v11066, %v11060
        %v11151 = vpack.c.b16 %v11067, %v11061
        %v11152 = vpack.c.b16 %v11068, %v11062
        %v11153 = vpack.c.b16 %v11069, %v11063
        %v11154 = vpack.c.b16 %v11070, %v11064
        %v11155 = vpack.c.b16 %v11071, %v11065
        %v11156 = vpack.c.b16 %v11078, %v11072
        %v11157 = vpack.c.b16 %v11079, %v11073
        %v11158 = vpack.c.b16 %v11080, %v11074
        %v11159 = vpack.c.b16 %v11081, %v11075
        %v11160 = vpack.c.b16 %v11082, %v11076
        %v11161 = vpack.c.b16 %v11083, %v11077
        %v11162 = vpack.c.b16 %v11090, %v11084
        %v11163 = vpack.c.b16 %v11091, %v11085
        %v11164 = vpack.c.b16 %v11092, %v11086
        %v11165 = vpack.c.b16 %v11093, %v11087
        %v11166 = vpack.c.b16 %v11094, %v11088
        %v11167 = vpack.c.b16 %v11095, %v11089
        %v11168 = vpack.c.b16 %v11102, %v11096
        %v11169 = vpack.c.b16 %v11103, %v11097
        %v11170 = vpack.c.b16 %v11104, %v11098
        %v11171 = vpack.c.b16 %v11105, %v11099
        %v11172 = vpack.c.b16 %v11106, %v11100
        %v11173 = vpack.c.b16 %v11107, %v11101
        %v11174 = vpack.c.b16 %v11114, %v11108
        %v11175 = vpack.c.b16 %v11115, %v11109
        %v11176 = vpack.c.b16 %v11116, %v11110
        %v11177 = vpack.c.b16 %v11117, %v11111
        %v11178 = vpack.c.b16 %v11118, %v11112
        %v11179 = vpack.c.b16 %v11119, %v11113
        %v11180 = vpack.c.b16 %v11126, %v11120
        %v11181 = vpack.c.b16 %v11127, %v11121
        %v11182 = vpack.c.b16 %v11128, %v11122
        %v11183 = vpack.c.b16 %v11129, %v11123
        %v11184 = vpack.c.b16 %v11130, %v11124
        %v11185 = vpack.c.b16 %v11131, %v11125
        %v11186 = vpack.c.b16 %v11138, %v11132
        %v11187 = vpack.c.b16 %v11139, %v11133
        %v11188 = vpack.c.b16 %v11140, %v11134
        %v11189 = vpack.c.b16 %v11141, %v11135
        %v11190 = vpack.c.b16 %v11142, %v11136
        %v11191 = vpack.c.b16 %v11143, %v11137
        %11240 = vmatprep.subr.bf16.mxu0 %v11145
        %11241 = vmatpush1.bf16.msra.mxu0 %v11144
        %11242 = vmatprep.subr.bf16.mxu0 %v11151
        %11243 = vmatpush1.bf16.msra.mxu0 %v11150
        %11244 = vmatprep.subr.bf16.mxu0 %v11157
        %11245 = vmatpush1.bf16.msra.mxu0 %v11156
        %11246 = vmatprep.subr.bf16.mxu0 %v11163
        %11247 = vmatpush1.bf16.msra.mxu0 %v11162
        %11248 = vmatprep.subr.bf16.mxu0 %v11169
        %11249 = vmatpush1.bf16.msra.mxu0 %v11168
        %11250 = vmatprep.subr.bf16.mxu0 %v11175
        %11251 = vmatpush1.bf16.msra.mxu0 %v11174
        %11252 = vmatprep.subr.bf16.mxu0 %v11181
        %11253 = vmatpush1.bf16.msra.mxu0 %v11180
        %11254 = vmatprep.subr.bf16.mxu0 %v11187
        %11255 = vmatpush1.bf16.msra.mxu0 %v11186
        %11256 = vmatprep.subr.bf16.mxu0 0
        %11257 = vmatpush1.bf16.msra.mxu0 0
        %11258 = vmatprep.subr.bf16.mxu0 0
        %11259 = vmatpush1.bf16.msra.mxu0 0
        %11260 = vmatprep.subr.bf16.mxu0 0
        %11261 = vmatpush1.bf16.msra.mxu0 0
        %11262 = vmatprep.subr.bf16.mxu0 0
        %11263 = vmatpush1.bf16.msra.mxu0 0
        %11264 = vmatprep.subr.bf16.mxu0 0
        %11265 = vmatpush1.bf16.msra.mxu0 0
        %11266 = vmatprep.subr.bf16.mxu0 0
        %11267 = vmatpush1.bf16.msra.mxu0 0
        %11268 = vmatprep.subr.bf16.mxu0 0
        %11269 = vmatpush1.bf16.msra.mxu0 0
        %11270 = vmatprep.subr.bf16.mxu0 0
        %11271 = vmatpush1.bf16.msra.mxu0 0
        %11272 = vmatprep.mubr.bf16.mxu0 0
        %11273 = vmatmul.mubr.bf16.gmra.mrb[0].mxu0 %v10999
        %v11274 = vpop.f32.mrb[0].mxu0
        %v11275 = vadd.f32 0.0, %v11274
        %v11276 = vpop.f32.mrb[0].mxu0
        %v11277 = vadd.f32 0.0, %v11276
        %v11278 = vpop.f32.mrb[0].mxu0
        %v11279 = vpop.f32.mrb[0].mxu0
        %11280 = vdwg.mxu0
        %11281 = vmatprep.subr.bf16.mxu0 %v11147
        %11282 = vmatpush1.bf16.msra.mxu0 %v11146
        %11283 = vmatprep.subr.bf16.mxu0 %v11153
        %11284 = vmatpush1.bf16.msra.mxu0 %v11152
        %11285 = vmatprep.subr.bf16.mxu0 %v11159
        %11286 = vmatpush1.bf16.msra.mxu0 %v11158
        %11287 = vmatprep.subr.bf16.mxu0 %v11165
        %11288 = vmatpush1.bf16.msra.mxu0 %v11164
        %11289 = vmatprep.subr.bf16.mxu0 %v11171
        %11290 = vmatpush1.bf16.msra.mxu0 %v11170
        %11291 = vmatprep.subr.bf16.mxu0 %v11177
        %11292 = vmatpush1.bf16.msra.mxu0 %v11176
        %11293 = vmatprep.subr.bf16.mxu0 %v11183
        %11294 = vmatpush1.bf16.msra.mxu0 %v11182
        %11295 = vmatprep.subr.bf16.mxu0 %v11189
        %11296 = vmatpush1.bf16.msra.mxu0 %v11188
        %11297 = vmatprep.subr.bf16.mxu0 0
        %11298 = vmatpush1.bf16.msra.mxu0 0
        %11299 = vmatprep.subr.bf16.mxu0 0
        %11300 = vmatpush1.bf16.msra.mxu0 0
        %11301 = vmatprep.subr.bf16.mxu0 0
        %11302 = vmatpush1.bf16.msra.mxu0 0
        %11303 = vmatprep.subr.bf16.mxu0 0
        %11304 = vmatpush1.bf16.msra.mxu0 0
        %11305 = vmatprep.subr.bf16.mxu0 0
        %11306 = vmatpush1.bf16.msra.mxu0 0
        %11307 = vmatprep.subr.bf16.mxu0 0
        %11308 = vmatpush1.bf16.msra.mxu0 0
        %11309 = vmatprep.subr.bf16.mxu0 0
        %11310 = vmatpush1.bf16.msra.mxu0 0
        %11311 = vmatprep.subr.bf16.mxu0 0
        %11312 = vmatpush1.bf16.msra.mxu0 0
        %11313 = vmatprep.mubr.bf16.mxu0 0
        %11314 = vmatmul.mubr.bf16.gmra.mrb[0].mxu0 %v10999
        %v11315 = vpop.f32.mrb[0].mxu0
        %v11316 = vadd.f32 0.0, %v11315
        %v11317 = vpop.f32.mrb[0].mxu0
        %v11318 = vadd.f32 0.0, %v11317
        %v11319 = vpop.f32.mrb[0].mxu0
        %v11320 = vpop.f32.mrb[0].mxu0
        %11321 = vdwg.mxu0
        %11322 = vmatprep.subr.bf16.mxu0 %v11149
        %11323 = vmatpush1.bf16.msra.mxu0 %v11148
        %11324 = vmatprep.subr.bf16.mxu0 %v11155
        %11325 = vmatpush1.bf16.msra.mxu0 %v11154
        %11326 = vmatprep.subr.bf16.mxu0 %v11161
        %11327 = vmatpush1.bf16.msra.mxu0 %v11160
        %11328 = vmatprep.subr.bf16.mxu0 %v11167
        %11329 = vmatpush1.bf16.msra.mxu0 %v11166
        %11330 = vmatprep.subr.bf16.mxu0 %v11173
        %11331 = vmatpush1.bf16.msra.mxu0 %v11172
        %11332 = vmatprep.subr.bf16.mxu0 %v11179
        %11333 = vmatpush1.bf16.msra.mxu0 %v11178
        %11334 = vmatprep.subr.bf16.mxu0 %v11185
        %11335 = vmatpush1.bf16.msra.mxu0 %v11184
        %11336 = vmatprep.subr.bf16.mxu0 %v11191
        %11337 = vmatpush1.bf16.msra.mxu0 %v11190
        %11338 = vmatprep.subr.bf16.mxu0 0
        %11339 = vmatpush1.bf16.msra.mxu0 0
        %11340 = vmatprep.subr.bf16.mxu0 0
        %11341 = vmatpush1.bf16.msra.mxu0 0
        %11342 = vmatprep.subr.bf16.mxu0 0
        %11343 = vmatpush1.bf16.msra.mxu0 0
        %11344 = vmatprep.subr.bf16.mxu0 0
        %11345 = vmatpush1.bf16.msra.mxu0 0
        %11346 = vmatprep.subr.bf16.mxu0 0
        %11347 = vmatpush1.bf16.msra.mxu0 0
        %11348 = vmatprep.subr.bf16.mxu0 0
        %11349 = vmatpush1.bf16.msra.mxu0 0
        %11350 = vmatprep.subr.bf16.mxu0 0
        %11351 = vmatpush1.bf16.msra.mxu0 0
        %11352 = vmatprep.subr.bf16.mxu0 0
        %11353 = vmatpush1.bf16.msra.mxu0 0
        %11354 = vmatprep.mubr.bf16.mxu0 0
        %11355 = vmatmul.mubr.bf16.gmra.mrb[0].mxu0 %v10999
        %v11356 = vpop.f32.mrb[0].mxu0
        %v11357 = vadd.f32 0.0, %v11356
        %v11358 = vpop.f32.mrb[0].mxu0
        %v11359 = vadd.f32 0.0, %v11358
        %v11360 = vpop.f32.mrb[0].mxu0
        %v11361 = vpop.f32.mrb[0].mxu0
        %11362 = vdwg.mxu0
        %v11363 = vadd.f32 %v10944, %v11275
        %v11364 = vadd.f32 %v10945, %v11277
        %v11365 = vadd.f32 %v10946, %v11316
        %v11366 = vadd.f32 %v10947, %v11318
        %v11367 = vadd.f32 %v10948, %v11357
        %v11368 = vadd.f32 %v10949, %v11359
        %v11369 = vld [vmem:[%s6] sm:$0x3f]
        %v11371 = vlaneseq
        %v11372 = vshrl.u32 %v11371, 7
        %v11373 = vsub.s32 0, %v11372
        %v11374 = vrot.slane %v11369, %v11373
        %v11375 = vlaneseq
        %v11376 = vshrl.u32 %v11375, 7
        %v11377 = vsub.s32 1, %v11376
        %v11378 = vrot.slane %v11369, %v11377
        %v11379 = vlaneseq
        %v11380 = vshrl.u32 %v11379, 7
        %v11381 = vsub.s32 2, %v11380
        %v11382 = vrot.slane %v11369, %v11381
        %v11383 = vlaneseq
        %v11384 = vshrl.u32 %v11383, 7
        %v11385 = vsub.s32 3, %v11384
        %v11386 = vrot.slane %v11369, %v11385
        %v11387 = vlaneseq
        %v11388 = vshrl.u32 %v11387, 7
        %v11389 = vsub.s32 4, %v11388
        %v11390 = vrot.slane %v11369, %v11389
        %v11391 = vlaneseq
        %v11392 = vshrl.u32 %v11391, 7
        %v11393 = vsub.s32 5, %v11392
        %v11394 = vrot.slane %v11369, %v11393
        %v11401 = vmul.f32 %v11363, %v11374
        %v11402 = vmul.f32 %v11364, %v11378
        %v11403 = vmul.f32 %v11365, %v11382
        %v11404 = vmul.f32 %v11366, %v11386
        %v11405 = vmul.f32 %v11367, %v11390
        %v11406 = vmul.f32 %v11368, %v11394
        %v11407 = vld [vmem:[%s7] sm:$0x3f]
        %v11409 = vlaneseq
        %v11410 = vshrl.u32 %v11409, 7
        %v11411 = vsub.s32 0, %v11410
        %v11412 = vrot.slane %v11407, %v11411
        %v11413 = vlaneseq
        %v11414 = vshrl.u32 %v11413, 7
        %v11415 = vsub.s32 1, %v11414
        %v11416 = vrot.slane %v11407, %v11415
        %v11417 = vlaneseq
        %v11418 = vshrl.u32 %v11417, 7
        %v11419 = vsub.s32 2, %v11418
        %v11420 = vrot.slane %v11407, %v11419
        %v11421 = vlaneseq
        %v11422 = vshrl.u32 %v11421, 7
        %v11423 = vsub.s32 3, %v11422
        %v11424 = vrot.slane %v11407, %v11423
        %v11425 = vlaneseq
        %v11426 = vshrl.u32 %v11425, 7
        %v11427 = vsub.s32 4, %v11426
        %v11428 = vrot.slane %v11407, %v11427
        %v11429 = vlaneseq
        %v11430 = vshrl.u32 %v11429, 7
        %v11431 = vsub.s32 5, %v11430
        %v11432 = vrot.slane %v11407, %v11431
        %v11439 = vadd.f32 %v11401, %v11412
        %v11440 = vadd.f32 %v11402, %v11416
        %v11441 = vadd.f32 %v11403, %v11420
        %v11442 = vadd.f32 %v11404, %v11424
        %v11443 = vadd.f32 %v11405, %v11428
        %v11444 = vadd.f32 %v11406, %v11432
        %v11445 = vmax.f32 %v11439, 0.0
        %v11446 = vmax.f32 %v11440, 0.0
        %v11447 = vmax.f32 %v11441, 0.0
        %v11448 = vmax.f32 %v11442, 0.0
        %v11449 = vmax.f32 %v11443, 0.0
        %v11450 = vmax.f32 %v11444, 0.0
        %v11451 = vpack.c.bf16 %v11445, %v11445
        %v11452 = vpack.c.bf16 %v11446, %v11446
        %v11453 = vpack.c.bf16 %v11447, %v11447
        %v11454 = vpack.c.bf16 %v11448, %v11448
        %v11455 = vpack.c.bf16 %v11449, %v11449
        %v11456 = vpack.c.bf16 %v11450, %v11450
        %v11457 = vld [vmem:[%s8] sm:$0xf]
        %v11458 = vld [vmem:[%s8 + $0x4] sm:$0xf]
        %v11459 = vld [vmem:[%s8 + $0x8] sm:$0xf]
        %v11460 = vld [vmem:[%s8 + $0xc] sm:$0xf]
        %v11461 = vld [vmem:[%s8 + $0x10] sm:$0xf]
        %v11462 = vld [vmem:[%s8 + $0x14] sm:$0xf]
        %v11463 = vld [vmem:[%s8 + $0x18] sm:$0xf]
        %v11464 = vld [vmem:[%s8 + $0x1c] sm:$0xf]
        %v11465 = vld [vmem:[%s8 + $0x20] sm:$0xf]
        %v11466 = vld [vmem:[%s8 + $0x24] sm:$0xf]
        %v11467 = vld [vmem:[%s8 + $0x28] sm:$0xf]
        %v11468 = vld [vmem:[%s8 + $0x2c] sm:$0xf]
        %v11469 = vld [vmem:[%s8 + $0x30] sm:$0xf]
        %v11470 = vld [vmem:[%s8 + $0x34] sm:$0xf]
        %v11471 = vld [vmem:[%s8 + $0x38] sm:$0xf]
        %v11472 = vld [vmem:[%s8 + $0x3c] sm:$0xf]
        %v11473 = vld [vmem:[%s8 + $0x40] sm:$0xf]
        %v11474 = vld [vmem:[%s8 + $0x44] sm:$0xf]
        %v11475 = vld [vmem:[%s8 + $0x48] sm:$0xf]
        %v11476 = vld [vmem:[%s8 + $0x4c] sm:$0xf]
        %v11477 = vld [vmem:[%s8 + $0x50] sm:$0xf]
        %v11478 = vld [vmem:[%s8 + $0x54] sm:$0xf]
        %v11479 = vld [vmem:[%s8 + $0x58] sm:$0xf]
        %v11480 = vld [vmem:[%s8 + $0x5c] sm:$0xf]
        %v11481 = vld [vmem:[%s8 + $0x60] sm:$0xf]
        %v11482 = vld [vmem:[%s8 + $0x64] sm:$0xf]
        %v11483 = vld [vmem:[%s8 + $0x68] sm:$0xf]
        %v11484 = vld [vmem:[%s8 + $0x6c] sm:$0xf]
        %v11485 = vld [vmem:[%s8 + $0x70] sm:$0xf]
        %v11486 = vld [vmem:[%s8 + $0x74] sm:$0xf]
        %v11487 = vld [vmem:[%s8 + $0x78] sm:$0xf]
        %v11488 = vld [vmem:[%s8 + $0x7c] sm:$0xf]
        %v11489 = vld [vmem:[%s8 + $0x80] sm:$0xf]
        %v11490 = vld [vmem:[%s8 + $0x84] sm:$0xf]
        %v11491 = vld [vmem:[%s8 + $0x88] sm:$0xf]
        %v11492 = vld [vmem:[%s8 + $0x8c] sm:$0xf]
        %v11493 = vld [vmem:[%s8 + $0x90] sm:$0xf]
        %v11494 = vld [vmem:[%s8 + $0x94] sm:$0xf]
        %v11495 = vld [vmem:[%s8 + $0x98] sm:$0xf]
        %v11496 = vld [vmem:[%s8 + $0x9c] sm:$0xf]
        %v11497 = vld [vmem:[%s8 + $0xa0] sm:$0xf]
        %v11498 = vld [vmem:[%s8 + $0xa4] sm:$0xf]
        %v11499 = vld [vmem:[%s8 + $0xa8] sm:$0xf]
        %v11500 = vld [vmem:[%s8 + $0xac] sm:$0xf]
        %v11501 = vld [vmem:[%s8 + $0xb0] sm:$0xf]
        %v11502 = vld [vmem:[%s8 + $0xb4] sm:$0xf]
        %v11503 = vld [vmem:[%s8 + $0xb8] sm:$0xf]
        %v11504 = vld [vmem:[%s8 + $0xbc] sm:$0xf]
        %v11505 = vld [vmem:[%s8 + $0xc0] sm:$0xf]
        %v11506 = vld [vmem:[%s8 + $0xc4] sm:$0xf]
        %v11507 = vld [vmem:[%s8 + $0xc8] sm:$0xf]
        %v11508 = vld [vmem:[%s8 + $0xcc] sm:$0xf]
        %v11509 = vld [vmem:[%s8 + $0xd0] sm:$0xf]
        %v11510 = vld [vmem:[%s8 + $0xd4] sm:$0xf]
        %v11511 = vld [vmem:[%s8 + $0xd8] sm:$0xf]
        %v11512 = vld [vmem:[%s8 + $0xdc] sm:$0xf]
        %v11513 = vld [vmem:[%s8 + $0xe0] sm:$0xf]
        %v11514 = vld [vmem:[%s8 + $0xe4] sm:$0xf]
        %v11515 = vld [vmem:[%s8 + $0xe8] sm:$0xf]
        %v11516 = vld [vmem:[%s8 + $0xec] sm:$0xf]
        %v11517 = vld [vmem:[%s8 + $0xf0] sm:$0xf]
        %v11518 = vld [vmem:[%s8 + $0xf4] sm:$0xf]
        %v11519 = vld [vmem:[%s8 + $0xf8] sm:$0xf]
        %v11520 = vld [vmem:[%s8 + $0xfc] sm:$0xf]
        %v11521 = vld [vmem:[%s8 + $0x100] sm:$0xf]
        %v11522 = vld [vmem:[%s8 + $0x104] sm:$0xf]
        %v11523 = vld [vmem:[%s8 + $0x108] sm:$0xf]
        %v11524 = vld [vmem:[%s8 + $0x10c] sm:$0xf]
        %v11525 = vld [vmem:[%s8 + $0x110] sm:$0xf]
        %v11526 = vld [vmem:[%s8 + $0x114] sm:$0xf]
        %v11527 = vld [vmem:[%s8 + $0x118] sm:$0xf]
        %v11528 = vld [vmem:[%s8 + $0x11c] sm:$0xf]
        %v11529 = vld [vmem:[%s8 + $0x120] sm:$0xf]
        %v11530 = vld [vmem:[%s8 + $0x124] sm:$0xf]
        %v11531 = vld [vmem:[%s8 + $0x128] sm:$0xf]
        %v11532 = vld [vmem:[%s8 + $0x12c] sm:$0xf]
        %v11533 = vld [vmem:[%s8 + $0x130] sm:$0xf]
        %v11534 = vld [vmem:[%s8 + $0x134] sm:$0xf]
        %v11535 = vld [vmem:[%s8 + $0x138] sm:$0xf]
        %v11536 = vld [vmem:[%s8 + $0x13c] sm:$0xf]
        %v11537 = vld [vmem:[%s8 + $0x140] sm:$0xf]
        %v11538 = vld [vmem:[%s8 + $0x144] sm:$0xf]
        %v11539 = vld [vmem:[%s8 + $0x148] sm:$0xf]
        %v11540 = vld [vmem:[%s8 + $0x14c] sm:$0xf]
        %v11541 = vld [vmem:[%s8 + $0x150] sm:$0xf]
        %v11542 = vld [vmem:[%s8 + $0x154] sm:$0xf]
        %v11543 = vld [vmem:[%s8 + $0x158] sm:$0xf]
        %v11544 = vld [vmem:[%s8 + $0x15c] sm:$0xf]
        %v11545 = vld [vmem:[%s8 + $0x160] sm:$0xf]
        %v11546 = vld [vmem:[%s8 + $0x164] sm:$0xf]
        %v11547 = vld [vmem:[%s8 + $0x168] sm:$0xf]
        %v11548 = vld [vmem:[%s8 + $0x16c] sm:$0xf]
        %v11549 = vld [vmem:[%s8 + $0x170] sm:$0xf]
        %v11550 = vld [vmem:[%s8 + $0x174] sm:$0xf]
        %v11551 = vld [vmem:[%s8 + $0x178] sm:$0xf]
        %v11552 = vld [vmem:[%s8 + $0x17c] sm:$0xf]
        %v11553 = vld [vmem:[%s9] sm:$0x1]
        %v11650 = vunpack.c.l.b16 %v11457
        %v11651 = vunpack.c.l.b16 %v11458
        %v11652 = vunpack.c.l.b16 %v11459
        %v11653 = vunpack.c.l.b16 %v11460
        %v11654 = vunpack.c.l.b16 %v11461
        %v11655 = vunpack.c.l.b16 %v11462
        %v11656 = vunpack.c.l.b16 %v11463
        %v11657 = vunpack.c.l.b16 %v11464
        %v11658 = vunpack.c.l.b16 %v11465
        %v11659 = vunpack.c.l.b16 %v11466
        %v11660 = vunpack.c.l.b16 %v11467
        %v11661 = vunpack.c.l.b16 %v11468
        %v11662 = vunpack.c.l.b16 %v11469
        %v11663 = vunpack.c.l.b16 %v11470
        %v11664 = vunpack.c.l.b16 %v11471
        %v11665 = vunpack.c.l.b16 %v11472
        %v11666 = vunpack.c.l.b16 %v11473
        %v11667 = vunpack.c.l.b16 %v11474
        %v11668 = vunpack.c.l.b16 %v11475
        %v11669 = vunpack.c.l.b16 %v11476
        %v11670 = vunpack.c.l.b16 %v11477
        %v11671 = vunpack.c.l.b16 %v11478
        %v11672 = vunpack.c.l.b16 %v11479
        %v11673 = vunpack.c.l.b16 %v11480
        %v11674 = vunpack.c.l.b16 %v11481
        %v11675 = vunpack.c.l.b16 %v11482
        %v11676 = vunpack.c.l.b16 %v11483
        %v11677 = vunpack.c.l.b16 %v11484
        %v11678 = vunpack.c.l.b16 %v11485
        %v11679 = vunpack.c.l.b16 %v11486
        %v11680 = vunpack.c.l.b16 %v11487
        %v11681 = vunpack.c.l.b16 %v11488
        %v11682 = vunpack.c.l.b16 %v11489
        %v11683 = vunpack.c.l.b16 %v11490
        %v11684 = vunpack.c.l.b16 %v11491
        %v11685 = vunpack.c.l.b16 %v11492
        %v11686 = vunpack.c.l.b16 %v11493
        %v11687 = vunpack.c.l.b16 %v11494
        %v11688 = vunpack.c.l.b16 %v11495
        %v11689 = vunpack.c.l.b16 %v11496
        %v11690 = vunpack.c.l.b16 %v11497
        %v11691 = vunpack.c.l.b16 %v11498
        %v11692 = vunpack.c.l.b16 %v11499
        %v11693 = vunpack.c.l.b16 %v11500
        %v11694 = vunpack.c.l.b16 %v11501
        %v11695 = vunpack.c.l.b16 %v11502
        %v11696 = vunpack.c.l.b16 %v11503
        %v11697 = vunpack.c.l.b16 %v11504
        %v11698 = vunpack.c.l.b16 %v11505
        %v11699 = vunpack.c.l.b16 %v11506
        %v11700 = vunpack.c.l.b16 %v11507
        %v11701 = vunpack.c.l.b16 %v11508
        %v11702 = vunpack.c.l.b16 %v11509
        %v11703 = vunpack.c.l.b16 %v11510
        %v11704 = vunpack.c.l.b16 %v11511
        %v11705 = vunpack.c.l.b16 %v11512
        %v11706 = vunpack.c.l.b16 %v11513
        %v11707 = vunpack.c.l.b16 %v11514
        %v11708 = vunpack.c.l.b16 %v11515
        %v11709 = vunpack.c.l.b16 %v11516
        %v11710 = vunpack.c.l.b16 %v11517
        %v11711 = vunpack.c.l.b16 %v11518
        %v11712 = vunpack.c.l.b16 %v11519
        %v11713 = vunpack.c.l.b16 %v11520
        %v11714 = vunpack.c.l.b16 %v11521
        %v11715 = vunpack.c.l.b16 %v11522
        %v11716 = vunpack.c.l.b16 %v11523
        %v11717 = vunpack.c.l.b16 %v11524
        %v11718 = vunpack.c.l.b16 %v11525
        %v11719 = vunpack.c.l.b16 %v11526
        %v11720 = vunpack.c.l.b16 %v11527
        %v11721 = vunpack.c.l.b16 %v11528
        %v11722 = vunpack.c.l.b16 %v11529
        %v11723 = vunpack.c.l.b16 %v11530
        %v11724 = vunpack.c.l.b16 %v11531
        %v11725 = vunpack.c.l.b16 %v11532
        %v11726 = vunpack.c.l.b16 %v11533
        %v11727 = vunpack.c.l.b16 %v11534
        %v11728 = vunpack.c.l.b16 %v11535
        %v11729 = vunpack.c.l.b16 %v11536
        %v11730 = vunpack.c.l.b16 %v11537
        %v11731 = vunpack.c.l.b16 %v11538
        %v11732 = vunpack.c.l.b16 %v11539
        %v11733 = vunpack.c.l.b16 %v11540
        %v11734 = vunpack.c.l.b16 %v11541
        %v11735 = vunpack.c.l.b16 %v11542
        %v11736 = vunpack.c.l.b16 %v11543
        %v11737 = vunpack.c.l.b16 %v11544
        %v11738 = vunpack.c.l.b16 %v11545
        %v11739 = vunpack.c.l.b16 %v11546
        %v11740 = vunpack.c.l.b16 %v11547
        %v11741 = vunpack.c.l.b16 %v11548
        %v11742 = vunpack.c.l.b16 %v11549
        %v11743 = vunpack.c.l.b16 %v11550
        %v11744 = vunpack.c.l.b16 %v11551
        %v11745 = vunpack.c.l.b16 %v11552
        %v11746 = vpack.c.b16 %v11651, %v11650
        %v11747 = vpack.c.b16 %v11653, %v11652
        %v11748 = vpack.c.b16 %v11655, %v11654
        %v11749 = vpack.c.b16 %v11657, %v11656
        %v11750 = vpack.c.b16 %v11659, %v11658
        %v11751 = vpack.c.b16 %v11661, %v11660
        %v11752 = vpack.c.b16 %v11663, %v11662
        %v11753 = vpack.c.b16 %v11665, %v11664
        %v11754 = vpack.c.b16 %v11667, %v11666
        %v11755 = vpack.c.b16 %v11669, %v11668
        %v11756 = vpack.c.b16 %v11671, %v11670
        %v11757 = vpack.c.b16 %v11673, %v11672
        %v11758 = vpack.c.b16 %v11675, %v11674
        %v11759 = vpack.c.b16 %v11677, %v11676
        %v11760 = vpack.c.b16 %v11679, %v11678
        %v11761 = vpack.c.b16 %v11681, %v11680
        %v11762 = vpack.c.b16 %v11683, %v11682
        %v11763 = vpack.c.b16 %v11685, %v11684
        %v11764 = vpack.c.b16 %v11687, %v11686
        %v11765 = vpack.c.b16 %v11689, %v11688
        %v11766 = vpack.c.b16 %v11691, %v11690
        %v11767 = vpack.c.b16 %v11693, %v11692
        %v11768 = vpack.c.b16 %v11695, %v11694
        %v11769 = vpack.c.b16 %v11697, %v11696
        %v11770 = vpack.c.b16 %v11699, %v11698
        %v11771 = vpack.c.b16 %v11701, %v11700
        %v11772 = vpack.c.b16 %v11703, %v11702
        %v11773 = vpack.c.b16 %v11705, %v11704
        %v11774 = vpack.c.b16 %v11707, %v11706
        %v11775 = vpack.c.b16 %v11709, %v11708
        %v11776 = vpack.c.b16 %v11711, %v11710
        %v11777 = vpack.c.b16 %v11713, %v11712
        %v11778 = vpack.c.b16 %v11715, %v11714
        %v11779 = vpack.c.b16 %v11717, %v11716
        %v11780 = vpack.c.b16 %v11719, %v11718
        %v11781 = vpack.c.b16 %v11721, %v11720
        %v11782 = vpack.c.b16 %v11723, %v11722
        %v11783 = vpack.c.b16 %v11725, %v11724
        %v11784 = vpack.c.b16 %v11727, %v11726
        %v11785 = vpack.c.b16 %v11729, %v11728
        %v11786 = vpack.c.b16 %v11731, %v11730
        %v11787 = vpack.c.b16 %v11733, %v11732
        %v11788 = vpack.c.b16 %v11735, %v11734
        %v11789 = vpack.c.b16 %v11737, %v11736
        %v11790 = vpack.c.b16 %v11739, %v11738
        %v11791 = vpack.c.b16 %v11741, %v11740
        %v11792 = vpack.c.b16 %v11743, %v11742
        %v11793 = vpack.c.b16 %v11745, %v11744
        %11842 = vmatprep.subr.bf16.mxu0 0
        %11843 = vmatpush1.bf16.msra.mxu0 %v11746
        %11844 = vmatprep.subr.bf16.mxu0 0
        %11845 = vmatpush1.bf16.msra.mxu0 %v11747
        %11846 = vmatprep.subr.bf16.mxu0 0
        %11847 = vmatpush1.bf16.msra.mxu0 %v11748
        %11848 = vmatprep.subr.bf16.mxu0 0
        %11849 = vmatpush1.bf16.msra.mxu0 %v11749
        %11850 = vmatprep.subr.bf16.mxu0 0
        %11851 = vmatpush1.bf16.msra.mxu0 %v11750
        %11852 = vmatprep.subr.bf16.mxu0 0
        %11853 = vmatpush1.bf16.msra.mxu0 %v11751
        %11854 = vmatprep.subr.bf16.mxu0 0
        %11855 = vmatpush1.bf16.msra.mxu0 %v11752
        %11856 = vmatprep.subr.bf16.mxu0 0
        %11857 = vmatpush1.bf16.msra.mxu0 %v11753
        %11858 = vmatprep.subr.bf16.mxu0 0
        %11859 = vmatpush1.bf16.msra.mxu0 %v11754
        %11860 = vmatprep.subr.bf16.mxu0 0
        %11861 = vmatpush1.bf16.msra.mxu0 %v11755
        %11862 = vmatprep.subr.bf16.mxu0 0
        %11863 = vmatpush1.bf16.msra.mxu0 %v11756
        %11864 = vmatprep.subr.bf16.mxu0 0
        %11865 = vmatpush1.bf16.msra.mxu0 %v11757
        %11866 = vmatprep.subr.bf16.mxu0 0
        %11867 = vmatpush1.bf16.msra.mxu0 %v11758
        %11868 = vmatprep.subr.bf16.mxu0 0
        %11869 = vmatpush1.bf16.msra.mxu0 %v11759
        %11870 = vmatprep.subr.bf16.mxu0 0
        %11871 = vmatpush1.bf16.msra.mxu0 %v11760
        %11872 = vmatprep.subr.bf16.mxu0 0
        %11873 = vmatpush1.bf16.msra.mxu0 %v11761
        %11874 = vmatprep.mubr.bf16.mxu0 %v11452
        %11875 = vmatmul.mubr.bf16.gmra.mrb[0].mxu0 %v11451
        %v11876 = vpop.f32.mrb[0].mxu0
        %v11877 = vadd.f32 %v11553, %v11876
        %v11878 = vpop.f32.mrb[0].mxu0
        %v11879 = vpop.f32.mrb[0].mxu0
        %v11880 = vpop.f32.mrb[0].mxu0
        %11881 = vdwg.mxu0
        %11882 = vmatprep.subr.bf16.mxu0 0
        %11883 = vmatpush1.bf16.msra.mxu0 %v11762
        %11884 = vmatprep.subr.bf16.mxu0 0
        %11885 = vmatpush1.bf16.msra.mxu0 %v11763
        %11886 = vmatprep.subr.bf16.mxu0 0
        %11887 = vmatpush1.bf16.msra.mxu0 %v11764
        %11888 = vmatprep.subr.bf16.mxu0 0
        %11889 = vmatpush1.bf16.msra.mxu0 %v11765
        %11890 = vmatprep.subr.bf16.mxu0 0
        %11891 = vmatpush1.bf16.msra.mxu0 %v11766
        %11892 = vmatprep.subr.bf16.mxu0 0
        %11893 = vmatpush1.bf16.msra.mxu0 %v11767
        %11894 = vmatprep.subr.bf16.mxu0 0
        %11895 = vmatpush1.bf16.msra.mxu0 %v11768
        %11896 = vmatprep.subr.bf16.mxu0 0
        %11897 = vmatpush1.bf16.msra.mxu0 %v11769
        %11898 = vmatprep.subr.bf16.mxu0 0
        %11899 = vmatpush1.bf16.msra.mxu0 %v11770
        %11900 = vmatprep.subr.bf16.mxu0 0
        %11901 = vmatpush1.bf16.msra.mxu0 %v11771
        %11902 = vmatprep.subr.bf16.mxu0 0
        %11903 = vmatpush1.bf16.msra.mxu0 %v11772
        %11904 = vmatprep.subr.bf16.mxu0 0
        %11905 = vmatpush1.bf16.msra.mxu0 %v11773
        %11906 = vmatprep.subr.bf16.mxu0 0
        %11907 = vmatpush1.bf16.msra.mxu0 %v11774
        %11908 = vmatprep.subr.bf16.mxu0 0
        %11909 = vmatpush1.bf16.msra.mxu0 %v11775
        %11910 = vmatprep.subr.bf16.mxu0 0
        %11911 = vmatpush1.bf16.msra.mxu0 %v11776
        %11912 = vmatprep.subr.bf16.mxu0 0
        %11913 = vmatpush1.bf16.msra.mxu0 %v11777
        %11914 = vmatprep.mubr.bf16.mxu0 %v11454
        %11915 = vmatmul.mubr.bf16.gmra.mrb[0].mxu0 %v11453
        %v11916 = vpop.f32.mrb[0].mxu0
        %v11917 = vadd.f32 %v11877, %v11916
        %v11918 = vpop.f32.mrb[0].mxu0
        %v11919 = vpop.f32.mrb[0].mxu0
        %v11920 = vpop.f32.mrb[0].mxu0
        %11921 = vdwg.mxu0
        %11922 = vmatprep.subr.bf16.mxu0 0
        %11923 = vmatpush1.bf16.msra.mxu0 %v11778
        %11924 = vmatprep.subr.bf16.mxu0 0
        %11925 = vmatpush1.bf16.msra.mxu0 %v11779
        %11926 = vmatprep.subr.bf16.mxu0 0
        %11927 = vmatpush1.bf16.msra.mxu0 %v11780
        %11928 = vmatprep.subr.bf16.mxu0 0
        %11929 = vmatpush1.bf16.msra.mxu0 %v11781
        %11930 = vmatprep.subr.bf16.mxu0 0
        %11931 = vmatpush1.bf16.msra.mxu0 %v11782
        %11932 = vmatprep.subr.bf16.mxu0 0
        %11933 = vmatpush1.bf16.msra.mxu0 %v11783
        %11934 = vmatprep.subr.bf16.mxu0 0
        %11935 = vmatpush1.bf16.msra.mxu0 %v11784
        %11936 = vmatprep.subr.bf16.mxu0 0
        %11937 = vmatpush1.bf16.msra.mxu0 %v11785
        %11938 = vmatprep.subr.bf16.mxu0 0
        %11939 = vmatpush1.bf16.msra.mxu0 %v11786
        %11940 = vmatprep.subr.bf16.mxu0 0
        %11941 = vmatpush1.bf16.msra.mxu0 %v11787
        %11942 = vmatprep.subr.bf16.mxu0 0
        %11943 = vmatpush1.bf16.msra.mxu0 %v11788
        %11944 = vmatprep.subr.bf16.mxu0 0
        %11945 = vmatpush1.bf16.msra.mxu0 %v11789
        %11946 = vmatprep.subr.bf16.mxu0 0
        %11947 = vmatpush1.bf16.msra.mxu0 %v11790
        %11948 = vmatprep.subr.bf16.mxu0 0
        %11949 = vmatpush1.bf16.msra.mxu0 %v11791
        %11950 = vmatprep.subr.bf16.mxu0 0
        %11951 = vmatpush1.bf16.msra.mxu0 %v11792
        %11952 = vmatprep.subr.bf16.mxu0 0
        %11953 = vmatpush1.bf16.msra.mxu0 %v11793
        %11954 = vmatprep.mubr.bf16.mxu0 %v11456
        %11955 = vmatmul.mubr.bf16.gmra.mrb[0].mxu0 %v11455
        %v11956 = vpop.f32.mrb[0].mxu0
        %v11957 = vadd.f32 %v11917, %v11956
        %v11958 = vpop.f32.mrb[0].mxu0
        %v11959 = vpop.f32.mrb[0].mxu0
        %v11960 = vpop.f32.mrb[0].mxu0
        %11961 = vdwg.mxu0
        %11962 = vst [vmem:[%s351] sm:$0x1] %v11957
        %s11963 = sand.u32 %s247, 1
        %s11964 = scalar_lea.sflag [#allocation4], %s11963
        %s11965 = sand.u32 %s247, 1
        %s11966 = scalar_lea.vmem [#allocation3], %s11965
        // Predicated region
        $region61: #{inception_aux_forward.1} parent=59 // pred_check
          %p11967 = pneg %p257
        $region62: #{inception_aux_forward.1} parent=59 // pred_check_branch
          %11969 = sbr.rel (%p11967) target = $region64
        $region63: #{inception_aux_forward.1} parent=59 // pred_region
          %s11971 = ssub.s32 16, 16
          %11972 = vsyncadd %s11964, %s11971
          %s11973 = smul.addr %s24, 16
          %s11974 = scalar_lea.hbm %s10, %s11973
          %s11976 = sshll.u32 %s11966, 4
          %s11977 = int_to_ptr.vmem [resolvable:$true] %s11976
          %11979 = dma.vmem_to_hbm [thread:$0]  %s11977, 16, %s11974, %s11964
        $region64: #{inception_aux_forward.1} parent=59 // pred_fallthru
          _
      $region60: #{inception_aux_forward.1} parent=5 // pred_fallthru
        _
      %p11980 = scmp.le.s32.totalorder 2, %s19
      // Predicated region
      $region65: #{inception_aux_forward.1} parent=5 // pred_check
        %p11981 = pneg %p11980
      $region66: #{inception_aux_forward.1} parent=5 // pred_check_branch
        %11983 = sbr.rel (%p11981) target = $region68
      $region67: #{inception_aux_forward.1} parent=5 // pred_region
        %s11984 = ssub.s32 %s19, 2
        // Predicated region
        $region69: #{inception_aux_forward.1} parent=67 // pred_check
          %p11985 = pneg %p263
        $region70: #{inception_aux_forward.1} parent=67 // pred_check_branch
          %11987 = sbr.rel (%p11985) target = $region72
        $region71: #{inception_aux_forward.1} parent=67 // pred_region
          %s11988 = sand.u32 %s248, 1
          %s11989 = scalar_lea.sflag [#allocation4], %s11988
          %s11990 = sand.u32 %s248, 1
          %s11991 = scalar_lea.vmem [#allocation3], %s11990
          %11992 = dma.done %s11989, 16
        $region72: #{inception_aux_forward.1} parent=67 // pred_fallthru
          _
      $region68: #{inception_aux_forward.1} parent=5 // pred_fallthru
        _
    $region6: #{inception_aux_forward.1} parent=1 // loop_footer
      %s23 = sadd.s32 1, %s19
    $region7: #{inception_aux_forward.1} parent=1 // loop_footer_branch
      %18 = sbr.rel target = $region3
    $region8: #{inception_aux_forward.1} parent=1 // loop_exit
      _
    %11993 = vsyncpa [#allocation4], 1
    %s11994 = scalar_lea.sflag [#allocation4], 1
    %11995 = vsyncpa %s11994, 1

</llo_original>
